<compile_context>
chip_gen: v7x
topology: tpu7x:2x2x1
jax: 0.10.0
libtpu: 0.0.40
codegen_flags: <defaults>
</compile_context>

<pallas_src>
import jax
import jax.numpy as jnp
import numpy as np
from jax.experimental import pallas as pl
from jax.experimental.pallas import tpu as pltpu

# Dims implied by the module: fc1 in-features 944 = 16 * 59 * 1  =>  conv1
# input is (N, 1, 120, 4).
N, C_IN, H, W = 2, 1, 120, 4
C_OUT = 16
KS = 3                               # conv kernel size
KK = KS * KS                         # 9 taps
OH, OW = H - KS + 1, W - KS + 1      # 118, 2   (VALID conv)
PH, PW = OH // 2, OW // 2            # 59, 1    (2x2 max-pool)
PHP = 128                            # pooled-h padded to a full vreg lane width
FEAT = C_OUT * PH * PW               # 944   (torch flatten width)
FEATP = C_OUT * PHP                  # 2048  (lane-dense padded feature width)
HID, OUT = 50, 5
NWIN = 4                             # 2x2 pool window positions
WBLK = N * PHP                       # 256 lanes per pool-window block
HIGHEST = jax.lax.Precision.HIGHEST


def net_kernel(patch_ref, small_ref, wf_ref, o_ref, flat_ref):
    # patch_ref: (9, NWIN*N*PHP) = (9, 1024); lane index = win*256 + n*128 + h
    # small_ref: (24, 16) packed tiny params:
    #     [0:16, 0:9]   conv weight (16, 9)
    #     [0:16, 9:10]  conv bias   (16, 1)
    #     [16:17, 0:5]  fused fc bias (1, 5)
    # wf_ref:  (2048, 5) fused fc1·fc2 weight (rows for padded h are zero)
    # o_ref:   (N, 5)
    # flat_ref (scratch): (N, 2048) lane-dense flatten slab, feature = c*128 + h
    wc = small_ref[0:C_OUT, 0:KK]                         # (16, 9)
    bc = small_ref[0:C_OUT, KK:KK + 1]                    # (16, 1)
    bf = small_ref[C_OUT:C_OUT + 1, 0:OUT]                # (1, 5)

    # ---- conv1 as a single GEMM: (16,9) x (9,1024) -> (16,1024) ------------
    conv = jnp.dot(wc, patch_ref[...],
                   preferred_element_type=jnp.float32, precision=HIGHEST)

    # ---- 2x2 max-pool: max over 4 window blocks (256-lane aligned) ---------
    pooled = conv[:, 0:WBLK]
    for w in range(1, NWIN):
        pooled = jnp.maximum(pooled, conv[:, w * WBLK:(w + 1) * WBLK])

    # bias-add + ReLU commute with the max (uniform per-channel shift, monotone)
    act = jnp.maximum(pooled + bc, 0.0)                   # (16, 256); col = n*128 + h

    # ---- flatten: 32 full, lane-aligned (1, 128) vreg copies ----------------
    # Padded h rows carry relu(bias) but the matching Wf rows are zero, so
    # they contribute nothing to the output.
    for n in range(N):
        for c in range(C_OUT):
            flat_ref[n:n + 1, c * PHP:(c + 1) * PHP] = \
                act[c:c + 1, n * PHP:(n + 1) * PHP]

    # ---- fused fc1·fc2 -> softmax -------------------------------------------
    h2 = jnp.dot(flat_ref[...], wf_ref[...],
                 preferred_element_type=jnp.float32, precision=HIGHEST) + bf
    m = jnp.max(h2, axis=-1, keepdims=True)
    e = jnp.exp(h2 - m)
    o_ref[...] = e / jnp.sum(e, axis=-1, keepdims=True)


def prepare_params(params):
    """One-time (outside the hot path) weight re-layout + fc fusion."""
    conv_w, conv_b, fc1_w, fc1_b, fc2_w, fc2_b = params
    wc = conv_w.reshape(C_OUT, KK)                          # (16, 9)
    bc = conv_b.reshape(C_OUT, 1)                           # (16, 1)
    # fc1 weight permuted to the kernel's flatten order f' = c*128 + h,
    # zero rows for the padded h in [59, 128).
    w1 = fc1_w.reshape(HID, C_OUT, PH)                      # [j, c, h]
    w1 = jnp.pad(w1, ((0, 0), (0, 0), (0, PHP - PH)))       # [j, c, h128]
    w1p = jnp.transpose(w1, (1, 2, 0)).reshape(FEATP, HID)  # [c*128+h, j]
    # Fuse fc1·fc2 offline (no nonlinearity between them).
    wf = jnp.dot(w1p, fc2_w.T, precision=HIGHEST)           # (2048, 5)
    bf = jnp.dot(fc1_b, fc2_w.T, precision=HIGHEST) + fc2_b  # (5,)
    # Pack all tiny params into one array -> one DMA instead of three.
    small = jnp.zeros((24, 16), jnp.float32)
    small = small.at[0:C_OUT, 0:KK].set(wc)
    small = small.at[0:C_OUT, KK:KK + 1].set(bc)
    small = small.at[C_OUT:C_OUT + 1, 0:OUT].set(bf.reshape(1, OUT))
    return small, wf


@jax.jit
def net_forward(x, small, wf):
    n = x.shape[0]
    assert n == N, "kernel is specialized for the demo batch size"

    # --- im2col preamble (tiny: x is 3.8 KB, patches 36 KB), kept in XLA ----
    # TODO(synk): if xprof ever shows this splitting into multiple dispatches,
    # build the 9 taps in-kernel from a pre-transposed x (H on lanes) using
    # static slices + pltpu.roll, or cache `patches` across calls.
    x2 = x[:, 0]                                            # (N, 120, 4)
    p = jnp.stack([x2[:, di:di + OH, dj:dj + OW]
                   for di in range(KS) for dj in range(KS)], axis=-1)
    #                                                        (N, 118, 2, 9)
    p = p.reshape(n, PH, 2, 2, KK)                          # [n, h, dr, dc, k]
    p = p.transpose(2, 3, 0, 1, 4).reshape(NWIN, n, PH, KK)  # [win, n, h, k]
    p = jnp.pad(p, ((0, 0), (0, 0), (0, PHP - PH), (0, 0)))  # pad h 59 -> 128
    patches = p.reshape(NWIN * n * PHP, KK).T               # (9, 1024)

    return pl.pallas_call(
        net_kernel,
        out_shape=jax.ShapeDtypeStruct((n, OUT), jnp.float32),
        scratch_shapes=[pltpu.VMEM((n, FEATP), jnp.float32)],
    )(patches, small, wf)


def net_reference(x, params):
    conv_w, conv_b, fc1_w, fc1_b, fc2_w, fc2_b = params
    n = x.shape[0]
    y = jax.lax.conv_general_dilated(
        x, conv_w, (1, 1), "VALID",
        dimension_numbers=("NCHW", "OIHW", "NCHW"), precision=HIGHEST)
    y = jnp.maximum(y + conv_b.reshape(1, C_OUT, 1, 1), 0.0)   # (N,16,118,2)
    y = y.reshape(n, C_OUT, PH, 2, PW, 2).max(axis=(3, 5))     # (N,16,59,1)
    flat = y.reshape(n, FEAT)
    h1 = jnp.dot(flat, fc1_w.T, precision=HIGHEST) + fc1_b
    h2 = jnp.dot(h1, fc2_w.T, precision=HIGHEST) + fc2_b
    return jax.nn.softmax(h2, axis=1)


if __name__ == "__main__":
    key = jax.random.PRNGKey(0)
    ks = jax.random.split(key, 7)
    conv_w = jax.random.normal(ks[0], (C_OUT, C_IN, KS, KS), jnp.float32) * 0.1
    conv_b = jax.random.normal(ks[1], (C_OUT,), jnp.float32) * 0.1
    fc1_w = jax.random.normal(ks[2], (HID, FEAT), jnp.float32) * 0.05
    fc1_b = jax.random.normal(ks[3], (HID,), jnp.float32) * 0.05
    fc2_w = jax.random.normal(ks[4], (OUT, HID), jnp.float32) * 0.1
    fc2_b = jax.random.normal(ks[5], (OUT,), jnp.float32) * 0.1
    params = (conv_w, conv_b, fc1_w, fc1_b, fc2_w, fc2_b)

    x = jax.random.normal(ks[6], (N, C_IN, H, W), jnp.float32)

    small, wf = prepare_params(params)            # one-time weight prep
    out = jax.block_until_ready(net_forward(x, small, wf))
    ref = jax.block_until_ready(net_reference(x, params))

    np.testing.assert_allclose(np.asarray(out), np.asarray(ref),
                               rtol=1e-4, atol=1e-4)
    assert out.shape == (N, OUT)
    print("KERNEL_OK")
</pallas_src>

<mosaic_0001>
module attributes {stable_mosaic.version = 11 : i64} {
  func.func @net_kernel(%arg0: memref<9x1024xf32, #tpu.memory_space<vmem>>, %arg1: memref<24x16xf32, #tpu.memory_space<vmem>>, %arg2: memref<2048x5xf32, #tpu.memory_space<vmem>>, %arg3: memref<2x5xf32, #tpu.memory_space<vmem>>, %arg4: memref<2x2048xf32, #tpu.memory_space<vmem>>) attributes {dimension_semantics = [], scalar_prefetch = 0 : i64, scratch_operands = 1 : i64, tpu.core_type = #tpu.core_type<tc>} {
    %c0 = arith.constant 0 : index
    %c0_0 = arith.constant 0 : index
    %0 = vector.load %arg1[%c0, %c0_0] : memref<24x16xf32, #tpu.memory_space<vmem>>, vector<16x9xf32>
    %c0_1 = arith.constant 0 : index
    %c9 = arith.constant 9 : index
    %1 = vector.load %arg1[%c0_1, %c9] : memref<24x16xf32, #tpu.memory_space<vmem>>, vector<16x1xf32>
    %c16 = arith.constant 16 : index
    %c0_2 = arith.constant 0 : index
    %2 = vector.load %arg1[%c16, %c0_2] : memref<24x16xf32, #tpu.memory_space<vmem>>, vector<1x5xf32>
    %c0_3 = arith.constant 0 : index
    %c0_4 = arith.constant 0 : index
    %3 = vector.load %arg0[%c0_3, %c0_4] : memref<9x1024xf32, #tpu.memory_space<vmem>>, vector<9x1024xf32>
    %cst = arith.constant dense<0.000000e+00> : vector<16x1024xf32>
    %4 = tpu.matmul %0, %3, %cst {dimension_numbers = #tpu.dot_dimension_numbers<[1], [0], [0], [1], [0, 0, 1, 1], [], []>, precision = #tpu.contract_precision<fp32>} : vector<16x9xf32>, vector<9x1024xf32>, vector<16x1024xf32> -> vector<16x1024xf32>
    %5 = vector.extract_strided_slice %4 {offsets = [0, 0], sizes = [16, 256], strides = [1, 1]} : vector<16x1024xf32> to vector<16x256xf32>
    %6 = vector.extract_strided_slice %4 {offsets = [0, 256], sizes = [16, 256], strides = [1, 1]} : vector<16x1024xf32> to vector<16x256xf32>
    %7 = arith.maximumf %5, %6 : vector<16x256xf32>
    %8 = vector.extract_strided_slice %4 {offsets = [0, 512], sizes = [16, 256], strides = [1, 1]} : vector<16x1024xf32> to vector<16x256xf32>
    %9 = arith.maximumf %7, %8 : vector<16x256xf32>
    %10 = vector.extract_strided_slice %4 {offsets = [0, 768], sizes = [16, 256], strides = [1, 1]} : vector<16x1024xf32> to vector<16x256xf32>
    %11 = arith.maximumf %9, %10 : vector<16x256xf32>
    %12 = vector.broadcast %1 : vector<16x1xf32> to vector<16x256xf32>
    %13 = arith.addf %11, %12 : vector<16x256xf32>
    %cst_5 = arith.constant 0.000000e+00 : f32
    %14 = vector.broadcast %cst_5 : f32 to vector<16x256xf32>
    %15 = arith.maximumf %13, %14 : vector<16x256xf32>
    %16 = vector.extract_strided_slice %15 {offsets = [0, 0], sizes = [1, 128], strides = [1, 1]} : vector<16x256xf32> to vector<1x128xf32>
    %c0_6 = arith.constant 0 : index
    %c0_7 = arith.constant 0 : index
    %17 = vector.load %arg4[%c0_6, %c0_7] : memref<2x2048xf32, #tpu.memory_space<vmem>>, vector<1x128xf32>
    tpu.vector_store %arg4[%c0_6, %c0_7], %16 {strides = array<i32>} : memref<2x2048xf32, #tpu.memory_space<vmem>>, vector<1x128xf32>,
    %18 = vector.extract_strided_slice %15 {offsets = [1, 0], sizes = [1, 128], strides = [1, 1]} : vector<16x256xf32> to vector<1x128xf32>
    %c0_8 = arith.constant 0 : index
    %c128 = arith.constant 128 : index
    %19 = vector.load %arg4[%c0_8, %c128] : memref<2x2048xf32, #tpu.memory_space<vmem>>, vector<1x128xf32>
    tpu.vector_store %arg4[%c0_8, %c128], %18 {strides = array<i32>} : memref<2x2048xf32, #tpu.memory_space<vmem>>, vector<1x128xf32>,
    %20 = vector.extract_strided_slice %15 {offsets = [2, 0], sizes = [1, 128], strides = [1, 1]} : vector<16x256xf32> to vector<1x128xf32>
    %c0_9 = arith.constant 0 : index
    %c256 = arith.constant 256 : index
    %21 = vector.load %arg4[%c0_9, %c256] : memref<2x2048xf32, #tpu.memory_space<vmem>>, vector<1x128xf32>
    tpu.vector_store %arg4[%c0_9, %c256], %20 {strides = array<i32>} : memref<2x2048xf32, #tpu.memory_space<vmem>>, vector<1x128xf32>,
    %22 = vector.extract_strided_slice %15 {offsets = [3, 0], sizes = [1, 128], strides = [1, 1]} : vector<16x256xf32> to vector<1x128xf32>
    %c0_10 = arith.constant 0 : index
    %c384 = arith.constant 384 : index
    %23 = vector.load %arg4[%c0_10, %c384] : memref<2x2048xf32, #tpu.memory_space<vmem>>, vector<1x128xf32>
    tpu.vector_store %arg4[%c0_10, %c384], %22 {strides = array<i32>} : memref<2x2048xf32, #tpu.memory_space<vmem>>, vector<1x128xf32>,
    %24 = vector.extract_strided_slice %15 {offsets = [4, 0], sizes = [1, 128], strides = [1, 1]} : vector<16x256xf32> to vector<1x128xf32>
    %c0_11 = arith.constant 0 : index
    %c512 = arith.constant 512 : index
    %25 = vector.load %arg4[%c0_11, %c512] : memref<2x2048xf32, #tpu.memory_space<vmem>>, vector<1x128xf32>
    tpu.vector_store %arg4[%c0_11, %c512], %24 {strides = array<i32>} : memref<2x2048xf32, #tpu.memory_space<vmem>>, vector<1x128xf32>,
    %26 = vector.extract_strided_slice %15 {offsets = [5, 0], sizes = [1, 128], strides = [1, 1]} : vector<16x256xf32> to vector<1x128xf32>
    %c0_12 = arith.constant 0 : index
    %c640 = arith.constant 640 : index
    %27 = vector.load %arg4[%c0_12, %c640] : memref<2x2048xf32, #tpu.memory_space<vmem>>, vector<1x128xf32>
    tpu.vector_store %arg4[%c0_12, %c640], %26 {strides = array<i32>} : memref<2x2048xf32, #tpu.memory_space<vmem>>, vector<1x128xf32>,
    %28 = vector.extract_strided_slice %15 {offsets = [6, 0], sizes = [1, 128], strides = [1, 1]} : vector<16x256xf32> to vector<1x128xf32>
    %c0_13 = arith.constant 0 : index
    %c768 = arith.constant 768 : index
    %29 = vector.load %arg4[%c0_13, %c768] : memref<2x2048xf32, #tpu.memory_space<vmem>>, vector<1x128xf32>
    tpu.vector_store %arg4[%c0_13, %c768], %28 {strides = array<i32>} : memref<2x2048xf32, #tpu.memory_space<vmem>>, vector<1x128xf32>,
    %30 = vector.extract_strided_slice %15 {offsets = [7, 0], sizes = [1, 128], strides = [1, 1]} : vector<16x256xf32> to vector<1x128xf32>
    %c0_14 = arith.constant 0 : index
    %c896 = arith.constant 896 : index
    %31 = vector.load %arg4[%c0_14, %c896] : memref<2x2048xf32, #tpu.memory_space<vmem>>, vector<1x128xf32>
    tpu.vector_store %arg4[%c0_14, %c896], %30 {strides = array<i32>} : memref<2x2048xf32, #tpu.memory_space<vmem>>, vector<1x128xf32>,
    %32 = vector.extract_strided_slice %15 {offsets = [8, 0], sizes = [1, 128], strides = [1, 1]} : vector<16x256xf32> to vector<1x128xf32>
    %c0_15 = arith.constant 0 : index
    %c1024 = arith.constant 1024 : index
    %33 = vector.load %arg4[%c0_15, %c1024] : memref<2x2048xf32, #tpu.memory_space<vmem>>, vector<1x128xf32>
    tpu.vector_store %arg4[%c0_15, %c1024], %32 {strides = array<i32>} : memref<2x2048xf32, #tpu.memory_space<vmem>>, vector<1x128xf32>,
    %34 = vector.extract_strided_slice %15 {offsets = [9, 0], sizes = [1, 128], strides = [1, 1]} : vector<16x256xf32> to vector<1x128xf32>
    %c0_16 = arith.constant 0 : index
    %c1152 = arith.constant 1152 : index
    %35 = vector.load %arg4[%c0_16, %c1152] : memref<2x2048xf32, #tpu.memory_space<vmem>>, vector<1x128xf32>
    tpu.vector_store %arg4[%c0_16, %c1152], %34 {strides = array<i32>} : memref<2x2048xf32, #tpu.memory_space<vmem>>, vector<1x128xf32>,
    %36 = vector.extract_strided_slice %15 {offsets = [10, 0], sizes = [1, 128], strides = [1, 1]} : vector<16x256xf32> to vector<1x128xf32>
    %c0_17 = arith.constant 0 : index
    %c1280 = arith.constant 1280 : index
    %37 = vector.load %arg4[%c0_17, %c1280] : memref<2x2048xf32, #tpu.memory_space<vmem>>, vector<1x128xf32>
    tpu.vector_store %arg4[%c0_17, %c1280], %36 {strides = array<i32>} : memref<2x2048xf32, #tpu.memory_space<vmem>>, vector<1x128xf32>,
    %38 = vector.extract_strided_slice %15 {offsets = [11, 0], sizes = [1, 128], strides = [1, 1]} : vector<16x256xf32> to vector<1x128xf32>
    %c0_18 = arith.constant 0 : index
    %c1408 = arith.constant 1408 : index
    %39 = vector.load %arg4[%c0_18, %c1408] : memref<2x2048xf32, #tpu.memory_space<vmem>>, vector<1x128xf32>
    tpu.vector_store %arg4[%c0_18, %c1408], %38 {strides = array<i32>} : memref<2x2048xf32, #tpu.memory_space<vmem>>, vector<1x128xf32>,
    %40 = vector.extract_strided_slice %15 {offsets = [12, 0], sizes = [1, 128], strides = [1, 1]} : vector<16x256xf32> to vector<1x128xf32>
    %c0_19 = arith.constant 0 : index
    %c1536 = arith.constant 1536 : index
    %41 = vector.load %arg4[%c0_19, %c1536] : memref<2x2048xf32, #tpu.memory_space<vmem>>, vector<1x128xf32>
    tpu.vector_store %arg4[%c0_19, %c1536], %40 {strides = array<i32>} : memref<2x2048xf32, #tpu.memory_space<vmem>>, vector<1x128xf32>,
    %42 = vector.extract_strided_slice %15 {offsets = [13, 0], sizes = [1, 128], strides = [1, 1]} : vector<16x256xf32> to vector<1x128xf32>
    %c0_20 = arith.constant 0 : index
    %c1664 = arith.constant 1664 : index
    %43 = vector.load %arg4[%c0_20, %c1664] : memref<2x2048xf32, #tpu.memory_space<vmem>>, vector<1x128xf32>
    tpu.vector_store %arg4[%c0_20, %c1664], %42 {strides = array<i32>} : memref<2x2048xf32, #tpu.memory_space<vmem>>, vector<1x128xf32>,
    %44 = vector.extract_strided_slice %15 {offsets = [14, 0], sizes = [1, 128], strides = [1, 1]} : vector<16x256xf32> to vector<1x128xf32>
    %c0_21 = arith.constant 0 : index
    %c1792 = arith.constant 1792 : index
    %45 = vector.load %arg4[%c0_21, %c1792] : memref<2x2048xf32, #tpu.memory_space<vmem>>, vector<1x128xf32>
    tpu.vector_store %arg4[%c0_21, %c1792], %44 {strides = array<i32>} : memref<2x2048xf32, #tpu.memory_space<vmem>>, vector<1x128xf32>,
    %46 = vector.extract_strided_slice %15 {offsets = [15, 0], sizes = [1, 128], strides = [1, 1]} : vector<16x256xf32> to vector<1x128xf32>
    %c0_22 = arith.constant 0 : index
    %c1920 = arith.constant 1920 : index
    %47 = vector.load %arg4[%c0_22, %c1920] : memref<2x2048xf32, #tpu.memory_space<vmem>>, vector<1x128xf32>
    tpu.vector_store %arg4[%c0_22, %c1920], %46 {strides = array<i32>} : memref<2x2048xf32, #tpu.memory_space<vmem>>, vector<1x128xf32>,
    %48 = vector.extract_strided_slice %15 {offsets = [0, 128], sizes = [1, 128], strides = [1, 1]} : vector<16x256xf32> to vector<1x128xf32>
    %c1 = arith.constant 1 : index
    %c0_23 = arith.constant 0 : index
    %49 = vector.load %arg4[%c1, %c0_23] : memref<2x2048xf32, #tpu.memory_space<vmem>>, vector<1x128xf32>
    tpu.vector_store %arg4[%c1, %c0_23], %48 {strides = array<i32>} : memref<2x2048xf32, #tpu.memory_space<vmem>>, vector<1x128xf32>,
    %50 = vector.extract_strided_slice %15 {offsets = [1, 128], sizes = [1, 128], strides = [1, 1]} : vector<16x256xf32> to vector<1x128xf32>
    %c1_24 = arith.constant 1 : index
    %c128_25 = arith.constant 128 : index
    %51 = vector.load %arg4[%c1_24, %c128_25] : memref<2x2048xf32, #tpu.memory_space<vmem>>, vector<1x128xf32>
    tpu.vector_store %arg4[%c1_24, %c128_25], %50 {strides = array<i32>} : memref<2x2048xf32, #tpu.memory_space<vmem>>, vector<1x128xf32>,
    %52 = vector.extract_strided_slice %15 {offsets = [2, 128], sizes = [1, 128], strides = [1, 1]} : vector<16x256xf32> to vector<1x128xf32>
    %c1_26 = arith.constant 1 : index
    %c256_27 = arith.constant 256 : index
    %53 = vector.load %arg4[%c1_26, %c256_27] : memref<2x2048xf32, #tpu.memory_space<vmem>>, vector<1x128xf32>
    tpu.vector_store %arg4[%c1_26, %c256_27], %52 {strides = array<i32>} : memref<2x2048xf32, #tpu.memory_space<vmem>>, vector<1x128xf32>,
    %54 = vector.extract_strided_slice %15 {offsets = [3, 128], sizes = [1, 128], strides = [1, 1]} : vector<16x256xf32> to vector<1x128xf32>
    %c1_28 = arith.constant 1 : index
    %c384_29 = arith.constant 384 : index
    %55 = vector.load %arg4[%c1_28, %c384_29] : memref<2x2048xf32, #tpu.memory_space<vmem>>, vector<1x128xf32>
    tpu.vector_store %arg4[%c1_28, %c384_29], %54 {strides = array<i32>} : memref<2x2048xf32, #tpu.memory_space<vmem>>, vector<1x128xf32>,
    %56 = vector.extract_strided_slice %15 {offsets = [4, 128], sizes = [1, 128], strides = [1, 1]} : vector<16x256xf32> to vector<1x128xf32>
    %c1_30 = arith.constant 1 : index
    %c512_31 = arith.constant 512 : index
    %57 = vector.load %arg4[%c1_30, %c512_31] : memref<2x2048xf32, #tpu.memory_space<vmem>>, vector<1x128xf32>
    tpu.vector_store %arg4[%c1_30, %c512_31], %56 {strides = array<i32>} : memref<2x2048xf32, #tpu.memory_space<vmem>>, vector<1x128xf32>,
    %58 = vector.extract_strided_slice %15 {offsets = [5, 128], sizes = [1, 128], strides = [1, 1]} : vector<16x256xf32> to vector<1x128xf32>
    %c1_32 = arith.constant 1 : index
    %c640_33 = arith.constant 640 : index
    %59 = vector.load %arg4[%c1_32, %c640_33] : memref<2x2048xf32, #tpu.memory_space<vmem>>, vector<1x128xf32>
    tpu.vector_store %arg4[%c1_32, %c640_33], %58 {strides = array<i32>} : memref<2x2048xf32, #tpu.memory_space<vmem>>, vector<1x128xf32>,
    %60 = vector.extract_strided_slice %15 {offsets = [6, 128], sizes = [1, 128], strides = [1, 1]} : vector<16x256xf32> to vector<1x128xf32>
    %c1_34 = arith.constant 1 : index
    %c768_35 = arith.constant 768 : index
    %61 = vector.load %arg4[%c1_34, %c768_35] : memref<2x2048xf32, #tpu.memory_space<vmem>>, vector<1x128xf32>
    tpu.vector_store %arg4[%c1_34, %c768_35], %60 {strides = array<i32>} : memref<2x2048xf32, #tpu.memory_space<vmem>>, vector<1x128xf32>,
    %62 = vector.extract_strided_slice %15 {offsets = [7, 128], sizes = [1, 128], strides = [1, 1]} : vector<16x256xf32> to vector<1x128xf32>
    %c1_36 = arith.constant 1 : index
    %c896_37 = arith.constant 896 : index
    %63 = vector.load %arg4[%c1_36, %c896_37] : memref<2x2048xf32, #tpu.memory_space<vmem>>, vector<1x128xf32>
    tpu.vector_store %arg4[%c1_36, %c896_37], %62 {strides = array<i32>} : memref<2x2048xf32, #tpu.memory_space<vmem>>, vector<1x128xf32>,
    %64 = vector.extract_strided_slice %15 {offsets = [8, 128], sizes = [1, 128], strides = [1, 1]} : vector<16x256xf32> to vector<1x128xf32>
    %c1_38 = arith.constant 1 : index
    %c1024_39 = arith.constant 1024 : index
    %65 = vector.load %arg4[%c1_38, %c1024_39] : memref<2x2048xf32, #tpu.memory_space<vmem>>, vector<1x128xf32>
    tpu.vector_store %arg4[%c1_38, %c1024_39], %64 {strides = array<i32>} : memref<2x2048xf32, #tpu.memory_space<vmem>>, vector<1x128xf32>,
    %66 = vector.extract_strided_slice %15 {offsets = [9, 128], sizes = [1, 128], strides = [1, 1]} : vector<16x256xf32> to vector<1x128xf32>
    %c1_40 = arith.constant 1 : index
    %c1152_41 = arith.constant 1152 : index
    %67 = vector.load %arg4[%c1_40, %c1152_41] : memref<2x2048xf32, #tpu.memory_space<vmem>>, vector<1x128xf32>
    tpu.vector_store %arg4[%c1_40, %c1152_41], %66 {strides = array<i32>} : memref<2x2048xf32, #tpu.memory_space<vmem>>, vector<1x128xf32>,
    %68 = vector.extract_strided_slice %15 {offsets = [10, 128], sizes = [1, 128], strides = [1, 1]} : vector<16x256xf32> to vector<1x128xf32>
    %c1_42 = arith.constant 1 : index
    %c1280_43 = arith.constant 1280 : index
    %69 = vector.load %arg4[%c1_42, %c1280_43] : memref<2x2048xf32, #tpu.memory_space<vmem>>, vector<1x128xf32>
    tpu.vector_store %arg4[%c1_42, %c1280_43], %68 {strides = array<i32>} : memref<2x2048xf32, #tpu.memory_space<vmem>>, vector<1x128xf32>,
    %70 = vector.extract_strided_slice %15 {offsets = [11, 128], sizes = [1, 128], strides = [1, 1]} : vector<16x256xf32> to vector<1x128xf32>
    %c1_44 = arith.constant 1 : index
    %c1408_45 = arith.constant 1408 : index
    %71 = vector.load %arg4[%c1_44, %c1408_45] : memref<2x2048xf32, #tpu.memory_space<vmem>>, vector<1x128xf32>
    tpu.vector_store %arg4[%c1_44, %c1408_45], %70 {strides = array<i32>} : memref<2x2048xf32, #tpu.memory_space<vmem>>, vector<1x128xf32>,
    %72 = vector.extract_strided_slice %15 {offsets = [12, 128], sizes = [1, 128], strides = [1, 1]} : vector<16x256xf32> to vector<1x128xf32>
    %c1_46 = arith.constant 1 : index
    %c1536_47 = arith.constant 1536 : index
    %73 = vector.load %arg4[%c1_46, %c1536_47] : memref<2x2048xf32, #tpu.memory_space<vmem>>, vector<1x128xf32>
    tpu.vector_store %arg4[%c1_46, %c1536_47], %72 {strides = array<i32>} : memref<2x2048xf32, #tpu.memory_space<vmem>>, vector<1x128xf32>,
    %74 = vector.extract_strided_slice %15 {offsets = [13, 128], sizes = [1, 128], strides = [1, 1]} : vector<16x256xf32> to vector<1x128xf32>
    %c1_48 = arith.constant 1 : index
    %c1664_49 = arith.constant 1664 : index
    %75 = vector.load %arg4[%c1_48, %c1664_49] : memref<2x2048xf32, #tpu.memory_space<vmem>>, vector<1x128xf32>
    tpu.vector_store %arg4[%c1_48, %c1664_49], %74 {strides = array<i32>} : memref<2x2048xf32, #tpu.memory_space<vmem>>, vector<1x128xf32>,
    %76 = vector.extract_strided_slice %15 {offsets = [14, 128], sizes = [1, 128], strides = [1, 1]} : vector<16x256xf32> to vector<1x128xf32>
    %c1_50 = arith.constant 1 : index
    %c1792_51 = arith.constant 1792 : index
    %77 = vector.load %arg4[%c1_50, %c1792_51] : memref<2x2048xf32, #tpu.memory_space<vmem>>, vector<1x128xf32>
    tpu.vector_store %arg4[%c1_50, %c1792_51], %76 {strides = array<i32>} : memref<2x2048xf32, #tpu.memory_space<vmem>>, vector<1x128xf32>,
    %78 = vector.extract_strided_slice %15 {offsets = [15, 128], sizes = [1, 128], strides = [1, 1]} : vector<16x256xf32> to vector<1x128xf32>
    %c1_52 = arith.constant 1 : index
    %c1920_53 = arith.constant 1920 : index
    %79 = vector.load %arg4[%c1_52, %c1920_53] : memref<2x2048xf32, #tpu.memory_space<vmem>>, vector<1x128xf32>
    tpu.vector_store %arg4[%c1_52, %c1920_53], %78 {strides = array<i32>} : memref<2x2048xf32, #tpu.memory_space<vmem>>, vector<1x128xf32>,
    %c0_54 = arith.constant 0 : index
    %c0_55 = arith.constant 0 : index
    %80 = vector.load %arg4[%c0_54, %c0_55] : memref<2x2048xf32, #tpu.memory_space<vmem>>, vector<2x2048xf32>
    %c0_56 = arith.constant 0 : index
    %c0_57 = arith.constant 0 : index
    %81 = vector.load %arg2[%c0_56, %c0_57] : memref<2048x5xf32, #tpu.memory_space<vmem>>, vector<2048x5xf32>
    %cst_58 = arith.constant dense<0.000000e+00> : vector<2x5xf32>
    %82 = tpu.matmul %80, %81, %cst_58 {dimension_numbers = #tpu.dot_dimension_numbers<[1], [0], [0], [1], [0, 0, 1, 1], [], []>, precision = #tpu.contract_precision<fp32>} : vector<2x2048xf32>, vector<2048x5xf32>, vector<2x5xf32> -> vector<2x5xf32>
    %83 = vector.broadcast %2 : vector<1x5xf32> to vector<2x5xf32>
    %84 = arith.addf %82, %83 : vector<2x5xf32>
    %cst_59 = arith.constant dense<0xFF800000> : vector<2xf32>
    %85 = vector.multi_reduction <maximumf>, %84, %cst_59 [1] : vector<2x5xf32> to vector<2xf32>
    %86 = vector.shape_cast %85 : vector<2xf32> to vector<2x1xf32>
    %87 = vector.broadcast %86 : vector<2x1xf32> to vector<2x5xf32>
    %88 = arith.subf %84, %87 : vector<2x5xf32>
    %89 = math.exp %88 : vector<2x5xf32>
    %cst_60 = arith.constant dense<0.000000e+00> : vector<2xf32>
    %90 = vector.multi_reduction <add>, %89, %cst_60 [1] : vector<2x5xf32> to vector<2xf32>
    %91 = vector.shape_cast %90 : vector<2xf32> to vector<2x1xf32>
    %92 = vector.broadcast %91 : vector<2x1xf32> to vector<2x5xf32>
    %93 = arith.divf %89, %92 : vector<2x5xf32>
    %c0_61 = arith.constant 0 : index
    %c0_62 = arith.constant 0 : index
    %94 = vector.load %arg3[%c0_61, %c0_62] : memref<2x5xf32, #tpu.memory_space<vmem>>, vector<2x5xf32>
    tpu.vector_store %arg3[%c0_61, %c0_62], %93 {strides = array<i32>} : memref<2x5xf32, #tpu.memory_space<vmem>>, vector<2x5xf32>,
    return
  }
}

</mosaic_0001>

<llo_original>
// kernel: net_forward.1
$region0: #{net_forward.1}
  #allocation0 [shape = 'u32[]', space=smem, size = 0x4, offset = 0x4, fixed_abs, tag = 'smem constant byte address 0x4 - core index']
  #allocation1 [shape = 'u32[144,128]{1,0:T(1,128)}', space=vmem, size = 0x12000, scoped, tag = 'internal scratch']
  #allocation2 [shape = 'f32[2,2048]{1,0:T(2,128)}', space=vmem, size = 0x4000, scoped, tag = 'scratch operand']
  %s0 = inlined_call_operand.vmem [shape: f32[9,1024], index: 0, kind: input, shape index: {}]
  %s1 = inlined_call_operand.vmem [shape: f32[24,16], index: 1, kind: input, shape index: {}]
  %s2 = inlined_call_operand.vmem [shape: f32[2048,5], index: 2, kind: input, shape index: {}]
  %s3 = inlined_call_operand.hbm [shape: f32[2,5], index: 3, kind: output, shape index: {}]
  %s4 = sld [smem:[#allocation0]]
  $region22: #{net_forward.1} parent=0
    _
  %s6 = ssub.s32 1, %s4
  %s7 = scalar_select 0, %s6, %s4
  $region1: #{net_forward.1} parent=0
    #allocation3 [shape = 'u8[1024]{0}', space=vmem, size = 0x400, scoped, tag = 'output window, operand 0, single buffered']
    #allocation4 [shape = 's32[1]{0}', space=sflag, size = 0x4, scoped, tag = 'scoped memory for net_forward.1']
    %8 = vsyncpa [#allocation4], 0
    // Predicated region
    $region2: #{net_forward.1} parent=1 // pred_check
      _
    $region3: #{net_forward.1} parent=1 // pred_check_branch
      %10 = sbr.rel (0) target = $region5
    $region4: #{net_forward.1} parent=1 // pred_region
      _
    $region5: #{net_forward.1} parent=1 // pred_fallthru
      _
    // Predicated region
    $region6: #{net_forward.1} parent=1 // pred_check
      _
    $region7: #{net_forward.1} parent=1 // pred_check_branch
      %12 = sbr.rel (0) target = $region9
    $region8: #{net_forward.1} parent=1 // pred_region
      _
    $region9: #{net_forward.1} parent=1 // pred_fallthru
      _
    // Predicated region
    $region10: #{net_forward.1} parent=1 // pred_check
      _
    $region11: #{net_forward.1} parent=1 // pred_check_branch
      %14 = sbr.rel (0) target = $region13
    $region12: #{net_forward.1} parent=1 // pred_region
      _
    $region13: #{net_forward.1} parent=1 // pred_fallthru
      _
    %v15 = vld [vmem:[%s1] sm:$0xff]
    %v16 = vld [vmem:[%s1 + $0x8] sm:$0xff]
    %v17 = vld [vmem:[%s1 + $0x10] sm:$0x1]
    %v18 = vld [vmem:[%s0] sm:$0xff]
    %v19 = vld [vmem:[%s0 + $0x8] sm:$0xff]
    %v20 = vld [vmem:[%s0 + $0x10] sm:$0xff]
    %v21 = vld [vmem:[%s0 + $0x18] sm:$0xff]
    %v22 = vld [vmem:[%s0 + $0x20] sm:$0xff]
    %v23 = vld [vmem:[%s0 + $0x28] sm:$0xff]
    %v24 = vld [vmem:[%s0 + $0x30] sm:$0xff]
    %v25 = vld [vmem:[%s0 + $0x38] sm:$0xff]
    %v26 = vld [vmem:[%s0 + $0x40] sm:$0x1]
    %v27 = vld [vmem:[%s0 + $0x48] sm:$0x1]
    %v28 = vld [vmem:[%s0 + $0x50] sm:$0x1]
    %v29 = vld [vmem:[%s0 + $0x58] sm:$0x1]
    %v30 = vld [vmem:[%s0 + $0x60] sm:$0x1]
    %v31 = vld [vmem:[%s0 + $0x68] sm:$0x1]
    %v32 = vld [vmem:[%s0 + $0x70] sm:$0x1]
    %v33 = vld [vmem:[%s0 + $0x78] sm:$0x1]
    %vm34 = vcmask 72704
    %v36 = vsel %vm34, %v15, 0
    %v39 = vsel %vm34, %v16, 0
    %vm41 = vcmask 1040384
    %v43 = vsel %vm41, %v26, 0
    %v46 = vsel %vm41, %v27, 0
    %v49 = vsel %vm41, %v28, 0
    %v52 = vsel %vm41, %v29, 0
    %v55 = vsel %vm41, %v30, 0
    %v58 = vsel %vm41, %v31, 0
    %v61 = vsel %vm41, %v32, 0
    %v64 = vsel %vm41, %v33, 0
    %v66 = vand.u32 %v19, 4294901760
    %67 = vmatprep.subr.mxu0 %v66
    %v68 = vand.u32 %v18, 4294901760
    %69 = vmatpush1.msra.mxu0 %v68
    %v70 = vand.u32 %v46, 4294901760
    %71 = vmatprep.subr.mxu0 %v70
    %v72 = vand.u32 %v43, 4294901760
    %73 = vmatpush1.msra.mxu0 %v72
    %74 = vmatprep.subr.mxu0 0.0
    %75 = vmatpush1.msra.mxu0 0.0
    %76 = vmatprep.subr.mxu0 0.0
    %77 = vmatpush1.msra.mxu0 0.0
    %78 = vmatprep.subr.mxu0 0.0
    %79 = vmatpush1.msra.mxu0 0.0
    %80 = vmatprep.subr.mxu0 0.0
    %81 = vmatpush1.msra.mxu0 0.0
    %82 = vmatprep.subr.mxu0 0.0
    %83 = vmatpush1.msra.mxu0 0.0
    %84 = vmatprep.subr.mxu0 0.0
    %85 = vmatpush1.msra.mxu0 0.0
    %86 = vmatprep.subr.mxu0 0.0
    %87 = vmatpush1.msra.mxu0 0.0
    %88 = vmatprep.subr.mxu0 0.0
    %89 = vmatpush1.msra.mxu0 0.0
    %90 = vmatprep.subr.mxu0 0.0
    %91 = vmatpush1.msra.mxu0 0.0
    %92 = vmatprep.subr.mxu0 0.0
    %93 = vmatpush1.msra.mxu0 0.0
    %94 = vmatprep.subr.mxu0 0.0
    %95 = vmatpush1.msra.mxu0 0.0
    %96 = vmatprep.subr.mxu0 0.0
    %97 = vmatpush1.msra.mxu0 0.0
    %98 = vmatprep.subr.mxu0 0.0
    %99 = vmatpush1.msra.mxu0 0.0
    %100 = vmatprep.subr.mxu0 0.0
    %101 = vmatpush1.msra.mxu0 0.0
    %102 = vmatprep.subr.mxu0 0.0
    %103 = vmatpush1.msra.mxu0 0.0
    %104 = vmatprep.subr.mxu0 0.0
    %105 = vmatpush1.msra.mxu0 0.0
    %106 = vmatprep.subr.mxu0 0.0
    %107 = vmatpush1.msra.mxu0 0.0
    %108 = vmatprep.subr.mxu0 0.0
    %109 = vmatpush1.msra.mxu0 0.0
    %110 = vmatprep.subr.mxu0 0.0
    %111 = vmatpush1.msra.mxu0 0.0
    %112 = vmatprep.subr.mxu0 0.0
    %113 = vmatpush1.msra.mxu0 0.0
    %114 = vmatprep.subr.mxu0 0.0
    %115 = vmatpush1.msra.mxu0 0.0
    %116 = vmatprep.subr.mxu0 0.0
    %117 = vmatpush1.msra.mxu0 0.0
    %118 = vmatprep.subr.mxu0 0.0
    %119 = vmatpush1.msra.mxu0 0.0
    %120 = vmatprep.subr.mxu0 0.0
    %121 = vmatpush1.msra.mxu0 0.0
    %122 = vmatprep.subr.mxu0 0.0
    %123 = vmatpush1.msra.mxu0 0.0
    %124 = vmatprep.subr.mxu0 0.0
    %125 = vmatpush1.msra.mxu0 0.0
    %126 = vmatprep.subr.mxu0 0.0
    %127 = vmatpush1.msra.mxu0 0.0
    %128 = vmatprep.subr.mxu0 0.0
    %129 = vmatpush1.msra.mxu0 0.0
    %130 = vmatprep.subr.mxu0 0.0
    %131 = vmatpush1.msra.mxu0 0.0
    %132 = vmatprep.subr.mxu0 0.0
    %133 = vmatpush1.msra.mxu0 0.0
    %134 = vmatprep.mubr.f32.mxu0 0.0
    %v135 = vand.u32 %v36, 4294901760
    %v136 = vsub.f32 %v36, %v135
    %v137 = vand.u32 %v136, 4294901760
    %v138 = vsub.f32 %v136, %v137
    %v139 = vand.u32 %v138, 4294901760
    %140 = vmatmul.mubr.f32.gmra.mrb[0].mxu0 %v139
    %v141 = vpop.f32.mrb[0].mxu0
    %v142 = vadd.f32 0.0, %v141
    %v143 = vpop.f32.mrb[0].mxu0
    %v144 = vadd.f32 0.0, %v143
    %145 = vmatprep.mubr.f32.mxu0 0.0
    %v146 = vand.u32 %v39, 4294901760
    %v147 = vsub.f32 %v39, %v146
    %v148 = vand.u32 %v147, 4294901760
    %v149 = vsub.f32 %v147, %v148
    %v150 = vand.u32 %v149, 4294901760
    %151 = vmatmul.mubr.f32.gmra.mrb[0].mxu0 %v150
    %v152 = vpop.f32.mrb[0].mxu0
    %v153 = vadd.f32 0.0, %v152
    %v154 = vpop.f32.mrb[0].mxu0
    %v155 = vadd.f32 0.0, %v154
    %156 = vdwg.mxu0
    %v157 = vand.u32 %v19, 4294901760
    %v158 = vsub.f32 %v19, %v157
    %v159 = vand.u32 %v158, 4294901760
    %v160 = vsub.f32 %v158, %v159
    %v161 = vand.u32 %v160, 4294901760
    %162 = vmatprep.subr.mxu0 %v161
    %v163 = vand.u32 %v18, 4294901760
    %v164 = vsub.f32 %v18, %v163
    %v165 = vand.u32 %v164, 4294901760
    %v166 = vsub.f32 %v164, %v165
    %v167 = vand.u32 %v166, 4294901760
    %168 = vmatpush1.msra.mxu0 %v167
    %v169 = vand.u32 %v46, 4294901760
    %v170 = vsub.f32 %v46, %v169
    %v171 = vand.u32 %v170, 4294901760
    %v172 = vsub.f32 %v170, %v171
    %v173 = vand.u32 %v172, 4294901760
    %174 = vmatprep.subr.mxu0 %v173
    %v175 = vand.u32 %v43, 4294901760
    %v176 = vsub.f32 %v43, %v175
    %v177 = vand.u32 %v176, 4294901760
    %v178 = vsub.f32 %v176, %v177
    %v179 = vand.u32 %v178, 4294901760
    %180 = vmatpush1.msra.mxu0 %v179
    %181 = vmatprep.subr.mxu0 0.0
    %182 = vmatpush1.msra.mxu0 0.0
    %183 = vmatprep.subr.mxu0 0.0
    %184 = vmatpush1.msra.mxu0 0.0
    %185 = vmatprep.subr.mxu0 0.0
    %186 = vmatpush1.msra.mxu0 0.0
    %187 = vmatprep.subr.mxu0 0.0
    %188 = vmatpush1.msra.mxu0 0.0
    %189 = vmatprep.subr.mxu0 0.0
    %190 = vmatpush1.msra.mxu0 0.0
    %191 = vmatprep.subr.mxu0 0.0
    %192 = vmatpush1.msra.mxu0 0.0
    %193 = vmatprep.subr.mxu0 0.0
    %194 = vmatpush1.msra.mxu0 0.0
    %195 = vmatprep.subr.mxu0 0.0
    %196 = vmatpush1.msra.mxu0 0.0
    %197 = vmatprep.subr.mxu0 0.0
    %198 = vmatpush1.msra.mxu0 0.0
    %199 = vmatprep.subr.mxu0 0.0
    %200 = vmatpush1.msra.mxu0 0.0
    %201 = vmatprep.subr.mxu0 0.0
    %202 = vmatpush1.msra.mxu0 0.0
    %203 = vmatprep.subr.mxu0 0.0
    %204 = vmatpush1.msra.mxu0 0.0
    %205 = vmatprep.subr.mxu0 0.0
    %206 = vmatpush1.msra.mxu0 0.0
    %207 = vmatprep.subr.mxu0 0.0
    %208 = vmatpush1.msra.mxu0 0.0
    %209 = vmatprep.subr.mxu0 0.0
    %210 = vmatpush1.msra.mxu0 0.0
    %211 = vmatprep.subr.mxu0 0.0
    %212 = vmatpush1.msra.mxu0 0.0
    %213 = vmatprep.subr.mxu0 0.0
    %214 = vmatpush1.msra.mxu0 0.0
    %215 = vmatprep.subr.mxu0 0.0
    %216 = vmatpush1.msra.mxu0 0.0
    %217 = vmatprep.subr.mxu0 0.0
    %218 = vmatpush1.msra.mxu0 0.0
    %219 = vmatprep.subr.mxu0 0.0
    %220 = vmatpush1.msra.mxu0 0.0
    %221 = vmatprep.subr.mxu0 0.0
    %222 = vmatpush1.msra.mxu0 0.0
    %223 = vmatprep.subr.mxu0 0.0
    %224 = vmatpush1.msra.mxu0 0.0
    %225 = vmatprep.subr.mxu0 0.0
    %226 = vmatpush1.msra.mxu0 0.0
    %227 = vmatprep.subr.mxu0 0.0
    %228 = vmatpush1.msra.mxu0 0.0
    %229 = vmatprep.subr.mxu0 0.0
    %230 = vmatpush1.msra.mxu0 0.0
    %231 = vmatprep.subr.mxu0 0.0
    %232 = vmatpush1.msra.mxu0 0.0
    %233 = vmatprep.subr.mxu0 0.0
    %234 = vmatpush1.msra.mxu0 0.0
    %235 = vmatprep.subr.mxu0 0.0
    %236 = vmatpush1.msra.mxu0 0.0
    %237 = vmatprep.subr.mxu0 0.0
    %238 = vmatpush1.msra.mxu0 0.0
    %239 = vmatprep.subr.mxu0 0.0
    %240 = vmatpush1.msra.mxu0 0.0
    %241 = vmatprep.mubr.f32.mxu0 0.0
    %v242 = vand.u32 %v36, 4294901760
    %243 = vmatmul.mubr.f32.gmra.mrb[0].mxu0 %v242
    %v244 = vpop.f32.mrb[0].mxu0
    %v245 = vadd.f32 %v142, %v244
    %v246 = vpop.f32.mrb[0].mxu0
    %v247 = vadd.f32 %v144, %v246
    %248 = vmatprep.mubr.f32.mxu0 0.0
    %v249 = vand.u32 %v39, 4294901760
    %250 = vmatmul.mubr.f32.gmra.mrb[0].mxu0 %v249
    %v251 = vpop.f32.mrb[0].mxu0
    %v252 = vadd.f32 %v153, %v251
    %v253 = vpop.f32.mrb[0].mxu0
    %v254 = vadd.f32 %v155, %v253
    %255 = vdwg.mxu0
    %v256 = vand.u32 %v19, 4294901760
    %v257 = vsub.f32 %v19, %v256
    %258 = vmatprep.subr.mxu0 %v257
    %v259 = vand.u32 %v18, 4294901760
    %v260 = vsub.f32 %v18, %v259
    %261 = vmatpush1.msra.mxu0 %v260
    %v262 = vand.u32 %v46, 4294901760
    %v263 = vsub.f32 %v46, %v262
    %264 = vmatprep.subr.mxu0 %v263
    %v265 = vand.u32 %v43, 4294901760
    %v266 = vsub.f32 %v43, %v265
    %267 = vmatpush1.msra.mxu0 %v266
    %268 = vmatprep.subr.mxu0 0.0
    %269 = vmatpush1.msra.mxu0 0.0
    %270 = vmatprep.subr.mxu0 0.0
    %271 = vmatpush1.msra.mxu0 0.0
    %272 = vmatprep.subr.mxu0 0.0
    %273 = vmatpush1.msra.mxu0 0.0
    %274 = vmatprep.subr.mxu0 0.0
    %275 = vmatpush1.msra.mxu0 0.0
    %276 = vmatprep.subr.mxu0 0.0
    %277 = vmatpush1.msra.mxu0 0.0
    %278 = vmatprep.subr.mxu0 0.0
    %279 = vmatpush1.msra.mxu0 0.0
    %280 = vmatprep.subr.mxu0 0.0
    %281 = vmatpush1.msra.mxu0 0.0
    %282 = vmatprep.subr.mxu0 0.0
    %283 = vmatpush1.msra.mxu0 0.0
    %284 = vmatprep.subr.mxu0 0.0
    %285 = vmatpush1.msra.mxu0 0.0
    %286 = vmatprep.subr.mxu0 0.0
    %287 = vmatpush1.msra.mxu0 0.0
    %288 = vmatprep.subr.mxu0 0.0
    %289 = vmatpush1.msra.mxu0 0.0
    %290 = vmatprep.subr.mxu0 0.0
    %291 = vmatpush1.msra.mxu0 0.0
    %292 = vmatprep.subr.mxu0 0.0
    %293 = vmatpush1.msra.mxu0 0.0
    %294 = vmatprep.subr.mxu0 0.0
    %295 = vmatpush1.msra.mxu0 0.0
    %296 = vmatprep.subr.mxu0 0.0
    %297 = vmatpush1.msra.mxu0 0.0
    %298 = vmatprep.subr.mxu0 0.0
    %299 = vmatpush1.msra.mxu0 0.0
    %300 = vmatprep.subr.mxu0 0.0
    %301 = vmatpush1.msra.mxu0 0.0
    %302 = vmatprep.subr.mxu0 0.0
    %303 = vmatpush1.msra.mxu0 0.0
    %304 = vmatprep.subr.mxu0 0.0
    %305 = vmatpush1.msra.mxu0 0.0
    %306 = vmatprep.subr.mxu0 0.0
    %307 = vmatpush1.msra.mxu0 0.0
    %308 = vmatprep.subr.mxu0 0.0
    %309 = vmatpush1.msra.mxu0 0.0
    %310 = vmatprep.subr.mxu0 0.0
    %311 = vmatpush1.msra.mxu0 0.0
    %312 = vmatprep.subr.mxu0 0.0
    %313 = vmatpush1.msra.mxu0 0.0
    %314 = vmatprep.subr.mxu0 0.0
    %315 = vmatpush1.msra.mxu0 0.0
    %316 = vmatprep.subr.mxu0 0.0
    %317 = vmatpush1.msra.mxu0 0.0
    %318 = vmatprep.subr.mxu0 0.0
    %319 = vmatpush1.msra.mxu0 0.0
    %320 = vmatprep.subr.mxu0 0.0
    %321 = vmatpush1.msra.mxu0 0.0
    %322 = vmatprep.subr.mxu0 0.0
    %323 = vmatpush1.msra.mxu0 0.0
    %324 = vmatprep.subr.mxu0 0.0
    %325 = vmatpush1.msra.mxu0 0.0
    %326 = vmatprep.subr.mxu0 0.0
    %327 = vmatpush1.msra.mxu0 0.0
    %328 = vmatprep.mubr.f32.mxu0 0.0
    %v329 = vand.u32 %v36, 4294901760
    %v330 = vsub.f32 %v36, %v329
    %331 = vmatmul.mubr.f32.gmra.mrb[0].mxu0 %v330
    %v332 = vpop.f32.mrb[0].mxu0
    %v333 = vadd.f32 %v245, %v332
    %v334 = vpop.f32.mrb[0].mxu0
    %v335 = vadd.f32 %v247, %v334
    %336 = vmatprep.mubr.f32.mxu0 0.0
    %v337 = vand.u32 %v39, 4294901760
    %v338 = vsub.f32 %v39, %v337
    %339 = vmatmul.mubr.f32.gmra.mrb[0].mxu0 %v338
    %v340 = vpop.f32.mrb[0].mxu0
    %v341 = vadd.f32 %v252, %v340
    %v342 = vpop.f32.mrb[0].mxu0
    %v343 = vadd.f32 %v254, %v342
    %344 = vdwg.mxu0
    %v345 = vand.u32 %v19, 4294901760
    %346 = vmatprep.subr.mxu0 %v345
    %v347 = vand.u32 %v18, 4294901760
    %348 = vmatpush1.msra.mxu0 %v347
    %v349 = vand.u32 %v46, 4294901760
    %350 = vmatprep.subr.mxu0 %v349
    %v351 = vand.u32 %v43, 4294901760
    %352 = vmatpush1.msra.mxu0 %v351
    %353 = vmatprep.subr.mxu0 0.0
    %354 = vmatpush1.msra.mxu0 0.0
    %355 = vmatprep.subr.mxu0 0.0
    %356 = vmatpush1.msra.mxu0 0.0
    %357 = vmatprep.subr.mxu0 0.0
    %358 = vmatpush1.msra.mxu0 0.0
    %359 = vmatprep.subr.mxu0 0.0
    %360 = vmatpush1.msra.mxu0 0.0
    %361 = vmatprep.subr.mxu0 0.0
    %362 = vmatpush1.msra.mxu0 0.0
    %363 = vmatprep.subr.mxu0 0.0
    %364 = vmatpush1.msra.mxu0 0.0
    %365 = vmatprep.subr.mxu0 0.0
    %366 = vmatpush1.msra.mxu0 0.0
    %367 = vmatprep.subr.mxu0 0.0
    %368 = vmatpush1.msra.mxu0 0.0
    %369 = vmatprep.subr.mxu0 0.0
    %370 = vmatpush1.msra.mxu0 0.0
    %371 = vmatprep.subr.mxu0 0.0
    %372 = vmatpush1.msra.mxu0 0.0
    %373 = vmatprep.subr.mxu0 0.0
    %374 = vmatpush1.msra.mxu0 0.0
    %375 = vmatprep.subr.mxu0 0.0
    %376 = vmatpush1.msra.mxu0 0.0
    %377 = vmatprep.subr.mxu0 0.0
    %378 = vmatpush1.msra.mxu0 0.0
    %379 = vmatprep.subr.mxu0 0.0
    %380 = vmatpush1.msra.mxu0 0.0
    %381 = vmatprep.subr.mxu0 0.0
    %382 = vmatpush1.msra.mxu0 0.0
    %383 = vmatprep.subr.mxu0 0.0
    %384 = vmatpush1.msra.mxu0 0.0
    %385 = vmatprep.subr.mxu0 0.0
    %386 = vmatpush1.msra.mxu0 0.0
    %387 = vmatprep.subr.mxu0 0.0
    %388 = vmatpush1.msra.mxu0 0.0
    %389 = vmatprep.subr.mxu0 0.0
    %390 = vmatpush1.msra.mxu0 0.0
    %391 = vmatprep.subr.mxu0 0.0
    %392 = vmatpush1.msra.mxu0 0.0
    %393 = vmatprep.subr.mxu0 0.0
    %394 = vmatpush1.msra.mxu0 0.0
    %395 = vmatprep.subr.mxu0 0.0
    %396 = vmatpush1.msra.mxu0 0.0
    %397 = vmatprep.subr.mxu0 0.0
    %398 = vmatpush1.msra.mxu0 0.0
    %399 = vmatprep.subr.mxu0 0.0
    %400 = vmatpush1.msra.mxu0 0.0
    %401 = vmatprep.subr.mxu0 0.0
    %402 = vmatpush1.msra.mxu0 0.0
    %403 = vmatprep.subr.mxu0 0.0
    %404 = vmatpush1.msra.mxu0 0.0
    %405 = vmatprep.subr.mxu0 0.0
    %406 = vmatpush1.msra.mxu0 0.0
    %407 = vmatprep.subr.mxu0 0.0
    %408 = vmatpush1.msra.mxu0 0.0
    %409 = vmatprep.subr.mxu0 0.0
    %410 = vmatpush1.msra.mxu0 0.0
    %411 = vmatprep.subr.mxu0 0.0
    %412 = vmatpush1.msra.mxu0 0.0
    %413 = vmatprep.mubr.f32.mxu0 0.0
    %v414 = vand.u32 %v36, 4294901760
    %v415 = vsub.f32 %v36, %v414
    %v416 = vand.u32 %v415, 4294901760
    %417 = vmatmul.mubr.f32.gmra.mrb[0].mxu0 %v416
    %v418 = vpop.f32.mrb[0].mxu0
    %v419 = vadd.f32 %v333, %v418
    %v420 = vpop.f32.mrb[0].mxu0
    %v421 = vadd.f32 %v335, %v420
    %422 = vmatprep.mubr.f32.mxu0 0.0
    %v423 = vand.u32 %v39, 4294901760
    %v424 = vsub.f32 %v39, %v423
    %v425 = vand.u32 %v424, 4294901760
    %426 = vmatmul.mubr.f32.gmra.mrb[0].mxu0 %v425
    %v427 = vpop.f32.mrb[0].mxu0
    %v428 = vadd.f32 %v341, %v427
    %v429 = vpop.f32.mrb[0].mxu0
    %v430 = vadd.f32 %v343, %v429
    %431 = vdwg.mxu0
    %v432 = vand.u32 %v19, 4294901760
    %v433 = vsub.f32 %v19, %v432
    %v434 = vand.u32 %v433, 4294901760
    %435 = vmatprep.subr.mxu0 %v434
    %v436 = vand.u32 %v18, 4294901760
    %v437 = vsub.f32 %v18, %v436
    %v438 = vand.u32 %v437, 4294901760
    %439 = vmatpush1.msra.mxu0 %v438
    %v440 = vand.u32 %v46, 4294901760
    %v441 = vsub.f32 %v46, %v440
    %v442 = vand.u32 %v441, 4294901760
    %443 = vmatprep.subr.mxu0 %v442
    %v444 = vand.u32 %v43, 4294901760
    %v445 = vsub.f32 %v43, %v444
    %v446 = vand.u32 %v445, 4294901760
    %447 = vmatpush1.msra.mxu0 %v446
    %448 = vmatprep.subr.mxu0 0.0
    %449 = vmatpush1.msra.mxu0 0.0
    %450 = vmatprep.subr.mxu0 0.0
    %451 = vmatpush1.msra.mxu0 0.0
    %452 = vmatprep.subr.mxu0 0.0
    %453 = vmatpush1.msra.mxu0 0.0
    %454 = vmatprep.subr.mxu0 0.0
    %455 = vmatpush1.msra.mxu0 0.0
    %456 = vmatprep.subr.mxu0 0.0
    %457 = vmatpush1.msra.mxu0 0.0
    %458 = vmatprep.subr.mxu0 0.0
    %459 = vmatpush1.msra.mxu0 0.0
    %460 = vmatprep.subr.mxu0 0.0
    %461 = vmatpush1.msra.mxu0 0.0
    %462 = vmatprep.subr.mxu0 0.0
    %463 = vmatpush1.msra.mxu0 0.0
    %464 = vmatprep.subr.mxu0 0.0
    %465 = vmatpush1.msra.mxu0 0.0
    %466 = vmatprep.subr.mxu0 0.0
    %467 = vmatpush1.msra.mxu0 0.0
    %468 = vmatprep.subr.mxu0 0.0
    %469 = vmatpush1.msra.mxu0 0.0
    %470 = vmatprep.subr.mxu0 0.0
    %471 = vmatpush1.msra.mxu0 0.0
    %472 = vmatprep.subr.mxu0 0.0
    %473 = vmatpush1.msra.mxu0 0.0
    %474 = vmatprep.subr.mxu0 0.0
    %475 = vmatpush1.msra.mxu0 0.0
    %476 = vmatprep.subr.mxu0 0.0
    %477 = vmatpush1.msra.mxu0 0.0
    %478 = vmatprep.subr.mxu0 0.0
    %479 = vmatpush1.msra.mxu0 0.0
    %480 = vmatprep.subr.mxu0 0.0
    %481 = vmatpush1.msra.mxu0 0.0
    %482 = vmatprep.subr.mxu0 0.0
    %483 = vmatpush1.msra.mxu0 0.0
    %484 = vmatprep.subr.mxu0 0.0
    %485 = vmatpush1.msra.mxu0 0.0
    %486 = vmatprep.subr.mxu0 0.0
    %487 = vmatpush1.msra.mxu0 0.0
    %488 = vmatprep.subr.mxu0 0.0
    %489 = vmatpush1.msra.mxu0 0.0
    %490 = vmatprep.subr.mxu0 0.0
    %491 = vmatpush1.msra.mxu0 0.0
    %492 = vmatprep.subr.mxu0 0.0
    %493 = vmatpush1.msra.mxu0 0.0
    %494 = vmatprep.subr.mxu0 0.0
    %495 = vmatpush1.msra.mxu0 0.0
    %496 = vmatprep.subr.mxu0 0.0
    %497 = vmatpush1.msra.mxu0 0.0
    %498 = vmatprep.subr.mxu0 0.0
    %499 = vmatpush1.msra.mxu0 0.0
    %500 = vmatprep.subr.mxu0 0.0
    %501 = vmatpush1.msra.mxu0 0.0
    %502 = vmatprep.subr.mxu0 0.0
    %503 = vmatpush1.msra.mxu0 0.0
    %504 = vmatprep.subr.mxu0 0.0
    %505 = vmatpush1.msra.mxu0 0.0
    %506 = vmatprep.subr.mxu0 0.0
    %507 = vmatpush1.msra.mxu0 0.0
    %508 = vmatprep.mubr.f32.mxu0 0.0
    %v509 = vand.u32 %v36, 4294901760
    %510 = vmatmul.mubr.f32.gmra.mrb[0].mxu0 %v509
    %v511 = vpop.f32.mrb[0].mxu0
    %v512 = vadd.f32 %v419, %v511
    %v513 = vpop.f32.mrb[0].mxu0
    %v514 = vadd.f32 %v421, %v513
    %515 = vmatprep.mubr.f32.mxu0 0.0
    %v516 = vand.u32 %v39, 4294901760
    %517 = vmatmul.mubr.f32.gmra.mrb[0].mxu0 %v516
    %v518 = vpop.f32.mrb[0].mxu0
    %v519 = vadd.f32 %v428, %v518
    %v520 = vpop.f32.mrb[0].mxu0
    %v521 = vadd.f32 %v430, %v520
    %522 = vdwg.mxu0
    %v523 = vand.u32 %v19, 4294901760
    %524 = vmatprep.subr.mxu0 %v523
    %v525 = vand.u32 %v18, 4294901760
    %526 = vmatpush1.msra.mxu0 %v525
    %v527 = vand.u32 %v46, 4294901760
    %528 = vmatprep.subr.mxu0 %v527
    %v529 = vand.u32 %v43, 4294901760
    %530 = vmatpush1.msra.mxu0 %v529
    %531 = vmatprep.subr.mxu0 0.0
    %532 = vmatpush1.msra.mxu0 0.0
    %533 = vmatprep.subr.mxu0 0.0
    %534 = vmatpush1.msra.mxu0 0.0
    %535 = vmatprep.subr.mxu0 0.0
    %536 = vmatpush1.msra.mxu0 0.0
    %537 = vmatprep.subr.mxu0 0.0
    %538 = vmatpush1.msra.mxu0 0.0
    %539 = vmatprep.subr.mxu0 0.0
    %540 = vmatpush1.msra.mxu0 0.0
    %541 = vmatprep.subr.mxu0 0.0
    %542 = vmatpush1.msra.mxu0 0.0
    %543 = vmatprep.subr.mxu0 0.0
    %544 = vmatpush1.msra.mxu0 0.0
    %545 = vmatprep.subr.mxu0 0.0
    %546 = vmatpush1.msra.mxu0 0.0
    %547 = vmatprep.subr.mxu0 0.0
    %548 = vmatpush1.msra.mxu0 0.0
    %549 = vmatprep.subr.mxu0 0.0
    %550 = vmatpush1.msra.mxu0 0.0
    %551 = vmatprep.subr.mxu0 0.0
    %552 = vmatpush1.msra.mxu0 0.0
    %553 = vmatprep.subr.mxu0 0.0
    %554 = vmatpush1.msra.mxu0 0.0
    %555 = vmatprep.subr.mxu0 0.0
    %556 = vmatpush1.msra.mxu0 0.0
    %557 = vmatprep.subr.mxu0 0.0
    %558 = vmatpush1.msra.mxu0 0.0
    %559 = vmatprep.subr.mxu0 0.0
    %560 = vmatpush1.msra.mxu0 0.0
    %561 = vmatprep.subr.mxu0 0.0
    %562 = vmatpush1.msra.mxu0 0.0
    %563 = vmatprep.subr.mxu0 0.0
    %564 = vmatpush1.msra.mxu0 0.0
    %565 = vmatprep.subr.mxu0 0.0
    %566 = vmatpush1.msra.mxu0 0.0
    %567 = vmatprep.subr.mxu0 0.0
    %568 = vmatpush1.msra.mxu0 0.0
    %569 = vmatprep.subr.mxu0 0.0
    %570 = vmatpush1.msra.mxu0 0.0
    %571 = vmatprep.subr.mxu0 0.0
    %572 = vmatpush1.msra.mxu0 0.0
    %573 = vmatprep.subr.mxu0 0.0
    %574 = vmatpush1.msra.mxu0 0.0
    %575 = vmatprep.subr.mxu0 0.0
    %576 = vmatpush1.msra.mxu0 0.0
    %577 = vmatprep.subr.mxu0 0.0
    %578 = vmatpush1.msra.mxu0 0.0
    %579 = vmatprep.subr.mxu0 0.0
    %580 = vmatpush1.msra.mxu0 0.0
    %581 = vmatprep.subr.mxu0 0.0
    %582 = vmatpush1.msra.mxu0 0.0
    %583 = vmatprep.subr.mxu0 0.0
    %584 = vmatpush1.msra.mxu0 0.0
    %585 = vmatprep.subr.mxu0 0.0
    %586 = vmatpush1.msra.mxu0 0.0
    %587 = vmatprep.subr.mxu0 0.0
    %588 = vmatpush1.msra.mxu0 0.0
    %589 = vmatprep.subr.mxu0 0.0
    %590 = vmatpush1.msra.mxu0 0.0
    %591 = vmatprep.mubr.f32.mxu0 0.0
    %v592 = vand.u32 %v36, 4294901760
    %593 = vmatmul.mubr.f32.gmra.mrb[0].mxu0 %v592
    %v594 = vpop.f32.mrb[0].mxu0
    %v595 = vadd.f32 %v512, %v594
    %v596 = vpop.f32.mrb[0].mxu0
    %v597 = vadd.f32 %v514, %v596
    %598 = vmatprep.mubr.f32.mxu0 0.0
    %v599 = vand.u32 %v39, 4294901760
    %600 = vmatmul.mubr.f32.gmra.mrb[0].mxu0 %v599
    %v601 = vpop.f32.mrb[0].mxu0
    %v602 = vadd.f32 %v519, %v601
    %v603 = vpop.f32.mrb[0].mxu0
    %v604 = vadd.f32 %v521, %v603
    %605 = vdwg.mxu0
    %v606 = vand.u32 %v21, 4294901760
    %607 = vmatprep.subr.mxu0 %v606
    %v608 = vand.u32 %v20, 4294901760
    %609 = vmatpush1.msra.mxu0 %v608
    %v610 = vand.u32 %v52, 4294901760
    %611 = vmatprep.subr.mxu0 %v610
    %v612 = vand.u32 %v49, 4294901760
    %613 = vmatpush1.msra.mxu0 %v612
    %614 = vmatprep.subr.mxu0 0.0
    %615 = vmatpush1.msra.mxu0 0.0
    %616 = vmatprep.subr.mxu0 0.0
    %617 = vmatpush1.msra.mxu0 0.0
    %618 = vmatprep.subr.mxu0 0.0
    %619 = vmatpush1.msra.mxu0 0.0
    %620 = vmatprep.subr.mxu0 0.0
    %621 = vmatpush1.msra.mxu0 0.0
    %622 = vmatprep.subr.mxu0 0.0
    %623 = vmatpush1.msra.mxu0 0.0
    %624 = vmatprep.subr.mxu0 0.0
    %625 = vmatpush1.msra.mxu0 0.0
    %626 = vmatprep.subr.mxu0 0.0
    %627 = vmatpush1.msra.mxu0 0.0
    %628 = vmatprep.subr.mxu0 0.0
    %629 = vmatpush1.msra.mxu0 0.0
    %630 = vmatprep.subr.mxu0 0.0
    %631 = vmatpush1.msra.mxu0 0.0
    %632 = vmatprep.subr.mxu0 0.0
    %633 = vmatpush1.msra.mxu0 0.0
    %634 = vmatprep.subr.mxu0 0.0
    %635 = vmatpush1.msra.mxu0 0.0
    %636 = vmatprep.subr.mxu0 0.0
    %637 = vmatpush1.msra.mxu0 0.0
    %638 = vmatprep.subr.mxu0 0.0
    %639 = vmatpush1.msra.mxu0 0.0
    %640 = vmatprep.subr.mxu0 0.0
    %641 = vmatpush1.msra.mxu0 0.0
    %642 = vmatprep.subr.mxu0 0.0
    %643 = vmatpush1.msra.mxu0 0.0
    %644 = vmatprep.subr.mxu0 0.0
    %645 = vmatpush1.msra.mxu0 0.0
    %646 = vmatprep.subr.mxu0 0.0
    %647 = vmatpush1.msra.mxu0 0.0
    %648 = vmatprep.subr.mxu0 0.0
    %649 = vmatpush1.msra.mxu0 0.0
    %650 = vmatprep.subr.mxu0 0.0
    %651 = vmatpush1.msra.mxu0 0.0
    %652 = vmatprep.subr.mxu0 0.0
    %653 = vmatpush1.msra.mxu0 0.0
    %654 = vmatprep.subr.mxu0 0.0
    %655 = vmatpush1.msra.mxu0 0.0
    %656 = vmatprep.subr.mxu0 0.0
    %657 = vmatpush1.msra.mxu0 0.0
    %658 = vmatprep.subr.mxu0 0.0
    %659 = vmatpush1.msra.mxu0 0.0
    %660 = vmatprep.subr.mxu0 0.0
    %661 = vmatpush1.msra.mxu0 0.0
    %662 = vmatprep.subr.mxu0 0.0
    %663 = vmatpush1.msra.mxu0 0.0
    %664 = vmatprep.subr.mxu0 0.0
    %665 = vmatpush1.msra.mxu0 0.0
    %666 = vmatprep.subr.mxu0 0.0
    %667 = vmatpush1.msra.mxu0 0.0
    %668 = vmatprep.subr.mxu0 0.0
    %669 = vmatpush1.msra.mxu0 0.0
    %670 = vmatprep.subr.mxu0 0.0
    %671 = vmatpush1.msra.mxu0 0.0
    %672 = vmatprep.subr.mxu0 0.0
    %673 = vmatpush1.msra.mxu0 0.0
    %674 = vmatprep.mubr.f32.mxu0 0.0
    %v675 = vand.u32 %v36, 4294901760
    %v676 = vsub.f32 %v36, %v675
    %v677 = vand.u32 %v676, 4294901760
    %v678 = vsub.f32 %v676, %v677
    %v679 = vand.u32 %v678, 4294901760
    %680 = vmatmul.mubr.f32.gmra.mrb[0].mxu0 %v679
    %v681 = vpop.f32.mrb[0].mxu0
    %v682 = vadd.f32 0.0, %v681
    %v683 = vpop.f32.mrb[0].mxu0
    %v684 = vadd.f32 0.0, %v683
    %685 = vmatprep.mubr.f32.mxu0 0.0
    %v686 = vand.u32 %v39, 4294901760
    %v687 = vsub.f32 %v39, %v686
    %v688 = vand.u32 %v687, 4294901760
    %v689 = vsub.f32 %v687, %v688
    %v690 = vand.u32 %v689, 4294901760
    %691 = vmatmul.mubr.f32.gmra.mrb[0].mxu0 %v690
    %v692 = vpop.f32.mrb[0].mxu0
    %v693 = vadd.f32 0.0, %v692
    %v694 = vpop.f32.mrb[0].mxu0
    %v695 = vadd.f32 0.0, %v694
    %696 = vdwg.mxu0
    %v697 = vand.u32 %v21, 4294901760
    %v698 = vsub.f32 %v21, %v697
    %v699 = vand.u32 %v698, 4294901760
    %v700 = vsub.f32 %v698, %v699
    %v701 = vand.u32 %v700, 4294901760
    %702 = vmatprep.subr.mxu0 %v701
    %v703 = vand.u32 %v20, 4294901760
    %v704 = vsub.f32 %v20, %v703
    %v705 = vand.u32 %v704, 4294901760
    %v706 = vsub.f32 %v704, %v705
    %v707 = vand.u32 %v706, 4294901760
    %708 = vmatpush1.msra.mxu0 %v707
    %v709 = vand.u32 %v52, 4294901760
    %v710 = vsub.f32 %v52, %v709
    %v711 = vand.u32 %v710, 4294901760
    %v712 = vsub.f32 %v710, %v711
    %v713 = vand.u32 %v712, 4294901760
    %714 = vmatprep.subr.mxu0 %v713
    %v715 = vand.u32 %v49, 4294901760
    %v716 = vsub.f32 %v49, %v715
    %v717 = vand.u32 %v716, 4294901760
    %v718 = vsub.f32 %v716, %v717
    %v719 = vand.u32 %v718, 4294901760
    %720 = vmatpush1.msra.mxu0 %v719
    %721 = vmatprep.subr.mxu0 0.0
    %722 = vmatpush1.msra.mxu0 0.0
    %723 = vmatprep.subr.mxu0 0.0
    %724 = vmatpush1.msra.mxu0 0.0
    %725 = vmatprep.subr.mxu0 0.0
    %726 = vmatpush1.msra.mxu0 0.0
    %727 = vmatprep.subr.mxu0 0.0
    %728 = vmatpush1.msra.mxu0 0.0
    %729 = vmatprep.subr.mxu0 0.0
    %730 = vmatpush1.msra.mxu0 0.0
    %731 = vmatprep.subr.mxu0 0.0
    %732 = vmatpush1.msra.mxu0 0.0
    %733 = vmatprep.subr.mxu0 0.0
    %734 = vmatpush1.msra.mxu0 0.0
    %735 = vmatprep.subr.mxu0 0.0
    %736 = vmatpush1.msra.mxu0 0.0
    %737 = vmatprep.subr.mxu0 0.0
    %738 = vmatpush1.msra.mxu0 0.0
    %739 = vmatprep.subr.mxu0 0.0
    %740 = vmatpush1.msra.mxu0 0.0
    %741 = vmatprep.subr.mxu0 0.0
    %742 = vmatpush1.msra.mxu0 0.0
    %743 = vmatprep.subr.mxu0 0.0
    %744 = vmatpush1.msra.mxu0 0.0
    %745 = vmatprep.subr.mxu0 0.0
    %746 = vmatpush1.msra.mxu0 0.0
    %747 = vmatprep.subr.mxu0 0.0
    %748 = vmatpush1.msra.mxu0 0.0
    %749 = vmatprep.subr.mxu0 0.0
    %750 = vmatpush1.msra.mxu0 0.0
    %751 = vmatprep.subr.mxu0 0.0
    %752 = vmatpush1.msra.mxu0 0.0
    %753 = vmatprep.subr.mxu0 0.0
    %754 = vmatpush1.msra.mxu0 0.0
    %755 = vmatprep.subr.mxu0 0.0
    %756 = vmatpush1.msra.mxu0 0.0
    %757 = vmatprep.subr.mxu0 0.0
    %758 = vmatpush1.msra.mxu0 0.0
    %759 = vmatprep.subr.mxu0 0.0
    %760 = vmatpush1.msra.mxu0 0.0
    %761 = vmatprep.subr.mxu0 0.0
    %762 = vmatpush1.msra.mxu0 0.0
    %763 = vmatprep.subr.mxu0 0.0
    %764 = vmatpush1.msra.mxu0 0.0
    %765 = vmatprep.subr.mxu0 0.0
    %766 = vmatpush1.msra.mxu0 0.0
    %767 = vmatprep.subr.mxu0 0.0
    %768 = vmatpush1.msra.mxu0 0.0
    %769 = vmatprep.subr.mxu0 0.0
    %770 = vmatpush1.msra.mxu0 0.0
    %771 = vmatprep.subr.mxu0 0.0
    %772 = vmatpush1.msra.mxu0 0.0
    %773 = vmatprep.subr.mxu0 0.0
    %774 = vmatpush1.msra.mxu0 0.0
    %775 = vmatprep.subr.mxu0 0.0
    %776 = vmatpush1.msra.mxu0 0.0
    %777 = vmatprep.subr.mxu0 0.0
    %778 = vmatpush1.msra.mxu0 0.0
    %779 = vmatprep.subr.mxu0 0.0
    %780 = vmatpush1.msra.mxu0 0.0
    %781 = vmatprep.mubr.f32.mxu0 0.0
    %v782 = vand.u32 %v36, 4294901760
    %783 = vmatmul.mubr.f32.gmra.mrb[0].mxu0 %v782
    %v784 = vpop.f32.mrb[0].mxu0
    %v785 = vadd.f32 %v682, %v784
    %v786 = vpop.f32.mrb[0].mxu0
    %v787 = vadd.f32 %v684, %v786
    %788 = vmatprep.mubr.f32.mxu0 0.0
    %v789 = vand.u32 %v39, 4294901760
    %790 = vmatmul.mubr.f32.gmra.mrb[0].mxu0 %v789
    %v791 = vpop.f32.mrb[0].mxu0
    %v792 = vadd.f32 %v693, %v791
    %v793 = vpop.f32.mrb[0].mxu0
    %v794 = vadd.f32 %v695, %v793
    %795 = vdwg.mxu0
    %v796 = vand.u32 %v21, 4294901760
    %v797 = vsub.f32 %v21, %v796
    %798 = vmatprep.subr.mxu0 %v797
    %v799 = vand.u32 %v20, 4294901760
    %v800 = vsub.f32 %v20, %v799
    %801 = vmatpush1.msra.mxu0 %v800
    %v802 = vand.u32 %v52, 4294901760
    %v803 = vsub.f32 %v52, %v802
    %804 = vmatprep.subr.mxu0 %v803
    %v805 = vand.u32 %v49, 4294901760
    %v806 = vsub.f32 %v49, %v805
    %807 = vmatpush1.msra.mxu0 %v806
    %808 = vmatprep.subr.mxu0 0.0
    %809 = vmatpush1.msra.mxu0 0.0
    %810 = vmatprep.subr.mxu0 0.0
    %811 = vmatpush1.msra.mxu0 0.0
    %812 = vmatprep.subr.mxu0 0.0
    %813 = vmatpush1.msra.mxu0 0.0
    %814 = vmatprep.subr.mxu0 0.0
    %815 = vmatpush1.msra.mxu0 0.0
    %816 = vmatprep.subr.mxu0 0.0
    %817 = vmatpush1.msra.mxu0 0.0
    %818 = vmatprep.subr.mxu0 0.0
    %819 = vmatpush1.msra.mxu0 0.0
    %820 = vmatprep.subr.mxu0 0.0
    %821 = vmatpush1.msra.mxu0 0.0
    %822 = vmatprep.subr.mxu0 0.0
    %823 = vmatpush1.msra.mxu0 0.0
    %824 = vmatprep.subr.mxu0 0.0
    %825 = vmatpush1.msra.mxu0 0.0
    %826 = vmatprep.subr.mxu0 0.0
    %827 = vmatpush1.msra.mxu0 0.0
    %828 = vmatprep.subr.mxu0 0.0
    %829 = vmatpush1.msra.mxu0 0.0
    %830 = vmatprep.subr.mxu0 0.0
    %831 = vmatpush1.msra.mxu0 0.0
    %832 = vmatprep.subr.mxu0 0.0
    %833 = vmatpush1.msra.mxu0 0.0
    %834 = vmatprep.subr.mxu0 0.0
    %835 = vmatpush1.msra.mxu0 0.0
    %836 = vmatprep.subr.mxu0 0.0
    %837 = vmatpush1.msra.mxu0 0.0
    %838 = vmatprep.subr.mxu0 0.0
    %839 = vmatpush1.msra.mxu0 0.0
    %840 = vmatprep.subr.mxu0 0.0
    %841 = vmatpush1.msra.mxu0 0.0
    %842 = vmatprep.subr.mxu0 0.0
    %843 = vmatpush1.msra.mxu0 0.0
    %844 = vmatprep.subr.mxu0 0.0
    %845 = vmatpush1.msra.mxu0 0.0
    %846 = vmatprep.subr.mxu0 0.0
    %847 = vmatpush1.msra.mxu0 0.0
    %848 = vmatprep.subr.mxu0 0.0
    %849 = vmatpush1.msra.mxu0 0.0
    %850 = vmatprep.subr.mxu0 0.0
    %851 = vmatpush1.msra.mxu0 0.0
    %852 = vmatprep.subr.mxu0 0.0
    %853 = vmatpush1.msra.mxu0 0.0
    %854 = vmatprep.subr.mxu0 0.0
    %855 = vmatpush1.msra.mxu0 0.0
    %856 = vmatprep.subr.mxu0 0.0
    %857 = vmatpush1.msra.mxu0 0.0
    %858 = vmatprep.subr.mxu0 0.0
    %859 = vmatpush1.msra.mxu0 0.0
    %860 = vmatprep.subr.mxu0 0.0
    %861 = vmatpush1.msra.mxu0 0.0
    %862 = vmatprep.subr.mxu0 0.0
    %863 = vmatpush1.msra.mxu0 0.0
    %864 = vmatprep.subr.mxu0 0.0
    %865 = vmatpush1.msra.mxu0 0.0
    %866 = vmatprep.subr.mxu0 0.0
    %867 = vmatpush1.msra.mxu0 0.0
    %868 = vmatprep.mubr.f32.mxu0 0.0
    %v869 = vand.u32 %v36, 4294901760
    %v870 = vsub.f32 %v36, %v869
    %871 = vmatmul.mubr.f32.gmra.mrb[0].mxu0 %v870
    %v872 = vpop.f32.mrb[0].mxu0
    %v873 = vadd.f32 %v785, %v872
    %v874 = vpop.f32.mrb[0].mxu0
    %v875 = vadd.f32 %v787, %v874
    %876 = vmatprep.mubr.f32.mxu0 0.0
    %v877 = vand.u32 %v39, 4294901760
    %v878 = vsub.f32 %v39, %v877
    %879 = vmatmul.mubr.f32.gmra.mrb[0].mxu0 %v878
    %v880 = vpop.f32.mrb[0].mxu0
    %v881 = vadd.f32 %v792, %v880
    %v882 = vpop.f32.mrb[0].mxu0
    %v883 = vadd.f32 %v794, %v882
    %884 = vdwg.mxu0
    %v885 = vand.u32 %v21, 4294901760
    %886 = vmatprep.subr.mxu0 %v885
    %v887 = vand.u32 %v20, 4294901760
    %888 = vmatpush1.msra.mxu0 %v887
    %v889 = vand.u32 %v52, 4294901760
    %890 = vmatprep.subr.mxu0 %v889
    %v891 = vand.u32 %v49, 4294901760
    %892 = vmatpush1.msra.mxu0 %v891
    %893 = vmatprep.subr.mxu0 0.0
    %894 = vmatpush1.msra.mxu0 0.0
    %895 = vmatprep.subr.mxu0 0.0
    %896 = vmatpush1.msra.mxu0 0.0
    %897 = vmatprep.subr.mxu0 0.0
    %898 = vmatpush1.msra.mxu0 0.0
    %899 = vmatprep.subr.mxu0 0.0
    %900 = vmatpush1.msra.mxu0 0.0
    %901 = vmatprep.subr.mxu0 0.0
    %902 = vmatpush1.msra.mxu0 0.0
    %903 = vmatprep.subr.mxu0 0.0
    %904 = vmatpush1.msra.mxu0 0.0
    %905 = vmatprep.subr.mxu0 0.0
    %906 = vmatpush1.msra.mxu0 0.0
    %907 = vmatprep.subr.mxu0 0.0
    %908 = vmatpush1.msra.mxu0 0.0
    %909 = vmatprep.subr.mxu0 0.0
    %910 = vmatpush1.msra.mxu0 0.0
    %911 = vmatprep.subr.mxu0 0.0
    %912 = vmatpush1.msra.mxu0 0.0
    %913 = vmatprep.subr.mxu0 0.0
    %914 = vmatpush1.msra.mxu0 0.0
    %915 = vmatprep.subr.mxu0 0.0
    %916 = vmatpush1.msra.mxu0 0.0
    %917 = vmatprep.subr.mxu0 0.0
    %918 = vmatpush1.msra.mxu0 0.0
    %919 = vmatprep.subr.mxu0 0.0
    %920 = vmatpush1.msra.mxu0 0.0
    %921 = vmatprep.subr.mxu0 0.0
    %922 = vmatpush1.msra.mxu0 0.0
    %923 = vmatprep.subr.mxu0 0.0
    %924 = vmatpush1.msra.mxu0 0.0
    %925 = vmatprep.subr.mxu0 0.0
    %926 = vmatpush1.msra.mxu0 0.0
    %927 = vmatprep.subr.mxu0 0.0
    %928 = vmatpush1.msra.mxu0 0.0
    %929 = vmatprep.subr.mxu0 0.0
    %930 = vmatpush1.msra.mxu0 0.0
    %931 = vmatprep.subr.mxu0 0.0
    %932 = vmatpush1.msra.mxu0 0.0
    %933 = vmatprep.subr.mxu0 0.0
    %934 = vmatpush1.msra.mxu0 0.0
    %935 = vmatprep.subr.mxu0 0.0
    %936 = vmatpush1.msra.mxu0 0.0
    %937 = vmatprep.subr.mxu0 0.0
    %938 = vmatpush1.msra.mxu0 0.0
    %939 = vmatprep.subr.mxu0 0.0
    %940 = vmatpush1.msra.mxu0 0.0
    %941 = vmatprep.subr.mxu0 0.0
    %942 = vmatpush1.msra.mxu0 0.0
    %943 = vmatprep.subr.mxu0 0.0
    %944 = vmatpush1.msra.mxu0 0.0
    %945 = vmatprep.subr.mxu0 0.0
    %946 = vmatpush1.msra.mxu0 0.0
    %947 = vmatprep.subr.mxu0 0.0
    %948 = vmatpush1.msra.mxu0 0.0
    %949 = vmatprep.subr.mxu0 0.0
    %950 = vmatpush1.msra.mxu0 0.0
    %951 = vmatprep.subr.mxu0 0.0
    %952 = vmatpush1.msra.mxu0 0.0
    %953 = vmatprep.mubr.f32.mxu0 0.0
    %v954 = vand.u32 %v36, 4294901760
    %v955 = vsub.f32 %v36, %v954
    %v956 = vand.u32 %v955, 4294901760
    %957 = vmatmul.mubr.f32.gmra.mrb[0].mxu0 %v956
    %v958 = vpop.f32.mrb[0].mxu0
    %v959 = vadd.f32 %v873, %v958
    %v960 = vpop.f32.mrb[0].mxu0
    %v961 = vadd.f32 %v875, %v960
    %962 = vmatprep.mubr.f32.mxu0 0.0
    %v963 = vand.u32 %v39, 4294901760
    %v964 = vsub.f32 %v39, %v963
    %v965 = vand.u32 %v964, 4294901760
    %966 = vmatmul.mubr.f32.gmra.mrb[0].mxu0 %v965
    %v967 = vpop.f32.mrb[0].mxu0
    %v968 = vadd.f32 %v881, %v967
    %v969 = vpop.f32.mrb[0].mxu0
    %v970 = vadd.f32 %v883, %v969
    %971 = vdwg.mxu0
    %v972 = vand.u32 %v21, 4294901760
    %v973 = vsub.f32 %v21, %v972
    %v974 = vand.u32 %v973, 4294901760
    %975 = vmatprep.subr.mxu0 %v974
    %v976 = vand.u32 %v20, 4294901760
    %v977 = vsub.f32 %v20, %v976
    %v978 = vand.u32 %v977, 4294901760
    %979 = vmatpush1.msra.mxu0 %v978
    %v980 = vand.u32 %v52, 4294901760
    %v981 = vsub.f32 %v52, %v980
    %v982 = vand.u32 %v981, 4294901760
    %983 = vmatprep.subr.mxu0 %v982
    %v984 = vand.u32 %v49, 4294901760
    %v985 = vsub.f32 %v49, %v984
    %v986 = vand.u32 %v985, 4294901760
    %987 = vmatpush1.msra.mxu0 %v986
    %988 = vmatprep.subr.mxu0 0.0
    %989 = vmatpush1.msra.mxu0 0.0
    %990 = vmatprep.subr.mxu0 0.0
    %991 = vmatpush1.msra.mxu0 0.0
    %992 = vmatprep.subr.mxu0 0.0
    %993 = vmatpush1.msra.mxu0 0.0
    %994 = vmatprep.subr.mxu0 0.0
    %995 = vmatpush1.msra.mxu0 0.0
    %996 = vmatprep.subr.mxu0 0.0
    %997 = vmatpush1.msra.mxu0 0.0
    %998 = vmatprep.subr.mxu0 0.0
    %999 = vmatpush1.msra.mxu0 0.0
    %1000 = vmatprep.subr.mxu0 0.0
    %1001 = vmatpush1.msra.mxu0 0.0
    %1002 = vmatprep.subr.mxu0 0.0
    %1003 = vmatpush1.msra.mxu0 0.0
    %1004 = vmatprep.subr.mxu0 0.0
    %1005 = vmatpush1.msra.mxu0 0.0
    %1006 = vmatprep.subr.mxu0 0.0
    %1007 = vmatpush1.msra.mxu0 0.0
    %1008 = vmatprep.subr.mxu0 0.0
    %1009 = vmatpush1.msra.mxu0 0.0
    %1010 = vmatprep.subr.mxu0 0.0
    %1011 = vmatpush1.msra.mxu0 0.0
    %1012 = vmatprep.subr.mxu0 0.0
    %1013 = vmatpush1.msra.mxu0 0.0
    %1014 = vmatprep.subr.mxu0 0.0
    %1015 = vmatpush1.msra.mxu0 0.0
    %1016 = vmatprep.subr.mxu0 0.0
    %1017 = vmatpush1.msra.mxu0 0.0
    %1018 = vmatprep.subr.mxu0 0.0
    %1019 = vmatpush1.msra.mxu0 0.0
    %1020 = vmatprep.subr.mxu0 0.0
    %1021 = vmatpush1.msra.mxu0 0.0
    %1022 = vmatprep.subr.mxu0 0.0
    %1023 = vmatpush1.msra.mxu0 0.0
    %1024 = vmatprep.subr.mxu0 0.0
    %1025 = vmatpush1.msra.mxu0 0.0
    %1026 = vmatprep.subr.mxu0 0.0
    %1027 = vmatpush1.msra.mxu0 0.0
    %1028 = vmatprep.subr.mxu0 0.0
    %1029 = vmatpush1.msra.mxu0 0.0
    %1030 = vmatprep.subr.mxu0 0.0
    %1031 = vmatpush1.msra.mxu0 0.0
    %1032 = vmatprep.subr.mxu0 0.0
    %1033 = vmatpush1.msra.mxu0 0.0
    %1034 = vmatprep.subr.mxu0 0.0
    %1035 = vmatpush1.msra.mxu0 0.0
    %1036 = vmatprep.subr.mxu0 0.0
    %1037 = vmatpush1.msra.mxu0 0.0
    %1038 = vmatprep.subr.mxu0 0.0
    %1039 = vmatpush1.msra.mxu0 0.0
    %1040 = vmatprep.subr.mxu0 0.0
    %1041 = vmatpush1.msra.mxu0 0.0
    %1042 = vmatprep.subr.mxu0 0.0
    %1043 = vmatpush1.msra.mxu0 0.0
    %1044 = vmatprep.subr.mxu0 0.0
    %1045 = vmatpush1.msra.mxu0 0.0
    %1046 = vmatprep.subr.mxu0 0.0
    %1047 = vmatpush1.msra.mxu0 0.0
    %1048 = vmatprep.mubr.f32.mxu0 0.0
    %v1049 = vand.u32 %v36, 4294901760
    %1050 = vmatmul.mubr.f32.gmra.mrb[0].mxu0 %v1049
    %v1051 = vpop.f32.mrb[0].mxu0
    %v1052 = vadd.f32 %v959, %v1051
    %v1053 = vpop.f32.mrb[0].mxu0
    %v1054 = vadd.f32 %v961, %v1053
    %1055 = vmatprep.mubr.f32.mxu0 0.0
    %v1056 = vand.u32 %v39, 4294901760
    %1057 = vmatmul.mubr.f32.gmra.mrb[0].mxu0 %v1056
    %v1058 = vpop.f32.mrb[0].mxu0
    %v1059 = vadd.f32 %v968, %v1058
    %v1060 = vpop.f32.mrb[0].mxu0
    %v1061 = vadd.f32 %v970, %v1060
    %1062 = vdwg.mxu0
    %v1063 = vand.u32 %v21, 4294901760
    %1064 = vmatprep.subr.mxu0 %v1063
    %v1065 = vand.u32 %v20, 4294901760
    %1066 = vmatpush1.msra.mxu0 %v1065
    %v1067 = vand.u32 %v52, 4294901760
    %1068 = vmatprep.subr.mxu0 %v1067
    %v1069 = vand.u32 %v49, 4294901760
    %1070 = vmatpush1.msra.mxu0 %v1069
    %1071 = vmatprep.subr.mxu0 0.0
    %1072 = vmatpush1.msra.mxu0 0.0
    %1073 = vmatprep.subr.mxu0 0.0
    %1074 = vmatpush1.msra.mxu0 0.0
    %1075 = vmatprep.subr.mxu0 0.0
    %1076 = vmatpush1.msra.mxu0 0.0
    %1077 = vmatprep.subr.mxu0 0.0
    %1078 = vmatpush1.msra.mxu0 0.0
    %1079 = vmatprep.subr.mxu0 0.0
    %1080 = vmatpush1.msra.mxu0 0.0
    %1081 = vmatprep.subr.mxu0 0.0
    %1082 = vmatpush1.msra.mxu0 0.0
    %1083 = vmatprep.subr.mxu0 0.0
    %1084 = vmatpush1.msra.mxu0 0.0
    %1085 = vmatprep.subr.mxu0 0.0
    %1086 = vmatpush1.msra.mxu0 0.0
    %1087 = vmatprep.subr.mxu0 0.0
    %1088 = vmatpush1.msra.mxu0 0.0
    %1089 = vmatprep.subr.mxu0 0.0
    %1090 = vmatpush1.msra.mxu0 0.0
    %1091 = vmatprep.subr.mxu0 0.0
    %1092 = vmatpush1.msra.mxu0 0.0
    %1093 = vmatprep.subr.mxu0 0.0
    %1094 = vmatpush1.msra.mxu0 0.0
    %1095 = vmatprep.subr.mxu0 0.0
    %1096 = vmatpush1.msra.mxu0 0.0
    %1097 = vmatprep.subr.mxu0 0.0
    %1098 = vmatpush1.msra.mxu0 0.0
    %1099 = vmatprep.subr.mxu0 0.0
    %1100 = vmatpush1.msra.mxu0 0.0
    %1101 = vmatprep.subr.mxu0 0.0
    %1102 = vmatpush1.msra.mxu0 0.0
    %1103 = vmatprep.subr.mxu0 0.0
    %1104 = vmatpush1.msra.mxu0 0.0
    %1105 = vmatprep.subr.mxu0 0.0
    %1106 = vmatpush1.msra.mxu0 0.0
    %1107 = vmatprep.subr.mxu0 0.0
    %1108 = vmatpush1.msra.mxu0 0.0
    %1109 = vmatprep.subr.mxu0 0.0
    %1110 = vmatpush1.msra.mxu0 0.0
    %1111 = vmatprep.subr.mxu0 0.0
    %1112 = vmatpush1.msra.mxu0 0.0
    %1113 = vmatprep.subr.mxu0 0.0
    %1114 = vmatpush1.msra.mxu0 0.0
    %1115 = vmatprep.subr.mxu0 0.0
    %1116 = vmatpush1.msra.mxu0 0.0
    %1117 = vmatprep.subr.mxu0 0.0
    %1118 = vmatpush1.msra.mxu0 0.0
    %1119 = vmatprep.subr.mxu0 0.0
    %1120 = vmatpush1.msra.mxu0 0.0
    %1121 = vmatprep.subr.mxu0 0.0
    %1122 = vmatpush1.msra.mxu0 0.0
    %1123 = vmatprep.subr.mxu0 0.0
    %1124 = vmatpush1.msra.mxu0 0.0
    %1125 = vmatprep.subr.mxu0 0.0
    %1126 = vmatpush1.msra.mxu0 0.0
    %1127 = vmatprep.subr.mxu0 0.0
    %1128 = vmatpush1.msra.mxu0 0.0
    %1129 = vmatprep.subr.mxu0 0.0
    %1130 = vmatpush1.msra.mxu0 0.0
    %1131 = vmatprep.mubr.f32.mxu0 0.0
    %v1132 = vand.u32 %v36, 4294901760
    %1133 = vmatmul.mubr.f32.gmra.mrb[0].mxu0 %v1132
    %v1134 = vpop.f32.mrb[0].mxu0
    %v1135 = vadd.f32 %v1052, %v1134
    %v1136 = vpop.f32.mrb[0].mxu0
    %v1137 = vadd.f32 %v1054, %v1136
    %1138 = vmatprep.mubr.f32.mxu0 0.0
    %v1139 = vand.u32 %v39, 4294901760
    %1140 = vmatmul.mubr.f32.gmra.mrb[0].mxu0 %v1139
    %v1141 = vpop.f32.mrb[0].mxu0
    %v1142 = vadd.f32 %v1059, %v1141
    %v1143 = vpop.f32.mrb[0].mxu0
    %v1144 = vadd.f32 %v1061, %v1143
    %1145 = vdwg.mxu0
    %v1146 = vand.u32 %v23, 4294901760
    %1147 = vmatprep.subr.mxu0 %v1146
    %v1148 = vand.u32 %v22, 4294901760
    %1149 = vmatpush1.msra.mxu0 %v1148
    %v1150 = vand.u32 %v58, 4294901760
    %1151 = vmatprep.subr.mxu0 %v1150
    %v1152 = vand.u32 %v55, 4294901760
    %1153 = vmatpush1.msra.mxu0 %v1152
    %1154 = vmatprep.subr.mxu0 0.0
    %1155 = vmatpush1.msra.mxu0 0.0
    %1156 = vmatprep.subr.mxu0 0.0
    %1157 = vmatpush1.msra.mxu0 0.0
    %1158 = vmatprep.subr.mxu0 0.0
    %1159 = vmatpush1.msra.mxu0 0.0
    %1160 = vmatprep.subr.mxu0 0.0
    %1161 = vmatpush1.msra.mxu0 0.0
    %1162 = vmatprep.subr.mxu0 0.0
    %1163 = vmatpush1.msra.mxu0 0.0
    %1164 = vmatprep.subr.mxu0 0.0
    %1165 = vmatpush1.msra.mxu0 0.0
    %1166 = vmatprep.subr.mxu0 0.0
    %1167 = vmatpush1.msra.mxu0 0.0
    %1168 = vmatprep.subr.mxu0 0.0
    %1169 = vmatpush1.msra.mxu0 0.0
    %1170 = vmatprep.subr.mxu0 0.0
    %1171 = vmatpush1.msra.mxu0 0.0
    %1172 = vmatprep.subr.mxu0 0.0
    %1173 = vmatpush1.msra.mxu0 0.0
    %1174 = vmatprep.subr.mxu0 0.0
    %1175 = vmatpush1.msra.mxu0 0.0
    %1176 = vmatprep.subr.mxu0 0.0
    %1177 = vmatpush1.msra.mxu0 0.0
    %1178 = vmatprep.subr.mxu0 0.0
    %1179 = vmatpush1.msra.mxu0 0.0
    %1180 = vmatprep.subr.mxu0 0.0
    %1181 = vmatpush1.msra.mxu0 0.0
    %1182 = vmatprep.subr.mxu0 0.0
    %1183 = vmatpush1.msra.mxu0 0.0
    %1184 = vmatprep.subr.mxu0 0.0
    %1185 = vmatpush1.msra.mxu0 0.0
    %1186 = vmatprep.subr.mxu0 0.0
    %1187 = vmatpush1.msra.mxu0 0.0
    %1188 = vmatprep.subr.mxu0 0.0
    %1189 = vmatpush1.msra.mxu0 0.0
    %1190 = vmatprep.subr.mxu0 0.0
    %1191 = vmatpush1.msra.mxu0 0.0
    %1192 = vmatprep.subr.mxu0 0.0
    %1193 = vmatpush1.msra.mxu0 0.0
    %1194 = vmatprep.subr.mxu0 0.0
    %1195 = vmatpush1.msra.mxu0 0.0
    %1196 = vmatprep.subr.mxu0 0.0
    %1197 = vmatpush1.msra.mxu0 0.0
    %1198 = vmatprep.subr.mxu0 0.0
    %1199 = vmatpush1.msra.mxu0 0.0
    %1200 = vmatprep.subr.mxu0 0.0
    %1201 = vmatpush1.msra.mxu0 0.0
    %1202 = vmatprep.subr.mxu0 0.0
    %1203 = vmatpush1.msra.mxu0 0.0
    %1204 = vmatprep.subr.mxu0 0.0
    %1205 = vmatpush1.msra.mxu0 0.0
    %1206 = vmatprep.subr.mxu0 0.0
    %1207 = vmatpush1.msra.mxu0 0.0
    %1208 = vmatprep.subr.mxu0 0.0
    %1209 = vmatpush1.msra.mxu0 0.0
    %1210 = vmatprep.subr.mxu0 0.0
    %1211 = vmatpush1.msra.mxu0 0.0
    %1212 = vmatprep.subr.mxu0 0.0
    %1213 = vmatpush1.msra.mxu0 0.0
    %1214 = vmatprep.mubr.f32.mxu0 0.0
    %v1215 = vand.u32 %v36, 4294901760
    %v1216 = vsub.f32 %v36, %v1215
    %v1217 = vand.u32 %v1216, 4294901760
    %v1218 = vsub.f32 %v1216, %v1217
    %v1219 = vand.u32 %v1218, 4294901760
    %1220 = vmatmul.mubr.f32.gmra.mrb[0].mxu0 %v1219
    %v1221 = vpop.f32.mrb[0].mxu0
    %v1222 = vadd.f32 0.0, %v1221
    %v1223 = vpop.f32.mrb[0].mxu0
    %v1224 = vadd.f32 0.0, %v1223
    %1225 = vmatprep.mubr.f32.mxu0 0.0
    %v1226 = vand.u32 %v39, 4294901760
    %v1227 = vsub.f32 %v39, %v1226
    %v1228 = vand.u32 %v1227, 4294901760
    %v1229 = vsub.f32 %v1227, %v1228
    %v1230 = vand.u32 %v1229, 4294901760
    %1231 = vmatmul.mubr.f32.gmra.mrb[0].mxu0 %v1230
    %v1232 = vpop.f32.mrb[0].mxu0
    %v1233 = vadd.f32 0.0, %v1232
    %v1234 = vpop.f32.mrb[0].mxu0
    %v1235 = vadd.f32 0.0, %v1234
    %1236 = vdwg.mxu0
    %v1237 = vand.u32 %v23, 4294901760
    %v1238 = vsub.f32 %v23, %v1237
    %v1239 = vand.u32 %v1238, 4294901760
    %v1240 = vsub.f32 %v1238, %v1239
    %v1241 = vand.u32 %v1240, 4294901760
    %1242 = vmatprep.subr.mxu0 %v1241
    %v1243 = vand.u32 %v22, 4294901760
    %v1244 = vsub.f32 %v22, %v1243
    %v1245 = vand.u32 %v1244, 4294901760
    %v1246 = vsub.f32 %v1244, %v1245
    %v1247 = vand.u32 %v1246, 4294901760
    %1248 = vmatpush1.msra.mxu0 %v1247
    %v1249 = vand.u32 %v58, 4294901760
    %v1250 = vsub.f32 %v58, %v1249
    %v1251 = vand.u32 %v1250, 4294901760
    %v1252 = vsub.f32 %v1250, %v1251
    %v1253 = vand.u32 %v1252, 4294901760
    %1254 = vmatprep.subr.mxu0 %v1253
    %v1255 = vand.u32 %v55, 4294901760
    %v1256 = vsub.f32 %v55, %v1255
    %v1257 = vand.u32 %v1256, 4294901760
    %v1258 = vsub.f32 %v1256, %v1257
    %v1259 = vand.u32 %v1258, 4294901760
    %1260 = vmatpush1.msra.mxu0 %v1259
    %1261 = vmatprep.subr.mxu0 0.0
    %1262 = vmatpush1.msra.mxu0 0.0
    %1263 = vmatprep.subr.mxu0 0.0
    %1264 = vmatpush1.msra.mxu0 0.0
    %1265 = vmatprep.subr.mxu0 0.0
    %1266 = vmatpush1.msra.mxu0 0.0
    %1267 = vmatprep.subr.mxu0 0.0
    %1268 = vmatpush1.msra.mxu0 0.0
    %1269 = vmatprep.subr.mxu0 0.0
    %1270 = vmatpush1.msra.mxu0 0.0
    %1271 = vmatprep.subr.mxu0 0.0
    %1272 = vmatpush1.msra.mxu0 0.0
    %1273 = vmatprep.subr.mxu0 0.0
    %1274 = vmatpush1.msra.mxu0 0.0
    %1275 = vmatprep.subr.mxu0 0.0
    %1276 = vmatpush1.msra.mxu0 0.0
    %1277 = vmatprep.subr.mxu0 0.0
    %1278 = vmatpush1.msra.mxu0 0.0
    %1279 = vmatprep.subr.mxu0 0.0
    %1280 = vmatpush1.msra.mxu0 0.0
    %1281 = vmatprep.subr.mxu0 0.0
    %1282 = vmatpush1.msra.mxu0 0.0
    %1283 = vmatprep.subr.mxu0 0.0
    %1284 = vmatpush1.msra.mxu0 0.0
    %1285 = vmatprep.subr.mxu0 0.0
    %1286 = vmatpush1.msra.mxu0 0.0
    %1287 = vmatprep.subr.mxu0 0.0
    %1288 = vmatpush1.msra.mxu0 0.0
    %1289 = vmatprep.subr.mxu0 0.0
    %1290 = vmatpush1.msra.mxu0 0.0
    %1291 = vmatprep.subr.mxu0 0.0
    %1292 = vmatpush1.msra.mxu0 0.0
    %1293 = vmatprep.subr.mxu0 0.0
    %1294 = vmatpush1.msra.mxu0 0.0
    %1295 = vmatprep.subr.mxu0 0.0
    %1296 = vmatpush1.msra.mxu0 0.0
    %1297 = vmatprep.subr.mxu0 0.0
    %1298 = vmatpush1.msra.mxu0 0.0
    %1299 = vmatprep.subr.mxu0 0.0
    %1300 = vmatpush1.msra.mxu0 0.0
    %1301 = vmatprep.subr.mxu0 0.0
    %1302 = vmatpush1.msra.mxu0 0.0
    %1303 = vmatprep.subr.mxu0 0.0
    %1304 = vmatpush1.msra.mxu0 0.0
    %1305 = vmatprep.subr.mxu0 0.0
    %1306 = vmatpush1.msra.mxu0 0.0
    %1307 = vmatprep.subr.mxu0 0.0
    %1308 = vmatpush1.msra.mxu0 0.0
    %1309 = vmatprep.subr.mxu0 0.0
    %1310 = vmatpush1.msra.mxu0 0.0
    %1311 = vmatprep.subr.mxu0 0.0
    %1312 = vmatpush1.msra.mxu0 0.0
    %1313 = vmatprep.subr.mxu0 0.0
    %1314 = vmatpush1.msra.mxu0 0.0
    %1315 = vmatprep.subr.mxu0 0.0
    %1316 = vmatpush1.msra.mxu0 0.0
    %1317 = vmatprep.subr.mxu0 0.0
    %1318 = vmatpush1.msra.mxu0 0.0
    %1319 = vmatprep.subr.mxu0 0.0
    %1320 = vmatpush1.msra.mxu0 0.0
    %1321 = vmatprep.mubr.f32.mxu0 0.0
    %v1322 = vand.u32 %v36, 4294901760
    %1323 = vmatmul.mubr.f32.gmra.mrb[0].mxu0 %v1322
    %v1324 = vpop.f32.mrb[0].mxu0
    %v1325 = vadd.f32 %v1222, %v1324
    %v1326 = vpop.f32.mrb[0].mxu0
    %v1327 = vadd.f32 %v1224, %v1326
    %1328 = vmatprep.mubr.f32.mxu0 0.0
    %v1329 = vand.u32 %v39, 4294901760
    %1330 = vmatmul.mubr.f32.gmra.mrb[0].mxu0 %v1329
    %v1331 = vpop.f32.mrb[0].mxu0
    %v1332 = vadd.f32 %v1233, %v1331
    %v1333 = vpop.f32.mrb[0].mxu0
    %v1334 = vadd.f32 %v1235, %v1333
    %1335 = vdwg.mxu0
    %v1336 = vand.u32 %v23, 4294901760
    %v1337 = vsub.f32 %v23, %v1336
    %1338 = vmatprep.subr.mxu0 %v1337
    %v1339 = vand.u32 %v22, 4294901760
    %v1340 = vsub.f32 %v22, %v1339
    %1341 = vmatpush1.msra.mxu0 %v1340
    %v1342 = vand.u32 %v58, 4294901760
    %v1343 = vsub.f32 %v58, %v1342
    %1344 = vmatprep.subr.mxu0 %v1343
    %v1345 = vand.u32 %v55, 4294901760
    %v1346 = vsub.f32 %v55, %v1345
    %1347 = vmatpush1.msra.mxu0 %v1346
    %1348 = vmatprep.subr.mxu0 0.0
    %1349 = vmatpush1.msra.mxu0 0.0
    %1350 = vmatprep.subr.mxu0 0.0
    %1351 = vmatpush1.msra.mxu0 0.0
    %1352 = vmatprep.subr.mxu0 0.0
    %1353 = vmatpush1.msra.mxu0 0.0
    %1354 = vmatprep.subr.mxu0 0.0
    %1355 = vmatpush1.msra.mxu0 0.0
    %1356 = vmatprep.subr.mxu0 0.0
    %1357 = vmatpush1.msra.mxu0 0.0
    %1358 = vmatprep.subr.mxu0 0.0
    %1359 = vmatpush1.msra.mxu0 0.0
    %1360 = vmatprep.subr.mxu0 0.0
    %1361 = vmatpush1.msra.mxu0 0.0
    %1362 = vmatprep.subr.mxu0 0.0
    %1363 = vmatpush1.msra.mxu0 0.0
    %1364 = vmatprep.subr.mxu0 0.0
    %1365 = vmatpush1.msra.mxu0 0.0
    %1366 = vmatprep.subr.mxu0 0.0
    %1367 = vmatpush1.msra.mxu0 0.0
    %1368 = vmatprep.subr.mxu0 0.0
    %1369 = vmatpush1.msra.mxu0 0.0
    %1370 = vmatprep.subr.mxu0 0.0
    %1371 = vmatpush1.msra.mxu0 0.0
    %1372 = vmatprep.subr.mxu0 0.0
    %1373 = vmatpush1.msra.mxu0 0.0
    %1374 = vmatprep.subr.mxu0 0.0
    %1375 = vmatpush1.msra.mxu0 0.0
    %1376 = vmatprep.subr.mxu0 0.0
    %1377 = vmatpush1.msra.mxu0 0.0
    %1378 = vmatprep.subr.mxu0 0.0
    %1379 = vmatpush1.msra.mxu0 0.0
    %1380 = vmatprep.subr.mxu0 0.0
    %1381 = vmatpush1.msra.mxu0 0.0
    %1382 = vmatprep.subr.mxu0 0.0
    %1383 = vmatpush1.msra.mxu0 0.0
    %1384 = vmatprep.subr.mxu0 0.0
    %1385 = vmatpush1.msra.mxu0 0.0
    %1386 = vmatprep.subr.mxu0 0.0
    %1387 = vmatpush1.msra.mxu0 0.0
    %1388 = vmatprep.subr.mxu0 0.0
    %1389 = vmatpush1.msra.mxu0 0.0
    %1390 = vmatprep.subr.mxu0 0.0
    %1391 = vmatpush1.msra.mxu0 0.0
    %1392 = vmatprep.subr.mxu0 0.0
    %1393 = vmatpush1.msra.mxu0 0.0
    %1394 = vmatprep.subr.mxu0 0.0
    %1395 = vmatpush1.msra.mxu0 0.0
    %1396 = vmatprep.subr.mxu0 0.0
    %1397 = vmatpush1.msra.mxu0 0.0
    %1398 = vmatprep.subr.mxu0 0.0
    %1399 = vmatpush1.msra.mxu0 0.0
    %1400 = vmatprep.subr.mxu0 0.0
    %1401 = vmatpush1.msra.mxu0 0.0
    %1402 = vmatprep.subr.mxu0 0.0
    %1403 = vmatpush1.msra.mxu0 0.0
    %1404 = vmatprep.subr.mxu0 0.0
    %1405 = vmatpush1.msra.mxu0 0.0
    %1406 = vmatprep.subr.mxu0 0.0
    %1407 = vmatpush1.msra.mxu0 0.0
    %1408 = vmatprep.mubr.f32.mxu0 0.0
    %v1409 = vand.u32 %v36, 4294901760
    %v1410 = vsub.f32 %v36, %v1409
    %1411 = vmatmul.mubr.f32.gmra.mrb[0].mxu0 %v1410
    %v1412 = vpop.f32.mrb[0].mxu0
    %v1413 = vadd.f32 %v1325, %v1412
    %v1414 = vpop.f32.mrb[0].mxu0
    %v1415 = vadd.f32 %v1327, %v1414
    %1416 = vmatprep.mubr.f32.mxu0 0.0
    %v1417 = vand.u32 %v39, 4294901760
    %v1418 = vsub.f32 %v39, %v1417
    %1419 = vmatmul.mubr.f32.gmra.mrb[0].mxu0 %v1418
    %v1420 = vpop.f32.mrb[0].mxu0
    %v1421 = vadd.f32 %v1332, %v1420
    %v1422 = vpop.f32.mrb[0].mxu0
    %v1423 = vadd.f32 %v1334, %v1422
    %1424 = vdwg.mxu0
    %v1425 = vand.u32 %v23, 4294901760
    %1426 = vmatprep.subr.mxu0 %v1425
    %v1427 = vand.u32 %v22, 4294901760
    %1428 = vmatpush1.msra.mxu0 %v1427
    %v1429 = vand.u32 %v58, 4294901760
    %1430 = vmatprep.subr.mxu0 %v1429
    %v1431 = vand.u32 %v55, 4294901760
    %1432 = vmatpush1.msra.mxu0 %v1431
    %1433 = vmatprep.subr.mxu0 0.0
    %1434 = vmatpush1.msra.mxu0 0.0
    %1435 = vmatprep.subr.mxu0 0.0
    %1436 = vmatpush1.msra.mxu0 0.0
    %1437 = vmatprep.subr.mxu0 0.0
    %1438 = vmatpush1.msra.mxu0 0.0
    %1439 = vmatprep.subr.mxu0 0.0
    %1440 = vmatpush1.msra.mxu0 0.0
    %1441 = vmatprep.subr.mxu0 0.0
    %1442 = vmatpush1.msra.mxu0 0.0
    %1443 = vmatprep.subr.mxu0 0.0
    %1444 = vmatpush1.msra.mxu0 0.0
    %1445 = vmatprep.subr.mxu0 0.0
    %1446 = vmatpush1.msra.mxu0 0.0
    %1447 = vmatprep.subr.mxu0 0.0
    %1448 = vmatpush1.msra.mxu0 0.0
    %1449 = vmatprep.subr.mxu0 0.0
    %1450 = vmatpush1.msra.mxu0 0.0
    %1451 = vmatprep.subr.mxu0 0.0
    %1452 = vmatpush1.msra.mxu0 0.0
    %1453 = vmatprep.subr.mxu0 0.0
    %1454 = vmatpush1.msra.mxu0 0.0
    %1455 = vmatprep.subr.mxu0 0.0
    %1456 = vmatpush1.msra.mxu0 0.0
    %1457 = vmatprep.subr.mxu0 0.0
    %1458 = vmatpush1.msra.mxu0 0.0
    %1459 = vmatprep.subr.mxu0 0.0
    %1460 = vmatpush1.msra.mxu0 0.0
    %1461 = vmatprep.subr.mxu0 0.0
    %1462 = vmatpush1.msra.mxu0 0.0
    %1463 = vmatprep.subr.mxu0 0.0
    %1464 = vmatpush1.msra.mxu0 0.0
    %1465 = vmatprep.subr.mxu0 0.0
    %1466 = vmatpush1.msra.mxu0 0.0
    %1467 = vmatprep.subr.mxu0 0.0
    %1468 = vmatpush1.msra.mxu0 0.0
    %1469 = vmatprep.subr.mxu0 0.0
    %1470 = vmatpush1.msra.mxu0 0.0
    %1471 = vmatprep.subr.mxu0 0.0
    %1472 = vmatpush1.msra.mxu0 0.0
    %1473 = vmatprep.subr.mxu0 0.0
    %1474 = vmatpush1.msra.mxu0 0.0
    %1475 = vmatprep.subr.mxu0 0.0
    %1476 = vmatpush1.msra.mxu0 0.0
    %1477 = vmatprep.subr.mxu0 0.0
    %1478 = vmatpush1.msra.mxu0 0.0
    %1479 = vmatprep.subr.mxu0 0.0
    %1480 = vmatpush1.msra.mxu0 0.0
    %1481 = vmatprep.subr.mxu0 0.0
    %1482 = vmatpush1.msra.mxu0 0.0
    %1483 = vmatprep.subr.mxu0 0.0
    %1484 = vmatpush1.msra.mxu0 0.0
    %1485 = vmatprep.subr.mxu0 0.0
    %1486 = vmatpush1.msra.mxu0 0.0
    %1487 = vmatprep.subr.mxu0 0.0
    %1488 = vmatpush1.msra.mxu0 0.0
    %1489 = vmatprep.subr.mxu0 0.0
    %1490 = vmatpush1.msra.mxu0 0.0
    %1491 = vmatprep.subr.mxu0 0.0
    %1492 = vmatpush1.msra.mxu0 0.0
    %1493 = vmatprep.mubr.f32.mxu0 0.0
    %v1494 = vand.u32 %v36, 4294901760
    %v1495 = vsub.f32 %v36, %v1494
    %v1496 = vand.u32 %v1495, 4294901760
    %1497 = vmatmul.mubr.f32.gmra.mrb[0].mxu0 %v1496
    %v1498 = vpop.f32.mrb[0].mxu0
    %v1499 = vadd.f32 %v1413, %v1498
    %v1500 = vpop.f32.mrb[0].mxu0
    %v1501 = vadd.f32 %v1415, %v1500
    %1502 = vmatprep.mubr.f32.mxu0 0.0
    %v1503 = vand.u32 %v39, 4294901760
    %v1504 = vsub.f32 %v39, %v1503
    %v1505 = vand.u32 %v1504, 4294901760
    %1506 = vmatmul.mubr.f32.gmra.mrb[0].mxu0 %v1505
    %v1507 = vpop.f32.mrb[0].mxu0
    %v1508 = vadd.f32 %v1421, %v1507
    %v1509 = vpop.f32.mrb[0].mxu0
    %v1510 = vadd.f32 %v1423, %v1509
    %1511 = vdwg.mxu0
    %v1512 = vand.u32 %v23, 4294901760
    %v1513 = vsub.f32 %v23, %v1512
    %v1514 = vand.u32 %v1513, 4294901760
    %1515 = vmatprep.subr.mxu0 %v1514
    %v1516 = vand.u32 %v22, 4294901760
    %v1517 = vsub.f32 %v22, %v1516
    %v1518 = vand.u32 %v1517, 4294901760
    %1519 = vmatpush1.msra.mxu0 %v1518
    %v1520 = vand.u32 %v58, 4294901760
    %v1521 = vsub.f32 %v58, %v1520
    %v1522 = vand.u32 %v1521, 4294901760
    %1523 = vmatprep.subr.mxu0 %v1522
    %v1524 = vand.u32 %v55, 4294901760
    %v1525 = vsub.f32 %v55, %v1524
    %v1526 = vand.u32 %v1525, 4294901760
    %1527 = vmatpush1.msra.mxu0 %v1526
    %1528 = vmatprep.subr.mxu0 0.0
    %1529 = vmatpush1.msra.mxu0 0.0
    %1530 = vmatprep.subr.mxu0 0.0
    %1531 = vmatpush1.msra.mxu0 0.0
    %1532 = vmatprep.subr.mxu0 0.0
    %1533 = vmatpush1.msra.mxu0 0.0
    %1534 = vmatprep.subr.mxu0 0.0
    %1535 = vmatpush1.msra.mxu0 0.0
    %1536 = vmatprep.subr.mxu0 0.0
    %1537 = vmatpush1.msra.mxu0 0.0
    %1538 = vmatprep.subr.mxu0 0.0
    %1539 = vmatpush1.msra.mxu0 0.0
    %1540 = vmatprep.subr.mxu0 0.0
    %1541 = vmatpush1.msra.mxu0 0.0
    %1542 = vmatprep.subr.mxu0 0.0
    %1543 = vmatpush1.msra.mxu0 0.0
    %1544 = vmatprep.subr.mxu0 0.0
    %1545 = vmatpush1.msra.mxu0 0.0
    %1546 = vmatprep.subr.mxu0 0.0
    %1547 = vmatpush1.msra.mxu0 0.0
    %1548 = vmatprep.subr.mxu0 0.0
    %1549 = vmatpush1.msra.mxu0 0.0
    %1550 = vmatprep.subr.mxu0 0.0
    %1551 = vmatpush1.msra.mxu0 0.0
    %1552 = vmatprep.subr.mxu0 0.0
    %1553 = vmatpush1.msra.mxu0 0.0
    %1554 = vmatprep.subr.mxu0 0.0
    %1555 = vmatpush1.msra.mxu0 0.0
    %1556 = vmatprep.subr.mxu0 0.0
    %1557 = vmatpush1.msra.mxu0 0.0
    %1558 = vmatprep.subr.mxu0 0.0
    %1559 = vmatpush1.msra.mxu0 0.0
    %1560 = vmatprep.subr.mxu0 0.0
    %1561 = vmatpush1.msra.mxu0 0.0
    %1562 = vmatprep.subr.mxu0 0.0
    %1563 = vmatpush1.msra.mxu0 0.0
    %1564 = vmatprep.subr.mxu0 0.0
    %1565 = vmatpush1.msra.mxu0 0.0
    %1566 = vmatprep.subr.mxu0 0.0
    %1567 = vmatpush1.msra.mxu0 0.0
    %1568 = vmatprep.subr.mxu0 0.0
    %1569 = vmatpush1.msra.mxu0 0.0
    %1570 = vmatprep.subr.mxu0 0.0
    %1571 = vmatpush1.msra.mxu0 0.0
    %1572 = vmatprep.subr.mxu0 0.0
    %1573 = vmatpush1.msra.mxu0 0.0
    %1574 = vmatprep.subr.mxu0 0.0
    %1575 = vmatpush1.msra.mxu0 0.0
    %1576 = vmatprep.subr.mxu0 0.0
    %1577 = vmatpush1.msra.mxu0 0.0
    %1578 = vmatprep.subr.mxu0 0.0
    %1579 = vmatpush1.msra.mxu0 0.0
    %1580 = vmatprep.subr.mxu0 0.0
    %1581 = vmatpush1.msra.mxu0 0.0
    %1582 = vmatprep.subr.mxu0 0.0
    %1583 = vmatpush1.msra.mxu0 0.0
    %1584 = vmatprep.subr.mxu0 0.0
    %1585 = vmatpush1.msra.mxu0 0.0
    %1586 = vmatprep.subr.mxu0 0.0
    %1587 = vmatpush1.msra.mxu0 0.0
    %1588 = vmatprep.mubr.f32.mxu0 0.0
    %v1589 = vand.u32 %v36, 4294901760
    %1590 = vmatmul.mubr.f32.gmra.mrb[0].mxu0 %v1589
    %v1591 = vpop.f32.mrb[0].mxu0
    %v1592 = vadd.f32 %v1499, %v1591
    %v1593 = vpop.f32.mrb[0].mxu0
    %v1594 = vadd.f32 %v1501, %v1593
    %1595 = vmatprep.mubr.f32.mxu0 0.0
    %v1596 = vand.u32 %v39, 4294901760
    %1597 = vmatmul.mubr.f32.gmra.mrb[0].mxu0 %v1596
    %v1598 = vpop.f32.mrb[0].mxu0
    %v1599 = vadd.f32 %v1508, %v1598
    %v1600 = vpop.f32.mrb[0].mxu0
    %v1601 = vadd.f32 %v1510, %v1600
    %1602 = vdwg.mxu0
    %v1603 = vand.u32 %v23, 4294901760
    %1604 = vmatprep.subr.mxu0 %v1603
    %v1605 = vand.u32 %v22, 4294901760
    %1606 = vmatpush1.msra.mxu0 %v1605
    %v1607 = vand.u32 %v58, 4294901760
    %1608 = vmatprep.subr.mxu0 %v1607
    %v1609 = vand.u32 %v55, 4294901760
    %1610 = vmatpush1.msra.mxu0 %v1609
    %1611 = vmatprep.subr.mxu0 0.0
    %1612 = vmatpush1.msra.mxu0 0.0
    %1613 = vmatprep.subr.mxu0 0.0
    %1614 = vmatpush1.msra.mxu0 0.0
    %1615 = vmatprep.subr.mxu0 0.0
    %1616 = vmatpush1.msra.mxu0 0.0
    %1617 = vmatprep.subr.mxu0 0.0
    %1618 = vmatpush1.msra.mxu0 0.0
    %1619 = vmatprep.subr.mxu0 0.0
    %1620 = vmatpush1.msra.mxu0 0.0
    %1621 = vmatprep.subr.mxu0 0.0
    %1622 = vmatpush1.msra.mxu0 0.0
    %1623 = vmatprep.subr.mxu0 0.0
    %1624 = vmatpush1.msra.mxu0 0.0
    %1625 = vmatprep.subr.mxu0 0.0
    %1626 = vmatpush1.msra.mxu0 0.0
    %1627 = vmatprep.subr.mxu0 0.0
    %1628 = vmatpush1.msra.mxu0 0.0
    %1629 = vmatprep.subr.mxu0 0.0
    %1630 = vmatpush1.msra.mxu0 0.0
    %1631 = vmatprep.subr.mxu0 0.0
    %1632 = vmatpush1.msra.mxu0 0.0
    %1633 = vmatprep.subr.mxu0 0.0
    %1634 = vmatpush1.msra.mxu0 0.0
    %1635 = vmatprep.subr.mxu0 0.0
    %1636 = vmatpush1.msra.mxu0 0.0
    %1637 = vmatprep.subr.mxu0 0.0
    %1638 = vmatpush1.msra.mxu0 0.0
    %1639 = vmatprep.subr.mxu0 0.0
    %1640 = vmatpush1.msra.mxu0 0.0
    %1641 = vmatprep.subr.mxu0 0.0
    %1642 = vmatpush1.msra.mxu0 0.0
    %1643 = vmatprep.subr.mxu0 0.0
    %1644 = vmatpush1.msra.mxu0 0.0
    %1645 = vmatprep.subr.mxu0 0.0
    %1646 = vmatpush1.msra.mxu0 0.0
    %1647 = vmatprep.subr.mxu0 0.0
    %1648 = vmatpush1.msra.mxu0 0.0
    %1649 = vmatprep.subr.mxu0 0.0
    %1650 = vmatpush1.msra.mxu0 0.0
    %1651 = vmatprep.subr.mxu0 0.0
    %1652 = vmatpush1.msra.mxu0 0.0
    %1653 = vmatprep.subr.mxu0 0.0
    %1654 = vmatpush1.msra.mxu0 0.0
    %1655 = vmatprep.subr.mxu0 0.0
    %1656 = vmatpush1.msra.mxu0 0.0
    %1657 = vmatprep.subr.mxu0 0.0
    %1658 = vmatpush1.msra.mxu0 0.0
    %1659 = vmatprep.subr.mxu0 0.0
    %1660 = vmatpush1.msra.mxu0 0.0
    %1661 = vmatprep.subr.mxu0 0.0
    %1662 = vmatpush1.msra.mxu0 0.0
    %1663 = vmatprep.subr.mxu0 0.0
    %1664 = vmatpush1.msra.mxu0 0.0
    %1665 = vmatprep.subr.mxu0 0.0
    %1666 = vmatpush1.msra.mxu0 0.0
    %1667 = vmatprep.subr.mxu0 0.0
    %1668 = vmatpush1.msra.mxu0 0.0
    %1669 = vmatprep.subr.mxu0 0.0
    %1670 = vmatpush1.msra.mxu0 0.0
    %1671 = vmatprep.mubr.f32.mxu0 0.0
    %v1672 = vand.u32 %v36, 4294901760
    %1673 = vmatmul.mubr.f32.gmra.mrb[0].mxu0 %v1672
    %v1674 = vpop.f32.mrb[0].mxu0
    %v1675 = vadd.f32 %v1592, %v1674
    %v1676 = vpop.f32.mrb[0].mxu0
    %v1677 = vadd.f32 %v1594, %v1676
    %1678 = vmatprep.mubr.f32.mxu0 0.0
    %v1679 = vand.u32 %v39, 4294901760
    %1680 = vmatmul.mubr.f32.gmra.mrb[0].mxu0 %v1679
    %v1681 = vpop.f32.mrb[0].mxu0
    %v1682 = vadd.f32 %v1599, %v1681
    %v1683 = vpop.f32.mrb[0].mxu0
    %v1684 = vadd.f32 %v1601, %v1683
    %1685 = vdwg.mxu0
    %v1686 = vand.u32 %v25, 4294901760
    %1687 = vmatprep.subr.mxu0 %v1686
    %v1688 = vand.u32 %v24, 4294901760
    %1689 = vmatpush1.msra.mxu0 %v1688
    %v1690 = vand.u32 %v64, 4294901760
    %1691 = vmatprep.subr.mxu0 %v1690
    %v1692 = vand.u32 %v61, 4294901760
    %1693 = vmatpush1.msra.mxu0 %v1692
    %1694 = vmatprep.subr.mxu0 0.0
    %1695 = vmatpush1.msra.mxu0 0.0
    %1696 = vmatprep.subr.mxu0 0.0
    %1697 = vmatpush1.msra.mxu0 0.0
    %1698 = vmatprep.subr.mxu0 0.0
    %1699 = vmatpush1.msra.mxu0 0.0
    %1700 = vmatprep.subr.mxu0 0.0
    %1701 = vmatpush1.msra.mxu0 0.0
    %1702 = vmatprep.subr.mxu0 0.0
    %1703 = vmatpush1.msra.mxu0 0.0
    %1704 = vmatprep.subr.mxu0 0.0
    %1705 = vmatpush1.msra.mxu0 0.0
    %1706 = vmatprep.subr.mxu0 0.0
    %1707 = vmatpush1.msra.mxu0 0.0
    %1708 = vmatprep.subr.mxu0 0.0
    %1709 = vmatpush1.msra.mxu0 0.0
    %1710 = vmatprep.subr.mxu0 0.0
    %1711 = vmatpush1.msra.mxu0 0.0
    %1712 = vmatprep.subr.mxu0 0.0
    %1713 = vmatpush1.msra.mxu0 0.0
    %1714 = vmatprep.subr.mxu0 0.0
    %1715 = vmatpush1.msra.mxu0 0.0
    %1716 = vmatprep.subr.mxu0 0.0
    %1717 = vmatpush1.msra.mxu0 0.0
    %1718 = vmatprep.subr.mxu0 0.0
    %1719 = vmatpush1.msra.mxu0 0.0
    %1720 = vmatprep.subr.mxu0 0.0
    %1721 = vmatpush1.msra.mxu0 0.0
    %1722 = vmatprep.subr.mxu0 0.0
    %1723 = vmatpush1.msra.mxu0 0.0
    %1724 = vmatprep.subr.mxu0 0.0
    %1725 = vmatpush1.msra.mxu0 0.0
    %1726 = vmatprep.subr.mxu0 0.0
    %1727 = vmatpush1.msra.mxu0 0.0
    %1728 = vmatprep.subr.mxu0 0.0
    %1729 = vmatpush1.msra.mxu0 0.0
    %1730 = vmatprep.subr.mxu0 0.0
    %1731 = vmatpush1.msra.mxu0 0.0
    %1732 = vmatprep.subr.mxu0 0.0
    %1733 = vmatpush1.msra.mxu0 0.0
    %1734 = vmatprep.subr.mxu0 0.0
    %1735 = vmatpush1.msra.mxu0 0.0
    %1736 = vmatprep.subr.mxu0 0.0
    %1737 = vmatpush1.msra.mxu0 0.0
    %1738 = vmatprep.subr.mxu0 0.0
    %1739 = vmatpush1.msra.mxu0 0.0
    %1740 = vmatprep.subr.mxu0 0.0
    %1741 = vmatpush1.msra.mxu0 0.0
    %1742 = vmatprep.subr.mxu0 0.0
    %1743 = vmatpush1.msra.mxu0 0.0
    %1744 = vmatprep.subr.mxu0 0.0
    %1745 = vmatpush1.msra.mxu0 0.0
    %1746 = vmatprep.subr.mxu0 0.0
    %1747 = vmatpush1.msra.mxu0 0.0
    %1748 = vmatprep.subr.mxu0 0.0
    %1749 = vmatpush1.msra.mxu0 0.0
    %1750 = vmatprep.subr.mxu0 0.0
    %1751 = vmatpush1.msra.mxu0 0.0
    %1752 = vmatprep.subr.mxu0 0.0
    %1753 = vmatpush1.msra.mxu0 0.0
    %1754 = vmatprep.mubr.f32.mxu0 0.0
    %v1755 = vand.u32 %v36, 4294901760
    %v1756 = vsub.f32 %v36, %v1755
    %v1757 = vand.u32 %v1756, 4294901760
    %v1758 = vsub.f32 %v1756, %v1757
    %v1759 = vand.u32 %v1758, 4294901760
    %1760 = vmatmul.mubr.f32.gmra.mrb[0].mxu0 %v1759
    %v1761 = vpop.f32.mrb[0].mxu0
    %v1762 = vadd.f32 0.0, %v1761
    %v1763 = vpop.f32.mrb[0].mxu0
    %v1764 = vadd.f32 0.0, %v1763
    %1765 = vmatprep.mubr.f32.mxu0 0.0
    %v1766 = vand.u32 %v39, 4294901760
    %v1767 = vsub.f32 %v39, %v1766
    %v1768 = vand.u32 %v1767, 4294901760
    %v1769 = vsub.f32 %v1767, %v1768
    %v1770 = vand.u32 %v1769, 4294901760
    %1771 = vmatmul.mubr.f32.gmra.mrb[0].mxu0 %v1770
    %v1772 = vpop.f32.mrb[0].mxu0
    %v1773 = vadd.f32 0.0, %v1772
    %v1774 = vpop.f32.mrb[0].mxu0
    %v1775 = vadd.f32 0.0, %v1774
    %1776 = vdwg.mxu0
    %v1777 = vand.u32 %v25, 4294901760
    %v1778 = vsub.f32 %v25, %v1777
    %v1779 = vand.u32 %v1778, 4294901760
    %v1780 = vsub.f32 %v1778, %v1779
    %v1781 = vand.u32 %v1780, 4294901760
    %1782 = vmatprep.subr.mxu0 %v1781
    %v1783 = vand.u32 %v24, 4294901760
    %v1784 = vsub.f32 %v24, %v1783
    %v1785 = vand.u32 %v1784, 4294901760
    %v1786 = vsub.f32 %v1784, %v1785
    %v1787 = vand.u32 %v1786, 4294901760
    %1788 = vmatpush1.msra.mxu0 %v1787
    %v1789 = vand.u32 %v64, 4294901760
    %v1790 = vsub.f32 %v64, %v1789
    %v1791 = vand.u32 %v1790, 4294901760
    %v1792 = vsub.f32 %v1790, %v1791
    %v1793 = vand.u32 %v1792, 4294901760
    %1794 = vmatprep.subr.mxu0 %v1793
    %v1795 = vand.u32 %v61, 4294901760
    %v1796 = vsub.f32 %v61, %v1795
    %v1797 = vand.u32 %v1796, 4294901760
    %v1798 = vsub.f32 %v1796, %v1797
    %v1799 = vand.u32 %v1798, 4294901760
    %1800 = vmatpush1.msra.mxu0 %v1799
    %1801 = vmatprep.subr.mxu0 0.0
    %1802 = vmatpush1.msra.mxu0 0.0
    %1803 = vmatprep.subr.mxu0 0.0
    %1804 = vmatpush1.msra.mxu0 0.0
    %1805 = vmatprep.subr.mxu0 0.0
    %1806 = vmatpush1.msra.mxu0 0.0
    %1807 = vmatprep.subr.mxu0 0.0
    %1808 = vmatpush1.msra.mxu0 0.0
    %1809 = vmatprep.subr.mxu0 0.0
    %1810 = vmatpush1.msra.mxu0 0.0
    %1811 = vmatprep.subr.mxu0 0.0
    %1812 = vmatpush1.msra.mxu0 0.0
    %1813 = vmatprep.subr.mxu0 0.0
    %1814 = vmatpush1.msra.mxu0 0.0
    %1815 = vmatprep.subr.mxu0 0.0
    %1816 = vmatpush1.msra.mxu0 0.0
    %1817 = vmatprep.subr.mxu0 0.0
    %1818 = vmatpush1.msra.mxu0 0.0
    %1819 = vmatprep.subr.mxu0 0.0
    %1820 = vmatpush1.msra.mxu0 0.0
    %1821 = vmatprep.subr.mxu0 0.0
    %1822 = vmatpush1.msra.mxu0 0.0
    %1823 = vmatprep.subr.mxu0 0.0
    %1824 = vmatpush1.msra.mxu0 0.0
    %1825 = vmatprep.subr.mxu0 0.0
    %1826 = vmatpush1.msra.mxu0 0.0
    %1827 = vmatprep.subr.mxu0 0.0
    %1828 = vmatpush1.msra.mxu0 0.0
    %1829 = vmatprep.subr.mxu0 0.0
    %1830 = vmatpush1.msra.mxu0 0.0
    %1831 = vmatprep.subr.mxu0 0.0
    %1832 = vmatpush1.msra.mxu0 0.0
    %1833 = vmatprep.subr.mxu0 0.0
    %1834 = vmatpush1.msra.mxu0 0.0
    %1835 = vmatprep.subr.mxu0 0.0
    %1836 = vmatpush1.msra.mxu0 0.0
    %1837 = vmatprep.subr.mxu0 0.0
    %1838 = vmatpush1.msra.mxu0 0.0
    %1839 = vmatprep.subr.mxu0 0.0
    %1840 = vmatpush1.msra.mxu0 0.0
    %1841 = vmatprep.subr.mxu0 0.0
    %1842 = vmatpush1.msra.mxu0 0.0
    %1843 = vmatprep.subr.mxu0 0.0
    %1844 = vmatpush1.msra.mxu0 0.0
    %1845 = vmatprep.subr.mxu0 0.0
    %1846 = vmatpush1.msra.mxu0 0.0
    %1847 = vmatprep.subr.mxu0 0.0
    %1848 = vmatpush1.msra.mxu0 0.0
    %1849 = vmatprep.subr.mxu0 0.0
    %1850 = vmatpush1.msra.mxu0 0.0
    %1851 = vmatprep.subr.mxu0 0.0
    %1852 = vmatpush1.msra.mxu0 0.0
    %1853 = vmatprep.subr.mxu0 0.0
    %1854 = vmatpush1.msra.mxu0 0.0
    %1855 = vmatprep.subr.mxu0 0.0
    %1856 = vmatpush1.msra.mxu0 0.0
    %1857 = vmatprep.subr.mxu0 0.0
    %1858 = vmatpush1.msra.mxu0 0.0
    %1859 = vmatprep.subr.mxu0 0.0
    %1860 = vmatpush1.msra.mxu0 0.0
    %1861 = vmatprep.mubr.f32.mxu0 0.0
    %v1862 = vand.u32 %v36, 4294901760
    %1863 = vmatmul.mubr.f32.gmra.mrb[0].mxu0 %v1862
    %v1864 = vpop.f32.mrb[0].mxu0
    %v1865 = vadd.f32 %v1762, %v1864
    %v1866 = vpop.f32.mrb[0].mxu0
    %v1867 = vadd.f32 %v1764, %v1866
    %1868 = vmatprep.mubr.f32.mxu0 0.0
    %v1869 = vand.u32 %v39, 4294901760
    %1870 = vmatmul.mubr.f32.gmra.mrb[0].mxu0 %v1869
    %v1871 = vpop.f32.mrb[0].mxu0
    %v1872 = vadd.f32 %v1773, %v1871
    %v1873 = vpop.f32.mrb[0].mxu0
    %v1874 = vadd.f32 %v1775, %v1873
    %1875 = vdwg.mxu0
    %v1876 = vand.u32 %v25, 4294901760
    %v1877 = vsub.f32 %v25, %v1876
    %1878 = vmatprep.subr.mxu0 %v1877
    %v1879 = vand.u32 %v24, 4294901760
    %v1880 = vsub.f32 %v24, %v1879
    %1881 = vmatpush1.msra.mxu0 %v1880
    %v1882 = vand.u32 %v64, 4294901760
    %v1883 = vsub.f32 %v64, %v1882
    %1884 = vmatprep.subr.mxu0 %v1883
    %v1885 = vand.u32 %v61, 4294901760
    %v1886 = vsub.f32 %v61, %v1885
    %1887 = vmatpush1.msra.mxu0 %v1886
    %1888 = vmatprep.subr.mxu0 0.0
    %1889 = vmatpush1.msra.mxu0 0.0
    %1890 = vmatprep.subr.mxu0 0.0
    %1891 = vmatpush1.msra.mxu0 0.0
    %1892 = vmatprep.subr.mxu0 0.0
    %1893 = vmatpush1.msra.mxu0 0.0
    %1894 = vmatprep.subr.mxu0 0.0
    %1895 = vmatpush1.msra.mxu0 0.0
    %1896 = vmatprep.subr.mxu0 0.0
    %1897 = vmatpush1.msra.mxu0 0.0
    %1898 = vmatprep.subr.mxu0 0.0
    %1899 = vmatpush1.msra.mxu0 0.0
    %1900 = vmatprep.subr.mxu0 0.0
    %1901 = vmatpush1.msra.mxu0 0.0
    %1902 = vmatprep.subr.mxu0 0.0
    %1903 = vmatpush1.msra.mxu0 0.0
    %1904 = vmatprep.subr.mxu0 0.0
    %1905 = vmatpush1.msra.mxu0 0.0
    %1906 = vmatprep.subr.mxu0 0.0
    %1907 = vmatpush1.msra.mxu0 0.0
    %1908 = vmatprep.subr.mxu0 0.0
    %1909 = vmatpush1.msra.mxu0 0.0
    %1910 = vmatprep.subr.mxu0 0.0
    %1911 = vmatpush1.msra.mxu0 0.0
    %1912 = vmatprep.subr.mxu0 0.0
    %1913 = vmatpush1.msra.mxu0 0.0
    %1914 = vmatprep.subr.mxu0 0.0
    %1915 = vmatpush1.msra.mxu0 0.0
    %1916 = vmatprep.subr.mxu0 0.0
    %1917 = vmatpush1.msra.mxu0 0.0
    %1918 = vmatprep.subr.mxu0 0.0
    %1919 = vmatpush1.msra.mxu0 0.0
    %1920 = vmatprep.subr.mxu0 0.0
    %1921 = vmatpush1.msra.mxu0 0.0
    %1922 = vmatprep.subr.mxu0 0.0
    %1923 = vmatpush1.msra.mxu0 0.0
    %1924 = vmatprep.subr.mxu0 0.0
    %1925 = vmatpush1.msra.mxu0 0.0
    %1926 = vmatprep.subr.mxu0 0.0
    %1927 = vmatpush1.msra.mxu0 0.0
    %1928 = vmatprep.subr.mxu0 0.0
    %1929 = vmatpush1.msra.mxu0 0.0
    %1930 = vmatprep.subr.mxu0 0.0
    %1931 = vmatpush1.msra.mxu0 0.0
    %1932 = vmatprep.subr.mxu0 0.0
    %1933 = vmatpush1.msra.mxu0 0.0
    %1934 = vmatprep.subr.mxu0 0.0
    %1935 = vmatpush1.msra.mxu0 0.0
    %1936 = vmatprep.subr.mxu0 0.0
    %1937 = vmatpush1.msra.mxu0 0.0
    %1938 = vmatprep.subr.mxu0 0.0
    %1939 = vmatpush1.msra.mxu0 0.0
    %1940 = vmatprep.subr.mxu0 0.0
    %1941 = vmatpush1.msra.mxu0 0.0
    %1942 = vmatprep.subr.mxu0 0.0
    %1943 = vmatpush1.msra.mxu0 0.0
    %1944 = vmatprep.subr.mxu0 0.0
    %1945 = vmatpush1.msra.mxu0 0.0
    %1946 = vmatprep.subr.mxu0 0.0
    %1947 = vmatpush1.msra.mxu0 0.0
    %1948 = vmatprep.mubr.f32.mxu0 0.0
    %v1949 = vand.u32 %v36, 4294901760
    %v1950 = vsub.f32 %v36, %v1949
    %1951 = vmatmul.mubr.f32.gmra.mrb[0].mxu0 %v1950
    %v1952 = vpop.f32.mrb[0].mxu0
    %v1953 = vadd.f32 %v1865, %v1952
    %v1954 = vpop.f32.mrb[0].mxu0
    %v1955 = vadd.f32 %v1867, %v1954
    %1956 = vmatprep.mubr.f32.mxu0 0.0
    %v1957 = vand.u32 %v39, 4294901760
    %v1958 = vsub.f32 %v39, %v1957
    %1959 = vmatmul.mubr.f32.gmra.mrb[0].mxu0 %v1958
    %v1960 = vpop.f32.mrb[0].mxu0
    %v1961 = vadd.f32 %v1872, %v1960
    %v1962 = vpop.f32.mrb[0].mxu0
    %v1963 = vadd.f32 %v1874, %v1962
    %1964 = vdwg.mxu0
    %v1965 = vand.u32 %v25, 4294901760
    %1966 = vmatprep.subr.mxu0 %v1965
    %v1967 = vand.u32 %v24, 4294901760
    %1968 = vmatpush1.msra.mxu0 %v1967
    %v1969 = vand.u32 %v64, 4294901760
    %1970 = vmatprep.subr.mxu0 %v1969
    %v1971 = vand.u32 %v61, 4294901760
    %1972 = vmatpush1.msra.mxu0 %v1971
    %1973 = vmatprep.subr.mxu0 0.0
    %1974 = vmatpush1.msra.mxu0 0.0
    %1975 = vmatprep.subr.mxu0 0.0
    %1976 = vmatpush1.msra.mxu0 0.0
    %1977 = vmatprep.subr.mxu0 0.0
    %1978 = vmatpush1.msra.mxu0 0.0
    %1979 = vmatprep.subr.mxu0 0.0
    %1980 = vmatpush1.msra.mxu0 0.0
    %1981 = vmatprep.subr.mxu0 0.0
    %1982 = vmatpush1.msra.mxu0 0.0
    %1983 = vmatprep.subr.mxu0 0.0
    %1984 = vmatpush1.msra.mxu0 0.0
    %1985 = vmatprep.subr.mxu0 0.0
    %1986 = vmatpush1.msra.mxu0 0.0
    %1987 = vmatprep.subr.mxu0 0.0
    %1988 = vmatpush1.msra.mxu0 0.0
    %1989 = vmatprep.subr.mxu0 0.0
    %1990 = vmatpush1.msra.mxu0 0.0
    %1991 = vmatprep.subr.mxu0 0.0
    %1992 = vmatpush1.msra.mxu0 0.0
    %1993 = vmatprep.subr.mxu0 0.0
    %1994 = vmatpush1.msra.mxu0 0.0
    %1995 = vmatprep.subr.mxu0 0.0
    %1996 = vmatpush1.msra.mxu0 0.0
    %1997 = vmatprep.subr.mxu0 0.0
    %1998 = vmatpush1.msra.mxu0 0.0
    %1999 = vmatprep.subr.mxu0 0.0
    %2000 = vmatpush1.msra.mxu0 0.0
    %2001 = vmatprep.subr.mxu0 0.0
    %2002 = vmatpush1.msra.mxu0 0.0
    %2003 = vmatprep.subr.mxu0 0.0
    %2004 = vmatpush1.msra.mxu0 0.0
    %2005 = vmatprep.subr.mxu0 0.0
    %2006 = vmatpush1.msra.mxu0 0.0
    %2007 = vmatprep.subr.mxu0 0.0
    %2008 = vmatpush1.msra.mxu0 0.0
    %2009 = vmatprep.subr.mxu0 0.0
    %2010 = vmatpush1.msra.mxu0 0.0
    %2011 = vmatprep.subr.mxu0 0.0
    %2012 = vmatpush1.msra.mxu0 0.0
    %2013 = vmatprep.subr.mxu0 0.0
    %2014 = vmatpush1.msra.mxu0 0.0
    %2015 = vmatprep.subr.mxu0 0.0
    %2016 = vmatpush1.msra.mxu0 0.0
    %2017 = vmatprep.subr.mxu0 0.0
    %2018 = vmatpush1.msra.mxu0 0.0
    %2019 = vmatprep.subr.mxu0 0.0
    %2020 = vmatpush1.msra.mxu0 0.0
    %2021 = vmatprep.subr.mxu0 0.0
    %2022 = vmatpush1.msra.mxu0 0.0
    %2023 = vmatprep.subr.mxu0 0.0
    %2024 = vmatpush1.msra.mxu0 0.0
    %2025 = vmatprep.subr.mxu0 0.0
    %2026 = vmatpush1.msra.mxu0 0.0
    %2027 = vmatprep.subr.mxu0 0.0
    %2028 = vmatpush1.msra.mxu0 0.0
    %2029 = vmatprep.subr.mxu0 0.0
    %2030 = vmatpush1.msra.mxu0 0.0
    %2031 = vmatprep.subr.mxu0 0.0
    %2032 = vmatpush1.msra.mxu0 0.0
    %2033 = vmatprep.mubr.f32.mxu0 0.0
    %v2034 = vand.u32 %v36, 4294901760
    %v2035 = vsub.f32 %v36, %v2034
    %v2036 = vand.u32 %v2035, 4294901760
    %2037 = vmatmul.mubr.f32.gmra.mrb[0].mxu0 %v2036
    %v2038 = vpop.f32.mrb[0].mxu0
    %v2039 = vadd.f32 %v1953, %v2038
    %v2040 = vpop.f32.mrb[0].mxu0
    %v2041 = vadd.f32 %v1955, %v2040
    %2042 = vmatprep.mubr.f32.mxu0 0.0
    %v2043 = vand.u32 %v39, 4294901760
    %v2044 = vsub.f32 %v39, %v2043
    %v2045 = vand.u32 %v2044, 4294901760
    %2046 = vmatmul.mubr.f32.gmra.mrb[0].mxu0 %v2045
    %v2047 = vpop.f32.mrb[0].mxu0
    %v2048 = vadd.f32 %v1961, %v2047
    %v2049 = vpop.f32.mrb[0].mxu0
    %v2050 = vadd.f32 %v1963, %v2049
    %2051 = vdwg.mxu0
    %v2052 = vand.u32 %v25, 4294901760
    %v2053 = vsub.f32 %v25, %v2052
    %v2054 = vand.u32 %v2053, 4294901760
    %2055 = vmatprep.subr.mxu0 %v2054
    %v2056 = vand.u32 %v24, 4294901760
    %v2057 = vsub.f32 %v24, %v2056
    %v2058 = vand.u32 %v2057, 4294901760
    %2059 = vmatpush1.msra.mxu0 %v2058
    %v2060 = vand.u32 %v64, 4294901760
    %v2061 = vsub.f32 %v64, %v2060
    %v2062 = vand.u32 %v2061, 4294901760
    %2063 = vmatprep.subr.mxu0 %v2062
    %v2064 = vand.u32 %v61, 4294901760
    %v2065 = vsub.f32 %v61, %v2064
    %v2066 = vand.u32 %v2065, 4294901760
    %2067 = vmatpush1.msra.mxu0 %v2066
    %2068 = vmatprep.subr.mxu0 0.0
    %2069 = vmatpush1.msra.mxu0 0.0
    %2070 = vmatprep.subr.mxu0 0.0
    %2071 = vmatpush1.msra.mxu0 0.0
    %2072 = vmatprep.subr.mxu0 0.0
    %2073 = vmatpush1.msra.mxu0 0.0
    %2074 = vmatprep.subr.mxu0 0.0
    %2075 = vmatpush1.msra.mxu0 0.0
    %2076 = vmatprep.subr.mxu0 0.0
    %2077 = vmatpush1.msra.mxu0 0.0
    %2078 = vmatprep.subr.mxu0 0.0
    %2079 = vmatpush1.msra.mxu0 0.0
    %2080 = vmatprep.subr.mxu0 0.0
    %2081 = vmatpush1.msra.mxu0 0.0
    %2082 = vmatprep.subr.mxu0 0.0
    %2083 = vmatpush1.msra.mxu0 0.0
    %2084 = vmatprep.subr.mxu0 0.0
    %2085 = vmatpush1.msra.mxu0 0.0
    %2086 = vmatprep.subr.mxu0 0.0
    %2087 = vmatpush1.msra.mxu0 0.0
    %2088 = vmatprep.subr.mxu0 0.0
    %2089 = vmatpush1.msra.mxu0 0.0
    %2090 = vmatprep.subr.mxu0 0.0
    %2091 = vmatpush1.msra.mxu0 0.0
    %2092 = vmatprep.subr.mxu0 0.0
    %2093 = vmatpush1.msra.mxu0 0.0
    %2094 = vmatprep.subr.mxu0 0.0
    %2095 = vmatpush1.msra.mxu0 0.0
    %2096 = vmatprep.subr.mxu0 0.0
    %2097 = vmatpush1.msra.mxu0 0.0
    %2098 = vmatprep.subr.mxu0 0.0
    %2099 = vmatpush1.msra.mxu0 0.0
    %2100 = vmatprep.subr.mxu0 0.0
    %2101 = vmatpush1.msra.mxu0 0.0
    %2102 = vmatprep.subr.mxu0 0.0
    %2103 = vmatpush1.msra.mxu0 0.0
    %2104 = vmatprep.subr.mxu0 0.0
    %2105 = vmatpush1.msra.mxu0 0.0
    %2106 = vmatprep.subr.mxu0 0.0
    %2107 = vmatpush1.msra.mxu0 0.0
    %2108 = vmatprep.subr.mxu0 0.0
    %2109 = vmatpush1.msra.mxu0 0.0
    %2110 = vmatprep.subr.mxu0 0.0
    %2111 = vmatpush1.msra.mxu0 0.0
    %2112 = vmatprep.subr.mxu0 0.0
    %2113 = vmatpush1.msra.mxu0 0.0
    %2114 = vmatprep.subr.mxu0 0.0
    %2115 = vmatpush1.msra.mxu0 0.0
    %2116 = vmatprep.subr.mxu0 0.0
    %2117 = vmatpush1.msra.mxu0 0.0
    %2118 = vmatprep.subr.mxu0 0.0
    %2119 = vmatpush1.msra.mxu0 0.0
    %2120 = vmatprep.subr.mxu0 0.0
    %2121 = vmatpush1.msra.mxu0 0.0
    %2122 = vmatprep.subr.mxu0 0.0
    %2123 = vmatpush1.msra.mxu0 0.0
    %2124 = vmatprep.subr.mxu0 0.0
    %2125 = vmatpush1.msra.mxu0 0.0
    %2126 = vmatprep.subr.mxu0 0.0
    %2127 = vmatpush1.msra.mxu0 0.0
    %2128 = vmatprep.mubr.f32.mxu0 0.0
    %v2129 = vand.u32 %v36, 4294901760
    %2130 = vmatmul.mubr.f32.gmra.mrb[0].mxu0 %v2129
    %v2131 = vpop.f32.mrb[0].mxu0
    %v2132 = vadd.f32 %v2039, %v2131
    %v2133 = vpop.f32.mrb[0].mxu0
    %v2134 = vadd.f32 %v2041, %v2133
    %2135 = vmatprep.mubr.f32.mxu0 0.0
    %v2136 = vand.u32 %v39, 4294901760
    %2137 = vmatmul.mubr.f32.gmra.mrb[0].mxu0 %v2136
    %v2138 = vpop.f32.mrb[0].mxu0
    %v2139 = vadd.f32 %v2048, %v2138
    %v2140 = vpop.f32.mrb[0].mxu0
    %v2141 = vadd.f32 %v2050, %v2140
    %2142 = vdwg.mxu0
    %v2143 = vand.u32 %v25, 4294901760
    %2144 = vmatprep.subr.mxu0 %v2143
    %v2145 = vand.u32 %v24, 4294901760
    %2146 = vmatpush1.msra.mxu0 %v2145
    %v2147 = vand.u32 %v64, 4294901760
    %2148 = vmatprep.subr.mxu0 %v2147
    %v2149 = vand.u32 %v61, 4294901760
    %2150 = vmatpush1.msra.mxu0 %v2149
    %2151 = vmatprep.subr.mxu0 0.0
    %2152 = vmatpush1.msra.mxu0 0.0
    %2153 = vmatprep.subr.mxu0 0.0
    %2154 = vmatpush1.msra.mxu0 0.0
    %2155 = vmatprep.subr.mxu0 0.0
    %2156 = vmatpush1.msra.mxu0 0.0
    %2157 = vmatprep.subr.mxu0 0.0
    %2158 = vmatpush1.msra.mxu0 0.0
    %2159 = vmatprep.subr.mxu0 0.0
    %2160 = vmatpush1.msra.mxu0 0.0
    %2161 = vmatprep.subr.mxu0 0.0
    %2162 = vmatpush1.msra.mxu0 0.0
    %2163 = vmatprep.subr.mxu0 0.0
    %2164 = vmatpush1.msra.mxu0 0.0
    %2165 = vmatprep.subr.mxu0 0.0
    %2166 = vmatpush1.msra.mxu0 0.0
    %2167 = vmatprep.subr.mxu0 0.0
    %2168 = vmatpush1.msra.mxu0 0.0
    %2169 = vmatprep.subr.mxu0 0.0
    %2170 = vmatpush1.msra.mxu0 0.0
    %2171 = vmatprep.subr.mxu0 0.0
    %2172 = vmatpush1.msra.mxu0 0.0
    %2173 = vmatprep.subr.mxu0 0.0
    %2174 = vmatpush1.msra.mxu0 0.0
    %2175 = vmatprep.subr.mxu0 0.0
    %2176 = vmatpush1.msra.mxu0 0.0
    %2177 = vmatprep.subr.mxu0 0.0
    %2178 = vmatpush1.msra.mxu0 0.0
    %2179 = vmatprep.subr.mxu0 0.0
    %2180 = vmatpush1.msra.mxu0 0.0
    %2181 = vmatprep.subr.mxu0 0.0
    %2182 = vmatpush1.msra.mxu0 0.0
    %2183 = vmatprep.subr.mxu0 0.0
    %2184 = vmatpush1.msra.mxu0 0.0
    %2185 = vmatprep.subr.mxu0 0.0
    %2186 = vmatpush1.msra.mxu0 0.0
    %2187 = vmatprep.subr.mxu0 0.0
    %2188 = vmatpush1.msra.mxu0 0.0
    %2189 = vmatprep.subr.mxu0 0.0
    %2190 = vmatpush1.msra.mxu0 0.0
    %2191 = vmatprep.subr.mxu0 0.0
    %2192 = vmatpush1.msra.mxu0 0.0
    %2193 = vmatprep.subr.mxu0 0.0
    %2194 = vmatpush1.msra.mxu0 0.0
    %2195 = vmatprep.subr.mxu0 0.0
    %2196 = vmatpush1.msra.mxu0 0.0
    %2197 = vmatprep.subr.mxu0 0.0
    %2198 = vmatpush1.msra.mxu0 0.0
    %2199 = vmatprep.subr.mxu0 0.0
    %2200 = vmatpush1.msra.mxu0 0.0
    %2201 = vmatprep.subr.mxu0 0.0
    %2202 = vmatpush1.msra.mxu0 0.0
    %2203 = vmatprep.subr.mxu0 0.0
    %2204 = vmatpush1.msra.mxu0 0.0
    %2205 = vmatprep.subr.mxu0 0.0
    %2206 = vmatpush1.msra.mxu0 0.0
    %2207 = vmatprep.subr.mxu0 0.0
    %2208 = vmatpush1.msra.mxu0 0.0
    %2209 = vmatprep.subr.mxu0 0.0
    %2210 = vmatpush1.msra.mxu0 0.0
    %2211 = vmatprep.mubr.f32.mxu0 0.0
    %v2212 = vand.u32 %v36, 4294901760
    %2213 = vmatmul.mubr.f32.gmra.mrb[0].mxu0 %v2212
    %v2214 = vpop.f32.mrb[0].mxu0
    %v2215 = vadd.f32 %v2132, %v2214
    %v2216 = vpop.f32.mrb[0].mxu0
    %v2217 = vadd.f32 %v2134, %v2216
    %2218 = vmatprep.mubr.f32.mxu0 0.0
    %v2219 = vand.u32 %v39, 4294901760
    %2220 = vmatmul.mubr.f32.gmra.mrb[0].mxu0 %v2219
    %v2221 = vpop.f32.mrb[0].mxu0
    %v2222 = vadd.f32 %v2139, %v2221
    %v2223 = vpop.f32.mrb[0].mxu0
    %v2224 = vadd.f32 %v2141, %v2223
    %2225 = vdwg.mxu0
    %v2226 = vmax.f32 %v595, %v1135
    %v2227 = vmax.f32 %v597, %v1137
    %v2228 = vmax.f32 %v602, %v1142
    %v2229 = vmax.f32 %v604, %v1144
    %v2230 = vmax.f32 %v2226, %v1675
    %v2231 = vmax.f32 %v2227, %v1677
    %v2232 = vmax.f32 %v2228, %v1682
    %v2233 = vmax.f32 %v2229, %v1684
    %v2234 = vmax.f32 %v2230, %v2215
    %v2235 = vmax.f32 %v2231, %v2217
    %v2236 = vmax.f32 %v2232, %v2222
    %v2237 = vmax.f32 %v2233, %v2224
    %2238 = vset.pattern.permute.xlu0 9
    %2239 = vperm.xlu0 %2238, %v15
    %v2240 = vpop.permute.xlu0 %2239
    %2242 = vset.pattern.permute.xlu0 9
    %2243 = vperm.xlu0 %2242, %v16
    %v2244 = vpop.permute.xlu0 %2243
    %v2246 = vadd.f32 %v2234, %v2240
    %v2247 = vadd.f32 %v2235, %v2240
    %v2248 = vadd.f32 %v2236, %v2244
    %v2249 = vadd.f32 %v2237, %v2244
    %v2250 = vmax.f32 %v2246, 0.0
    %v2251 = vmax.f32 %v2247, 0.0
    %v2252 = vmax.f32 %v2248, 0.0
    %v2253 = vmax.f32 %v2249, 0.0
    %2254 = vst [vmem:[#allocation2] sm:$0x1] %v2250
    %v2257 = vunpack.c.l.s4 1983009808
    %v2258 = vunpack.c.0.s8 %v2257
    %v2259 = vlaneseq
    %v2260 = vshrl.u32 %v2259, 7
    %v2261 = vsub.s32 %v2258, %v2260
    %v2262 = vrot.slane %v2250, %v2261
    %v2263 = vrot.slane %v2262, 7
    %v2264 = vrot.slane %v2263, 2
    %2266 = vst [vmem:[#allocation2 + $0x2] sm:$0x1] %v2264
    %v2267 = vcombine.high %v2262, %v2262
    %2269 = vst [vmem:[#allocation2 + $0x4] sm:$0x1] %v2267
    %v2270 = vrot.slane %v2267, 7
    %v2271 = vrot.slane %v2270, 2
    %2273 = vst [vmem:[#allocation2 + $0x6] sm:$0x1] %v2271
    %v2274 = vcombine.high %v2250, %v2250
    %v2276 = vunpack.c.l.s4 1983009808
    %v2277 = vunpack.c.0.s8 %v2276
    %v2278 = vlaneseq
    %v2279 = vshrl.u32 %v2278, 7
    %v2280 = vsub.s32 %v2277, %v2279
    %v2281 = vrot.slane %v2274, %v2280
    %2283 = vst [vmem:[#allocation2 + $0x8] sm:$0x1] %v2281
    %v2284 = vrot.slane %v2281, 7
    %v2285 = vrot.slane %v2284, 2
    %2287 = vst [vmem:[#allocation2 + $0xa] sm:$0x1] %v2285
    %v2288 = vcombine.high %v2281, %v2281
    %2290 = vst [vmem:[#allocation2 + $0xc] sm:$0x1] %v2288
    %v2291 = vrot.slane %v2288, 7
    %v2292 = vrot.slane %v2291, 2
    %2294 = vst [vmem:[#allocation2 + $0xe] sm:$0x1] %v2292
    %2295 = vst [vmem:[#allocation2 + $0x10] sm:$0x1] %v2252
    %v2298 = vunpack.c.l.s4 1983009808
    %v2299 = vunpack.c.0.s8 %v2298
    %v2300 = vlaneseq
    %v2301 = vshrl.u32 %v2300, 7
    %v2302 = vsub.s32 %v2299, %v2301
    %v2303 = vrot.slane %v2252, %v2302
    %v2304 = vrot.slane %v2303, 7
    %v2305 = vrot.slane %v2304, 2
    %2307 = vst [vmem:[#allocation2 + $0x12] sm:$0x1] %v2305
    %v2308 = vcombine.high %v2303, %v2303
    %2310 = vst [vmem:[#allocation2 + $0x14] sm:$0x1] %v2308
    %v2311 = vrot.slane %v2308, 7
    %v2312 = vrot.slane %v2311, 2
    %2314 = vst [vmem:[#allocation2 + $0x16] sm:$0x1] %v2312
    %v2315 = vcombine.high %v2252, %v2252
    %v2317 = vunpack.c.l.s4 1983009808
    %v2318 = vunpack.c.0.s8 %v2317
    %v2319 = vlaneseq
    %v2320 = vshrl.u32 %v2319, 7
    %v2321 = vsub.s32 %v2318, %v2320
    %v2322 = vrot.slane %v2315, %v2321
    %2324 = vst [vmem:[#allocation2 + $0x18] sm:$0x1] %v2322
    %v2325 = vrot.slane %v2322, 7
    %v2326 = vrot.slane %v2325, 2
    %2328 = vst [vmem:[#allocation2 + $0x1a] sm:$0x1] %v2326
    %v2329 = vcombine.high %v2322, %v2322
    %2331 = vst [vmem:[#allocation2 + $0x1c] sm:$0x1] %v2329
    %v2332 = vrot.slane %v2329, 7
    %v2333 = vrot.slane %v2332, 2
    %2335 = vst [vmem:[#allocation2 + $0x1e] sm:$0x1] %v2333
    %2336 = vst [vmem:[#allocation2 + $0x1] sm:$0x1] %v2251
    %v2339 = vunpack.c.l.s4 1983009808
    %v2340 = vunpack.c.0.s8 %v2339
    %v2341 = vlaneseq
    %v2342 = vshrl.u32 %v2341, 7
    %v2343 = vsub.s32 %v2340, %v2342
    %v2344 = vrot.slane %v2251, %v2343
    %v2345 = vrot.slane %v2344, 7
    %v2346 = vrot.slane %v2345, 2
    %2348 = vst [vmem:[#allocation2 + $0x3] sm:$0x1] %v2346
    %v2349 = vcombine.high %v2344, %v2344
    %2351 = vst [vmem:[#allocation2 + $0x5] sm:$0x1] %v2349
    %v2352 = vrot.slane %v2349, 7
    %v2353 = vrot.slane %v2352, 2
    %2355 = vst [vmem:[#allocation2 + $0x7] sm:$0x1] %v2353
    %v2356 = vcombine.high %v2251, %v2251
    %v2358 = vunpack.c.l.s4 1983009808
    %v2359 = vunpack.c.0.s8 %v2358
    %v2360 = vlaneseq
    %v2361 = vshrl.u32 %v2360, 7
    %v2362 = vsub.s32 %v2359, %v2361
    %v2363 = vrot.slane %v2356, %v2362
    %2365 = vst [vmem:[#allocation2 + $0x9] sm:$0x1] %v2363
    %v2366 = vrot.slane %v2363, 7
    %v2367 = vrot.slane %v2366, 2
    %2369 = vst [vmem:[#allocation2 + $0xb] sm:$0x1] %v2367
    %v2370 = vcombine.high %v2363, %v2363
    %2372 = vst [vmem:[#allocation2 + $0xd] sm:$0x1] %v2370
    %v2373 = vrot.slane %v2370, 7
    %v2374 = vrot.slane %v2373, 2
    %2376 = vst [vmem:[#allocation2 + $0xf] sm:$0x1] %v2374
    %2377 = vst [vmem:[#allocation2 + $0x11] sm:$0x1] %v2253
    %v2380 = vunpack.c.l.s4 1983009808
    %v2381 = vunpack.c.0.s8 %v2380
    %v2382 = vlaneseq
    %v2383 = vshrl.u32 %v2382, 7
    %v2384 = vsub.s32 %v2381, %v2383
    %v2385 = vrot.slane %v2253, %v2384
    %v2386 = vrot.slane %v2385, 7
    %v2387 = vrot.slane %v2386, 2
    %2389 = vst [vmem:[#allocation2 + $0x13] sm:$0x1] %v2387
    %v2390 = vcombine.high %v2385, %v2385
    %2392 = vst [vmem:[#allocation2 + $0x15] sm:$0x1] %v2390
    %v2393 = vrot.slane %v2390, 7
    %v2394 = vrot.slane %v2393, 2
    %2396 = vst [vmem:[#allocation2 + $0x17] sm:$0x1] %v2394
    %v2397 = vcombine.high %v2253, %v2253
    %v2399 = vunpack.c.l.s4 1983009808
    %v2400 = vunpack.c.0.s8 %v2399
    %v2401 = vlaneseq
    %v2402 = vshrl.u32 %v2401, 7
    %v2403 = vsub.s32 %v2400, %v2402
    %v2404 = vrot.slane %v2397, %v2403
    %2406 = vst [vmem:[#allocation2 + $0x19] sm:$0x1] %v2404
    %v2407 = vrot.slane %v2404, 7
    %v2408 = vrot.slane %v2407, 2
    %2410 = vst [vmem:[#allocation2 + $0x1b] sm:$0x1] %v2408
    %v2411 = vcombine.high %v2404, %v2404
    %2413 = vst [vmem:[#allocation2 + $0x1d] sm:$0x1] %v2411
    %v2414 = vrot.slane %v2411, 7
    %v2415 = vrot.slane %v2414, 2
    %2417 = vst [vmem:[#allocation2 + $0x1f] sm:$0x1] %v2415
    %v2418 = vld [vmem:[#allocation2] sm:$0xff]
    %v2419 = vld [vmem:[#allocation2 + $0x8] sm:$0xff]
    %v2420 = vld [vmem:[#allocation2 + $0x10] sm:$0xff]
    %v2421 = vld [vmem:[#allocation2 + $0x18] sm:$0xff]
    %v2422 = vld [vmem:[%s2] sm:$0xff]
    %v2423 = vld [vmem:[%s2 + $0x8] sm:$0xff]
    %v2424 = vld [vmem:[%s2 + $0x10] sm:$0xff]
    %v2425 = vld [vmem:[%s2 + $0x18] sm:$0xff]
    %v2426 = vld [vmem:[%s2 + $0x20] sm:$0xff]
    %v2427 = vld [vmem:[%s2 + $0x28] sm:$0xff]
    %v2428 = vld [vmem:[%s2 + $0x30] sm:$0xff]
    %v2429 = vld [vmem:[%s2 + $0x38] sm:$0xff]
    %v2430 = vld [vmem:[%s2 + $0x40] sm:$0xff]
    %v2431 = vld [vmem:[%s2 + $0x48] sm:$0xff]
    %v2432 = vld [vmem:[%s2 + $0x50] sm:$0xff]
    %v2433 = vld [vmem:[%s2 + $0x58] sm:$0xff]
    %v2434 = vld [vmem:[%s2 + $0x60] sm:$0xff]
    %v2435 = vld [vmem:[%s2 + $0x68] sm:$0xff]
    %v2436 = vld [vmem:[%s2 + $0x70] sm:$0xff]
    %v2437 = vld [vmem:[%s2 + $0x78] sm:$0xff]
    %v2438 = vld [vmem:[%s2 + $0x80] sm:$0xff]
    %v2439 = vld [vmem:[%s2 + $0x88] sm:$0xff]
    %v2440 = vld [vmem:[%s2 + $0x90] sm:$0xff]
    %v2441 = vld [vmem:[%s2 + $0x98] sm:$0xff]
    %v2442 = vld [vmem:[%s2 + $0xa0] sm:$0xff]
    %v2443 = vld [vmem:[%s2 + $0xa8] sm:$0xff]
    %v2444 = vld [vmem:[%s2 + $0xb0] sm:$0xff]
    %v2445 = vld [vmem:[%s2 + $0xb8] sm:$0xff]
    %v2446 = vld [vmem:[%s2 + $0xc0] sm:$0xff]
    %v2447 = vld [vmem:[%s2 + $0xc8] sm:$0xff]
    %v2448 = vld [vmem:[%s2 + $0xd0] sm:$0xff]
    %v2449 = vld [vmem:[%s2 + $0xd8] sm:$0xff]
    %v2450 = vld [vmem:[%s2 + $0xe0] sm:$0xff]
    %v2451 = vld [vmem:[%s2 + $0xe8] sm:$0xff]
    %v2452 = vld [vmem:[%s2 + $0xf0] sm:$0xff]
    %v2453 = vld [vmem:[%s2 + $0xf8] sm:$0xff]
    %v2454 = vld [vmem:[%s2 + $0x100] sm:$0xff]
    %v2455 = vld [vmem:[%s2 + $0x108] sm:$0xff]
    %v2456 = vld [vmem:[%s2 + $0x110] sm:$0xff]
    %v2457 = vld [vmem:[%s2 + $0x118] sm:$0xff]
    %v2458 = vld [vmem:[%s2 + $0x120] sm:$0xff]
    %v2459 = vld [vmem:[%s2 + $0x128] sm:$0xff]
    %v2460 = vld [vmem:[%s2 + $0x130] sm:$0xff]
    %v2461 = vld [vmem:[%s2 + $0x138] sm:$0xff]
    %v2462 = vld [vmem:[%s2 + $0x140] sm:$0xff]
    %v2463 = vld [vmem:[%s2 + $0x148] sm:$0xff]
    %v2464 = vld [vmem:[%s2 + $0x150] sm:$0xff]
    %v2465 = vld [vmem:[%s2 + $0x158] sm:$0xff]
    %v2466 = vld [vmem:[%s2 + $0x160] sm:$0xff]
    %v2467 = vld [vmem:[%s2 + $0x168] sm:$0xff]
    %v2468 = vld [vmem:[%s2 + $0x170] sm:$0xff]
    %v2469 = vld [vmem:[%s2 + $0x178] sm:$0xff]
    %v2470 = vld [vmem:[%s2 + $0x180] sm:$0xff]
    %v2471 = vld [vmem:[%s2 + $0x188] sm:$0xff]
    %v2472 = vld [vmem:[%s2 + $0x190] sm:$0xff]
    %v2473 = vld [vmem:[%s2 + $0x198] sm:$0xff]
    %v2474 = vld [vmem:[%s2 + $0x1a0] sm:$0xff]
    %v2475 = vld [vmem:[%s2 + $0x1a8] sm:$0xff]
    %v2476 = vld [vmem:[%s2 + $0x1b0] sm:$0xff]
    %v2477 = vld [vmem:[%s2 + $0x1b8] sm:$0xff]
    %v2478 = vld [vmem:[%s2 + $0x1c0] sm:$0xff]
    %v2479 = vld [vmem:[%s2 + $0x1c8] sm:$0xff]
    %v2480 = vld [vmem:[%s2 + $0x1d0] sm:$0xff]
    %v2481 = vld [vmem:[%s2 + $0x1d8] sm:$0xff]
    %v2482 = vld [vmem:[%s2 + $0x1e0] sm:$0xff]
    %v2483 = vld [vmem:[%s2 + $0x1e8] sm:$0xff]
    %v2484 = vld [vmem:[%s2 + $0x1f0] sm:$0xff]
    %v2485 = vld [vmem:[%s2 + $0x1f8] sm:$0xff]
    %v2486 = vld [vmem:[%s2 + $0x200] sm:$0xff]
    %v2487 = vld [vmem:[%s2 + $0x208] sm:$0xff]
    %v2488 = vld [vmem:[%s2 + $0x210] sm:$0xff]
    %v2489 = vld [vmem:[%s2 + $0x218] sm:$0xff]
    %v2490 = vld [vmem:[%s2 + $0x220] sm:$0xff]
    %v2491 = vld [vmem:[%s2 + $0x228] sm:$0xff]
    %v2492 = vld [vmem:[%s2 + $0x230] sm:$0xff]
    %v2493 = vld [vmem:[%s2 + $0x238] sm:$0xff]
    %v2494 = vld [vmem:[%s2 + $0x240] sm:$0xff]
    %v2495 = vld [vmem:[%s2 + $0x248] sm:$0xff]
    %v2496 = vld [vmem:[%s2 + $0x250] sm:$0xff]
    %v2497 = vld [vmem:[%s2 + $0x258] sm:$0xff]
    %v2498 = vld [vmem:[%s2 + $0x260] sm:$0xff]
    %v2499 = vld [vmem:[%s2 + $0x268] sm:$0xff]
    %v2500 = vld [vmem:[%s2 + $0x270] sm:$0xff]
    %v2501 = vld [vmem:[%s2 + $0x278] sm:$0xff]
    %v2502 = vld [vmem:[%s2 + $0x280] sm:$0xff]
    %v2503 = vld [vmem:[%s2 + $0x288] sm:$0xff]
    %v2504 = vld [vmem:[%s2 + $0x290] sm:$0xff]
    %v2505 = vld [vmem:[%s2 + $0x298] sm:$0xff]
    %v2506 = vld [vmem:[%s2 + $0x2a0] sm:$0xff]
    %v2507 = vld [vmem:[%s2 + $0x2a8] sm:$0xff]
    %v2508 = vld [vmem:[%s2 + $0x2b0] sm:$0xff]
    %v2509 = vld [vmem:[%s2 + $0x2b8] sm:$0xff]
    %v2510 = vld [vmem:[%s2 + $0x2c0] sm:$0xff]
    %v2511 = vld [vmem:[%s2 + $0x2c8] sm:$0xff]
    %v2512 = vld [vmem:[%s2 + $0x2d0] sm:$0xff]
    %v2513 = vld [vmem:[%s2 + $0x2d8] sm:$0xff]
    %v2514 = vld [vmem:[%s2 + $0x2e0] sm:$0xff]
    %v2515 = vld [vmem:[%s2 + $0x2e8] sm:$0xff]
    %v2516 = vld [vmem:[%s2 + $0x2f0] sm:$0xff]
    %v2517 = vld [vmem:[%s2 + $0x2f8] sm:$0xff]
    %v2518 = vld [vmem:[%s2 + $0x300] sm:$0xff]
    %v2519 = vld [vmem:[%s2 + $0x308] sm:$0xff]
    %v2520 = vld [vmem:[%s2 + $0x310] sm:$0xff]
    %v2521 = vld [vmem:[%s2 + $0x318] sm:$0xff]
    %v2522 = vld [vmem:[%s2 + $0x320] sm:$0xff]
    %v2523 = vld [vmem:[%s2 + $0x328] sm:$0xff]
    %v2524 = vld [vmem:[%s2 + $0x330] sm:$0xff]
    %v2525 = vld [vmem:[%s2 + $0x338] sm:$0xff]
    %v2526 = vld [vmem:[%s2 + $0x340] sm:$0xff]
    %v2527 = vld [vmem:[%s2 + $0x348] sm:$0xff]
    %v2528 = vld [vmem:[%s2 + $0x350] sm:$0xff]
    %v2529 = vld [vmem:[%s2 + $0x358] sm:$0xff]
    %v2530 = vld [vmem:[%s2 + $0x360] sm:$0xff]
    %v2531 = vld [vmem:[%s2 + $0x368] sm:$0xff]
    %v2532 = vld [vmem:[%s2 + $0x370] sm:$0xff]
    %v2533 = vld [vmem:[%s2 + $0x378] sm:$0xff]
    %v2534 = vld [vmem:[%s2 + $0x380] sm:$0xff]
    %v2535 = vld [vmem:[%s2 + $0x388] sm:$0xff]
    %v2536 = vld [vmem:[%s2 + $0x390] sm:$0xff]
    %v2537 = vld [vmem:[%s2 + $0x398] sm:$0xff]
    %v2538 = vld [vmem:[%s2 + $0x3a0] sm:$0xff]
    %v2539 = vld [vmem:[%s2 + $0x3a8] sm:$0xff]
    %v2540 = vld [vmem:[%s2 + $0x3b0] sm:$0xff]
    %v2541 = vld [vmem:[%s2 + $0x3b8] sm:$0xff]
    %v2542 = vld [vmem:[%s2 + $0x3c0] sm:$0xff]
    %v2543 = vld [vmem:[%s2 + $0x3c8] sm:$0xff]
    %v2544 = vld [vmem:[%s2 + $0x3d0] sm:$0xff]
    %v2545 = vld [vmem:[%s2 + $0x3d8] sm:$0xff]
    %v2546 = vld [vmem:[%s2 + $0x3e0] sm:$0xff]
    %v2547 = vld [vmem:[%s2 + $0x3e8] sm:$0xff]
    %v2548 = vld [vmem:[%s2 + $0x3f0] sm:$0xff]
    %v2549 = vld [vmem:[%s2 + $0x3f8] sm:$0xff]
    %v2550 = vld [vmem:[%s2 + $0x400] sm:$0xff]
    %v2551 = vld [vmem:[%s2 + $0x408] sm:$0xff]
    %v2552 = vld [vmem:[%s2 + $0x410] sm:$0xff]
    %v2553 = vld [vmem:[%s2 + $0x418] sm:$0xff]
    %v2554 = vld [vmem:[%s2 + $0x420] sm:$0xff]
    %v2555 = vld [vmem:[%s2 + $0x428] sm:$0xff]
    %v2556 = vld [vmem:[%s2 + $0x430] sm:$0xff]
    %v2557 = vld [vmem:[%s2 + $0x438] sm:$0xff]
    %v2558 = vld [vmem:[%s2 + $0x440] sm:$0xff]
    %v2559 = vld [vmem:[%s2 + $0x448] sm:$0xff]
    %v2560 = vld [vmem:[%s2 + $0x450] sm:$0xff]
    %v2561 = vld [vmem:[%s2 + $0x458] sm:$0xff]
    %v2562 = vld [vmem:[%s2 + $0x460] sm:$0xff]
    %v2563 = vld [vmem:[%s2 + $0x468] sm:$0xff]
    %v2564 = vld [vmem:[%s2 + $0x470] sm:$0xff]
    %v2565 = vld [vmem:[%s2 + $0x478] sm:$0xff]
    %v2566 = vld [vmem:[%s2 + $0x480] sm:$0xff]
    %v2567 = vld [vmem:[%s2 + $0x488] sm:$0xff]
    %v2568 = vld [vmem:[%s2 + $0x490] sm:$0xff]
    %v2569 = vld [vmem:[%s2 + $0x498] sm:$0xff]
    %v2570 = vld [vmem:[%s2 + $0x4a0] sm:$0xff]
    %v2571 = vld [vmem:[%s2 + $0x4a8] sm:$0xff]
    %v2572 = vld [vmem:[%s2 + $0x4b0] sm:$0xff]
    %v2573 = vld [vmem:[%s2 + $0x4b8] sm:$0xff]
    %v2574 = vld [vmem:[%s2 + $0x4c0] sm:$0xff]
    %v2575 = vld [vmem:[%s2 + $0x4c8] sm:$0xff]
    %v2576 = vld [vmem:[%s2 + $0x4d0] sm:$0xff]
    %v2577 = vld [vmem:[%s2 + $0x4d8] sm:$0xff]
    %v2578 = vld [vmem:[%s2 + $0x4e0] sm:$0xff]
    %v2579 = vld [vmem:[%s2 + $0x4e8] sm:$0xff]
    %v2580 = vld [vmem:[%s2 + $0x4f0] sm:$0xff]
    %v2581 = vld [vmem:[%s2 + $0x4f8] sm:$0xff]
    %v2582 = vld [vmem:[%s2 + $0x500] sm:$0xff]
    %v2583 = vld [vmem:[%s2 + $0x508] sm:$0xff]
    %v2584 = vld [vmem:[%s2 + $0x510] sm:$0xff]
    %v2585 = vld [vmem:[%s2 + $0x518] sm:$0xff]
    %v2586 = vld [vmem:[%s2 + $0x520] sm:$0xff]
    %v2587 = vld [vmem:[%s2 + $0x528] sm:$0xff]
    %v2588 = vld [vmem:[%s2 + $0x530] sm:$0xff]
    %v2589 = vld [vmem:[%s2 + $0x538] sm:$0xff]
    %v2590 = vld [vmem:[%s2 + $0x540] sm:$0xff]
    %v2591 = vld [vmem:[%s2 + $0x548] sm:$0xff]
    %v2592 = vld [vmem:[%s2 + $0x550] sm:$0xff]
    %v2593 = vld [vmem:[%s2 + $0x558] sm:$0xff]
    %v2594 = vld [vmem:[%s2 + $0x560] sm:$0xff]
    %v2595 = vld [vmem:[%s2 + $0x568] sm:$0xff]
    %v2596 = vld [vmem:[%s2 + $0x570] sm:$0xff]
    %v2597 = vld [vmem:[%s2 + $0x578] sm:$0xff]
    %v2598 = vld [vmem:[%s2 + $0x580] sm:$0xff]
    %v2599 = vld [vmem:[%s2 + $0x588] sm:$0xff]
    %v2600 = vld [vmem:[%s2 + $0x590] sm:$0xff]
    %v2601 = vld [vmem:[%s2 + $0x598] sm:$0xff]
    %v2602 = vld [vmem:[%s2 + $0x5a0] sm:$0xff]
    %v2603 = vld [vmem:[%s2 + $0x5a8] sm:$0xff]
    %v2604 = vld [vmem:[%s2 + $0x5b0] sm:$0xff]
    %v2605 = vld [vmem:[%s2 + $0x5b8] sm:$0xff]
    %v2606 = vld [vmem:[%s2 + $0x5c0] sm:$0xff]
    %v2607 = vld [vmem:[%s2 + $0x5c8] sm:$0xff]
    %v2608 = vld [vmem:[%s2 + $0x5d0] sm:$0xff]
    %v2609 = vld [vmem:[%s2 + $0x5d8] sm:$0xff]
    %v2610 = vld [vmem:[%s2 + $0x5e0] sm:$0xff]
    %v2611 = vld [vmem:[%s2 + $0x5e8] sm:$0xff]
    %v2612 = vld [vmem:[%s2 + $0x5f0] sm:$0xff]
    %v2613 = vld [vmem:[%s2 + $0x5f8] sm:$0xff]
    %v2614 = vld [vmem:[%s2 + $0x600] sm:$0xff]
    %v2615 = vld [vmem:[%s2 + $0x608] sm:$0xff]
    %v2616 = vld [vmem:[%s2 + $0x610] sm:$0xff]
    %v2617 = vld [vmem:[%s2 + $0x618] sm:$0xff]
    %v2618 = vld [vmem:[%s2 + $0x620] sm:$0xff]
    %v2619 = vld [vmem:[%s2 + $0x628] sm:$0xff]
    %v2620 = vld [vmem:[%s2 + $0x630] sm:$0xff]
    %v2621 = vld [vmem:[%s2 + $0x638] sm:$0xff]
    %v2622 = vld [vmem:[%s2 + $0x640] sm:$0xff]
    %v2623 = vld [vmem:[%s2 + $0x648] sm:$0xff]
    %v2624 = vld [vmem:[%s2 + $0x650] sm:$0xff]
    %v2625 = vld [vmem:[%s2 + $0x658] sm:$0xff]
    %v2626 = vld [vmem:[%s2 + $0x660] sm:$0xff]
    %v2627 = vld [vmem:[%s2 + $0x668] sm:$0xff]
    %v2628 = vld [vmem:[%s2 + $0x670] sm:$0xff]
    %v2629 = vld [vmem:[%s2 + $0x678] sm:$0xff]
    %v2630 = vld [vmem:[%s2 + $0x680] sm:$0xff]
    %v2631 = vld [vmem:[%s2 + $0x688] sm:$0xff]
    %v2632 = vld [vmem:[%s2 + $0x690] sm:$0xff]
    %v2633 = vld [vmem:[%s2 + $0x698] sm:$0xff]
    %v2634 = vld [vmem:[%s2 + $0x6a0] sm:$0xff]
    %v2635 = vld [vmem:[%s2 + $0x6a8] sm:$0xff]
    %v2636 = vld [vmem:[%s2 + $0x6b0] sm:$0xff]
    %v2637 = vld [vmem:[%s2 + $0x6b8] sm:$0xff]
    %v2638 = vld [vmem:[%s2 + $0x6c0] sm:$0xff]
    %v2639 = vld [vmem:[%s2 + $0x6c8] sm:$0xff]
    %v2640 = vld [vmem:[%s2 + $0x6d0] sm:$0xff]
    %v2641 = vld [vmem:[%s2 + $0x6d8] sm:$0xff]
    %v2642 = vld [vmem:[%s2 + $0x6e0] sm:$0xff]
    %v2643 = vld [vmem:[%s2 + $0x6e8] sm:$0xff]
    %v2644 = vld [vmem:[%s2 + $0x6f0] sm:$0xff]
    %v2645 = vld [vmem:[%s2 + $0x6f8] sm:$0xff]
    %v2646 = vld [vmem:[%s2 + $0x700] sm:$0xff]
    %v2647 = vld [vmem:[%s2 + $0x708] sm:$0xff]
    %v2648 = vld [vmem:[%s2 + $0x710] sm:$0xff]
    %v2649 = vld [vmem:[%s2 + $0x718] sm:$0xff]
    %v2650 = vld [vmem:[%s2 + $0x720] sm:$0xff]
    %v2651 = vld [vmem:[%s2 + $0x728] sm:$0xff]
    %v2652 = vld [vmem:[%s2 + $0x730] sm:$0xff]
    %v2653 = vld [vmem:[%s2 + $0x738] sm:$0xff]
    %v2654 = vld [vmem:[%s2 + $0x740] sm:$0xff]
    %v2655 = vld [vmem:[%s2 + $0x748] sm:$0xff]
    %v2656 = vld [vmem:[%s2 + $0x750] sm:$0xff]
    %v2657 = vld [vmem:[%s2 + $0x758] sm:$0xff]
    %v2658 = vld [vmem:[%s2 + $0x760] sm:$0xff]
    %v2659 = vld [vmem:[%s2 + $0x768] sm:$0xff]
    %v2660 = vld [vmem:[%s2 + $0x770] sm:$0xff]
    %v2661 = vld [vmem:[%s2 + $0x778] sm:$0xff]
    %v2662 = vld [vmem:[%s2 + $0x780] sm:$0xff]
    %v2663 = vld [vmem:[%s2 + $0x788] sm:$0xff]
    %v2664 = vld [vmem:[%s2 + $0x790] sm:$0xff]
    %v2665 = vld [vmem:[%s2 + $0x798] sm:$0xff]
    %v2666 = vld [vmem:[%s2 + $0x7a0] sm:$0xff]
    %v2667 = vld [vmem:[%s2 + $0x7a8] sm:$0xff]
    %v2668 = vld [vmem:[%s2 + $0x7b0] sm:$0xff]
    %v2669 = vld [vmem:[%s2 + $0x7b8] sm:$0xff]
    %v2670 = vld [vmem:[%s2 + $0x7c0] sm:$0xff]
    %v2671 = vld [vmem:[%s2 + $0x7c8] sm:$0xff]
    %v2672 = vld [vmem:[%s2 + $0x7d0] sm:$0xff]
    %v2673 = vld [vmem:[%s2 + $0x7d8] sm:$0xff]
    %v2674 = vld [vmem:[%s2 + $0x7e0] sm:$0xff]
    %v2675 = vld [vmem:[%s2 + $0x7e8] sm:$0xff]
    %v2676 = vld [vmem:[%s2 + $0x7f0] sm:$0xff]
    %v2677 = vld [vmem:[%s2 + $0x7f8] sm:$0xff]
    %v2678 = vlaneseq
    %v2679 = vshrl.u32 %v2678, 7
    %v2680 = vsub.s32 0, %v2679
    %v2681 = vrot.slane %v17, %v2680
    %v2686 = vcombine.high %v2418, %v2418
    %v2688 = vunpack.c.l.s4 1983009808
    %v2689 = vunpack.c.0.s8 %v2688
    %v2690 = vlaneseq
    %v2691 = vshrl.u32 %v2690, 7
    %v2692 = vsub.s32 %v2689, %v2691
    %v2693 = vrot.slane %v2418, %v2692
    %v2695 = vunpack.c.l.s4 1983009808
    %v2696 = vunpack.c.0.s8 %v2695
    %v2697 = vlaneseq
    %v2698 = vshrl.u32 %v2697, 7
    %v2699 = vsub.s32 %v2696, %v2698
    %v2700 = vrot.slane %v2686, %v2699
    %v2701 = vcombine.high %v2693, %v2693
    %v2702 = vcombine.high %v2700, %v2700
    %v2703 = vcombine.high %v2419, %v2419
    %v2705 = vunpack.c.l.s4 1983009808
    %v2706 = vunpack.c.0.s8 %v2705
    %v2707 = vlaneseq
    %v2708 = vshrl.u32 %v2707, 7
    %v2709 = vsub.s32 %v2706, %v2708
    %v2710 = vrot.slane %v2419, %v2709
    %v2712 = vunpack.c.l.s4 1983009808
    %v2713 = vunpack.c.0.s8 %v2712
    %v2714 = vlaneseq
    %v2715 = vshrl.u32 %v2714, 7
    %v2716 = vsub.s32 %v2713, %v2715
    %v2717 = vrot.slane %v2703, %v2716
    %v2718 = vcombine.high %v2710, %v2710
    %v2719 = vcombine.high %v2717, %v2717
    %v2720 = vcombine.high %v2420, %v2420
    %v2722 = vunpack.c.l.s4 1983009808
    %v2723 = vunpack.c.0.s8 %v2722
    %v2724 = vlaneseq
    %v2725 = vshrl.u32 %v2724, 7
    %v2726 = vsub.s32 %v2723, %v2725
    %v2727 = vrot.slane %v2420, %v2726
    %v2729 = vunpack.c.l.s4 1983009808
    %v2730 = vunpack.c.0.s8 %v2729
    %v2731 = vlaneseq
    %v2732 = vshrl.u32 %v2731, 7
    %v2733 = vsub.s32 %v2730, %v2732
    %v2734 = vrot.slane %v2720, %v2733
    %v2735 = vcombine.high %v2727, %v2727
    %v2736 = vcombine.high %v2734, %v2734
    %v2737 = vcombine.high %v2421, %v2421
    %v2739 = vunpack.c.l.s4 1983009808
    %v2740 = vunpack.c.0.s8 %v2739
    %v2741 = vlaneseq
    %v2742 = vshrl.u32 %v2741, 7
    %v2743 = vsub.s32 %v2740, %v2742
    %v2744 = vrot.slane %v2421, %v2743
    %v2746 = vunpack.c.l.s4 1983009808
    %v2747 = vunpack.c.0.s8 %v2746
    %v2748 = vlaneseq
    %v2749 = vshrl.u32 %v2748, 7
    %v2750 = vsub.s32 %v2747, %v2749
    %v2751 = vrot.slane %v2737, %v2750
    %v2752 = vcombine.high %v2744, %v2744
    %v2753 = vcombine.high %v2751, %v2751
    %2770 = vmatprep.subr.mxu0 0.0
    %v2771 = vand.u32 %v2422, 4294901760
    %2772 = vmatpush1.msra.mxu0 %v2771
    %2773 = vmatprep.subr.mxu0 0.0
    %v2774 = vand.u32 %v2423, 4294901760
    %2775 = vmatpush1.msra.mxu0 %v2774
    %2776 = vmatprep.subr.mxu0 0.0
    %v2777 = vand.u32 %v2424, 4294901760
    %2778 = vmatpush1.msra.mxu0 %v2777
    %2779 = vmatprep.subr.mxu0 0.0
    %v2780 = vand.u32 %v2425, 4294901760
    %2781 = vmatpush1.msra.mxu0 %v2780
    %2782 = vmatprep.subr.mxu0 0.0
    %v2783 = vand.u32 %v2426, 4294901760
    %2784 = vmatpush1.msra.mxu0 %v2783
    %2785 = vmatprep.subr.mxu0 0.0
    %v2786 = vand.u32 %v2427, 4294901760
    %2787 = vmatpush1.msra.mxu0 %v2786
    %2788 = vmatprep.subr.mxu0 0.0
    %v2789 = vand.u32 %v2428, 4294901760
    %2790 = vmatpush1.msra.mxu0 %v2789
    %2791 = vmatprep.subr.mxu0 0.0
    %v2792 = vand.u32 %v2429, 4294901760
    %2793 = vmatpush1.msra.mxu0 %v2792
    %2794 = vmatprep.subr.mxu0 0.0
    %v2795 = vand.u32 %v2430, 4294901760
    %2796 = vmatpush1.msra.mxu0 %v2795
    %2797 = vmatprep.subr.mxu0 0.0
    %v2798 = vand.u32 %v2431, 4294901760
    %2799 = vmatpush1.msra.mxu0 %v2798
    %2800 = vmatprep.subr.mxu0 0.0
    %v2801 = vand.u32 %v2432, 4294901760
    %2802 = vmatpush1.msra.mxu0 %v2801
    %2803 = vmatprep.subr.mxu0 0.0
    %v2804 = vand.u32 %v2433, 4294901760
    %2805 = vmatpush1.msra.mxu0 %v2804
    %2806 = vmatprep.subr.mxu0 0.0
    %v2807 = vand.u32 %v2434, 4294901760
    %2808 = vmatpush1.msra.mxu0 %v2807
    %2809 = vmatprep.subr.mxu0 0.0
    %v2810 = vand.u32 %v2435, 4294901760
    %2811 = vmatpush1.msra.mxu0 %v2810
    %2812 = vmatprep.subr.mxu0 0.0
    %v2813 = vand.u32 %v2436, 4294901760
    %2814 = vmatpush1.msra.mxu0 %v2813
    %2815 = vmatprep.subr.mxu0 0.0
    %v2816 = vand.u32 %v2437, 4294901760
    %2817 = vmatpush1.msra.mxu0 %v2816
    %2818 = vmatprep.subr.mxu0 0.0
    %v2819 = vand.u32 %v2438, 4294901760
    %2820 = vmatpush1.msra.mxu0 %v2819
    %2821 = vmatprep.subr.mxu0 0.0
    %v2822 = vand.u32 %v2439, 4294901760
    %2823 = vmatpush1.msra.mxu0 %v2822
    %2824 = vmatprep.subr.mxu0 0.0
    %v2825 = vand.u32 %v2440, 4294901760
    %2826 = vmatpush1.msra.mxu0 %v2825
    %2827 = vmatprep.subr.mxu0 0.0
    %v2828 = vand.u32 %v2441, 4294901760
    %2829 = vmatpush1.msra.mxu0 %v2828
    %2830 = vmatprep.subr.mxu0 0.0
    %v2831 = vand.u32 %v2442, 4294901760
    %2832 = vmatpush1.msra.mxu0 %v2831
    %2833 = vmatprep.subr.mxu0 0.0
    %v2834 = vand.u32 %v2443, 4294901760
    %2835 = vmatpush1.msra.mxu0 %v2834
    %2836 = vmatprep.subr.mxu0 0.0
    %v2837 = vand.u32 %v2444, 4294901760
    %2838 = vmatpush1.msra.mxu0 %v2837
    %2839 = vmatprep.subr.mxu0 0.0
    %v2840 = vand.u32 %v2445, 4294901760
    %2841 = vmatpush1.msra.mxu0 %v2840
    %2842 = vmatprep.subr.mxu0 0.0
    %v2843 = vand.u32 %v2446, 4294901760
    %2844 = vmatpush1.msra.mxu0 %v2843
    %2845 = vmatprep.subr.mxu0 0.0
    %v2846 = vand.u32 %v2447, 4294901760
    %2847 = vmatpush1.msra.mxu0 %v2846
    %2848 = vmatprep.subr.mxu0 0.0
    %v2849 = vand.u32 %v2448, 4294901760
    %2850 = vmatpush1.msra.mxu0 %v2849
    %2851 = vmatprep.subr.mxu0 0.0
    %v2852 = vand.u32 %v2449, 4294901760
    %2853 = vmatpush1.msra.mxu0 %v2852
    %2854 = vmatprep.subr.mxu0 0.0
    %v2855 = vand.u32 %v2450, 4294901760
    %2856 = vmatpush1.msra.mxu0 %v2855
    %2857 = vmatprep.subr.mxu0 0.0
    %v2858 = vand.u32 %v2451, 4294901760
    %2859 = vmatpush1.msra.mxu0 %v2858
    %2860 = vmatprep.subr.mxu0 0.0
    %v2861 = vand.u32 %v2452, 4294901760
    %2862 = vmatpush1.msra.mxu0 %v2861
    %2863 = vmatprep.subr.mxu0 0.0
    %v2864 = vand.u32 %v2453, 4294901760
    %2865 = vmatpush1.msra.mxu0 %v2864
    %v2866 = vand.u32 %v2701, 4294901760
    %v2867 = vsub.f32 %v2701, %v2866
    %v2868 = vand.u32 %v2867, 4294901760
    %v2869 = vsub.f32 %v2867, %v2868
    %v2870 = vand.u32 %v2869, 4294901760
    %2871 = vmatprep.mubr.f32.mxu0 %v2870
    %v2872 = vand.u32 %v2693, 4294901760
    %v2873 = vsub.f32 %v2693, %v2872
    %v2874 = vand.u32 %v2873, 4294901760
    %v2875 = vsub.f32 %v2873, %v2874
    %v2876 = vand.u32 %v2875, 4294901760
    %2877 = vmatmul.mubr.f32.gmra.mrb[0].mxu0 %v2876
    %v2878 = vpop.f32.mrb[0].mxu0
    %v2879 = vadd.f32 %v2681, %v2878
    %v2880 = vpop.f32.mrb[0].mxu0
    %2881 = vdwg.mxu0
    %2882 = vmatprep.subr.mxu0 0.0
    %v2883 = vand.u32 %v2422, 4294901760
    %v2884 = vsub.f32 %v2422, %v2883
    %v2885 = vand.u32 %v2884, 4294901760
    %v2886 = vsub.f32 %v2884, %v2885
    %v2887 = vand.u32 %v2886, 4294901760
    %2888 = vmatpush1.msra.mxu0 %v2887
    %2889 = vmatprep.subr.mxu0 0.0
    %v2890 = vand.u32 %v2423, 4294901760
    %v2891 = vsub.f32 %v2423, %v2890
    %v2892 = vand.u32 %v2891, 4294901760
    %v2893 = vsub.f32 %v2891, %v2892
    %v2894 = vand.u32 %v2893, 4294901760
    %2895 = vmatpush1.msra.mxu0 %v2894
    %2896 = vmatprep.subr.mxu0 0.0
    %v2897 = vand.u32 %v2424, 4294901760
    %v2898 = vsub.f32 %v2424, %v2897
    %v2899 = vand.u32 %v2898, 4294901760
    %v2900 = vsub.f32 %v2898, %v2899
    %v2901 = vand.u32 %v2900, 4294901760
    %2902 = vmatpush1.msra.mxu0 %v2901
    %2903 = vmatprep.subr.mxu0 0.0
    %v2904 = vand.u32 %v2425, 4294901760
    %v2905 = vsub.f32 %v2425, %v2904
    %v2906 = vand.u32 %v2905, 4294901760
    %v2907 = vsub.f32 %v2905, %v2906
    %v2908 = vand.u32 %v2907, 4294901760
    %2909 = vmatpush1.msra.mxu0 %v2908
    %2910 = vmatprep.subr.mxu0 0.0
    %v2911 = vand.u32 %v2426, 4294901760
    %v2912 = vsub.f32 %v2426, %v2911
    %v2913 = vand.u32 %v2912, 4294901760
    %v2914 = vsub.f32 %v2912, %v2913
    %v2915 = vand.u32 %v2914, 4294901760
    %2916 = vmatpush1.msra.mxu0 %v2915
    %2917 = vmatprep.subr.mxu0 0.0
    %v2918 = vand.u32 %v2427, 4294901760
    %v2919 = vsub.f32 %v2427, %v2918
    %v2920 = vand.u32 %v2919, 4294901760
    %v2921 = vsub.f32 %v2919, %v2920
    %v2922 = vand.u32 %v2921, 4294901760
    %2923 = vmatpush1.msra.mxu0 %v2922
    %2924 = vmatprep.subr.mxu0 0.0
    %v2925 = vand.u32 %v2428, 4294901760
    %v2926 = vsub.f32 %v2428, %v2925
    %v2927 = vand.u32 %v2926, 4294901760
    %v2928 = vsub.f32 %v2926, %v2927
    %v2929 = vand.u32 %v2928, 4294901760
    %2930 = vmatpush1.msra.mxu0 %v2929
    %2931 = vmatprep.subr.mxu0 0.0
    %v2932 = vand.u32 %v2429, 4294901760
    %v2933 = vsub.f32 %v2429, %v2932
    %v2934 = vand.u32 %v2933, 4294901760
    %v2935 = vsub.f32 %v2933, %v2934
    %v2936 = vand.u32 %v2935, 4294901760
    %2937 = vmatpush1.msra.mxu0 %v2936
    %2938 = vmatprep.subr.mxu0 0.0
    %v2939 = vand.u32 %v2430, 4294901760
    %v2940 = vsub.f32 %v2430, %v2939
    %v2941 = vand.u32 %v2940, 4294901760
    %v2942 = vsub.f32 %v2940, %v2941
    %v2943 = vand.u32 %v2942, 4294901760
    %2944 = vmatpush1.msra.mxu0 %v2943
    %2945 = vmatprep.subr.mxu0 0.0
    %v2946 = vand.u32 %v2431, 4294901760
    %v2947 = vsub.f32 %v2431, %v2946
    %v2948 = vand.u32 %v2947, 4294901760
    %v2949 = vsub.f32 %v2947, %v2948
    %v2950 = vand.u32 %v2949, 4294901760
    %2951 = vmatpush1.msra.mxu0 %v2950
    %2952 = vmatprep.subr.mxu0 0.0
    %v2953 = vand.u32 %v2432, 4294901760
    %v2954 = vsub.f32 %v2432, %v2953
    %v2955 = vand.u32 %v2954, 4294901760
    %v2956 = vsub.f32 %v2954, %v2955
    %v2957 = vand.u32 %v2956, 4294901760
    %2958 = vmatpush1.msra.mxu0 %v2957
    %2959 = vmatprep.subr.mxu0 0.0
    %v2960 = vand.u32 %v2433, 4294901760
    %v2961 = vsub.f32 %v2433, %v2960
    %v2962 = vand.u32 %v2961, 4294901760
    %v2963 = vsub.f32 %v2961, %v2962
    %v2964 = vand.u32 %v2963, 4294901760
    %2965 = vmatpush1.msra.mxu0 %v2964
    %2966 = vmatprep.subr.mxu0 0.0
    %v2967 = vand.u32 %v2434, 4294901760
    %v2968 = vsub.f32 %v2434, %v2967
    %v2969 = vand.u32 %v2968, 4294901760
    %v2970 = vsub.f32 %v2968, %v2969
    %v2971 = vand.u32 %v2970, 4294901760
    %2972 = vmatpush1.msra.mxu0 %v2971
    %2973 = vmatprep.subr.mxu0 0.0
    %v2974 = vand.u32 %v2435, 4294901760
    %v2975 = vsub.f32 %v2435, %v2974
    %v2976 = vand.u32 %v2975, 4294901760
    %v2977 = vsub.f32 %v2975, %v2976
    %v2978 = vand.u32 %v2977, 4294901760
    %2979 = vmatpush1.msra.mxu0 %v2978
    %2980 = vmatprep.subr.mxu0 0.0
    %v2981 = vand.u32 %v2436, 4294901760
    %v2982 = vsub.f32 %v2436, %v2981
    %v2983 = vand.u32 %v2982, 4294901760
    %v2984 = vsub.f32 %v2982, %v2983
    %v2985 = vand.u32 %v2984, 4294901760
    %2986 = vmatpush1.msra.mxu0 %v2985
    %2987 = vmatprep.subr.mxu0 0.0
    %v2988 = vand.u32 %v2437, 4294901760
    %v2989 = vsub.f32 %v2437, %v2988
    %v2990 = vand.u32 %v2989, 4294901760
    %v2991 = vsub.f32 %v2989, %v2990
    %v2992 = vand.u32 %v2991, 4294901760
    %2993 = vmatpush1.msra.mxu0 %v2992
    %2994 = vmatprep.subr.mxu0 0.0
    %v2995 = vand.u32 %v2438, 4294901760
    %v2996 = vsub.f32 %v2438, %v2995
    %v2997 = vand.u32 %v2996, 4294901760
    %v2998 = vsub.f32 %v2996, %v2997
    %v2999 = vand.u32 %v2998, 4294901760
    %3000 = vmatpush1.msra.mxu0 %v2999
    %3001 = vmatprep.subr.mxu0 0.0
    %v3002 = vand.u32 %v2439, 4294901760
    %v3003 = vsub.f32 %v2439, %v3002
    %v3004 = vand.u32 %v3003, 4294901760
    %v3005 = vsub.f32 %v3003, %v3004
    %v3006 = vand.u32 %v3005, 4294901760
    %3007 = vmatpush1.msra.mxu0 %v3006
    %3008 = vmatprep.subr.mxu0 0.0
    %v3009 = vand.u32 %v2440, 4294901760
    %v3010 = vsub.f32 %v2440, %v3009
    %v3011 = vand.u32 %v3010, 4294901760
    %v3012 = vsub.f32 %v3010, %v3011
    %v3013 = vand.u32 %v3012, 4294901760
    %3014 = vmatpush1.msra.mxu0 %v3013
    %3015 = vmatprep.subr.mxu0 0.0
    %v3016 = vand.u32 %v2441, 4294901760
    %v3017 = vsub.f32 %v2441, %v3016
    %v3018 = vand.u32 %v3017, 4294901760
    %v3019 = vsub.f32 %v3017, %v3018
    %v3020 = vand.u32 %v3019, 4294901760
    %3021 = vmatpush1.msra.mxu0 %v3020
    %3022 = vmatprep.subr.mxu0 0.0
    %v3023 = vand.u32 %v2442, 4294901760
    %v3024 = vsub.f32 %v2442, %v3023
    %v3025 = vand.u32 %v3024, 4294901760
    %v3026 = vsub.f32 %v3024, %v3025
    %v3027 = vand.u32 %v3026, 4294901760
    %3028 = vmatpush1.msra.mxu0 %v3027
    %3029 = vmatprep.subr.mxu0 0.0
    %v3030 = vand.u32 %v2443, 4294901760
    %v3031 = vsub.f32 %v2443, %v3030
    %v3032 = vand.u32 %v3031, 4294901760
    %v3033 = vsub.f32 %v3031, %v3032
    %v3034 = vand.u32 %v3033, 4294901760
    %3035 = vmatpush1.msra.mxu0 %v3034
    %3036 = vmatprep.subr.mxu0 0.0
    %v3037 = vand.u32 %v2444, 4294901760
    %v3038 = vsub.f32 %v2444, %v3037
    %v3039 = vand.u32 %v3038, 4294901760
    %v3040 = vsub.f32 %v3038, %v3039
    %v3041 = vand.u32 %v3040, 4294901760
    %3042 = vmatpush1.msra.mxu0 %v3041
    %3043 = vmatprep.subr.mxu0 0.0
    %v3044 = vand.u32 %v2445, 4294901760
    %v3045 = vsub.f32 %v2445, %v3044
    %v3046 = vand.u32 %v3045, 4294901760
    %v3047 = vsub.f32 %v3045, %v3046
    %v3048 = vand.u32 %v3047, 4294901760
    %3049 = vmatpush1.msra.mxu0 %v3048
    %3050 = vmatprep.subr.mxu0 0.0
    %v3051 = vand.u32 %v2446, 4294901760
    %v3052 = vsub.f32 %v2446, %v3051
    %v3053 = vand.u32 %v3052, 4294901760
    %v3054 = vsub.f32 %v3052, %v3053
    %v3055 = vand.u32 %v3054, 4294901760
    %3056 = vmatpush1.msra.mxu0 %v3055
    %3057 = vmatprep.subr.mxu0 0.0
    %v3058 = vand.u32 %v2447, 4294901760
    %v3059 = vsub.f32 %v2447, %v3058
    %v3060 = vand.u32 %v3059, 4294901760
    %v3061 = vsub.f32 %v3059, %v3060
    %v3062 = vand.u32 %v3061, 4294901760
    %3063 = vmatpush1.msra.mxu0 %v3062
    %3064 = vmatprep.subr.mxu0 0.0
    %v3065 = vand.u32 %v2448, 4294901760
    %v3066 = vsub.f32 %v2448, %v3065
    %v3067 = vand.u32 %v3066, 4294901760
    %v3068 = vsub.f32 %v3066, %v3067
    %v3069 = vand.u32 %v3068, 4294901760
    %3070 = vmatpush1.msra.mxu0 %v3069
    %3071 = vmatprep.subr.mxu0 0.0
    %v3072 = vand.u32 %v2449, 4294901760
    %v3073 = vsub.f32 %v2449, %v3072
    %v3074 = vand.u32 %v3073, 4294901760
    %v3075 = vsub.f32 %v3073, %v3074
    %v3076 = vand.u32 %v3075, 4294901760
    %3077 = vmatpush1.msra.mxu0 %v3076
    %3078 = vmatprep.subr.mxu0 0.0
    %v3079 = vand.u32 %v2450, 4294901760
    %v3080 = vsub.f32 %v2450, %v3079
    %v3081 = vand.u32 %v3080, 4294901760
    %v3082 = vsub.f32 %v3080, %v3081
    %v3083 = vand.u32 %v3082, 4294901760
    %3084 = vmatpush1.msra.mxu0 %v3083
    %3085 = vmatprep.subr.mxu0 0.0
    %v3086 = vand.u32 %v2451, 4294901760
    %v3087 = vsub.f32 %v2451, %v3086
    %v3088 = vand.u32 %v3087, 4294901760
    %v3089 = vsub.f32 %v3087, %v3088
    %v3090 = vand.u32 %v3089, 4294901760
    %3091 = vmatpush1.msra.mxu0 %v3090
    %3092 = vmatprep.subr.mxu0 0.0
    %v3093 = vand.u32 %v2452, 4294901760
    %v3094 = vsub.f32 %v2452, %v3093
    %v3095 = vand.u32 %v3094, 4294901760
    %v3096 = vsub.f32 %v3094, %v3095
    %v3097 = vand.u32 %v3096, 4294901760
    %3098 = vmatpush1.msra.mxu0 %v3097
    %3099 = vmatprep.subr.mxu0 0.0
    %v3100 = vand.u32 %v2453, 4294901760
    %v3101 = vsub.f32 %v2453, %v3100
    %v3102 = vand.u32 %v3101, 4294901760
    %v3103 = vsub.f32 %v3101, %v3102
    %v3104 = vand.u32 %v3103, 4294901760
    %3105 = vmatpush1.msra.mxu0 %v3104
    %v3106 = vand.u32 %v2701, 4294901760
    %3107 = vmatprep.mubr.f32.mxu0 %v3106
    %v3108 = vand.u32 %v2693, 4294901760
    %3109 = vmatmul.mubr.f32.gmra.mrb[0].mxu0 %v3108
    %v3110 = vpop.f32.mrb[0].mxu0
    %v3111 = vadd.f32 %v2879, %v3110
    %v3112 = vpop.f32.mrb[0].mxu0
    %3113 = vdwg.mxu0
    %3114 = vmatprep.subr.mxu0 0.0
    %v3115 = vand.u32 %v2422, 4294901760
    %v3116 = vsub.f32 %v2422, %v3115
    %3117 = vmatpush1.msra.mxu0 %v3116
    %3118 = vmatprep.subr.mxu0 0.0
    %v3119 = vand.u32 %v2423, 4294901760
    %v3120 = vsub.f32 %v2423, %v3119
    %3121 = vmatpush1.msra.mxu0 %v3120
    %3122 = vmatprep.subr.mxu0 0.0
    %v3123 = vand.u32 %v2424, 4294901760
    %v3124 = vsub.f32 %v2424, %v3123
    %3125 = vmatpush1.msra.mxu0 %v3124
    %3126 = vmatprep.subr.mxu0 0.0
    %v3127 = vand.u32 %v2425, 4294901760
    %v3128 = vsub.f32 %v2425, %v3127
    %3129 = vmatpush1.msra.mxu0 %v3128
    %3130 = vmatprep.subr.mxu0 0.0
    %v3131 = vand.u32 %v2426, 4294901760
    %v3132 = vsub.f32 %v2426, %v3131
    %3133 = vmatpush1.msra.mxu0 %v3132
    %3134 = vmatprep.subr.mxu0 0.0
    %v3135 = vand.u32 %v2427, 4294901760
    %v3136 = vsub.f32 %v2427, %v3135
    %3137 = vmatpush1.msra.mxu0 %v3136
    %3138 = vmatprep.subr.mxu0 0.0
    %v3139 = vand.u32 %v2428, 4294901760
    %v3140 = vsub.f32 %v2428, %v3139
    %3141 = vmatpush1.msra.mxu0 %v3140
    %3142 = vmatprep.subr.mxu0 0.0
    %v3143 = vand.u32 %v2429, 4294901760
    %v3144 = vsub.f32 %v2429, %v3143
    %3145 = vmatpush1.msra.mxu0 %v3144
    %3146 = vmatprep.subr.mxu0 0.0
    %v3147 = vand.u32 %v2430, 4294901760
    %v3148 = vsub.f32 %v2430, %v3147
    %3149 = vmatpush1.msra.mxu0 %v3148
    %3150 = vmatprep.subr.mxu0 0.0
    %v3151 = vand.u32 %v2431, 4294901760
    %v3152 = vsub.f32 %v2431, %v3151
    %3153 = vmatpush1.msra.mxu0 %v3152
    %3154 = vmatprep.subr.mxu0 0.0
    %v3155 = vand.u32 %v2432, 4294901760
    %v3156 = vsub.f32 %v2432, %v3155
    %3157 = vmatpush1.msra.mxu0 %v3156
    %3158 = vmatprep.subr.mxu0 0.0
    %v3159 = vand.u32 %v2433, 4294901760
    %v3160 = vsub.f32 %v2433, %v3159
    %3161 = vmatpush1.msra.mxu0 %v3160
    %3162 = vmatprep.subr.mxu0 0.0
    %v3163 = vand.u32 %v2434, 4294901760
    %v3164 = vsub.f32 %v2434, %v3163
    %3165 = vmatpush1.msra.mxu0 %v3164
    %3166 = vmatprep.subr.mxu0 0.0
    %v3167 = vand.u32 %v2435, 4294901760
    %v3168 = vsub.f32 %v2435, %v3167
    %3169 = vmatpush1.msra.mxu0 %v3168
    %3170 = vmatprep.subr.mxu0 0.0
    %v3171 = vand.u32 %v2436, 4294901760
    %v3172 = vsub.f32 %v2436, %v3171
    %3173 = vmatpush1.msra.mxu0 %v3172
    %3174 = vmatprep.subr.mxu0 0.0
    %v3175 = vand.u32 %v2437, 4294901760
    %v3176 = vsub.f32 %v2437, %v3175
    %3177 = vmatpush1.msra.mxu0 %v3176
    %3178 = vmatprep.subr.mxu0 0.0
    %v3179 = vand.u32 %v2438, 4294901760
    %v3180 = vsub.f32 %v2438, %v3179
    %3181 = vmatpush1.msra.mxu0 %v3180
    %3182 = vmatprep.subr.mxu0 0.0
    %v3183 = vand.u32 %v2439, 4294901760
    %v3184 = vsub.f32 %v2439, %v3183
    %3185 = vmatpush1.msra.mxu0 %v3184
    %3186 = vmatprep.subr.mxu0 0.0
    %v3187 = vand.u32 %v2440, 4294901760
    %v3188 = vsub.f32 %v2440, %v3187
    %3189 = vmatpush1.msra.mxu0 %v3188
    %3190 = vmatprep.subr.mxu0 0.0
    %v3191 = vand.u32 %v2441, 4294901760
    %v3192 = vsub.f32 %v2441, %v3191
    %3193 = vmatpush1.msra.mxu0 %v3192
    %3194 = vmatprep.subr.mxu0 0.0
    %v3195 = vand.u32 %v2442, 4294901760
    %v3196 = vsub.f32 %v2442, %v3195
    %3197 = vmatpush1.msra.mxu0 %v3196
    %3198 = vmatprep.subr.mxu0 0.0
    %v3199 = vand.u32 %v2443, 4294901760
    %v3200 = vsub.f32 %v2443, %v3199
    %3201 = vmatpush1.msra.mxu0 %v3200
    %3202 = vmatprep.subr.mxu0 0.0
    %v3203 = vand.u32 %v2444, 4294901760
    %v3204 = vsub.f32 %v2444, %v3203
    %3205 = vmatpush1.msra.mxu0 %v3204
    %3206 = vmatprep.subr.mxu0 0.0
    %v3207 = vand.u32 %v2445, 4294901760
    %v3208 = vsub.f32 %v2445, %v3207
    %3209 = vmatpush1.msra.mxu0 %v3208
    %3210 = vmatprep.subr.mxu0 0.0
    %v3211 = vand.u32 %v2446, 4294901760
    %v3212 = vsub.f32 %v2446, %v3211
    %3213 = vmatpush1.msra.mxu0 %v3212
    %3214 = vmatprep.subr.mxu0 0.0
    %v3215 = vand.u32 %v2447, 4294901760
    %v3216 = vsub.f32 %v2447, %v3215
    %3217 = vmatpush1.msra.mxu0 %v3216
    %3218 = vmatprep.subr.mxu0 0.0
    %v3219 = vand.u32 %v2448, 4294901760
    %v3220 = vsub.f32 %v2448, %v3219
    %3221 = vmatpush1.msra.mxu0 %v3220
    %3222 = vmatprep.subr.mxu0 0.0
    %v3223 = vand.u32 %v2449, 4294901760
    %v3224 = vsub.f32 %v2449, %v3223
    %3225 = vmatpush1.msra.mxu0 %v3224
    %3226 = vmatprep.subr.mxu0 0.0
    %v3227 = vand.u32 %v2450, 4294901760
    %v3228 = vsub.f32 %v2450, %v3227
    %3229 = vmatpush1.msra.mxu0 %v3228
    %3230 = vmatprep.subr.mxu0 0.0
    %v3231 = vand.u32 %v2451, 4294901760
    %v3232 = vsub.f32 %v2451, %v3231
    %3233 = vmatpush1.msra.mxu0 %v3232
    %3234 = vmatprep.subr.mxu0 0.0
    %v3235 = vand.u32 %v2452, 4294901760
    %v3236 = vsub.f32 %v2452, %v3235
    %3237 = vmatpush1.msra.mxu0 %v3236
    %3238 = vmatprep.subr.mxu0 0.0
    %v3239 = vand.u32 %v2453, 4294901760
    %v3240 = vsub.f32 %v2453, %v3239
    %3241 = vmatpush1.msra.mxu0 %v3240
    %v3242 = vand.u32 %v2701, 4294901760
    %v3243 = vsub.f32 %v2701, %v3242
    %3244 = vmatprep.mubr.f32.mxu0 %v3243
    %v3245 = vand.u32 %v2693, 4294901760
    %v3246 = vsub.f32 %v2693, %v3245
    %3247 = vmatmul.mubr.f32.gmra.mrb[0].mxu0 %v3246
    %v3248 = vpop.f32.mrb[0].mxu0
    %v3249 = vadd.f32 %v3111, %v3248
    %v3250 = vpop.f32.mrb[0].mxu0
    %3251 = vdwg.mxu0
    %3252 = vmatprep.subr.mxu0 0.0
    %v3253 = vand.u32 %v2422, 4294901760
    %3254 = vmatpush1.msra.mxu0 %v3253
    %3255 = vmatprep.subr.mxu0 0.0
    %v3256 = vand.u32 %v2423, 4294901760
    %3257 = vmatpush1.msra.mxu0 %v3256
    %3258 = vmatprep.subr.mxu0 0.0
    %v3259 = vand.u32 %v2424, 4294901760
    %3260 = vmatpush1.msra.mxu0 %v3259
    %3261 = vmatprep.subr.mxu0 0.0
    %v3262 = vand.u32 %v2425, 4294901760
    %3263 = vmatpush1.msra.mxu0 %v3262
    %3264 = vmatprep.subr.mxu0 0.0
    %v3265 = vand.u32 %v2426, 4294901760
    %3266 = vmatpush1.msra.mxu0 %v3265
    %3267 = vmatprep.subr.mxu0 0.0
    %v3268 = vand.u32 %v2427, 4294901760
    %3269 = vmatpush1.msra.mxu0 %v3268
    %3270 = vmatprep.subr.mxu0 0.0
    %v3271 = vand.u32 %v2428, 4294901760
    %3272 = vmatpush1.msra.mxu0 %v3271
    %3273 = vmatprep.subr.mxu0 0.0
    %v3274 = vand.u32 %v2429, 4294901760
    %3275 = vmatpush1.msra.mxu0 %v3274
    %3276 = vmatprep.subr.mxu0 0.0
    %v3277 = vand.u32 %v2430, 4294901760
    %3278 = vmatpush1.msra.mxu0 %v3277
    %3279 = vmatprep.subr.mxu0 0.0
    %v3280 = vand.u32 %v2431, 4294901760
    %3281 = vmatpush1.msra.mxu0 %v3280
    %3282 = vmatprep.subr.mxu0 0.0
    %v3283 = vand.u32 %v2432, 4294901760
    %3284 = vmatpush1.msra.mxu0 %v3283
    %3285 = vmatprep.subr.mxu0 0.0
    %v3286 = vand.u32 %v2433, 4294901760
    %3287 = vmatpush1.msra.mxu0 %v3286
    %3288 = vmatprep.subr.mxu0 0.0
    %v3289 = vand.u32 %v2434, 4294901760
    %3290 = vmatpush1.msra.mxu0 %v3289
    %3291 = vmatprep.subr.mxu0 0.0
    %v3292 = vand.u32 %v2435, 4294901760
    %3293 = vmatpush1.msra.mxu0 %v3292
    %3294 = vmatprep.subr.mxu0 0.0
    %v3295 = vand.u32 %v2436, 4294901760
    %3296 = vmatpush1.msra.mxu0 %v3295
    %3297 = vmatprep.subr.mxu0 0.0
    %v3298 = vand.u32 %v2437, 4294901760
    %3299 = vmatpush1.msra.mxu0 %v3298
    %3300 = vmatprep.subr.mxu0 0.0
    %v3301 = vand.u32 %v2438, 4294901760
    %3302 = vmatpush1.msra.mxu0 %v3301
    %3303 = vmatprep.subr.mxu0 0.0
    %v3304 = vand.u32 %v2439, 4294901760
    %3305 = vmatpush1.msra.mxu0 %v3304
    %3306 = vmatprep.subr.mxu0 0.0
    %v3307 = vand.u32 %v2440, 4294901760
    %3308 = vmatpush1.msra.mxu0 %v3307
    %3309 = vmatprep.subr.mxu0 0.0
    %v3310 = vand.u32 %v2441, 4294901760
    %3311 = vmatpush1.msra.mxu0 %v3310
    %3312 = vmatprep.subr.mxu0 0.0
    %v3313 = vand.u32 %v2442, 4294901760
    %3314 = vmatpush1.msra.mxu0 %v3313
    %3315 = vmatprep.subr.mxu0 0.0
    %v3316 = vand.u32 %v2443, 4294901760
    %3317 = vmatpush1.msra.mxu0 %v3316
    %3318 = vmatprep.subr.mxu0 0.0
    %v3319 = vand.u32 %v2444, 4294901760
    %3320 = vmatpush1.msra.mxu0 %v3319
    %3321 = vmatprep.subr.mxu0 0.0
    %v3322 = vand.u32 %v2445, 4294901760
    %3323 = vmatpush1.msra.mxu0 %v3322
    %3324 = vmatprep.subr.mxu0 0.0
    %v3325 = vand.u32 %v2446, 4294901760
    %3326 = vmatpush1.msra.mxu0 %v3325
    %3327 = vmatprep.subr.mxu0 0.0
    %v3328 = vand.u32 %v2447, 4294901760
    %3329 = vmatpush1.msra.mxu0 %v3328
    %3330 = vmatprep.subr.mxu0 0.0
    %v3331 = vand.u32 %v2448, 4294901760
    %3332 = vmatpush1.msra.mxu0 %v3331
    %3333 = vmatprep.subr.mxu0 0.0
    %v3334 = vand.u32 %v2449, 4294901760
    %3335 = vmatpush1.msra.mxu0 %v3334
    %3336 = vmatprep.subr.mxu0 0.0
    %v3337 = vand.u32 %v2450, 4294901760
    %3338 = vmatpush1.msra.mxu0 %v3337
    %3339 = vmatprep.subr.mxu0 0.0
    %v3340 = vand.u32 %v2451, 4294901760
    %3341 = vmatpush1.msra.mxu0 %v3340
    %3342 = vmatprep.subr.mxu0 0.0
    %v3343 = vand.u32 %v2452, 4294901760
    %3344 = vmatpush1.msra.mxu0 %v3343
    %3345 = vmatprep.subr.mxu0 0.0
    %v3346 = vand.u32 %v2453, 4294901760
    %3347 = vmatpush1.msra.mxu0 %v3346
    %v3348 = vand.u32 %v2701, 4294901760
    %v3349 = vsub.f32 %v2701, %v3348
    %v3350 = vand.u32 %v3349, 4294901760
    %3351 = vmatprep.mubr.f32.mxu0 %v3350
    %v3352 = vand.u32 %v2693, 4294901760
    %v3353 = vsub.f32 %v2693, %v3352
    %v3354 = vand.u32 %v3353, 4294901760
    %3355 = vmatmul.mubr.f32.gmra.mrb[0].mxu0 %v3354
    %v3356 = vpop.f32.mrb[0].mxu0
    %v3357 = vadd.f32 %v3249, %v3356
    %v3358 = vpop.f32.mrb[0].mxu0
    %3359 = vdwg.mxu0
    %3360 = vmatprep.subr.mxu0 0.0
    %v3361 = vand.u32 %v2422, 4294901760
    %v3362 = vsub.f32 %v2422, %v3361
    %v3363 = vand.u32 %v3362, 4294901760
    %3364 = vmatpush1.msra.mxu0 %v3363
    %3365 = vmatprep.subr.mxu0 0.0
    %v3366 = vand.u32 %v2423, 4294901760
    %v3367 = vsub.f32 %v2423, %v3366
    %v3368 = vand.u32 %v3367, 4294901760
    %3369 = vmatpush1.msra.mxu0 %v3368
    %3370 = vmatprep.subr.mxu0 0.0
    %v3371 = vand.u32 %v2424, 4294901760
    %v3372 = vsub.f32 %v2424, %v3371
    %v3373 = vand.u32 %v3372, 4294901760
    %3374 = vmatpush1.msra.mxu0 %v3373
    %3375 = vmatprep.subr.mxu0 0.0
    %v3376 = vand.u32 %v2425, 4294901760
    %v3377 = vsub.f32 %v2425, %v3376
    %v3378 = vand.u32 %v3377, 4294901760
    %3379 = vmatpush1.msra.mxu0 %v3378
    %3380 = vmatprep.subr.mxu0 0.0
    %v3381 = vand.u32 %v2426, 4294901760
    %v3382 = vsub.f32 %v2426, %v3381
    %v3383 = vand.u32 %v3382, 4294901760
    %3384 = vmatpush1.msra.mxu0 %v3383
    %3385 = vmatprep.subr.mxu0 0.0
    %v3386 = vand.u32 %v2427, 4294901760
    %v3387 = vsub.f32 %v2427, %v3386
    %v3388 = vand.u32 %v3387, 4294901760
    %3389 = vmatpush1.msra.mxu0 %v3388
    %3390 = vmatprep.subr.mxu0 0.0
    %v3391 = vand.u32 %v2428, 4294901760
    %v3392 = vsub.f32 %v2428, %v3391
    %v3393 = vand.u32 %v3392, 4294901760
    %3394 = vmatpush1.msra.mxu0 %v3393
    %3395 = vmatprep.subr.mxu0 0.0
    %v3396 = vand.u32 %v2429, 4294901760
    %v3397 = vsub.f32 %v2429, %v3396
    %v3398 = vand.u32 %v3397, 4294901760
    %3399 = vmatpush1.msra.mxu0 %v3398
    %3400 = vmatprep.subr.mxu0 0.0
    %v3401 = vand.u32 %v2430, 4294901760
    %v3402 = vsub.f32 %v2430, %v3401
    %v3403 = vand.u32 %v3402, 4294901760
    %3404 = vmatpush1.msra.mxu0 %v3403
    %3405 = vmatprep.subr.mxu0 0.0
    %v3406 = vand.u32 %v2431, 4294901760
    %v3407 = vsub.f32 %v2431, %v3406
    %v3408 = vand.u32 %v3407, 4294901760
    %3409 = vmatpush1.msra.mxu0 %v3408
    %3410 = vmatprep.subr.mxu0 0.0
    %v3411 = vand.u32 %v2432, 4294901760
    %v3412 = vsub.f32 %v2432, %v3411
    %v3413 = vand.u32 %v3412, 4294901760
    %3414 = vmatpush1.msra.mxu0 %v3413
    %3415 = vmatprep.subr.mxu0 0.0
    %v3416 = vand.u32 %v2433, 4294901760
    %v3417 = vsub.f32 %v2433, %v3416
    %v3418 = vand.u32 %v3417, 4294901760
    %3419 = vmatpush1.msra.mxu0 %v3418
    %3420 = vmatprep.subr.mxu0 0.0
    %v3421 = vand.u32 %v2434, 4294901760
    %v3422 = vsub.f32 %v2434, %v3421
    %v3423 = vand.u32 %v3422, 4294901760
    %3424 = vmatpush1.msra.mxu0 %v3423
    %3425 = vmatprep.subr.mxu0 0.0
    %v3426 = vand.u32 %v2435, 4294901760
    %v3427 = vsub.f32 %v2435, %v3426
    %v3428 = vand.u32 %v3427, 4294901760
    %3429 = vmatpush1.msra.mxu0 %v3428
    %3430 = vmatprep.subr.mxu0 0.0
    %v3431 = vand.u32 %v2436, 4294901760
    %v3432 = vsub.f32 %v2436, %v3431
    %v3433 = vand.u32 %v3432, 4294901760
    %3434 = vmatpush1.msra.mxu0 %v3433
    %3435 = vmatprep.subr.mxu0 0.0
    %v3436 = vand.u32 %v2437, 4294901760
    %v3437 = vsub.f32 %v2437, %v3436
    %v3438 = vand.u32 %v3437, 4294901760
    %3439 = vmatpush1.msra.mxu0 %v3438
    %3440 = vmatprep.subr.mxu0 0.0
    %v3441 = vand.u32 %v2438, 4294901760
    %v3442 = vsub.f32 %v2438, %v3441
    %v3443 = vand.u32 %v3442, 4294901760
    %3444 = vmatpush1.msra.mxu0 %v3443
    %3445 = vmatprep.subr.mxu0 0.0
    %v3446 = vand.u32 %v2439, 4294901760
    %v3447 = vsub.f32 %v2439, %v3446
    %v3448 = vand.u32 %v3447, 4294901760
    %3449 = vmatpush1.msra.mxu0 %v3448
    %3450 = vmatprep.subr.mxu0 0.0
    %v3451 = vand.u32 %v2440, 4294901760
    %v3452 = vsub.f32 %v2440, %v3451
    %v3453 = vand.u32 %v3452, 4294901760
    %3454 = vmatpush1.msra.mxu0 %v3453
    %3455 = vmatprep.subr.mxu0 0.0
    %v3456 = vand.u32 %v2441, 4294901760
    %v3457 = vsub.f32 %v2441, %v3456
    %v3458 = vand.u32 %v3457, 4294901760
    %3459 = vmatpush1.msra.mxu0 %v3458
    %3460 = vmatprep.subr.mxu0 0.0
    %v3461 = vand.u32 %v2442, 4294901760
    %v3462 = vsub.f32 %v2442, %v3461
    %v3463 = vand.u32 %v3462, 4294901760
    %3464 = vmatpush1.msra.mxu0 %v3463
    %3465 = vmatprep.subr.mxu0 0.0
    %v3466 = vand.u32 %v2443, 4294901760
    %v3467 = vsub.f32 %v2443, %v3466
    %v3468 = vand.u32 %v3467, 4294901760
    %3469 = vmatpush1.msra.mxu0 %v3468
    %3470 = vmatprep.subr.mxu0 0.0
    %v3471 = vand.u32 %v2444, 4294901760
    %v3472 = vsub.f32 %v2444, %v3471
    %v3473 = vand.u32 %v3472, 4294901760
    %3474 = vmatpush1.msra.mxu0 %v3473
    %3475 = vmatprep.subr.mxu0 0.0
    %v3476 = vand.u32 %v2445, 4294901760
    %v3477 = vsub.f32 %v2445, %v3476
    %v3478 = vand.u32 %v3477, 4294901760
    %3479 = vmatpush1.msra.mxu0 %v3478
    %3480 = vmatprep.subr.mxu0 0.0
    %v3481 = vand.u32 %v2446, 4294901760
    %v3482 = vsub.f32 %v2446, %v3481
    %v3483 = vand.u32 %v3482, 4294901760
    %3484 = vmatpush1.msra.mxu0 %v3483
    %3485 = vmatprep.subr.mxu0 0.0
    %v3486 = vand.u32 %v2447, 4294901760
    %v3487 = vsub.f32 %v2447, %v3486
    %v3488 = vand.u32 %v3487, 4294901760
    %3489 = vmatpush1.msra.mxu0 %v3488
    %3490 = vmatprep.subr.mxu0 0.0
    %v3491 = vand.u32 %v2448, 4294901760
    %v3492 = vsub.f32 %v2448, %v3491
    %v3493 = vand.u32 %v3492, 4294901760
    %3494 = vmatpush1.msra.mxu0 %v3493
    %3495 = vmatprep.subr.mxu0 0.0
    %v3496 = vand.u32 %v2449, 4294901760
    %v3497 = vsub.f32 %v2449, %v3496
    %v3498 = vand.u32 %v3497, 4294901760
    %3499 = vmatpush1.msra.mxu0 %v3498
    %3500 = vmatprep.subr.mxu0 0.0
    %v3501 = vand.u32 %v2450, 4294901760
    %v3502 = vsub.f32 %v2450, %v3501
    %v3503 = vand.u32 %v3502, 4294901760
    %3504 = vmatpush1.msra.mxu0 %v3503
    %3505 = vmatprep.subr.mxu0 0.0
    %v3506 = vand.u32 %v2451, 4294901760
    %v3507 = vsub.f32 %v2451, %v3506
    %v3508 = vand.u32 %v3507, 4294901760
    %3509 = vmatpush1.msra.mxu0 %v3508
    %3510 = vmatprep.subr.mxu0 0.0
    %v3511 = vand.u32 %v2452, 4294901760
    %v3512 = vsub.f32 %v2452, %v3511
    %v3513 = vand.u32 %v3512, 4294901760
    %3514 = vmatpush1.msra.mxu0 %v3513
    %3515 = vmatprep.subr.mxu0 0.0
    %v3516 = vand.u32 %v2453, 4294901760
    %v3517 = vsub.f32 %v2453, %v3516
    %v3518 = vand.u32 %v3517, 4294901760
    %3519 = vmatpush1.msra.mxu0 %v3518
    %v3520 = vand.u32 %v2701, 4294901760
    %3521 = vmatprep.mubr.f32.mxu0 %v3520
    %v3522 = vand.u32 %v2693, 4294901760
    %3523 = vmatmul.mubr.f32.gmra.mrb[0].mxu0 %v3522
    %v3524 = vpop.f32.mrb[0].mxu0
    %v3525 = vadd.f32 %v3357, %v3524
    %v3526 = vpop.f32.mrb[0].mxu0
    %3527 = vdwg.mxu0
    %3528 = vmatprep.subr.mxu0 0.0
    %v3529 = vand.u32 %v2422, 4294901760
    %3530 = vmatpush1.msra.mxu0 %v3529
    %3531 = vmatprep.subr.mxu0 0.0
    %v3532 = vand.u32 %v2423, 4294901760
    %3533 = vmatpush1.msra.mxu0 %v3532
    %3534 = vmatprep.subr.mxu0 0.0
    %v3535 = vand.u32 %v2424, 4294901760
    %3536 = vmatpush1.msra.mxu0 %v3535
    %3537 = vmatprep.subr.mxu0 0.0
    %v3538 = vand.u32 %v2425, 4294901760
    %3539 = vmatpush1.msra.mxu0 %v3538
    %3540 = vmatprep.subr.mxu0 0.0
    %v3541 = vand.u32 %v2426, 4294901760
    %3542 = vmatpush1.msra.mxu0 %v3541
    %3543 = vmatprep.subr.mxu0 0.0
    %v3544 = vand.u32 %v2427, 4294901760
    %3545 = vmatpush1.msra.mxu0 %v3544
    %3546 = vmatprep.subr.mxu0 0.0
    %v3547 = vand.u32 %v2428, 4294901760
    %3548 = vmatpush1.msra.mxu0 %v3547
    %3549 = vmatprep.subr.mxu0 0.0
    %v3550 = vand.u32 %v2429, 4294901760
    %3551 = vmatpush1.msra.mxu0 %v3550
    %3552 = vmatprep.subr.mxu0 0.0
    %v3553 = vand.u32 %v2430, 4294901760
    %3554 = vmatpush1.msra.mxu0 %v3553
    %3555 = vmatprep.subr.mxu0 0.0
    %v3556 = vand.u32 %v2431, 4294901760
    %3557 = vmatpush1.msra.mxu0 %v3556
    %3558 = vmatprep.subr.mxu0 0.0
    %v3559 = vand.u32 %v2432, 4294901760
    %3560 = vmatpush1.msra.mxu0 %v3559
    %3561 = vmatprep.subr.mxu0 0.0
    %v3562 = vand.u32 %v2433, 4294901760
    %3563 = vmatpush1.msra.mxu0 %v3562
    %3564 = vmatprep.subr.mxu0 0.0
    %v3565 = vand.u32 %v2434, 4294901760
    %3566 = vmatpush1.msra.mxu0 %v3565
    %3567 = vmatprep.subr.mxu0 0.0
    %v3568 = vand.u32 %v2435, 4294901760
    %3569 = vmatpush1.msra.mxu0 %v3568
    %3570 = vmatprep.subr.mxu0 0.0
    %v3571 = vand.u32 %v2436, 4294901760
    %3572 = vmatpush1.msra.mxu0 %v3571
    %3573 = vmatprep.subr.mxu0 0.0
    %v3574 = vand.u32 %v2437, 4294901760
    %3575 = vmatpush1.msra.mxu0 %v3574
    %3576 = vmatprep.subr.mxu0 0.0
    %v3577 = vand.u32 %v2438, 4294901760
    %3578 = vmatpush1.msra.mxu0 %v3577
    %3579 = vmatprep.subr.mxu0 0.0
    %v3580 = vand.u32 %v2439, 4294901760
    %3581 = vmatpush1.msra.mxu0 %v3580
    %3582 = vmatprep.subr.mxu0 0.0
    %v3583 = vand.u32 %v2440, 4294901760
    %3584 = vmatpush1.msra.mxu0 %v3583
    %3585 = vmatprep.subr.mxu0 0.0
    %v3586 = vand.u32 %v2441, 4294901760
    %3587 = vmatpush1.msra.mxu0 %v3586
    %3588 = vmatprep.subr.mxu0 0.0
    %v3589 = vand.u32 %v2442, 4294901760
    %3590 = vmatpush1.msra.mxu0 %v3589
    %3591 = vmatprep.subr.mxu0 0.0
    %v3592 = vand.u32 %v2443, 4294901760
    %3593 = vmatpush1.msra.mxu0 %v3592
    %3594 = vmatprep.subr.mxu0 0.0
    %v3595 = vand.u32 %v2444, 4294901760
    %3596 = vmatpush1.msra.mxu0 %v3595
    %3597 = vmatprep.subr.mxu0 0.0
    %v3598 = vand.u32 %v2445, 4294901760
    %3599 = vmatpush1.msra.mxu0 %v3598
    %3600 = vmatprep.subr.mxu0 0.0
    %v3601 = vand.u32 %v2446, 4294901760
    %3602 = vmatpush1.msra.mxu0 %v3601
    %3603 = vmatprep.subr.mxu0 0.0
    %v3604 = vand.u32 %v2447, 4294901760
    %3605 = vmatpush1.msra.mxu0 %v3604
    %3606 = vmatprep.subr.mxu0 0.0
    %v3607 = vand.u32 %v2448, 4294901760
    %3608 = vmatpush1.msra.mxu0 %v3607
    %3609 = vmatprep.subr.mxu0 0.0
    %v3610 = vand.u32 %v2449, 4294901760
    %3611 = vmatpush1.msra.mxu0 %v3610
    %3612 = vmatprep.subr.mxu0 0.0
    %v3613 = vand.u32 %v2450, 4294901760
    %3614 = vmatpush1.msra.mxu0 %v3613
    %3615 = vmatprep.subr.mxu0 0.0
    %v3616 = vand.u32 %v2451, 4294901760
    %3617 = vmatpush1.msra.mxu0 %v3616
    %3618 = vmatprep.subr.mxu0 0.0
    %v3619 = vand.u32 %v2452, 4294901760
    %3620 = vmatpush1.msra.mxu0 %v3619
    %3621 = vmatprep.subr.mxu0 0.0
    %v3622 = vand.u32 %v2453, 4294901760
    %3623 = vmatpush1.msra.mxu0 %v3622
    %v3624 = vand.u32 %v2701, 4294901760
    %3625 = vmatprep.mubr.f32.mxu0 %v3624
    %v3626 = vand.u32 %v2693, 4294901760
    %3627 = vmatmul.mubr.f32.gmra.mrb[0].mxu0 %v3626
    %v3628 = vpop.f32.mrb[0].mxu0
    %v3629 = vadd.f32 %v3525, %v3628
    %v3630 = vpop.f32.mrb[0].mxu0
    %3631 = vdwg.mxu0
    %3632 = vmatprep.subr.mxu0 0.0
    %v3633 = vand.u32 %v2454, 4294901760
    %3634 = vmatpush1.msra.mxu0 %v3633
    %3635 = vmatprep.subr.mxu0 0.0
    %v3636 = vand.u32 %v2455, 4294901760
    %3637 = vmatpush1.msra.mxu0 %v3636
    %3638 = vmatprep.subr.mxu0 0.0
    %v3639 = vand.u32 %v2456, 4294901760
    %3640 = vmatpush1.msra.mxu0 %v3639
    %3641 = vmatprep.subr.mxu0 0.0
    %v3642 = vand.u32 %v2457, 4294901760
    %3643 = vmatpush1.msra.mxu0 %v3642
    %3644 = vmatprep.subr.mxu0 0.0
    %v3645 = vand.u32 %v2458, 4294901760
    %3646 = vmatpush1.msra.mxu0 %v3645
    %3647 = vmatprep.subr.mxu0 0.0
    %v3648 = vand.u32 %v2459, 4294901760
    %3649 = vmatpush1.msra.mxu0 %v3648
    %3650 = vmatprep.subr.mxu0 0.0
    %v3651 = vand.u32 %v2460, 4294901760
    %3652 = vmatpush1.msra.mxu0 %v3651
    %3653 = vmatprep.subr.mxu0 0.0
    %v3654 = vand.u32 %v2461, 4294901760
    %3655 = vmatpush1.msra.mxu0 %v3654
    %3656 = vmatprep.subr.mxu0 0.0
    %v3657 = vand.u32 %v2462, 4294901760
    %3658 = vmatpush1.msra.mxu0 %v3657
    %3659 = vmatprep.subr.mxu0 0.0
    %v3660 = vand.u32 %v2463, 4294901760
    %3661 = vmatpush1.msra.mxu0 %v3660
    %3662 = vmatprep.subr.mxu0 0.0
    %v3663 = vand.u32 %v2464, 4294901760
    %3664 = vmatpush1.msra.mxu0 %v3663
    %3665 = vmatprep.subr.mxu0 0.0
    %v3666 = vand.u32 %v2465, 4294901760
    %3667 = vmatpush1.msra.mxu0 %v3666
    %3668 = vmatprep.subr.mxu0 0.0
    %v3669 = vand.u32 %v2466, 4294901760
    %3670 = vmatpush1.msra.mxu0 %v3669
    %3671 = vmatprep.subr.mxu0 0.0
    %v3672 = vand.u32 %v2467, 4294901760
    %3673 = vmatpush1.msra.mxu0 %v3672
    %3674 = vmatprep.subr.mxu0 0.0
    %v3675 = vand.u32 %v2468, 4294901760
    %3676 = vmatpush1.msra.mxu0 %v3675
    %3677 = vmatprep.subr.mxu0 0.0
    %v3678 = vand.u32 %v2469, 4294901760
    %3679 = vmatpush1.msra.mxu0 %v3678
    %3680 = vmatprep.subr.mxu0 0.0
    %v3681 = vand.u32 %v2470, 4294901760
    %3682 = vmatpush1.msra.mxu0 %v3681
    %3683 = vmatprep.subr.mxu0 0.0
    %v3684 = vand.u32 %v2471, 4294901760
    %3685 = vmatpush1.msra.mxu0 %v3684
    %3686 = vmatprep.subr.mxu0 0.0
    %v3687 = vand.u32 %v2472, 4294901760
    %3688 = vmatpush1.msra.mxu0 %v3687
    %3689 = vmatprep.subr.mxu0 0.0
    %v3690 = vand.u32 %v2473, 4294901760
    %3691 = vmatpush1.msra.mxu0 %v3690
    %3692 = vmatprep.subr.mxu0 0.0
    %v3693 = vand.u32 %v2474, 4294901760
    %3694 = vmatpush1.msra.mxu0 %v3693
    %3695 = vmatprep.subr.mxu0 0.0
    %v3696 = vand.u32 %v2475, 4294901760
    %3697 = vmatpush1.msra.mxu0 %v3696
    %3698 = vmatprep.subr.mxu0 0.0
    %v3699 = vand.u32 %v2476, 4294901760
    %3700 = vmatpush1.msra.mxu0 %v3699
    %3701 = vmatprep.subr.mxu0 0.0
    %v3702 = vand.u32 %v2477, 4294901760
    %3703 = vmatpush1.msra.mxu0 %v3702
    %3704 = vmatprep.subr.mxu0 0.0
    %v3705 = vand.u32 %v2478, 4294901760
    %3706 = vmatpush1.msra.mxu0 %v3705
    %3707 = vmatprep.subr.mxu0 0.0
    %v3708 = vand.u32 %v2479, 4294901760
    %3709 = vmatpush1.msra.mxu0 %v3708
    %3710 = vmatprep.subr.mxu0 0.0
    %v3711 = vand.u32 %v2480, 4294901760
    %3712 = vmatpush1.msra.mxu0 %v3711
    %3713 = vmatprep.subr.mxu0 0.0
    %v3714 = vand.u32 %v2481, 4294901760
    %3715 = vmatpush1.msra.mxu0 %v3714
    %3716 = vmatprep.subr.mxu0 0.0
    %v3717 = vand.u32 %v2482, 4294901760
    %3718 = vmatpush1.msra.mxu0 %v3717
    %3719 = vmatprep.subr.mxu0 0.0
    %v3720 = vand.u32 %v2483, 4294901760
    %3721 = vmatpush1.msra.mxu0 %v3720
    %3722 = vmatprep.subr.mxu0 0.0
    %v3723 = vand.u32 %v2484, 4294901760
    %3724 = vmatpush1.msra.mxu0 %v3723
    %3725 = vmatprep.subr.mxu0 0.0
    %v3726 = vand.u32 %v2485, 4294901760
    %3727 = vmatpush1.msra.mxu0 %v3726
    %v3728 = vand.u32 %v2702, 4294901760
    %v3729 = vsub.f32 %v2702, %v3728
    %v3730 = vand.u32 %v3729, 4294901760
    %v3731 = vsub.f32 %v3729, %v3730
    %v3732 = vand.u32 %v3731, 4294901760
    %3733 = vmatprep.mubr.f32.mxu0 %v3732
    %v3734 = vand.u32 %v2700, 4294901760
    %v3735 = vsub.f32 %v2700, %v3734
    %v3736 = vand.u32 %v3735, 4294901760
    %v3737 = vsub.f32 %v3735, %v3736
    %v3738 = vand.u32 %v3737, 4294901760
    %3739 = vmatmul.mubr.f32.gmra.mrb[0].mxu0 %v3738
    %v3740 = vpop.f32.mrb[0].mxu0
    %v3741 = vadd.f32 %v3629, %v3740
    %v3742 = vpop.f32.mrb[0].mxu0
    %3743 = vdwg.mxu0
    %3744 = vmatprep.subr.mxu0 0.0
    %v3745 = vand.u32 %v2454, 4294901760
    %v3746 = vsub.f32 %v2454, %v3745
    %v3747 = vand.u32 %v3746, 4294901760
    %v3748 = vsub.f32 %v3746, %v3747
    %v3749 = vand.u32 %v3748, 4294901760
    %3750 = vmatpush1.msra.mxu0 %v3749
    %3751 = vmatprep.subr.mxu0 0.0
    %v3752 = vand.u32 %v2455, 4294901760
    %v3753 = vsub.f32 %v2455, %v3752
    %v3754 = vand.u32 %v3753, 4294901760
    %v3755 = vsub.f32 %v3753, %v3754
    %v3756 = vand.u32 %v3755, 4294901760
    %3757 = vmatpush1.msra.mxu0 %v3756
    %3758 = vmatprep.subr.mxu0 0.0
    %v3759 = vand.u32 %v2456, 4294901760
    %v3760 = vsub.f32 %v2456, %v3759
    %v3761 = vand.u32 %v3760, 4294901760
    %v3762 = vsub.f32 %v3760, %v3761
    %v3763 = vand.u32 %v3762, 4294901760
    %3764 = vmatpush1.msra.mxu0 %v3763
    %3765 = vmatprep.subr.mxu0 0.0
    %v3766 = vand.u32 %v2457, 4294901760
    %v3767 = vsub.f32 %v2457, %v3766
    %v3768 = vand.u32 %v3767, 4294901760
    %v3769 = vsub.f32 %v3767, %v3768
    %v3770 = vand.u32 %v3769, 4294901760
    %3771 = vmatpush1.msra.mxu0 %v3770
    %3772 = vmatprep.subr.mxu0 0.0
    %v3773 = vand.u32 %v2458, 4294901760
    %v3774 = vsub.f32 %v2458, %v3773
    %v3775 = vand.u32 %v3774, 4294901760
    %v3776 = vsub.f32 %v3774, %v3775
    %v3777 = vand.u32 %v3776, 4294901760
    %3778 = vmatpush1.msra.mxu0 %v3777
    %3779 = vmatprep.subr.mxu0 0.0
    %v3780 = vand.u32 %v2459, 4294901760
    %v3781 = vsub.f32 %v2459, %v3780
    %v3782 = vand.u32 %v3781, 4294901760
    %v3783 = vsub.f32 %v3781, %v3782
    %v3784 = vand.u32 %v3783, 4294901760
    %3785 = vmatpush1.msra.mxu0 %v3784
    %3786 = vmatprep.subr.mxu0 0.0
    %v3787 = vand.u32 %v2460, 4294901760
    %v3788 = vsub.f32 %v2460, %v3787
    %v3789 = vand.u32 %v3788, 4294901760
    %v3790 = vsub.f32 %v3788, %v3789
    %v3791 = vand.u32 %v3790, 4294901760
    %3792 = vmatpush1.msra.mxu0 %v3791
    %3793 = vmatprep.subr.mxu0 0.0
    %v3794 = vand.u32 %v2461, 4294901760
    %v3795 = vsub.f32 %v2461, %v3794
    %v3796 = vand.u32 %v3795, 4294901760
    %v3797 = vsub.f32 %v3795, %v3796
    %v3798 = vand.u32 %v3797, 4294901760
    %3799 = vmatpush1.msra.mxu0 %v3798
    %3800 = vmatprep.subr.mxu0 0.0
    %v3801 = vand.u32 %v2462, 4294901760
    %v3802 = vsub.f32 %v2462, %v3801
    %v3803 = vand.u32 %v3802, 4294901760
    %v3804 = vsub.f32 %v3802, %v3803
    %v3805 = vand.u32 %v3804, 4294901760
    %3806 = vmatpush1.msra.mxu0 %v3805
    %3807 = vmatprep.subr.mxu0 0.0
    %v3808 = vand.u32 %v2463, 4294901760
    %v3809 = vsub.f32 %v2463, %v3808
    %v3810 = vand.u32 %v3809, 4294901760
    %v3811 = vsub.f32 %v3809, %v3810
    %v3812 = vand.u32 %v3811, 4294901760
    %3813 = vmatpush1.msra.mxu0 %v3812
    %3814 = vmatprep.subr.mxu0 0.0
    %v3815 = vand.u32 %v2464, 4294901760
    %v3816 = vsub.f32 %v2464, %v3815
    %v3817 = vand.u32 %v3816, 4294901760
    %v3818 = vsub.f32 %v3816, %v3817
    %v3819 = vand.u32 %v3818, 4294901760
    %3820 = vmatpush1.msra.mxu0 %v3819
    %3821 = vmatprep.subr.mxu0 0.0
    %v3822 = vand.u32 %v2465, 4294901760
    %v3823 = vsub.f32 %v2465, %v3822
    %v3824 = vand.u32 %v3823, 4294901760
    %v3825 = vsub.f32 %v3823, %v3824
    %v3826 = vand.u32 %v3825, 4294901760
    %3827 = vmatpush1.msra.mxu0 %v3826
    %3828 = vmatprep.subr.mxu0 0.0
    %v3829 = vand.u32 %v2466, 4294901760
    %v3830 = vsub.f32 %v2466, %v3829
    %v3831 = vand.u32 %v3830, 4294901760
    %v3832 = vsub.f32 %v3830, %v3831
    %v3833 = vand.u32 %v3832, 4294901760
    %3834 = vmatpush1.msra.mxu0 %v3833
    %3835 = vmatprep.subr.mxu0 0.0
    %v3836 = vand.u32 %v2467, 4294901760
    %v3837 = vsub.f32 %v2467, %v3836
    %v3838 = vand.u32 %v3837, 4294901760
    %v3839 = vsub.f32 %v3837, %v3838
    %v3840 = vand.u32 %v3839, 4294901760
    %3841 = vmatpush1.msra.mxu0 %v3840
    %3842 = vmatprep.subr.mxu0 0.0
    %v3843 = vand.u32 %v2468, 4294901760
    %v3844 = vsub.f32 %v2468, %v3843
    %v3845 = vand.u32 %v3844, 4294901760
    %v3846 = vsub.f32 %v3844, %v3845
    %v3847 = vand.u32 %v3846, 4294901760
    %3848 = vmatpush1.msra.mxu0 %v3847
    %3849 = vmatprep.subr.mxu0 0.0
    %v3850 = vand.u32 %v2469, 4294901760
    %v3851 = vsub.f32 %v2469, %v3850
    %v3852 = vand.u32 %v3851, 4294901760
    %v3853 = vsub.f32 %v3851, %v3852
    %v3854 = vand.u32 %v3853, 4294901760
    %3855 = vmatpush1.msra.mxu0 %v3854
    %3856 = vmatprep.subr.mxu0 0.0
    %v3857 = vand.u32 %v2470, 4294901760
    %v3858 = vsub.f32 %v2470, %v3857
    %v3859 = vand.u32 %v3858, 4294901760
    %v3860 = vsub.f32 %v3858, %v3859
    %v3861 = vand.u32 %v3860, 4294901760
    %3862 = vmatpush1.msra.mxu0 %v3861
    %3863 = vmatprep.subr.mxu0 0.0
    %v3864 = vand.u32 %v2471, 4294901760
    %v3865 = vsub.f32 %v2471, %v3864
    %v3866 = vand.u32 %v3865, 4294901760
    %v3867 = vsub.f32 %v3865, %v3866
    %v3868 = vand.u32 %v3867, 4294901760
    %3869 = vmatpush1.msra.mxu0 %v3868
    %3870 = vmatprep.subr.mxu0 0.0
    %v3871 = vand.u32 %v2472, 4294901760
    %v3872 = vsub.f32 %v2472, %v3871
    %v3873 = vand.u32 %v3872, 4294901760
    %v3874 = vsub.f32 %v3872, %v3873
    %v3875 = vand.u32 %v3874, 4294901760
    %3876 = vmatpush1.msra.mxu0 %v3875
    %3877 = vmatprep.subr.mxu0 0.0
    %v3878 = vand.u32 %v2473, 4294901760
    %v3879 = vsub.f32 %v2473, %v3878
    %v3880 = vand.u32 %v3879, 4294901760
    %v3881 = vsub.f32 %v3879, %v3880
    %v3882 = vand.u32 %v3881, 4294901760
    %3883 = vmatpush1.msra.mxu0 %v3882
    %3884 = vmatprep.subr.mxu0 0.0
    %v3885 = vand.u32 %v2474, 4294901760
    %v3886 = vsub.f32 %v2474, %v3885
    %v3887 = vand.u32 %v3886, 4294901760
    %v3888 = vsub.f32 %v3886, %v3887
    %v3889 = vand.u32 %v3888, 4294901760
    %3890 = vmatpush1.msra.mxu0 %v3889
    %3891 = vmatprep.subr.mxu0 0.0
    %v3892 = vand.u32 %v2475, 4294901760
    %v3893 = vsub.f32 %v2475, %v3892
    %v3894 = vand.u32 %v3893, 4294901760
    %v3895 = vsub.f32 %v3893, %v3894
    %v3896 = vand.u32 %v3895, 4294901760
    %3897 = vmatpush1.msra.mxu0 %v3896
    %3898 = vmatprep.subr.mxu0 0.0
    %v3899 = vand.u32 %v2476, 4294901760
    %v3900 = vsub.f32 %v2476, %v3899
    %v3901 = vand.u32 %v3900, 4294901760
    %v3902 = vsub.f32 %v3900, %v3901
    %v3903 = vand.u32 %v3902, 4294901760
    %3904 = vmatpush1.msra.mxu0 %v3903
    %3905 = vmatprep.subr.mxu0 0.0
    %v3906 = vand.u32 %v2477, 4294901760
    %v3907 = vsub.f32 %v2477, %v3906
    %v3908 = vand.u32 %v3907, 4294901760
    %v3909 = vsub.f32 %v3907, %v3908
    %v3910 = vand.u32 %v3909, 4294901760
    %3911 = vmatpush1.msra.mxu0 %v3910
    %3912 = vmatprep.subr.mxu0 0.0
    %v3913 = vand.u32 %v2478, 4294901760
    %v3914 = vsub.f32 %v2478, %v3913
    %v3915 = vand.u32 %v3914, 4294901760
    %v3916 = vsub.f32 %v3914, %v3915
    %v3917 = vand.u32 %v3916, 4294901760
    %3918 = vmatpush1.msra.mxu0 %v3917
    %3919 = vmatprep.subr.mxu0 0.0
    %v3920 = vand.u32 %v2479, 4294901760
    %v3921 = vsub.f32 %v2479, %v3920
    %v3922 = vand.u32 %v3921, 4294901760
    %v3923 = vsub.f32 %v3921, %v3922
    %v3924 = vand.u32 %v3923, 4294901760
    %3925 = vmatpush1.msra.mxu0 %v3924
    %3926 = vmatprep.subr.mxu0 0.0
    %v3927 = vand.u32 %v2480, 4294901760
    %v3928 = vsub.f32 %v2480, %v3927
    %v3929 = vand.u32 %v3928, 4294901760
    %v3930 = vsub.f32 %v3928, %v3929
    %v3931 = vand.u32 %v3930, 4294901760
    %3932 = vmatpush1.msra.mxu0 %v3931
    %3933 = vmatprep.subr.mxu0 0.0
    %v3934 = vand.u32 %v2481, 4294901760
    %v3935 = vsub.f32 %v2481, %v3934
    %v3936 = vand.u32 %v3935, 4294901760
    %v3937 = vsub.f32 %v3935, %v3936
    %v3938 = vand.u32 %v3937, 4294901760
    %3939 = vmatpush1.msra.mxu0 %v3938
    %3940 = vmatprep.subr.mxu0 0.0
    %v3941 = vand.u32 %v2482, 4294901760
    %v3942 = vsub.f32 %v2482, %v3941
    %v3943 = vand.u32 %v3942, 4294901760
    %v3944 = vsub.f32 %v3942, %v3943
    %v3945 = vand.u32 %v3944, 4294901760
    %3946 = vmatpush1.msra.mxu0 %v3945
    %3947 = vmatprep.subr.mxu0 0.0
    %v3948 = vand.u32 %v2483, 4294901760
    %v3949 = vsub.f32 %v2483, %v3948
    %v3950 = vand.u32 %v3949, 4294901760
    %v3951 = vsub.f32 %v3949, %v3950
    %v3952 = vand.u32 %v3951, 4294901760
    %3953 = vmatpush1.msra.mxu0 %v3952
    %3954 = vmatprep.subr.mxu0 0.0
    %v3955 = vand.u32 %v2484, 4294901760
    %v3956 = vsub.f32 %v2484, %v3955
    %v3957 = vand.u32 %v3956, 4294901760
    %v3958 = vsub.f32 %v3956, %v3957
    %v3959 = vand.u32 %v3958, 4294901760
    %3960 = vmatpush1.msra.mxu0 %v3959
    %3961 = vmatprep.subr.mxu0 0.0
    %v3962 = vand.u32 %v2485, 4294901760
    %v3963 = vsub.f32 %v2485, %v3962
    %v3964 = vand.u32 %v3963, 4294901760
    %v3965 = vsub.f32 %v3963, %v3964
    %v3966 = vand.u32 %v3965, 4294901760
    %3967 = vmatpush1.msra.mxu0 %v3966
    %v3968 = vand.u32 %v2702, 4294901760
    %3969 = vmatprep.mubr.f32.mxu0 %v3968
    %v3970 = vand.u32 %v2700, 4294901760
    %3971 = vmatmul.mubr.f32.gmra.mrb[0].mxu0 %v3970
    %v3972 = vpop.f32.mrb[0].mxu0
    %v3973 = vadd.f32 %v3741, %v3972
    %v3974 = vpop.f32.mrb[0].mxu0
    %3975 = vdwg.mxu0
    %3976 = vmatprep.subr.mxu0 0.0
    %v3977 = vand.u32 %v2454, 4294901760
    %v3978 = vsub.f32 %v2454, %v3977
    %3979 = vmatpush1.msra.mxu0 %v3978
    %3980 = vmatprep.subr.mxu0 0.0
    %v3981 = vand.u32 %v2455, 4294901760
    %v3982 = vsub.f32 %v2455, %v3981
    %3983 = vmatpush1.msra.mxu0 %v3982
    %3984 = vmatprep.subr.mxu0 0.0
    %v3985 = vand.u32 %v2456, 4294901760
    %v3986 = vsub.f32 %v2456, %v3985
    %3987 = vmatpush1.msra.mxu0 %v3986
    %3988 = vmatprep.subr.mxu0 0.0
    %v3989 = vand.u32 %v2457, 4294901760
    %v3990 = vsub.f32 %v2457, %v3989
    %3991 = vmatpush1.msra.mxu0 %v3990
    %3992 = vmatprep.subr.mxu0 0.0
    %v3993 = vand.u32 %v2458, 4294901760
    %v3994 = vsub.f32 %v2458, %v3993
    %3995 = vmatpush1.msra.mxu0 %v3994
    %3996 = vmatprep.subr.mxu0 0.0
    %v3997 = vand.u32 %v2459, 4294901760
    %v3998 = vsub.f32 %v2459, %v3997
    %3999 = vmatpush1.msra.mxu0 %v3998
    %4000 = vmatprep.subr.mxu0 0.0
    %v4001 = vand.u32 %v2460, 4294901760
    %v4002 = vsub.f32 %v2460, %v4001
    %4003 = vmatpush1.msra.mxu0 %v4002
    %4004 = vmatprep.subr.mxu0 0.0
    %v4005 = vand.u32 %v2461, 4294901760
    %v4006 = vsub.f32 %v2461, %v4005
    %4007 = vmatpush1.msra.mxu0 %v4006
    %4008 = vmatprep.subr.mxu0 0.0
    %v4009 = vand.u32 %v2462, 4294901760
    %v4010 = vsub.f32 %v2462, %v4009
    %4011 = vmatpush1.msra.mxu0 %v4010
    %4012 = vmatprep.subr.mxu0 0.0
    %v4013 = vand.u32 %v2463, 4294901760
    %v4014 = vsub.f32 %v2463, %v4013
    %4015 = vmatpush1.msra.mxu0 %v4014
    %4016 = vmatprep.subr.mxu0 0.0
    %v4017 = vand.u32 %v2464, 4294901760
    %v4018 = vsub.f32 %v2464, %v4017
    %4019 = vmatpush1.msra.mxu0 %v4018
    %4020 = vmatprep.subr.mxu0 0.0
    %v4021 = vand.u32 %v2465, 4294901760
    %v4022 = vsub.f32 %v2465, %v4021
    %4023 = vmatpush1.msra.mxu0 %v4022
    %4024 = vmatprep.subr.mxu0 0.0
    %v4025 = vand.u32 %v2466, 4294901760
    %v4026 = vsub.f32 %v2466, %v4025
    %4027 = vmatpush1.msra.mxu0 %v4026
    %4028 = vmatprep.subr.mxu0 0.0
    %v4029 = vand.u32 %v2467, 4294901760
    %v4030 = vsub.f32 %v2467, %v4029
    %4031 = vmatpush1.msra.mxu0 %v4030
    %4032 = vmatprep.subr.mxu0 0.0
    %v4033 = vand.u32 %v2468, 4294901760
    %v4034 = vsub.f32 %v2468, %v4033
    %4035 = vmatpush1.msra.mxu0 %v4034
    %4036 = vmatprep.subr.mxu0 0.0
    %v4037 = vand.u32 %v2469, 4294901760
    %v4038 = vsub.f32 %v2469, %v4037
    %4039 = vmatpush1.msra.mxu0 %v4038
    %4040 = vmatprep.subr.mxu0 0.0
    %v4041 = vand.u32 %v2470, 4294901760
    %v4042 = vsub.f32 %v2470, %v4041
    %4043 = vmatpush1.msra.mxu0 %v4042
    %4044 = vmatprep.subr.mxu0 0.0
    %v4045 = vand.u32 %v2471, 4294901760
    %v4046 = vsub.f32 %v2471, %v4045
    %4047 = vmatpush1.msra.mxu0 %v4046
    %4048 = vmatprep.subr.mxu0 0.0
    %v4049 = vand.u32 %v2472, 4294901760
    %v4050 = vsub.f32 %v2472, %v4049
    %4051 = vmatpush1.msra.mxu0 %v4050
    %4052 = vmatprep.subr.mxu0 0.0
    %v4053 = vand.u32 %v2473, 4294901760
    %v4054 = vsub.f32 %v2473, %v4053
    %4055 = vmatpush1.msra.mxu0 %v4054
    %4056 = vmatprep.subr.mxu0 0.0
    %v4057 = vand.u32 %v2474, 4294901760
    %v4058 = vsub.f32 %v2474, %v4057
    %4059 = vmatpush1.msra.mxu0 %v4058
    %4060 = vmatprep.subr.mxu0 0.0
    %v4061 = vand.u32 %v2475, 4294901760
    %v4062 = vsub.f32 %v2475, %v4061
    %4063 = vmatpush1.msra.mxu0 %v4062
    %4064 = vmatprep.subr.mxu0 0.0
    %v4065 = vand.u32 %v2476, 4294901760
    %v4066 = vsub.f32 %v2476, %v4065
    %4067 = vmatpush1.msra.mxu0 %v4066
    %4068 = vmatprep.subr.mxu0 0.0
    %v4069 = vand.u32 %v2477, 4294901760
    %v4070 = vsub.f32 %v2477, %v4069
    %4071 = vmatpush1.msra.mxu0 %v4070
    %4072 = vmatprep.subr.mxu0 0.0
    %v4073 = vand.u32 %v2478, 4294901760
    %v4074 = vsub.f32 %v2478, %v4073
    %4075 = vmatpush1.msra.mxu0 %v4074
    %4076 = vmatprep.subr.mxu0 0.0
    %v4077 = vand.u32 %v2479, 4294901760
    %v4078 = vsub.f32 %v2479, %v4077
    %4079 = vmatpush1.msra.mxu0 %v4078
    %4080 = vmatprep.subr.mxu0 0.0
    %v4081 = vand.u32 %v2480, 4294901760
    %v4082 = vsub.f32 %v2480, %v4081
    %4083 = vmatpush1.msra.mxu0 %v4082
    %4084 = vmatprep.subr.mxu0 0.0
    %v4085 = vand.u32 %v2481, 4294901760
    %v4086 = vsub.f32 %v2481, %v4085
    %4087 = vmatpush1.msra.mxu0 %v4086
    %4088 = vmatprep.subr.mxu0 0.0
    %v4089 = vand.u32 %v2482, 4294901760
    %v4090 = vsub.f32 %v2482, %v4089
    %4091 = vmatpush1.msra.mxu0 %v4090
    %4092 = vmatprep.subr.mxu0 0.0
    %v4093 = vand.u32 %v2483, 4294901760
    %v4094 = vsub.f32 %v2483, %v4093
    %4095 = vmatpush1.msra.mxu0 %v4094
    %4096 = vmatprep.subr.mxu0 0.0
    %v4097 = vand.u32 %v2484, 4294901760
    %v4098 = vsub.f32 %v2484, %v4097
    %4099 = vmatpush1.msra.mxu0 %v4098
    %4100 = vmatprep.subr.mxu0 0.0
    %v4101 = vand.u32 %v2485, 4294901760
    %v4102 = vsub.f32 %v2485, %v4101
    %4103 = vmatpush1.msra.mxu0 %v4102
    %v4104 = vand.u32 %v2702, 4294901760
    %v4105 = vsub.f32 %v2702, %v4104
    %4106 = vmatprep.mubr.f32.mxu0 %v4105
    %v4107 = vand.u32 %v2700, 4294901760
    %v4108 = vsub.f32 %v2700, %v4107
    %4109 = vmatmul.mubr.f32.gmra.mrb[0].mxu0 %v4108
    %v4110 = vpop.f32.mrb[0].mxu0
    %v4111 = vadd.f32 %v3973, %v4110
    %v4112 = vpop.f32.mrb[0].mxu0
    %4113 = vdwg.mxu0
    %4114 = vmatprep.subr.mxu0 0.0
    %v4115 = vand.u32 %v2454, 4294901760
    %4116 = vmatpush1.msra.mxu0 %v4115
    %4117 = vmatprep.subr.mxu0 0.0
    %v4118 = vand.u32 %v2455, 4294901760
    %4119 = vmatpush1.msra.mxu0 %v4118
    %4120 = vmatprep.subr.mxu0 0.0
    %v4121 = vand.u32 %v2456, 4294901760
    %4122 = vmatpush1.msra.mxu0 %v4121
    %4123 = vmatprep.subr.mxu0 0.0
    %v4124 = vand.u32 %v2457, 4294901760
    %4125 = vmatpush1.msra.mxu0 %v4124
    %4126 = vmatprep.subr.mxu0 0.0
    %v4127 = vand.u32 %v2458, 4294901760
    %4128 = vmatpush1.msra.mxu0 %v4127
    %4129 = vmatprep.subr.mxu0 0.0
    %v4130 = vand.u32 %v2459, 4294901760
    %4131 = vmatpush1.msra.mxu0 %v4130
    %4132 = vmatprep.subr.mxu0 0.0
    %v4133 = vand.u32 %v2460, 4294901760
    %4134 = vmatpush1.msra.mxu0 %v4133
    %4135 = vmatprep.subr.mxu0 0.0
    %v4136 = vand.u32 %v2461, 4294901760
    %4137 = vmatpush1.msra.mxu0 %v4136
    %4138 = vmatprep.subr.mxu0 0.0
    %v4139 = vand.u32 %v2462, 4294901760
    %4140 = vmatpush1.msra.mxu0 %v4139
    %4141 = vmatprep.subr.mxu0 0.0
    %v4142 = vand.u32 %v2463, 4294901760
    %4143 = vmatpush1.msra.mxu0 %v4142
    %4144 = vmatprep.subr.mxu0 0.0
    %v4145 = vand.u32 %v2464, 4294901760
    %4146 = vmatpush1.msra.mxu0 %v4145
    %4147 = vmatprep.subr.mxu0 0.0
    %v4148 = vand.u32 %v2465, 4294901760
    %4149 = vmatpush1.msra.mxu0 %v4148
    %4150 = vmatprep.subr.mxu0 0.0
    %v4151 = vand.u32 %v2466, 4294901760
    %4152 = vmatpush1.msra.mxu0 %v4151
    %4153 = vmatprep.subr.mxu0 0.0
    %v4154 = vand.u32 %v2467, 4294901760
    %4155 = vmatpush1.msra.mxu0 %v4154
    %4156 = vmatprep.subr.mxu0 0.0
    %v4157 = vand.u32 %v2468, 4294901760
    %4158 = vmatpush1.msra.mxu0 %v4157
    %4159 = vmatprep.subr.mxu0 0.0
    %v4160 = vand.u32 %v2469, 4294901760
    %4161 = vmatpush1.msra.mxu0 %v4160
    %4162 = vmatprep.subr.mxu0 0.0
    %v4163 = vand.u32 %v2470, 4294901760
    %4164 = vmatpush1.msra.mxu0 %v4163
    %4165 = vmatprep.subr.mxu0 0.0
    %v4166 = vand.u32 %v2471, 4294901760
    %4167 = vmatpush1.msra.mxu0 %v4166
    %4168 = vmatprep.subr.mxu0 0.0
    %v4169 = vand.u32 %v2472, 4294901760
    %4170 = vmatpush1.msra.mxu0 %v4169
    %4171 = vmatprep.subr.mxu0 0.0
    %v4172 = vand.u32 %v2473, 4294901760
    %4173 = vmatpush1.msra.mxu0 %v4172
    %4174 = vmatprep.subr.mxu0 0.0
    %v4175 = vand.u32 %v2474, 4294901760
    %4176 = vmatpush1.msra.mxu0 %v4175
    %4177 = vmatprep.subr.mxu0 0.0
    %v4178 = vand.u32 %v2475, 4294901760
    %4179 = vmatpush1.msra.mxu0 %v4178
    %4180 = vmatprep.subr.mxu0 0.0
    %v4181 = vand.u32 %v2476, 4294901760
    %4182 = vmatpush1.msra.mxu0 %v4181
    %4183 = vmatprep.subr.mxu0 0.0
    %v4184 = vand.u32 %v2477, 4294901760
    %4185 = vmatpush1.msra.mxu0 %v4184
    %4186 = vmatprep.subr.mxu0 0.0
    %v4187 = vand.u32 %v2478, 4294901760
    %4188 = vmatpush1.msra.mxu0 %v4187
    %4189 = vmatprep.subr.mxu0 0.0
    %v4190 = vand.u32 %v2479, 4294901760
    %4191 = vmatpush1.msra.mxu0 %v4190
    %4192 = vmatprep.subr.mxu0 0.0
    %v4193 = vand.u32 %v2480, 4294901760
    %4194 = vmatpush1.msra.mxu0 %v4193
    %4195 = vmatprep.subr.mxu0 0.0
    %v4196 = vand.u32 %v2481, 4294901760
    %4197 = vmatpush1.msra.mxu0 %v4196
    %4198 = vmatprep.subr.mxu0 0.0
    %v4199 = vand.u32 %v2482, 4294901760
    %4200 = vmatpush1.msra.mxu0 %v4199
    %4201 = vmatprep.subr.mxu0 0.0
    %v4202 = vand.u32 %v2483, 4294901760
    %4203 = vmatpush1.msra.mxu0 %v4202
    %4204 = vmatprep.subr.mxu0 0.0
    %v4205 = vand.u32 %v2484, 4294901760
    %4206 = vmatpush1.msra.mxu0 %v4205
    %4207 = vmatprep.subr.mxu0 0.0
    %v4208 = vand.u32 %v2485, 4294901760
    %4209 = vmatpush1.msra.mxu0 %v4208
    %v4210 = vand.u32 %v2702, 4294901760
    %v4211 = vsub.f32 %v2702, %v4210
    %v4212 = vand.u32 %v4211, 4294901760
    %4213 = vmatprep.mubr.f32.mxu0 %v4212
    %v4214 = vand.u32 %v2700, 4294901760
    %v4215 = vsub.f32 %v2700, %v4214
    %v4216 = vand.u32 %v4215, 4294901760
    %4217 = vmatmul.mubr.f32.gmra.mrb[0].mxu0 %v4216
    %v4218 = vpop.f32.mrb[0].mxu0
    %v4219 = vadd.f32 %v4111, %v4218
    %v4220 = vpop.f32.mrb[0].mxu0
    %4221 = vdwg.mxu0
    %4222 = vmatprep.subr.mxu0 0.0
    %v4223 = vand.u32 %v2454, 4294901760
    %v4224 = vsub.f32 %v2454, %v4223
    %v4225 = vand.u32 %v4224, 4294901760
    %4226 = vmatpush1.msra.mxu0 %v4225
    %4227 = vmatprep.subr.mxu0 0.0
    %v4228 = vand.u32 %v2455, 4294901760
    %v4229 = vsub.f32 %v2455, %v4228
    %v4230 = vand.u32 %v4229, 4294901760
    %4231 = vmatpush1.msra.mxu0 %v4230
    %4232 = vmatprep.subr.mxu0 0.0
    %v4233 = vand.u32 %v2456, 4294901760
    %v4234 = vsub.f32 %v2456, %v4233
    %v4235 = vand.u32 %v4234, 4294901760
    %4236 = vmatpush1.msra.mxu0 %v4235
    %4237 = vmatprep.subr.mxu0 0.0
    %v4238 = vand.u32 %v2457, 4294901760
    %v4239 = vsub.f32 %v2457, %v4238
    %v4240 = vand.u32 %v4239, 4294901760
    %4241 = vmatpush1.msra.mxu0 %v4240
    %4242 = vmatprep.subr.mxu0 0.0
    %v4243 = vand.u32 %v2458, 4294901760
    %v4244 = vsub.f32 %v2458, %v4243
    %v4245 = vand.u32 %v4244, 4294901760
    %4246 = vmatpush1.msra.mxu0 %v4245
    %4247 = vmatprep.subr.mxu0 0.0
    %v4248 = vand.u32 %v2459, 4294901760
    %v4249 = vsub.f32 %v2459, %v4248
    %v4250 = vand.u32 %v4249, 4294901760
    %4251 = vmatpush1.msra.mxu0 %v4250
    %4252 = vmatprep.subr.mxu0 0.0
    %v4253 = vand.u32 %v2460, 4294901760
    %v4254 = vsub.f32 %v2460, %v4253
    %v4255 = vand.u32 %v4254, 4294901760
    %4256 = vmatpush1.msra.mxu0 %v4255
    %4257 = vmatprep.subr.mxu0 0.0
    %v4258 = vand.u32 %v2461, 4294901760
    %v4259 = vsub.f32 %v2461, %v4258
    %v4260 = vand.u32 %v4259, 4294901760
    %4261 = vmatpush1.msra.mxu0 %v4260
    %4262 = vmatprep.subr.mxu0 0.0
    %v4263 = vand.u32 %v2462, 4294901760
    %v4264 = vsub.f32 %v2462, %v4263
    %v4265 = vand.u32 %v4264, 4294901760
    %4266 = vmatpush1.msra.mxu0 %v4265
    %4267 = vmatprep.subr.mxu0 0.0
    %v4268 = vand.u32 %v2463, 4294901760
    %v4269 = vsub.f32 %v2463, %v4268
    %v4270 = vand.u32 %v4269, 4294901760
    %4271 = vmatpush1.msra.mxu0 %v4270
    %4272 = vmatprep.subr.mxu0 0.0
    %v4273 = vand.u32 %v2464, 4294901760
    %v4274 = vsub.f32 %v2464, %v4273
    %v4275 = vand.u32 %v4274, 4294901760
    %4276 = vmatpush1.msra.mxu0 %v4275
    %4277 = vmatprep.subr.mxu0 0.0
    %v4278 = vand.u32 %v2465, 4294901760
    %v4279 = vsub.f32 %v2465, %v4278
    %v4280 = vand.u32 %v4279, 4294901760
    %4281 = vmatpush1.msra.mxu0 %v4280
    %4282 = vmatprep.subr.mxu0 0.0
    %v4283 = vand.u32 %v2466, 4294901760
    %v4284 = vsub.f32 %v2466, %v4283
    %v4285 = vand.u32 %v4284, 4294901760
    %4286 = vmatpush1.msra.mxu0 %v4285
    %4287 = vmatprep.subr.mxu0 0.0
    %v4288 = vand.u32 %v2467, 4294901760
    %v4289 = vsub.f32 %v2467, %v4288
    %v4290 = vand.u32 %v4289, 4294901760
    %4291 = vmatpush1.msra.mxu0 %v4290
    %4292 = vmatprep.subr.mxu0 0.0
    %v4293 = vand.u32 %v2468, 4294901760
    %v4294 = vsub.f32 %v2468, %v4293
    %v4295 = vand.u32 %v4294, 4294901760
    %4296 = vmatpush1.msra.mxu0 %v4295
    %4297 = vmatprep.subr.mxu0 0.0
    %v4298 = vand.u32 %v2469, 4294901760
    %v4299 = vsub.f32 %v2469, %v4298
    %v4300 = vand.u32 %v4299, 4294901760
    %4301 = vmatpush1.msra.mxu0 %v4300
    %4302 = vmatprep.subr.mxu0 0.0
    %v4303 = vand.u32 %v2470, 4294901760
    %v4304 = vsub.f32 %v2470, %v4303
    %v4305 = vand.u32 %v4304, 4294901760
    %4306 = vmatpush1.msra.mxu0 %v4305
    %4307 = vmatprep.subr.mxu0 0.0
    %v4308 = vand.u32 %v2471, 4294901760
    %v4309 = vsub.f32 %v2471, %v4308
    %v4310 = vand.u32 %v4309, 4294901760
    %4311 = vmatpush1.msra.mxu0 %v4310
    %4312 = vmatprep.subr.mxu0 0.0
    %v4313 = vand.u32 %v2472, 4294901760
    %v4314 = vsub.f32 %v2472, %v4313
    %v4315 = vand.u32 %v4314, 4294901760
    %4316 = vmatpush1.msra.mxu0 %v4315
    %4317 = vmatprep.subr.mxu0 0.0
    %v4318 = vand.u32 %v2473, 4294901760
    %v4319 = vsub.f32 %v2473, %v4318
    %v4320 = vand.u32 %v4319, 4294901760
    %4321 = vmatpush1.msra.mxu0 %v4320
    %4322 = vmatprep.subr.mxu0 0.0
    %v4323 = vand.u32 %v2474, 4294901760
    %v4324 = vsub.f32 %v2474, %v4323
    %v4325 = vand.u32 %v4324, 4294901760
    %4326 = vmatpush1.msra.mxu0 %v4325
    %4327 = vmatprep.subr.mxu0 0.0
    %v4328 = vand.u32 %v2475, 4294901760
    %v4329 = vsub.f32 %v2475, %v4328
    %v4330 = vand.u32 %v4329, 4294901760
    %4331 = vmatpush1.msra.mxu0 %v4330
    %4332 = vmatprep.subr.mxu0 0.0
    %v4333 = vand.u32 %v2476, 4294901760
    %v4334 = vsub.f32 %v2476, %v4333
    %v4335 = vand.u32 %v4334, 4294901760
    %4336 = vmatpush1.msra.mxu0 %v4335
    %4337 = vmatprep.subr.mxu0 0.0
    %v4338 = vand.u32 %v2477, 4294901760
    %v4339 = vsub.f32 %v2477, %v4338
    %v4340 = vand.u32 %v4339, 4294901760
    %4341 = vmatpush1.msra.mxu0 %v4340
    %4342 = vmatprep.subr.mxu0 0.0
    %v4343 = vand.u32 %v2478, 4294901760
    %v4344 = vsub.f32 %v2478, %v4343
    %v4345 = vand.u32 %v4344, 4294901760
    %4346 = vmatpush1.msra.mxu0 %v4345
    %4347 = vmatprep.subr.mxu0 0.0
    %v4348 = vand.u32 %v2479, 4294901760
    %v4349 = vsub.f32 %v2479, %v4348
    %v4350 = vand.u32 %v4349, 4294901760
    %4351 = vmatpush1.msra.mxu0 %v4350
    %4352 = vmatprep.subr.mxu0 0.0
    %v4353 = vand.u32 %v2480, 4294901760
    %v4354 = vsub.f32 %v2480, %v4353
    %v4355 = vand.u32 %v4354, 4294901760
    %4356 = vmatpush1.msra.mxu0 %v4355
    %4357 = vmatprep.subr.mxu0 0.0
    %v4358 = vand.u32 %v2481, 4294901760
    %v4359 = vsub.f32 %v2481, %v4358
    %v4360 = vand.u32 %v4359, 4294901760
    %4361 = vmatpush1.msra.mxu0 %v4360
    %4362 = vmatprep.subr.mxu0 0.0
    %v4363 = vand.u32 %v2482, 4294901760
    %v4364 = vsub.f32 %v2482, %v4363
    %v4365 = vand.u32 %v4364, 4294901760
    %4366 = vmatpush1.msra.mxu0 %v4365
    %4367 = vmatprep.subr.mxu0 0.0
    %v4368 = vand.u32 %v2483, 4294901760
    %v4369 = vsub.f32 %v2483, %v4368
    %v4370 = vand.u32 %v4369, 4294901760
    %4371 = vmatpush1.msra.mxu0 %v4370
    %4372 = vmatprep.subr.mxu0 0.0
    %v4373 = vand.u32 %v2484, 4294901760
    %v4374 = vsub.f32 %v2484, %v4373
    %v4375 = vand.u32 %v4374, 4294901760
    %4376 = vmatpush1.msra.mxu0 %v4375
    %4377 = vmatprep.subr.mxu0 0.0
    %v4378 = vand.u32 %v2485, 4294901760
    %v4379 = vsub.f32 %v2485, %v4378
    %v4380 = vand.u32 %v4379, 4294901760
    %4381 = vmatpush1.msra.mxu0 %v4380
    %v4382 = vand.u32 %v2702, 4294901760
    %4383 = vmatprep.mubr.f32.mxu0 %v4382
    %v4384 = vand.u32 %v2700, 4294901760
    %4385 = vmatmul.mubr.f32.gmra.mrb[0].mxu0 %v4384
    %v4386 = vpop.f32.mrb[0].mxu0
    %v4387 = vadd.f32 %v4219, %v4386
    %v4388 = vpop.f32.mrb[0].mxu0
    %4389 = vdwg.mxu0
    %4390 = vmatprep.subr.mxu0 0.0
    %v4391 = vand.u32 %v2454, 4294901760
    %4392 = vmatpush1.msra.mxu0 %v4391
    %4393 = vmatprep.subr.mxu0 0.0
    %v4394 = vand.u32 %v2455, 4294901760
    %4395 = vmatpush1.msra.mxu0 %v4394
    %4396 = vmatprep.subr.mxu0 0.0
    %v4397 = vand.u32 %v2456, 4294901760
    %4398 = vmatpush1.msra.mxu0 %v4397
    %4399 = vmatprep.subr.mxu0 0.0
    %v4400 = vand.u32 %v2457, 4294901760
    %4401 = vmatpush1.msra.mxu0 %v4400
    %4402 = vmatprep.subr.mxu0 0.0
    %v4403 = vand.u32 %v2458, 4294901760
    %4404 = vmatpush1.msra.mxu0 %v4403
    %4405 = vmatprep.subr.mxu0 0.0
    %v4406 = vand.u32 %v2459, 4294901760
    %4407 = vmatpush1.msra.mxu0 %v4406
    %4408 = vmatprep.subr.mxu0 0.0
    %v4409 = vand.u32 %v2460, 4294901760
    %4410 = vmatpush1.msra.mxu0 %v4409
    %4411 = vmatprep.subr.mxu0 0.0
    %v4412 = vand.u32 %v2461, 4294901760
    %4413 = vmatpush1.msra.mxu0 %v4412
    %4414 = vmatprep.subr.mxu0 0.0
    %v4415 = vand.u32 %v2462, 4294901760
    %4416 = vmatpush1.msra.mxu0 %v4415
    %4417 = vmatprep.subr.mxu0 0.0
    %v4418 = vand.u32 %v2463, 4294901760
    %4419 = vmatpush1.msra.mxu0 %v4418
    %4420 = vmatprep.subr.mxu0 0.0
    %v4421 = vand.u32 %v2464, 4294901760
    %4422 = vmatpush1.msra.mxu0 %v4421
    %4423 = vmatprep.subr.mxu0 0.0
    %v4424 = vand.u32 %v2465, 4294901760
    %4425 = vmatpush1.msra.mxu0 %v4424
    %4426 = vmatprep.subr.mxu0 0.0
    %v4427 = vand.u32 %v2466, 4294901760
    %4428 = vmatpush1.msra.mxu0 %v4427
    %4429 = vmatprep.subr.mxu0 0.0
    %v4430 = vand.u32 %v2467, 4294901760
    %4431 = vmatpush1.msra.mxu0 %v4430
    %4432 = vmatprep.subr.mxu0 0.0
    %v4433 = vand.u32 %v2468, 4294901760
    %4434 = vmatpush1.msra.mxu0 %v4433
    %4435 = vmatprep.subr.mxu0 0.0
    %v4436 = vand.u32 %v2469, 4294901760
    %4437 = vmatpush1.msra.mxu0 %v4436
    %4438 = vmatprep.subr.mxu0 0.0
    %v4439 = vand.u32 %v2470, 4294901760
    %4440 = vmatpush1.msra.mxu0 %v4439
    %4441 = vmatprep.subr.mxu0 0.0
    %v4442 = vand.u32 %v2471, 4294901760
    %4443 = vmatpush1.msra.mxu0 %v4442
    %4444 = vmatprep.subr.mxu0 0.0
    %v4445 = vand.u32 %v2472, 4294901760
    %4446 = vmatpush1.msra.mxu0 %v4445
    %4447 = vmatprep.subr.mxu0 0.0
    %v4448 = vand.u32 %v2473, 4294901760
    %4449 = vmatpush1.msra.mxu0 %v4448
    %4450 = vmatprep.subr.mxu0 0.0
    %v4451 = vand.u32 %v2474, 4294901760
    %4452 = vmatpush1.msra.mxu0 %v4451
    %4453 = vmatprep.subr.mxu0 0.0
    %v4454 = vand.u32 %v2475, 4294901760
    %4455 = vmatpush1.msra.mxu0 %v4454
    %4456 = vmatprep.subr.mxu0 0.0
    %v4457 = vand.u32 %v2476, 4294901760
    %4458 = vmatpush1.msra.mxu0 %v4457
    %4459 = vmatprep.subr.mxu0 0.0
    %v4460 = vand.u32 %v2477, 4294901760
    %4461 = vmatpush1.msra.mxu0 %v4460
    %4462 = vmatprep.subr.mxu0 0.0
    %v4463 = vand.u32 %v2478, 4294901760
    %4464 = vmatpush1.msra.mxu0 %v4463
    %4465 = vmatprep.subr.mxu0 0.0
    %v4466 = vand.u32 %v2479, 4294901760
    %4467 = vmatpush1.msra.mxu0 %v4466
    %4468 = vmatprep.subr.mxu0 0.0
    %v4469 = vand.u32 %v2480, 4294901760
    %4470 = vmatpush1.msra.mxu0 %v4469
    %4471 = vmatprep.subr.mxu0 0.0
    %v4472 = vand.u32 %v2481, 4294901760
    %4473 = vmatpush1.msra.mxu0 %v4472
    %4474 = vmatprep.subr.mxu0 0.0
    %v4475 = vand.u32 %v2482, 4294901760
    %4476 = vmatpush1.msra.mxu0 %v4475
    %4477 = vmatprep.subr.mxu0 0.0
    %v4478 = vand.u32 %v2483, 4294901760
    %4479 = vmatpush1.msra.mxu0 %v4478
    %4480 = vmatprep.subr.mxu0 0.0
    %v4481 = vand.u32 %v2484, 4294901760
    %4482 = vmatpush1.msra.mxu0 %v4481
    %4483 = vmatprep.subr.mxu0 0.0
    %v4484 = vand.u32 %v2485, 4294901760
    %4485 = vmatpush1.msra.mxu0 %v4484
    %v4486 = vand.u32 %v2702, 4294901760
    %4487 = vmatprep.mubr.f32.mxu0 %v4486
    %v4488 = vand.u32 %v2700, 4294901760
    %4489 = vmatmul.mubr.f32.gmra.mrb[0].mxu0 %v4488
    %v4490 = vpop.f32.mrb[0].mxu0
    %v4491 = vadd.f32 %v4387, %v4490
    %v4492 = vpop.f32.mrb[0].mxu0
    %4493 = vdwg.mxu0
    %4494 = vmatprep.subr.mxu0 0.0
    %v4495 = vand.u32 %v2486, 4294901760
    %4496 = vmatpush1.msra.mxu0 %v4495
    %4497 = vmatprep.subr.mxu0 0.0
    %v4498 = vand.u32 %v2487, 4294901760
    %4499 = vmatpush1.msra.mxu0 %v4498
    %4500 = vmatprep.subr.mxu0 0.0
    %v4501 = vand.u32 %v2488, 4294901760
    %4502 = vmatpush1.msra.mxu0 %v4501
    %4503 = vmatprep.subr.mxu0 0.0
    %v4504 = vand.u32 %v2489, 4294901760
    %4505 = vmatpush1.msra.mxu0 %v4504
    %4506 = vmatprep.subr.mxu0 0.0
    %v4507 = vand.u32 %v2490, 4294901760
    %4508 = vmatpush1.msra.mxu0 %v4507
    %4509 = vmatprep.subr.mxu0 0.0
    %v4510 = vand.u32 %v2491, 4294901760
    %4511 = vmatpush1.msra.mxu0 %v4510
    %4512 = vmatprep.subr.mxu0 0.0
    %v4513 = vand.u32 %v2492, 4294901760
    %4514 = vmatpush1.msra.mxu0 %v4513
    %4515 = vmatprep.subr.mxu0 0.0
    %v4516 = vand.u32 %v2493, 4294901760
    %4517 = vmatpush1.msra.mxu0 %v4516
    %4518 = vmatprep.subr.mxu0 0.0
    %v4519 = vand.u32 %v2494, 4294901760
    %4520 = vmatpush1.msra.mxu0 %v4519
    %4521 = vmatprep.subr.mxu0 0.0
    %v4522 = vand.u32 %v2495, 4294901760
    %4523 = vmatpush1.msra.mxu0 %v4522
    %4524 = vmatprep.subr.mxu0 0.0
    %v4525 = vand.u32 %v2496, 4294901760
    %4526 = vmatpush1.msra.mxu0 %v4525
    %4527 = vmatprep.subr.mxu0 0.0
    %v4528 = vand.u32 %v2497, 4294901760
    %4529 = vmatpush1.msra.mxu0 %v4528
    %4530 = vmatprep.subr.mxu0 0.0
    %v4531 = vand.u32 %v2498, 4294901760
    %4532 = vmatpush1.msra.mxu0 %v4531
    %4533 = vmatprep.subr.mxu0 0.0
    %v4534 = vand.u32 %v2499, 4294901760
    %4535 = vmatpush1.msra.mxu0 %v4534
    %4536 = vmatprep.subr.mxu0 0.0
    %v4537 = vand.u32 %v2500, 4294901760
    %4538 = vmatpush1.msra.mxu0 %v4537
    %4539 = vmatprep.subr.mxu0 0.0
    %v4540 = vand.u32 %v2501, 4294901760
    %4541 = vmatpush1.msra.mxu0 %v4540
    %4542 = vmatprep.subr.mxu0 0.0
    %v4543 = vand.u32 %v2502, 4294901760
    %4544 = vmatpush1.msra.mxu0 %v4543
    %4545 = vmatprep.subr.mxu0 0.0
    %v4546 = vand.u32 %v2503, 4294901760
    %4547 = vmatpush1.msra.mxu0 %v4546
    %4548 = vmatprep.subr.mxu0 0.0
    %v4549 = vand.u32 %v2504, 4294901760
    %4550 = vmatpush1.msra.mxu0 %v4549
    %4551 = vmatprep.subr.mxu0 0.0
    %v4552 = vand.u32 %v2505, 4294901760
    %4553 = vmatpush1.msra.mxu0 %v4552
    %4554 = vmatprep.subr.mxu0 0.0
    %v4555 = vand.u32 %v2506, 4294901760
    %4556 = vmatpush1.msra.mxu0 %v4555
    %4557 = vmatprep.subr.mxu0 0.0
    %v4558 = vand.u32 %v2507, 4294901760
    %4559 = vmatpush1.msra.mxu0 %v4558
    %4560 = vmatprep.subr.mxu0 0.0
    %v4561 = vand.u32 %v2508, 4294901760
    %4562 = vmatpush1.msra.mxu0 %v4561
    %4563 = vmatprep.subr.mxu0 0.0
    %v4564 = vand.u32 %v2509, 4294901760
    %4565 = vmatpush1.msra.mxu0 %v4564
    %4566 = vmatprep.subr.mxu0 0.0
    %v4567 = vand.u32 %v2510, 4294901760
    %4568 = vmatpush1.msra.mxu0 %v4567
    %4569 = vmatprep.subr.mxu0 0.0
    %v4570 = vand.u32 %v2511, 4294901760
    %4571 = vmatpush1.msra.mxu0 %v4570
    %4572 = vmatprep.subr.mxu0 0.0
    %v4573 = vand.u32 %v2512, 4294901760
    %4574 = vmatpush1.msra.mxu0 %v4573
    %4575 = vmatprep.subr.mxu0 0.0
    %v4576 = vand.u32 %v2513, 4294901760
    %4577 = vmatpush1.msra.mxu0 %v4576
    %4578 = vmatprep.subr.mxu0 0.0
    %v4579 = vand.u32 %v2514, 4294901760
    %4580 = vmatpush1.msra.mxu0 %v4579
    %4581 = vmatprep.subr.mxu0 0.0
    %v4582 = vand.u32 %v2515, 4294901760
    %4583 = vmatpush1.msra.mxu0 %v4582
    %4584 = vmatprep.subr.mxu0 0.0
    %v4585 = vand.u32 %v2516, 4294901760
    %4586 = vmatpush1.msra.mxu0 %v4585
    %4587 = vmatprep.subr.mxu0 0.0
    %v4588 = vand.u32 %v2517, 4294901760
    %4589 = vmatpush1.msra.mxu0 %v4588
    %v4590 = vand.u32 %v2718, 4294901760
    %v4591 = vsub.f32 %v2718, %v4590
    %v4592 = vand.u32 %v4591, 4294901760
    %v4593 = vsub.f32 %v4591, %v4592
    %v4594 = vand.u32 %v4593, 4294901760
    %4595 = vmatprep.mubr.f32.mxu0 %v4594
    %v4596 = vand.u32 %v2710, 4294901760
    %v4597 = vsub.f32 %v2710, %v4596
    %v4598 = vand.u32 %v4597, 4294901760
    %v4599 = vsub.f32 %v4597, %v4598
    %v4600 = vand.u32 %v4599, 4294901760
    %4601 = vmatmul.mubr.f32.gmra.mrb[0].mxu0 %v4600
    %v4602 = vpop.f32.mrb[0].mxu0
    %v4603 = vadd.f32 %v4491, %v4602
    %v4604 = vpop.f32.mrb[0].mxu0
    %4605 = vdwg.mxu0
    %4606 = vmatprep.subr.mxu0 0.0
    %v4607 = vand.u32 %v2486, 4294901760
    %v4608 = vsub.f32 %v2486, %v4607
    %v4609 = vand.u32 %v4608, 4294901760
    %v4610 = vsub.f32 %v4608, %v4609
    %v4611 = vand.u32 %v4610, 4294901760
    %4612 = vmatpush1.msra.mxu0 %v4611
    %4613 = vmatprep.subr.mxu0 0.0
    %v4614 = vand.u32 %v2487, 4294901760
    %v4615 = vsub.f32 %v2487, %v4614
    %v4616 = vand.u32 %v4615, 4294901760
    %v4617 = vsub.f32 %v4615, %v4616
    %v4618 = vand.u32 %v4617, 4294901760
    %4619 = vmatpush1.msra.mxu0 %v4618
    %4620 = vmatprep.subr.mxu0 0.0
    %v4621 = vand.u32 %v2488, 4294901760
    %v4622 = vsub.f32 %v2488, %v4621
    %v4623 = vand.u32 %v4622, 4294901760
    %v4624 = vsub.f32 %v4622, %v4623
    %v4625 = vand.u32 %v4624, 4294901760
    %4626 = vmatpush1.msra.mxu0 %v4625
    %4627 = vmatprep.subr.mxu0 0.0
    %v4628 = vand.u32 %v2489, 4294901760
    %v4629 = vsub.f32 %v2489, %v4628
    %v4630 = vand.u32 %v4629, 4294901760
    %v4631 = vsub.f32 %v4629, %v4630
    %v4632 = vand.u32 %v4631, 4294901760
    %4633 = vmatpush1.msra.mxu0 %v4632
    %4634 = vmatprep.subr.mxu0 0.0
    %v4635 = vand.u32 %v2490, 4294901760
    %v4636 = vsub.f32 %v2490, %v4635
    %v4637 = vand.u32 %v4636, 4294901760
    %v4638 = vsub.f32 %v4636, %v4637
    %v4639 = vand.u32 %v4638, 4294901760
    %4640 = vmatpush1.msra.mxu0 %v4639
    %4641 = vmatprep.subr.mxu0 0.0
    %v4642 = vand.u32 %v2491, 4294901760
    %v4643 = vsub.f32 %v2491, %v4642
    %v4644 = vand.u32 %v4643, 4294901760
    %v4645 = vsub.f32 %v4643, %v4644
    %v4646 = vand.u32 %v4645, 4294901760
    %4647 = vmatpush1.msra.mxu0 %v4646
    %4648 = vmatprep.subr.mxu0 0.0
    %v4649 = vand.u32 %v2492, 4294901760
    %v4650 = vsub.f32 %v2492, %v4649
    %v4651 = vand.u32 %v4650, 4294901760
    %v4652 = vsub.f32 %v4650, %v4651
    %v4653 = vand.u32 %v4652, 4294901760
    %4654 = vmatpush1.msra.mxu0 %v4653
    %4655 = vmatprep.subr.mxu0 0.0
    %v4656 = vand.u32 %v2493, 4294901760
    %v4657 = vsub.f32 %v2493, %v4656
    %v4658 = vand.u32 %v4657, 4294901760
    %v4659 = vsub.f32 %v4657, %v4658
    %v4660 = vand.u32 %v4659, 4294901760
    %4661 = vmatpush1.msra.mxu0 %v4660
    %4662 = vmatprep.subr.mxu0 0.0
    %v4663 = vand.u32 %v2494, 4294901760
    %v4664 = vsub.f32 %v2494, %v4663
    %v4665 = vand.u32 %v4664, 4294901760
    %v4666 = vsub.f32 %v4664, %v4665
    %v4667 = vand.u32 %v4666, 4294901760
    %4668 = vmatpush1.msra.mxu0 %v4667
    %4669 = vmatprep.subr.mxu0 0.0
    %v4670 = vand.u32 %v2495, 4294901760
    %v4671 = vsub.f32 %v2495, %v4670
    %v4672 = vand.u32 %v4671, 4294901760
    %v4673 = vsub.f32 %v4671, %v4672
    %v4674 = vand.u32 %v4673, 4294901760
    %4675 = vmatpush1.msra.mxu0 %v4674
    %4676 = vmatprep.subr.mxu0 0.0
    %v4677 = vand.u32 %v2496, 4294901760
    %v4678 = vsub.f32 %v2496, %v4677
    %v4679 = vand.u32 %v4678, 4294901760
    %v4680 = vsub.f32 %v4678, %v4679
    %v4681 = vand.u32 %v4680, 4294901760
    %4682 = vmatpush1.msra.mxu0 %v4681
    %4683 = vmatprep.subr.mxu0 0.0
    %v4684 = vand.u32 %v2497, 4294901760
    %v4685 = vsub.f32 %v2497, %v4684
    %v4686 = vand.u32 %v4685, 4294901760
    %v4687 = vsub.f32 %v4685, %v4686
    %v4688 = vand.u32 %v4687, 4294901760
    %4689 = vmatpush1.msra.mxu0 %v4688
    %4690 = vmatprep.subr.mxu0 0.0
    %v4691 = vand.u32 %v2498, 4294901760
    %v4692 = vsub.f32 %v2498, %v4691
    %v4693 = vand.u32 %v4692, 4294901760
    %v4694 = vsub.f32 %v4692, %v4693
    %v4695 = vand.u32 %v4694, 4294901760
    %4696 = vmatpush1.msra.mxu0 %v4695
    %4697 = vmatprep.subr.mxu0 0.0
    %v4698 = vand.u32 %v2499, 4294901760
    %v4699 = vsub.f32 %v2499, %v4698
    %v4700 = vand.u32 %v4699, 4294901760
    %v4701 = vsub.f32 %v4699, %v4700
    %v4702 = vand.u32 %v4701, 4294901760
    %4703 = vmatpush1.msra.mxu0 %v4702
    %4704 = vmatprep.subr.mxu0 0.0
    %v4705 = vand.u32 %v2500, 4294901760
    %v4706 = vsub.f32 %v2500, %v4705
    %v4707 = vand.u32 %v4706, 4294901760
    %v4708 = vsub.f32 %v4706, %v4707
    %v4709 = vand.u32 %v4708, 4294901760
    %4710 = vmatpush1.msra.mxu0 %v4709
    %4711 = vmatprep.subr.mxu0 0.0
    %v4712 = vand.u32 %v2501, 4294901760
    %v4713 = vsub.f32 %v2501, %v4712
    %v4714 = vand.u32 %v4713, 4294901760
    %v4715 = vsub.f32 %v4713, %v4714
    %v4716 = vand.u32 %v4715, 4294901760
    %4717 = vmatpush1.msra.mxu0 %v4716
    %4718 = vmatprep.subr.mxu0 0.0
    %v4719 = vand.u32 %v2502, 4294901760
    %v4720 = vsub.f32 %v2502, %v4719
    %v4721 = vand.u32 %v4720, 4294901760
    %v4722 = vsub.f32 %v4720, %v4721
    %v4723 = vand.u32 %v4722, 4294901760
    %4724 = vmatpush1.msra.mxu0 %v4723
    %4725 = vmatprep.subr.mxu0 0.0
    %v4726 = vand.u32 %v2503, 4294901760
    %v4727 = vsub.f32 %v2503, %v4726
    %v4728 = vand.u32 %v4727, 4294901760
    %v4729 = vsub.f32 %v4727, %v4728
    %v4730 = vand.u32 %v4729, 4294901760
    %4731 = vmatpush1.msra.mxu0 %v4730
    %4732 = vmatprep.subr.mxu0 0.0
    %v4733 = vand.u32 %v2504, 4294901760
    %v4734 = vsub.f32 %v2504, %v4733
    %v4735 = vand.u32 %v4734, 4294901760
    %v4736 = vsub.f32 %v4734, %v4735
    %v4737 = vand.u32 %v4736, 4294901760
    %4738 = vmatpush1.msra.mxu0 %v4737
    %4739 = vmatprep.subr.mxu0 0.0
    %v4740 = vand.u32 %v2505, 4294901760
    %v4741 = vsub.f32 %v2505, %v4740
    %v4742 = vand.u32 %v4741, 4294901760
    %v4743 = vsub.f32 %v4741, %v4742
    %v4744 = vand.u32 %v4743, 4294901760
    %4745 = vmatpush1.msra.mxu0 %v4744
    %4746 = vmatprep.subr.mxu0 0.0
    %v4747 = vand.u32 %v2506, 4294901760
    %v4748 = vsub.f32 %v2506, %v4747
    %v4749 = vand.u32 %v4748, 4294901760
    %v4750 = vsub.f32 %v4748, %v4749
    %v4751 = vand.u32 %v4750, 4294901760
    %4752 = vmatpush1.msra.mxu0 %v4751
    %4753 = vmatprep.subr.mxu0 0.0
    %v4754 = vand.u32 %v2507, 4294901760
    %v4755 = vsub.f32 %v2507, %v4754
    %v4756 = vand.u32 %v4755, 4294901760
    %v4757 = vsub.f32 %v4755, %v4756
    %v4758 = vand.u32 %v4757, 4294901760
    %4759 = vmatpush1.msra.mxu0 %v4758
    %4760 = vmatprep.subr.mxu0 0.0
    %v4761 = vand.u32 %v2508, 4294901760
    %v4762 = vsub.f32 %v2508, %v4761
    %v4763 = vand.u32 %v4762, 4294901760
    %v4764 = vsub.f32 %v4762, %v4763
    %v4765 = vand.u32 %v4764, 4294901760
    %4766 = vmatpush1.msra.mxu0 %v4765
    %4767 = vmatprep.subr.mxu0 0.0
    %v4768 = vand.u32 %v2509, 4294901760
    %v4769 = vsub.f32 %v2509, %v4768
    %v4770 = vand.u32 %v4769, 4294901760
    %v4771 = vsub.f32 %v4769, %v4770
    %v4772 = vand.u32 %v4771, 4294901760
    %4773 = vmatpush1.msra.mxu0 %v4772
    %4774 = vmatprep.subr.mxu0 0.0
    %v4775 = vand.u32 %v2510, 4294901760
    %v4776 = vsub.f32 %v2510, %v4775
    %v4777 = vand.u32 %v4776, 4294901760
    %v4778 = vsub.f32 %v4776, %v4777
    %v4779 = vand.u32 %v4778, 4294901760
    %4780 = vmatpush1.msra.mxu0 %v4779
    %4781 = vmatprep.subr.mxu0 0.0
    %v4782 = vand.u32 %v2511, 4294901760
    %v4783 = vsub.f32 %v2511, %v4782
    %v4784 = vand.u32 %v4783, 4294901760
    %v4785 = vsub.f32 %v4783, %v4784
    %v4786 = vand.u32 %v4785, 4294901760
    %4787 = vmatpush1.msra.mxu0 %v4786
    %4788 = vmatprep.subr.mxu0 0.0
    %v4789 = vand.u32 %v2512, 4294901760
    %v4790 = vsub.f32 %v2512, %v4789
    %v4791 = vand.u32 %v4790, 4294901760
    %v4792 = vsub.f32 %v4790, %v4791
    %v4793 = vand.u32 %v4792, 4294901760
    %4794 = vmatpush1.msra.mxu0 %v4793
    %4795 = vmatprep.subr.mxu0 0.0
    %v4796 = vand.u32 %v2513, 4294901760
    %v4797 = vsub.f32 %v2513, %v4796
    %v4798 = vand.u32 %v4797, 4294901760
    %v4799 = vsub.f32 %v4797, %v4798
    %v4800 = vand.u32 %v4799, 4294901760
    %4801 = vmatpush1.msra.mxu0 %v4800
    %4802 = vmatprep.subr.mxu0 0.0
    %v4803 = vand.u32 %v2514, 4294901760
    %v4804 = vsub.f32 %v2514, %v4803
    %v4805 = vand.u32 %v4804, 4294901760
    %v4806 = vsub.f32 %v4804, %v4805
    %v4807 = vand.u32 %v4806, 4294901760
    %4808 = vmatpush1.msra.mxu0 %v4807
    %4809 = vmatprep.subr.mxu0 0.0
    %v4810 = vand.u32 %v2515, 4294901760
    %v4811 = vsub.f32 %v2515, %v4810
    %v4812 = vand.u32 %v4811, 4294901760
    %v4813 = vsub.f32 %v4811, %v4812
    %v4814 = vand.u32 %v4813, 4294901760
    %4815 = vmatpush1.msra.mxu0 %v4814
    %4816 = vmatprep.subr.mxu0 0.0
    %v4817 = vand.u32 %v2516, 4294901760
    %v4818 = vsub.f32 %v2516, %v4817
    %v4819 = vand.u32 %v4818, 4294901760
    %v4820 = vsub.f32 %v4818, %v4819
    %v4821 = vand.u32 %v4820, 4294901760
    %4822 = vmatpush1.msra.mxu0 %v4821
    %4823 = vmatprep.subr.mxu0 0.0
    %v4824 = vand.u32 %v2517, 4294901760
    %v4825 = vsub.f32 %v2517, %v4824
    %v4826 = vand.u32 %v4825, 4294901760
    %v4827 = vsub.f32 %v4825, %v4826
    %v4828 = vand.u32 %v4827, 4294901760
    %4829 = vmatpush1.msra.mxu0 %v4828
    %v4830 = vand.u32 %v2718, 4294901760
    %4831 = vmatprep.mubr.f32.mxu0 %v4830
    %v4832 = vand.u32 %v2710, 4294901760
    %4833 = vmatmul.mubr.f32.gmra.mrb[0].mxu0 %v4832
    %v4834 = vpop.f32.mrb[0].mxu0
    %v4835 = vadd.f32 %v4603, %v4834
    %v4836 = vpop.f32.mrb[0].mxu0
    %4837 = vdwg.mxu0
    %4838 = vmatprep.subr.mxu0 0.0
    %v4839 = vand.u32 %v2486, 4294901760
    %v4840 = vsub.f32 %v2486, %v4839
    %4841 = vmatpush1.msra.mxu0 %v4840
    %4842 = vmatprep.subr.mxu0 0.0
    %v4843 = vand.u32 %v2487, 4294901760
    %v4844 = vsub.f32 %v2487, %v4843
    %4845 = vmatpush1.msra.mxu0 %v4844
    %4846 = vmatprep.subr.mxu0 0.0
    %v4847 = vand.u32 %v2488, 4294901760
    %v4848 = vsub.f32 %v2488, %v4847
    %4849 = vmatpush1.msra.mxu0 %v4848
    %4850 = vmatprep.subr.mxu0 0.0
    %v4851 = vand.u32 %v2489, 4294901760
    %v4852 = vsub.f32 %v2489, %v4851
    %4853 = vmatpush1.msra.mxu0 %v4852
    %4854 = vmatprep.subr.mxu0 0.0
    %v4855 = vand.u32 %v2490, 4294901760
    %v4856 = vsub.f32 %v2490, %v4855
    %4857 = vmatpush1.msra.mxu0 %v4856
    %4858 = vmatprep.subr.mxu0 0.0
    %v4859 = vand.u32 %v2491, 4294901760
    %v4860 = vsub.f32 %v2491, %v4859
    %4861 = vmatpush1.msra.mxu0 %v4860
    %4862 = vmatprep.subr.mxu0 0.0
    %v4863 = vand.u32 %v2492, 4294901760
    %v4864 = vsub.f32 %v2492, %v4863
    %4865 = vmatpush1.msra.mxu0 %v4864
    %4866 = vmatprep.subr.mxu0 0.0
    %v4867 = vand.u32 %v2493, 4294901760
    %v4868 = vsub.f32 %v2493, %v4867
    %4869 = vmatpush1.msra.mxu0 %v4868
    %4870 = vmatprep.subr.mxu0 0.0
    %v4871 = vand.u32 %v2494, 4294901760
    %v4872 = vsub.f32 %v2494, %v4871
    %4873 = vmatpush1.msra.mxu0 %v4872
    %4874 = vmatprep.subr.mxu0 0.0
    %v4875 = vand.u32 %v2495, 4294901760
    %v4876 = vsub.f32 %v2495, %v4875
    %4877 = vmatpush1.msra.mxu0 %v4876
    %4878 = vmatprep.subr.mxu0 0.0
    %v4879 = vand.u32 %v2496, 4294901760
    %v4880 = vsub.f32 %v2496, %v4879
    %4881 = vmatpush1.msra.mxu0 %v4880
    %4882 = vmatprep.subr.mxu0 0.0
    %v4883 = vand.u32 %v2497, 4294901760
    %v4884 = vsub.f32 %v2497, %v4883
    %4885 = vmatpush1.msra.mxu0 %v4884
    %4886 = vmatprep.subr.mxu0 0.0
    %v4887 = vand.u32 %v2498, 4294901760
    %v4888 = vsub.f32 %v2498, %v4887
    %4889 = vmatpush1.msra.mxu0 %v4888
    %4890 = vmatprep.subr.mxu0 0.0
    %v4891 = vand.u32 %v2499, 4294901760
    %v4892 = vsub.f32 %v2499, %v4891
    %4893 = vmatpush1.msra.mxu0 %v4892
    %4894 = vmatprep.subr.mxu0 0.0
    %v4895 = vand.u32 %v2500, 4294901760
    %v4896 = vsub.f32 %v2500, %v4895
    %4897 = vmatpush1.msra.mxu0 %v4896
    %4898 = vmatprep.subr.mxu0 0.0
    %v4899 = vand.u32 %v2501, 4294901760
    %v4900 = vsub.f32 %v2501, %v4899
    %4901 = vmatpush1.msra.mxu0 %v4900
    %4902 = vmatprep.subr.mxu0 0.0
    %v4903 = vand.u32 %v2502, 4294901760
    %v4904 = vsub.f32 %v2502, %v4903
    %4905 = vmatpush1.msra.mxu0 %v4904
    %4906 = vmatprep.subr.mxu0 0.0
    %v4907 = vand.u32 %v2503, 4294901760
    %v4908 = vsub.f32 %v2503, %v4907
    %4909 = vmatpush1.msra.mxu0 %v4908
    %4910 = vmatprep.subr.mxu0 0.0
    %v4911 = vand.u32 %v2504, 4294901760
    %v4912 = vsub.f32 %v2504, %v4911
    %4913 = vmatpush1.msra.mxu0 %v4912
    %4914 = vmatprep.subr.mxu0 0.0
    %v4915 = vand.u32 %v2505, 4294901760
    %v4916 = vsub.f32 %v2505, %v4915
    %4917 = vmatpush1.msra.mxu0 %v4916
    %4918 = vmatprep.subr.mxu0 0.0
    %v4919 = vand.u32 %v2506, 4294901760
    %v4920 = vsub.f32 %v2506, %v4919
    %4921 = vmatpush1.msra.mxu0 %v4920
    %4922 = vmatprep.subr.mxu0 0.0
    %v4923 = vand.u32 %v2507, 4294901760
    %v4924 = vsub.f32 %v2507, %v4923
    %4925 = vmatpush1.msra.mxu0 %v4924
    %4926 = vmatprep.subr.mxu0 0.0
    %v4927 = vand.u32 %v2508, 4294901760
    %v4928 = vsub.f32 %v2508, %v4927
    %4929 = vmatpush1.msra.mxu0 %v4928
    %4930 = vmatprep.subr.mxu0 0.0
    %v4931 = vand.u32 %v2509, 4294901760
    %v4932 = vsub.f32 %v2509, %v4931
    %4933 = vmatpush1.msra.mxu0 %v4932
    %4934 = vmatprep.subr.mxu0 0.0
    %v4935 = vand.u32 %v2510, 4294901760
    %v4936 = vsub.f32 %v2510, %v4935
    %4937 = vmatpush1.msra.mxu0 %v4936
    %4938 = vmatprep.subr.mxu0 0.0
    %v4939 = vand.u32 %v2511, 4294901760
    %v4940 = vsub.f32 %v2511, %v4939
    %4941 = vmatpush1.msra.mxu0 %v4940
    %4942 = vmatprep.subr.mxu0 0.0
    %v4943 = vand.u32 %v2512, 4294901760
    %v4944 = vsub.f32 %v2512, %v4943
    %4945 = vmatpush1.msra.mxu0 %v4944
    %4946 = vmatprep.subr.mxu0 0.0
    %v4947 = vand.u32 %v2513, 4294901760
    %v4948 = vsub.f32 %v2513, %v4947
    %4949 = vmatpush1.msra.mxu0 %v4948
    %4950 = vmatprep.subr.mxu0 0.0
    %v4951 = vand.u32 %v2514, 4294901760
    %v4952 = vsub.f32 %v2514, %v4951
    %4953 = vmatpush1.msra.mxu0 %v4952
    %4954 = vmatprep.subr.mxu0 0.0
    %v4955 = vand.u32 %v2515, 4294901760
    %v4956 = vsub.f32 %v2515, %v4955
    %4957 = vmatpush1.msra.mxu0 %v4956
    %4958 = vmatprep.subr.mxu0 0.0
    %v4959 = vand.u32 %v2516, 4294901760
    %v4960 = vsub.f32 %v2516, %v4959
    %4961 = vmatpush1.msra.mxu0 %v4960
    %4962 = vmatprep.subr.mxu0 0.0
    %v4963 = vand.u32 %v2517, 4294901760
    %v4964 = vsub.f32 %v2517, %v4963
    %4965 = vmatpush1.msra.mxu0 %v4964
    %v4966 = vand.u32 %v2718, 4294901760
    %v4967 = vsub.f32 %v2718, %v4966
    %4968 = vmatprep.mubr.f32.mxu0 %v4967
    %v4969 = vand.u32 %v2710, 4294901760
    %v4970 = vsub.f32 %v2710, %v4969
    %4971 = vmatmul.mubr.f32.gmra.mrb[0].mxu0 %v4970
    %v4972 = vpop.f32.mrb[0].mxu0
    %v4973 = vadd.f32 %v4835, %v4972
    %v4974 = vpop.f32.mrb[0].mxu0
    %4975 = vdwg.mxu0
    %4976 = vmatprep.subr.mxu0 0.0
    %v4977 = vand.u32 %v2486, 4294901760
    %4978 = vmatpush1.msra.mxu0 %v4977
    %4979 = vmatprep.subr.mxu0 0.0
    %v4980 = vand.u32 %v2487, 4294901760
    %4981 = vmatpush1.msra.mxu0 %v4980
    %4982 = vmatprep.subr.mxu0 0.0
    %v4983 = vand.u32 %v2488, 4294901760
    %4984 = vmatpush1.msra.mxu0 %v4983
    %4985 = vmatprep.subr.mxu0 0.0
    %v4986 = vand.u32 %v2489, 4294901760
    %4987 = vmatpush1.msra.mxu0 %v4986
    %4988 = vmatprep.subr.mxu0 0.0
    %v4989 = vand.u32 %v2490, 4294901760
    %4990 = vmatpush1.msra.mxu0 %v4989
    %4991 = vmatprep.subr.mxu0 0.0
    %v4992 = vand.u32 %v2491, 4294901760
    %4993 = vmatpush1.msra.mxu0 %v4992
    %4994 = vmatprep.subr.mxu0 0.0
    %v4995 = vand.u32 %v2492, 4294901760
    %4996 = vmatpush1.msra.mxu0 %v4995
    %4997 = vmatprep.subr.mxu0 0.0
    %v4998 = vand.u32 %v2493, 4294901760
    %4999 = vmatpush1.msra.mxu0 %v4998
    %5000 = vmatprep.subr.mxu0 0.0
    %v5001 = vand.u32 %v2494, 4294901760
    %5002 = vmatpush1.msra.mxu0 %v5001
    %5003 = vmatprep.subr.mxu0 0.0
    %v5004 = vand.u32 %v2495, 4294901760
    %5005 = vmatpush1.msra.mxu0 %v5004
    %5006 = vmatprep.subr.mxu0 0.0
    %v5007 = vand.u32 %v2496, 4294901760
    %5008 = vmatpush1.msra.mxu0 %v5007
    %5009 = vmatprep.subr.mxu0 0.0
    %v5010 = vand.u32 %v2497, 4294901760
    %5011 = vmatpush1.msra.mxu0 %v5010
    %5012 = vmatprep.subr.mxu0 0.0
    %v5013 = vand.u32 %v2498, 4294901760
    %5014 = vmatpush1.msra.mxu0 %v5013
    %5015 = vmatprep.subr.mxu0 0.0
    %v5016 = vand.u32 %v2499, 4294901760
    %5017 = vmatpush1.msra.mxu0 %v5016
    %5018 = vmatprep.subr.mxu0 0.0
    %v5019 = vand.u32 %v2500, 4294901760
    %5020 = vmatpush1.msra.mxu0 %v5019
    %5021 = vmatprep.subr.mxu0 0.0
    %v5022 = vand.u32 %v2501, 4294901760
    %5023 = vmatpush1.msra.mxu0 %v5022
    %5024 = vmatprep.subr.mxu0 0.0
    %v5025 = vand.u32 %v2502, 4294901760
    %5026 = vmatpush1.msra.mxu0 %v5025
    %5027 = vmatprep.subr.mxu0 0.0
    %v5028 = vand.u32 %v2503, 4294901760
    %5029 = vmatpush1.msra.mxu0 %v5028
    %5030 = vmatprep.subr.mxu0 0.0
    %v5031 = vand.u32 %v2504, 4294901760
    %5032 = vmatpush1.msra.mxu0 %v5031
    %5033 = vmatprep.subr.mxu0 0.0
    %v5034 = vand.u32 %v2505, 4294901760
    %5035 = vmatpush1.msra.mxu0 %v5034
    %5036 = vmatprep.subr.mxu0 0.0
    %v5037 = vand.u32 %v2506, 4294901760
    %5038 = vmatpush1.msra.mxu0 %v5037
    %5039 = vmatprep.subr.mxu0 0.0
    %v5040 = vand.u32 %v2507, 4294901760
    %5041 = vmatpush1.msra.mxu0 %v5040
    %5042 = vmatprep.subr.mxu0 0.0
    %v5043 = vand.u32 %v2508, 4294901760
    %5044 = vmatpush1.msra.mxu0 %v5043
    %5045 = vmatprep.subr.mxu0 0.0
    %v5046 = vand.u32 %v2509, 4294901760
    %5047 = vmatpush1.msra.mxu0 %v5046
    %5048 = vmatprep.subr.mxu0 0.0
    %v5049 = vand.u32 %v2510, 4294901760
    %5050 = vmatpush1.msra.mxu0 %v5049
    %5051 = vmatprep.subr.mxu0 0.0
    %v5052 = vand.u32 %v2511, 4294901760
    %5053 = vmatpush1.msra.mxu0 %v5052
    %5054 = vmatprep.subr.mxu0 0.0
    %v5055 = vand.u32 %v2512, 4294901760
    %5056 = vmatpush1.msra.mxu0 %v5055
    %5057 = vmatprep.subr.mxu0 0.0
    %v5058 = vand.u32 %v2513, 4294901760
    %5059 = vmatpush1.msra.mxu0 %v5058
    %5060 = vmatprep.subr.mxu0 0.0
    %v5061 = vand.u32 %v2514, 4294901760
    %5062 = vmatpush1.msra.mxu0 %v5061
    %5063 = vmatprep.subr.mxu0 0.0
    %v5064 = vand.u32 %v2515, 4294901760
    %5065 = vmatpush1.msra.mxu0 %v5064
    %5066 = vmatprep.subr.mxu0 0.0
    %v5067 = vand.u32 %v2516, 4294901760
    %5068 = vmatpush1.msra.mxu0 %v5067
    %5069 = vmatprep.subr.mxu0 0.0
    %v5070 = vand.u32 %v2517, 4294901760
    %5071 = vmatpush1.msra.mxu0 %v5070
    %v5072 = vand.u32 %v2718, 4294901760
    %v5073 = vsub.f32 %v2718, %v5072
    %v5074 = vand.u32 %v5073, 4294901760
    %5075 = vmatprep.mubr.f32.mxu0 %v5074
    %v5076 = vand.u32 %v2710, 4294901760
    %v5077 = vsub.f32 %v2710, %v5076
    %v5078 = vand.u32 %v5077, 4294901760
    %5079 = vmatmul.mubr.f32.gmra.mrb[0].mxu0 %v5078
    %v5080 = vpop.f32.mrb[0].mxu0
    %v5081 = vadd.f32 %v4973, %v5080
    %v5082 = vpop.f32.mrb[0].mxu0
    %5083 = vdwg.mxu0
    %5084 = vmatprep.subr.mxu0 0.0
    %v5085 = vand.u32 %v2486, 4294901760
    %v5086 = vsub.f32 %v2486, %v5085
    %v5087 = vand.u32 %v5086, 4294901760
    %5088 = vmatpush1.msra.mxu0 %v5087
    %5089 = vmatprep.subr.mxu0 0.0
    %v5090 = vand.u32 %v2487, 4294901760
    %v5091 = vsub.f32 %v2487, %v5090
    %v5092 = vand.u32 %v5091, 4294901760
    %5093 = vmatpush1.msra.mxu0 %v5092
    %5094 = vmatprep.subr.mxu0 0.0
    %v5095 = vand.u32 %v2488, 4294901760
    %v5096 = vsub.f32 %v2488, %v5095
    %v5097 = vand.u32 %v5096, 4294901760
    %5098 = vmatpush1.msra.mxu0 %v5097
    %5099 = vmatprep.subr.mxu0 0.0
    %v5100 = vand.u32 %v2489, 4294901760
    %v5101 = vsub.f32 %v2489, %v5100
    %v5102 = vand.u32 %v5101, 4294901760
    %5103 = vmatpush1.msra.mxu0 %v5102
    %5104 = vmatprep.subr.mxu0 0.0
    %v5105 = vand.u32 %v2490, 4294901760
    %v5106 = vsub.f32 %v2490, %v5105
    %v5107 = vand.u32 %v5106, 4294901760
    %5108 = vmatpush1.msra.mxu0 %v5107
    %5109 = vmatprep.subr.mxu0 0.0
    %v5110 = vand.u32 %v2491, 4294901760
    %v5111 = vsub.f32 %v2491, %v5110
    %v5112 = vand.u32 %v5111, 4294901760
    %5113 = vmatpush1.msra.mxu0 %v5112
    %5114 = vmatprep.subr.mxu0 0.0
    %v5115 = vand.u32 %v2492, 4294901760
    %v5116 = vsub.f32 %v2492, %v5115
    %v5117 = vand.u32 %v5116, 4294901760
    %5118 = vmatpush1.msra.mxu0 %v5117
    %5119 = vmatprep.subr.mxu0 0.0
    %v5120 = vand.u32 %v2493, 4294901760
    %v5121 = vsub.f32 %v2493, %v5120
    %v5122 = vand.u32 %v5121, 4294901760
    %5123 = vmatpush1.msra.mxu0 %v5122
    %5124 = vmatprep.subr.mxu0 0.0
    %v5125 = vand.u32 %v2494, 4294901760
    %v5126 = vsub.f32 %v2494, %v5125
    %v5127 = vand.u32 %v5126, 4294901760
    %5128 = vmatpush1.msra.mxu0 %v5127
    %5129 = vmatprep.subr.mxu0 0.0
    %v5130 = vand.u32 %v2495, 4294901760
    %v5131 = vsub.f32 %v2495, %v5130
    %v5132 = vand.u32 %v5131, 4294901760
    %5133 = vmatpush1.msra.mxu0 %v5132
    %5134 = vmatprep.subr.mxu0 0.0
    %v5135 = vand.u32 %v2496, 4294901760
    %v5136 = vsub.f32 %v2496, %v5135
    %v5137 = vand.u32 %v5136, 4294901760
    %5138 = vmatpush1.msra.mxu0 %v5137
    %5139 = vmatprep.subr.mxu0 0.0
    %v5140 = vand.u32 %v2497, 4294901760
    %v5141 = vsub.f32 %v2497, %v5140
    %v5142 = vand.u32 %v5141, 4294901760
    %5143 = vmatpush1.msra.mxu0 %v5142
    %5144 = vmatprep.subr.mxu0 0.0
    %v5145 = vand.u32 %v2498, 4294901760
    %v5146 = vsub.f32 %v2498, %v5145
    %v5147 = vand.u32 %v5146, 4294901760
    %5148 = vmatpush1.msra.mxu0 %v5147
    %5149 = vmatprep.subr.mxu0 0.0
    %v5150 = vand.u32 %v2499, 4294901760
    %v5151 = vsub.f32 %v2499, %v5150
    %v5152 = vand.u32 %v5151, 4294901760
    %5153 = vmatpush1.msra.mxu0 %v5152
    %5154 = vmatprep.subr.mxu0 0.0
    %v5155 = vand.u32 %v2500, 4294901760
    %v5156 = vsub.f32 %v2500, %v5155
    %v5157 = vand.u32 %v5156, 4294901760
    %5158 = vmatpush1.msra.mxu0 %v5157
    %5159 = vmatprep.subr.mxu0 0.0
    %v5160 = vand.u32 %v2501, 4294901760
    %v5161 = vsub.f32 %v2501, %v5160
    %v5162 = vand.u32 %v5161, 4294901760
    %5163 = vmatpush1.msra.mxu0 %v5162
    %5164 = vmatprep.subr.mxu0 0.0
    %v5165 = vand.u32 %v2502, 4294901760
    %v5166 = vsub.f32 %v2502, %v5165
    %v5167 = vand.u32 %v5166, 4294901760
    %5168 = vmatpush1.msra.mxu0 %v5167
    %5169 = vmatprep.subr.mxu0 0.0
    %v5170 = vand.u32 %v2503, 4294901760
    %v5171 = vsub.f32 %v2503, %v5170
    %v5172 = vand.u32 %v5171, 4294901760
    %5173 = vmatpush1.msra.mxu0 %v5172
    %5174 = vmatprep.subr.mxu0 0.0
    %v5175 = vand.u32 %v2504, 4294901760
    %v5176 = vsub.f32 %v2504, %v5175
    %v5177 = vand.u32 %v5176, 4294901760
    %5178 = vmatpush1.msra.mxu0 %v5177
    %5179 = vmatprep.subr.mxu0 0.0
    %v5180 = vand.u32 %v2505, 4294901760
    %v5181 = vsub.f32 %v2505, %v5180
    %v5182 = vand.u32 %v5181, 4294901760
    %5183 = vmatpush1.msra.mxu0 %v5182
    %5184 = vmatprep.subr.mxu0 0.0
    %v5185 = vand.u32 %v2506, 4294901760
    %v5186 = vsub.f32 %v2506, %v5185
    %v5187 = vand.u32 %v5186, 4294901760
    %5188 = vmatpush1.msra.mxu0 %v5187
    %5189 = vmatprep.subr.mxu0 0.0
    %v5190 = vand.u32 %v2507, 4294901760
    %v5191 = vsub.f32 %v2507, %v5190
    %v5192 = vand.u32 %v5191, 4294901760
    %5193 = vmatpush1.msra.mxu0 %v5192
    %5194 = vmatprep.subr.mxu0 0.0
    %v5195 = vand.u32 %v2508, 4294901760
    %v5196 = vsub.f32 %v2508, %v5195
    %v5197 = vand.u32 %v5196, 4294901760
    %5198 = vmatpush1.msra.mxu0 %v5197
    %5199 = vmatprep.subr.mxu0 0.0
    %v5200 = vand.u32 %v2509, 4294901760
    %v5201 = vsub.f32 %v2509, %v5200
    %v5202 = vand.u32 %v5201, 4294901760
    %5203 = vmatpush1.msra.mxu0 %v5202
    %5204 = vmatprep.subr.mxu0 0.0
    %v5205 = vand.u32 %v2510, 4294901760
    %v5206 = vsub.f32 %v2510, %v5205
    %v5207 = vand.u32 %v5206, 4294901760
    %5208 = vmatpush1.msra.mxu0 %v5207
    %5209 = vmatprep.subr.mxu0 0.0
    %v5210 = vand.u32 %v2511, 4294901760
    %v5211 = vsub.f32 %v2511, %v5210
    %v5212 = vand.u32 %v5211, 4294901760
    %5213 = vmatpush1.msra.mxu0 %v5212
    %5214 = vmatprep.subr.mxu0 0.0
    %v5215 = vand.u32 %v2512, 4294901760
    %v5216 = vsub.f32 %v2512, %v5215
    %v5217 = vand.u32 %v5216, 4294901760
    %5218 = vmatpush1.msra.mxu0 %v5217
    %5219 = vmatprep.subr.mxu0 0.0
    %v5220 = vand.u32 %v2513, 4294901760
    %v5221 = vsub.f32 %v2513, %v5220
    %v5222 = vand.u32 %v5221, 4294901760
    %5223 = vmatpush1.msra.mxu0 %v5222
    %5224 = vmatprep.subr.mxu0 0.0
    %v5225 = vand.u32 %v2514, 4294901760
    %v5226 = vsub.f32 %v2514, %v5225
    %v5227 = vand.u32 %v5226, 4294901760
    %5228 = vmatpush1.msra.mxu0 %v5227
    %5229 = vmatprep.subr.mxu0 0.0
    %v5230 = vand.u32 %v2515, 4294901760
    %v5231 = vsub.f32 %v2515, %v5230
    %v5232 = vand.u32 %v5231, 4294901760
    %5233 = vmatpush1.msra.mxu0 %v5232
    %5234 = vmatprep.subr.mxu0 0.0
    %v5235 = vand.u32 %v2516, 4294901760
    %v5236 = vsub.f32 %v2516, %v5235
    %v5237 = vand.u32 %v5236, 4294901760
    %5238 = vmatpush1.msra.mxu0 %v5237
    %5239 = vmatprep.subr.mxu0 0.0
    %v5240 = vand.u32 %v2517, 4294901760
    %v5241 = vsub.f32 %v2517, %v5240
    %v5242 = vand.u32 %v5241, 4294901760
    %5243 = vmatpush1.msra.mxu0 %v5242
    %v5244 = vand.u32 %v2718, 4294901760
    %5245 = vmatprep.mubr.f32.mxu0 %v5244
    %v5246 = vand.u32 %v2710, 4294901760
    %5247 = vmatmul.mubr.f32.gmra.mrb[0].mxu0 %v5246
    %v5248 = vpop.f32.mrb[0].mxu0
    %v5249 = vadd.f32 %v5081, %v5248
    %v5250 = vpop.f32.mrb[0].mxu0
    %5251 = vdwg.mxu0
    %5252 = vmatprep.subr.mxu0 0.0
    %v5253 = vand.u32 %v2486, 4294901760
    %5254 = vmatpush1.msra.mxu0 %v5253
    %5255 = vmatprep.subr.mxu0 0.0
    %v5256 = vand.u32 %v2487, 4294901760
    %5257 = vmatpush1.msra.mxu0 %v5256
    %5258 = vmatprep.subr.mxu0 0.0
    %v5259 = vand.u32 %v2488, 4294901760
    %5260 = vmatpush1.msra.mxu0 %v5259
    %5261 = vmatprep.subr.mxu0 0.0
    %v5262 = vand.u32 %v2489, 4294901760
    %5263 = vmatpush1.msra.mxu0 %v5262
    %5264 = vmatprep.subr.mxu0 0.0
    %v5265 = vand.u32 %v2490, 4294901760
    %5266 = vmatpush1.msra.mxu0 %v5265
    %5267 = vmatprep.subr.mxu0 0.0
    %v5268 = vand.u32 %v2491, 4294901760
    %5269 = vmatpush1.msra.mxu0 %v5268
    %5270 = vmatprep.subr.mxu0 0.0
    %v5271 = vand.u32 %v2492, 4294901760
    %5272 = vmatpush1.msra.mxu0 %v5271
    %5273 = vmatprep.subr.mxu0 0.0
    %v5274 = vand.u32 %v2493, 4294901760
    %5275 = vmatpush1.msra.mxu0 %v5274
    %5276 = vmatprep.subr.mxu0 0.0
    %v5277 = vand.u32 %v2494, 4294901760
    %5278 = vmatpush1.msra.mxu0 %v5277
    %5279 = vmatprep.subr.mxu0 0.0
    %v5280 = vand.u32 %v2495, 4294901760
    %5281 = vmatpush1.msra.mxu0 %v5280
    %5282 = vmatprep.subr.mxu0 0.0
    %v5283 = vand.u32 %v2496, 4294901760
    %5284 = vmatpush1.msra.mxu0 %v5283
    %5285 = vmatprep.subr.mxu0 0.0
    %v5286 = vand.u32 %v2497, 4294901760
    %5287 = vmatpush1.msra.mxu0 %v5286
    %5288 = vmatprep.subr.mxu0 0.0
    %v5289 = vand.u32 %v2498, 4294901760
    %5290 = vmatpush1.msra.mxu0 %v5289
    %5291 = vmatprep.subr.mxu0 0.0
    %v5292 = vand.u32 %v2499, 4294901760
    %5293 = vmatpush1.msra.mxu0 %v5292
    %5294 = vmatprep.subr.mxu0 0.0
    %v5295 = vand.u32 %v2500, 4294901760
    %5296 = vmatpush1.msra.mxu0 %v5295
    %5297 = vmatprep.subr.mxu0 0.0
    %v5298 = vand.u32 %v2501, 4294901760
    %5299 = vmatpush1.msra.mxu0 %v5298
    %5300 = vmatprep.subr.mxu0 0.0
    %v5301 = vand.u32 %v2502, 4294901760
    %5302 = vmatpush1.msra.mxu0 %v5301
    %5303 = vmatprep.subr.mxu0 0.0
    %v5304 = vand.u32 %v2503, 4294901760
    %5305 = vmatpush1.msra.mxu0 %v5304
    %5306 = vmatprep.subr.mxu0 0.0
    %v5307 = vand.u32 %v2504, 4294901760
    %5308 = vmatpush1.msra.mxu0 %v5307
    %5309 = vmatprep.subr.mxu0 0.0
    %v5310 = vand.u32 %v2505, 4294901760
    %5311 = vmatpush1.msra.mxu0 %v5310
    %5312 = vmatprep.subr.mxu0 0.0
    %v5313 = vand.u32 %v2506, 4294901760
    %5314 = vmatpush1.msra.mxu0 %v5313
    %5315 = vmatprep.subr.mxu0 0.0
    %v5316 = vand.u32 %v2507, 4294901760
    %5317 = vmatpush1.msra.mxu0 %v5316
    %5318 = vmatprep.subr.mxu0 0.0
    %v5319 = vand.u32 %v2508, 4294901760
    %5320 = vmatpush1.msra.mxu0 %v5319
    %5321 = vmatprep.subr.mxu0 0.0
    %v5322 = vand.u32 %v2509, 4294901760
    %5323 = vmatpush1.msra.mxu0 %v5322
    %5324 = vmatprep.subr.mxu0 0.0
    %v5325 = vand.u32 %v2510, 4294901760
    %5326 = vmatpush1.msra.mxu0 %v5325
    %5327 = vmatprep.subr.mxu0 0.0
    %v5328 = vand.u32 %v2511, 4294901760
    %5329 = vmatpush1.msra.mxu0 %v5328
    %5330 = vmatprep.subr.mxu0 0.0
    %v5331 = vand.u32 %v2512, 4294901760
    %5332 = vmatpush1.msra.mxu0 %v5331
    %5333 = vmatprep.subr.mxu0 0.0
    %v5334 = vand.u32 %v2513, 4294901760
    %5335 = vmatpush1.msra.mxu0 %v5334
    %5336 = vmatprep.subr.mxu0 0.0
    %v5337 = vand.u32 %v2514, 4294901760
    %5338 = vmatpush1.msra.mxu0 %v5337
    %5339 = vmatprep.subr.mxu0 0.0
    %v5340 = vand.u32 %v2515, 4294901760
    %5341 = vmatpush1.msra.mxu0 %v5340
    %5342 = vmatprep.subr.mxu0 0.0
    %v5343 = vand.u32 %v2516, 4294901760
    %5344 = vmatpush1.msra.mxu0 %v5343
    %5345 = vmatprep.subr.mxu0 0.0
    %v5346 = vand.u32 %v2517, 4294901760
    %5347 = vmatpush1.msra.mxu0 %v5346
    %v5348 = vand.u32 %v2718, 4294901760
    %5349 = vmatprep.mubr.f32.mxu0 %v5348
    %v5350 = vand.u32 %v2710, 4294901760
    %5351 = vmatmul.mubr.f32.gmra.mrb[0].mxu0 %v5350
    %v5352 = vpop.f32.mrb[0].mxu0
    %v5353 = vadd.f32 %v5249, %v5352
    %v5354 = vpop.f32.mrb[0].mxu0
    %5355 = vdwg.mxu0
    %5356 = vmatprep.subr.mxu0 0.0
    %v5357 = vand.u32 %v2518, 4294901760
    %5358 = vmatpush1.msra.mxu0 %v5357
    %5359 = vmatprep.subr.mxu0 0.0
    %v5360 = vand.u32 %v2519, 4294901760
    %5361 = vmatpush1.msra.mxu0 %v5360
    %5362 = vmatprep.subr.mxu0 0.0
    %v5363 = vand.u32 %v2520, 4294901760
    %5364 = vmatpush1.msra.mxu0 %v5363
    %5365 = vmatprep.subr.mxu0 0.0
    %v5366 = vand.u32 %v2521, 4294901760
    %5367 = vmatpush1.msra.mxu0 %v5366
    %5368 = vmatprep.subr.mxu0 0.0
    %v5369 = vand.u32 %v2522, 4294901760
    %5370 = vmatpush1.msra.mxu0 %v5369
    %5371 = vmatprep.subr.mxu0 0.0
    %v5372 = vand.u32 %v2523, 4294901760
    %5373 = vmatpush1.msra.mxu0 %v5372
    %5374 = vmatprep.subr.mxu0 0.0
    %v5375 = vand.u32 %v2524, 4294901760
    %5376 = vmatpush1.msra.mxu0 %v5375
    %5377 = vmatprep.subr.mxu0 0.0
    %v5378 = vand.u32 %v2525, 4294901760
    %5379 = vmatpush1.msra.mxu0 %v5378
    %5380 = vmatprep.subr.mxu0 0.0
    %v5381 = vand.u32 %v2526, 4294901760
    %5382 = vmatpush1.msra.mxu0 %v5381
    %5383 = vmatprep.subr.mxu0 0.0
    %v5384 = vand.u32 %v2527, 4294901760
    %5385 = vmatpush1.msra.mxu0 %v5384
    %5386 = vmatprep.subr.mxu0 0.0
    %v5387 = vand.u32 %v2528, 4294901760
    %5388 = vmatpush1.msra.mxu0 %v5387
    %5389 = vmatprep.subr.mxu0 0.0
    %v5390 = vand.u32 %v2529, 4294901760
    %5391 = vmatpush1.msra.mxu0 %v5390
    %5392 = vmatprep.subr.mxu0 0.0
    %v5393 = vand.u32 %v2530, 4294901760
    %5394 = vmatpush1.msra.mxu0 %v5393
    %5395 = vmatprep.subr.mxu0 0.0
    %v5396 = vand.u32 %v2531, 4294901760
    %5397 = vmatpush1.msra.mxu0 %v5396
    %5398 = vmatprep.subr.mxu0 0.0
    %v5399 = vand.u32 %v2532, 4294901760
    %5400 = vmatpush1.msra.mxu0 %v5399
    %5401 = vmatprep.subr.mxu0 0.0
    %v5402 = vand.u32 %v2533, 4294901760
    %5403 = vmatpush1.msra.mxu0 %v5402
    %5404 = vmatprep.subr.mxu0 0.0
    %v5405 = vand.u32 %v2534, 4294901760
    %5406 = vmatpush1.msra.mxu0 %v5405
    %5407 = vmatprep.subr.mxu0 0.0
    %v5408 = vand.u32 %v2535, 4294901760
    %5409 = vmatpush1.msra.mxu0 %v5408
    %5410 = vmatprep.subr.mxu0 0.0
    %v5411 = vand.u32 %v2536, 4294901760
    %5412 = vmatpush1.msra.mxu0 %v5411
    %5413 = vmatprep.subr.mxu0 0.0
    %v5414 = vand.u32 %v2537, 4294901760
    %5415 = vmatpush1.msra.mxu0 %v5414
    %5416 = vmatprep.subr.mxu0 0.0
    %v5417 = vand.u32 %v2538, 4294901760
    %5418 = vmatpush1.msra.mxu0 %v5417
    %5419 = vmatprep.subr.mxu0 0.0
    %v5420 = vand.u32 %v2539, 4294901760
    %5421 = vmatpush1.msra.mxu0 %v5420
    %5422 = vmatprep.subr.mxu0 0.0
    %v5423 = vand.u32 %v2540, 4294901760
    %5424 = vmatpush1.msra.mxu0 %v5423
    %5425 = vmatprep.subr.mxu0 0.0
    %v5426 = vand.u32 %v2541, 4294901760
    %5427 = vmatpush1.msra.mxu0 %v5426
    %5428 = vmatprep.subr.mxu0 0.0
    %v5429 = vand.u32 %v2542, 4294901760
    %5430 = vmatpush1.msra.mxu0 %v5429
    %5431 = vmatprep.subr.mxu0 0.0
    %v5432 = vand.u32 %v2543, 4294901760
    %5433 = vmatpush1.msra.mxu0 %v5432
    %5434 = vmatprep.subr.mxu0 0.0
    %v5435 = vand.u32 %v2544, 4294901760
    %5436 = vmatpush1.msra.mxu0 %v5435
    %5437 = vmatprep.subr.mxu0 0.0
    %v5438 = vand.u32 %v2545, 4294901760
    %5439 = vmatpush1.msra.mxu0 %v5438
    %5440 = vmatprep.subr.mxu0 0.0
    %v5441 = vand.u32 %v2546, 4294901760
    %5442 = vmatpush1.msra.mxu0 %v5441
    %5443 = vmatprep.subr.mxu0 0.0
    %v5444 = vand.u32 %v2547, 4294901760
    %5445 = vmatpush1.msra.mxu0 %v5444
    %5446 = vmatprep.subr.mxu0 0.0
    %v5447 = vand.u32 %v2548, 4294901760
    %5448 = vmatpush1.msra.mxu0 %v5447
    %5449 = vmatprep.subr.mxu0 0.0
    %v5450 = vand.u32 %v2549, 4294901760
    %5451 = vmatpush1.msra.mxu0 %v5450
    %v5452 = vand.u32 %v2719, 4294901760
    %v5453 = vsub.f32 %v2719, %v5452
    %v5454 = vand.u32 %v5453, 4294901760
    %v5455 = vsub.f32 %v5453, %v5454
    %v5456 = vand.u32 %v5455, 4294901760
    %5457 = vmatprep.mubr.f32.mxu0 %v5456
    %v5458 = vand.u32 %v2717, 4294901760
    %v5459 = vsub.f32 %v2717, %v5458
    %v5460 = vand.u32 %v5459, 4294901760
    %v5461 = vsub.f32 %v5459, %v5460
    %v5462 = vand.u32 %v5461, 4294901760
    %5463 = vmatmul.mubr.f32.gmra.mrb[0].mxu0 %v5462
    %v5464 = vpop.f32.mrb[0].mxu0
    %v5465 = vadd.f32 %v5353, %v5464
    %v5466 = vpop.f32.mrb[0].mxu0
    %5467 = vdwg.mxu0
    %5468 = vmatprep.subr.mxu0 0.0
    %v5469 = vand.u32 %v2518, 4294901760
    %v5470 = vsub.f32 %v2518, %v5469
    %v5471 = vand.u32 %v5470, 4294901760
    %v5472 = vsub.f32 %v5470, %v5471
    %v5473 = vand.u32 %v5472, 4294901760
    %5474 = vmatpush1.msra.mxu0 %v5473
    %5475 = vmatprep.subr.mxu0 0.0
    %v5476 = vand.u32 %v2519, 4294901760
    %v5477 = vsub.f32 %v2519, %v5476
    %v5478 = vand.u32 %v5477, 4294901760
    %v5479 = vsub.f32 %v5477, %v5478
    %v5480 = vand.u32 %v5479, 4294901760
    %5481 = vmatpush1.msra.mxu0 %v5480
    %5482 = vmatprep.subr.mxu0 0.0
    %v5483 = vand.u32 %v2520, 4294901760
    %v5484 = vsub.f32 %v2520, %v5483
    %v5485 = vand.u32 %v5484, 4294901760
    %v5486 = vsub.f32 %v5484, %v5485
    %v5487 = vand.u32 %v5486, 4294901760
    %5488 = vmatpush1.msra.mxu0 %v5487
    %5489 = vmatprep.subr.mxu0 0.0
    %v5490 = vand.u32 %v2521, 4294901760
    %v5491 = vsub.f32 %v2521, %v5490
    %v5492 = vand.u32 %v5491, 4294901760
    %v5493 = vsub.f32 %v5491, %v5492
    %v5494 = vand.u32 %v5493, 4294901760
    %5495 = vmatpush1.msra.mxu0 %v5494
    %5496 = vmatprep.subr.mxu0 0.0
    %v5497 = vand.u32 %v2522, 4294901760
    %v5498 = vsub.f32 %v2522, %v5497
    %v5499 = vand.u32 %v5498, 4294901760
    %v5500 = vsub.f32 %v5498, %v5499
    %v5501 = vand.u32 %v5500, 4294901760
    %5502 = vmatpush1.msra.mxu0 %v5501
    %5503 = vmatprep.subr.mxu0 0.0
    %v5504 = vand.u32 %v2523, 4294901760
    %v5505 = vsub.f32 %v2523, %v5504
    %v5506 = vand.u32 %v5505, 4294901760
    %v5507 = vsub.f32 %v5505, %v5506
    %v5508 = vand.u32 %v5507, 4294901760
    %5509 = vmatpush1.msra.mxu0 %v5508
    %5510 = vmatprep.subr.mxu0 0.0
    %v5511 = vand.u32 %v2524, 4294901760
    %v5512 = vsub.f32 %v2524, %v5511
    %v5513 = vand.u32 %v5512, 4294901760
    %v5514 = vsub.f32 %v5512, %v5513
    %v5515 = vand.u32 %v5514, 4294901760
    %5516 = vmatpush1.msra.mxu0 %v5515
    %5517 = vmatprep.subr.mxu0 0.0
    %v5518 = vand.u32 %v2525, 4294901760
    %v5519 = vsub.f32 %v2525, %v5518
    %v5520 = vand.u32 %v5519, 4294901760
    %v5521 = vsub.f32 %v5519, %v5520
    %v5522 = vand.u32 %v5521, 4294901760
    %5523 = vmatpush1.msra.mxu0 %v5522
    %5524 = vmatprep.subr.mxu0 0.0
    %v5525 = vand.u32 %v2526, 4294901760
    %v5526 = vsub.f32 %v2526, %v5525
    %v5527 = vand.u32 %v5526, 4294901760
    %v5528 = vsub.f32 %v5526, %v5527
    %v5529 = vand.u32 %v5528, 4294901760
    %5530 = vmatpush1.msra.mxu0 %v5529
    %5531 = vmatprep.subr.mxu0 0.0
    %v5532 = vand.u32 %v2527, 4294901760
    %v5533 = vsub.f32 %v2527, %v5532
    %v5534 = vand.u32 %v5533, 4294901760
    %v5535 = vsub.f32 %v5533, %v5534
    %v5536 = vand.u32 %v5535, 4294901760
    %5537 = vmatpush1.msra.mxu0 %v5536
    %5538 = vmatprep.subr.mxu0 0.0
    %v5539 = vand.u32 %v2528, 4294901760
    %v5540 = vsub.f32 %v2528, %v5539
    %v5541 = vand.u32 %v5540, 4294901760
    %v5542 = vsub.f32 %v5540, %v5541
    %v5543 = vand.u32 %v5542, 4294901760
    %5544 = vmatpush1.msra.mxu0 %v5543
    %5545 = vmatprep.subr.mxu0 0.0
    %v5546 = vand.u32 %v2529, 4294901760
    %v5547 = vsub.f32 %v2529, %v5546
    %v5548 = vand.u32 %v5547, 4294901760
    %v5549 = vsub.f32 %v5547, %v5548
    %v5550 = vand.u32 %v5549, 4294901760
    %5551 = vmatpush1.msra.mxu0 %v5550
    %5552 = vmatprep.subr.mxu0 0.0
    %v5553 = vand.u32 %v2530, 4294901760
    %v5554 = vsub.f32 %v2530, %v5553
    %v5555 = vand.u32 %v5554, 4294901760
    %v5556 = vsub.f32 %v5554, %v5555
    %v5557 = vand.u32 %v5556, 4294901760
    %5558 = vmatpush1.msra.mxu0 %v5557
    %5559 = vmatprep.subr.mxu0 0.0
    %v5560 = vand.u32 %v2531, 4294901760
    %v5561 = vsub.f32 %v2531, %v5560
    %v5562 = vand.u32 %v5561, 4294901760
    %v5563 = vsub.f32 %v5561, %v5562
    %v5564 = vand.u32 %v5563, 4294901760
    %5565 = vmatpush1.msra.mxu0 %v5564
    %5566 = vmatprep.subr.mxu0 0.0
    %v5567 = vand.u32 %v2532, 4294901760
    %v5568 = vsub.f32 %v2532, %v5567
    %v5569 = vand.u32 %v5568, 4294901760
    %v5570 = vsub.f32 %v5568, %v5569
    %v5571 = vand.u32 %v5570, 4294901760
    %5572 = vmatpush1.msra.mxu0 %v5571
    %5573 = vmatprep.subr.mxu0 0.0
    %v5574 = vand.u32 %v2533, 4294901760
    %v5575 = vsub.f32 %v2533, %v5574
    %v5576 = vand.u32 %v5575, 4294901760
    %v5577 = vsub.f32 %v5575, %v5576
    %v5578 = vand.u32 %v5577, 4294901760
    %5579 = vmatpush1.msra.mxu0 %v5578
    %5580 = vmatprep.subr.mxu0 0.0
    %v5581 = vand.u32 %v2534, 4294901760
    %v5582 = vsub.f32 %v2534, %v5581
    %v5583 = vand.u32 %v5582, 4294901760
    %v5584 = vsub.f32 %v5582, %v5583
    %v5585 = vand.u32 %v5584, 4294901760
    %5586 = vmatpush1.msra.mxu0 %v5585
    %5587 = vmatprep.subr.mxu0 0.0
    %v5588 = vand.u32 %v2535, 4294901760
    %v5589 = vsub.f32 %v2535, %v5588
    %v5590 = vand.u32 %v5589, 4294901760
    %v5591 = vsub.f32 %v5589, %v5590
    %v5592 = vand.u32 %v5591, 4294901760
    %5593 = vmatpush1.msra.mxu0 %v5592
    %5594 = vmatprep.subr.mxu0 0.0
    %v5595 = vand.u32 %v2536, 4294901760
    %v5596 = vsub.f32 %v2536, %v5595
    %v5597 = vand.u32 %v5596, 4294901760
    %v5598 = vsub.f32 %v5596, %v5597
    %v5599 = vand.u32 %v5598, 4294901760
    %5600 = vmatpush1.msra.mxu0 %v5599
    %5601 = vmatprep.subr.mxu0 0.0
    %v5602 = vand.u32 %v2537, 4294901760
    %v5603 = vsub.f32 %v2537, %v5602
    %v5604 = vand.u32 %v5603, 4294901760
    %v5605 = vsub.f32 %v5603, %v5604
    %v5606 = vand.u32 %v5605, 4294901760
    %5607 = vmatpush1.msra.mxu0 %v5606
    %5608 = vmatprep.subr.mxu0 0.0
    %v5609 = vand.u32 %v2538, 4294901760
    %v5610 = vsub.f32 %v2538, %v5609
    %v5611 = vand.u32 %v5610, 4294901760
    %v5612 = vsub.f32 %v5610, %v5611
    %v5613 = vand.u32 %v5612, 4294901760
    %5614 = vmatpush1.msra.mxu0 %v5613
    %5615 = vmatprep.subr.mxu0 0.0
    %v5616 = vand.u32 %v2539, 4294901760
    %v5617 = vsub.f32 %v2539, %v5616
    %v5618 = vand.u32 %v5617, 4294901760
    %v5619 = vsub.f32 %v5617, %v5618
    %v5620 = vand.u32 %v5619, 4294901760
    %5621 = vmatpush1.msra.mxu0 %v5620
    %5622 = vmatprep.subr.mxu0 0.0
    %v5623 = vand.u32 %v2540, 4294901760
    %v5624 = vsub.f32 %v2540, %v5623
    %v5625 = vand.u32 %v5624, 4294901760
    %v5626 = vsub.f32 %v5624, %v5625
    %v5627 = vand.u32 %v5626, 4294901760
    %5628 = vmatpush1.msra.mxu0 %v5627
    %5629 = vmatprep.subr.mxu0 0.0
    %v5630 = vand.u32 %v2541, 4294901760
    %v5631 = vsub.f32 %v2541, %v5630
    %v5632 = vand.u32 %v5631, 4294901760
    %v5633 = vsub.f32 %v5631, %v5632
    %v5634 = vand.u32 %v5633, 4294901760
    %5635 = vmatpush1.msra.mxu0 %v5634
    %5636 = vmatprep.subr.mxu0 0.0
    %v5637 = vand.u32 %v2542, 4294901760
    %v5638 = vsub.f32 %v2542, %v5637
    %v5639 = vand.u32 %v5638, 4294901760
    %v5640 = vsub.f32 %v5638, %v5639
    %v5641 = vand.u32 %v5640, 4294901760
    %5642 = vmatpush1.msra.mxu0 %v5641
    %5643 = vmatprep.subr.mxu0 0.0
    %v5644 = vand.u32 %v2543, 4294901760
    %v5645 = vsub.f32 %v2543, %v5644
    %v5646 = vand.u32 %v5645, 4294901760
    %v5647 = vsub.f32 %v5645, %v5646
    %v5648 = vand.u32 %v5647, 4294901760
    %5649 = vmatpush1.msra.mxu0 %v5648
    %5650 = vmatprep.subr.mxu0 0.0
    %v5651 = vand.u32 %v2544, 4294901760
    %v5652 = vsub.f32 %v2544, %v5651
    %v5653 = vand.u32 %v5652, 4294901760
    %v5654 = vsub.f32 %v5652, %v5653
    %v5655 = vand.u32 %v5654, 4294901760
    %5656 = vmatpush1.msra.mxu0 %v5655
    %5657 = vmatprep.subr.mxu0 0.0
    %v5658 = vand.u32 %v2545, 4294901760
    %v5659 = vsub.f32 %v2545, %v5658
    %v5660 = vand.u32 %v5659, 4294901760
    %v5661 = vsub.f32 %v5659, %v5660
    %v5662 = vand.u32 %v5661, 4294901760
    %5663 = vmatpush1.msra.mxu0 %v5662
    %5664 = vmatprep.subr.mxu0 0.0
    %v5665 = vand.u32 %v2546, 4294901760
    %v5666 = vsub.f32 %v2546, %v5665
    %v5667 = vand.u32 %v5666, 4294901760
    %v5668 = vsub.f32 %v5666, %v5667
    %v5669 = vand.u32 %v5668, 4294901760
    %5670 = vmatpush1.msra.mxu0 %v5669
    %5671 = vmatprep.subr.mxu0 0.0
    %v5672 = vand.u32 %v2547, 4294901760
    %v5673 = vsub.f32 %v2547, %v5672
    %v5674 = vand.u32 %v5673, 4294901760
    %v5675 = vsub.f32 %v5673, %v5674
    %v5676 = vand.u32 %v5675, 4294901760
    %5677 = vmatpush1.msra.mxu0 %v5676
    %5678 = vmatprep.subr.mxu0 0.0
    %v5679 = vand.u32 %v2548, 4294901760
    %v5680 = vsub.f32 %v2548, %v5679
    %v5681 = vand.u32 %v5680, 4294901760
    %v5682 = vsub.f32 %v5680, %v5681
    %v5683 = vand.u32 %v5682, 4294901760
    %5684 = vmatpush1.msra.mxu0 %v5683
    %5685 = vmatprep.subr.mxu0 0.0
    %v5686 = vand.u32 %v2549, 4294901760
    %v5687 = vsub.f32 %v2549, %v5686
    %v5688 = vand.u32 %v5687, 4294901760
    %v5689 = vsub.f32 %v5687, %v5688
    %v5690 = vand.u32 %v5689, 4294901760
    %5691 = vmatpush1.msra.mxu0 %v5690
    %v5692 = vand.u32 %v2719, 4294901760
    %5693 = vmatprep.mubr.f32.mxu0 %v5692
    %v5694 = vand.u32 %v2717, 4294901760
    %5695 = vmatmul.mubr.f32.gmra.mrb[0].mxu0 %v5694
    %v5696 = vpop.f32.mrb[0].mxu0
    %v5697 = vadd.f32 %v5465, %v5696
    %v5698 = vpop.f32.mrb[0].mxu0
    %5699 = vdwg.mxu0
    %5700 = vmatprep.subr.mxu0 0.0
    %v5701 = vand.u32 %v2518, 4294901760
    %v5702 = vsub.f32 %v2518, %v5701
    %5703 = vmatpush1.msra.mxu0 %v5702
    %5704 = vmatprep.subr.mxu0 0.0
    %v5705 = vand.u32 %v2519, 4294901760
    %v5706 = vsub.f32 %v2519, %v5705
    %5707 = vmatpush1.msra.mxu0 %v5706
    %5708 = vmatprep.subr.mxu0 0.0
    %v5709 = vand.u32 %v2520, 4294901760
    %v5710 = vsub.f32 %v2520, %v5709
    %5711 = vmatpush1.msra.mxu0 %v5710
    %5712 = vmatprep.subr.mxu0 0.0
    %v5713 = vand.u32 %v2521, 4294901760
    %v5714 = vsub.f32 %v2521, %v5713
    %5715 = vmatpush1.msra.mxu0 %v5714
    %5716 = vmatprep.subr.mxu0 0.0
    %v5717 = vand.u32 %v2522, 4294901760
    %v5718 = vsub.f32 %v2522, %v5717
    %5719 = vmatpush1.msra.mxu0 %v5718
    %5720 = vmatprep.subr.mxu0 0.0
    %v5721 = vand.u32 %v2523, 4294901760
    %v5722 = vsub.f32 %v2523, %v5721
    %5723 = vmatpush1.msra.mxu0 %v5722
    %5724 = vmatprep.subr.mxu0 0.0
    %v5725 = vand.u32 %v2524, 4294901760
    %v5726 = vsub.f32 %v2524, %v5725
    %5727 = vmatpush1.msra.mxu0 %v5726
    %5728 = vmatprep.subr.mxu0 0.0
    %v5729 = vand.u32 %v2525, 4294901760
    %v5730 = vsub.f32 %v2525, %v5729
    %5731 = vmatpush1.msra.mxu0 %v5730
    %5732 = vmatprep.subr.mxu0 0.0
    %v5733 = vand.u32 %v2526, 4294901760
    %v5734 = vsub.f32 %v2526, %v5733
    %5735 = vmatpush1.msra.mxu0 %v5734
    %5736 = vmatprep.subr.mxu0 0.0
    %v5737 = vand.u32 %v2527, 4294901760
    %v5738 = vsub.f32 %v2527, %v5737
    %5739 = vmatpush1.msra.mxu0 %v5738
    %5740 = vmatprep.subr.mxu0 0.0
    %v5741 = vand.u32 %v2528, 4294901760
    %v5742 = vsub.f32 %v2528, %v5741
    %5743 = vmatpush1.msra.mxu0 %v5742
    %5744 = vmatprep.subr.mxu0 0.0
    %v5745 = vand.u32 %v2529, 4294901760
    %v5746 = vsub.f32 %v2529, %v5745
    %5747 = vmatpush1.msra.mxu0 %v5746
    %5748 = vmatprep.subr.mxu0 0.0
    %v5749 = vand.u32 %v2530, 4294901760
    %v5750 = vsub.f32 %v2530, %v5749
    %5751 = vmatpush1.msra.mxu0 %v5750
    %5752 = vmatprep.subr.mxu0 0.0
    %v5753 = vand.u32 %v2531, 4294901760
    %v5754 = vsub.f32 %v2531, %v5753
    %5755 = vmatpush1.msra.mxu0 %v5754
    %5756 = vmatprep.subr.mxu0 0.0
    %v5757 = vand.u32 %v2532, 4294901760
    %v5758 = vsub.f32 %v2532, %v5757
    %5759 = vmatpush1.msra.mxu0 %v5758
    %5760 = vmatprep.subr.mxu0 0.0
    %v5761 = vand.u32 %v2533, 4294901760
    %v5762 = vsub.f32 %v2533, %v5761
    %5763 = vmatpush1.msra.mxu0 %v5762
    %5764 = vmatprep.subr.mxu0 0.0
    %v5765 = vand.u32 %v2534, 4294901760
    %v5766 = vsub.f32 %v2534, %v5765
    %5767 = vmatpush1.msra.mxu0 %v5766
    %5768 = vmatprep.subr.mxu0 0.0
    %v5769 = vand.u32 %v2535, 4294901760
    %v5770 = vsub.f32 %v2535, %v5769
    %5771 = vmatpush1.msra.mxu0 %v5770
    %5772 = vmatprep.subr.mxu0 0.0
    %v5773 = vand.u32 %v2536, 4294901760
    %v5774 = vsub.f32 %v2536, %v5773
    %5775 = vmatpush1.msra.mxu0 %v5774
    %5776 = vmatprep.subr.mxu0 0.0
    %v5777 = vand.u32 %v2537, 4294901760
    %v5778 = vsub.f32 %v2537, %v5777
    %5779 = vmatpush1.msra.mxu0 %v5778
    %5780 = vmatprep.subr.mxu0 0.0
    %v5781 = vand.u32 %v2538, 4294901760
    %v5782 = vsub.f32 %v2538, %v5781
    %5783 = vmatpush1.msra.mxu0 %v5782
    %5784 = vmatprep.subr.mxu0 0.0
    %v5785 = vand.u32 %v2539, 4294901760
    %v5786 = vsub.f32 %v2539, %v5785
    %5787 = vmatpush1.msra.mxu0 %v5786
    %5788 = vmatprep.subr.mxu0 0.0
    %v5789 = vand.u32 %v2540, 4294901760
    %v5790 = vsub.f32 %v2540, %v5789
    %5791 = vmatpush1.msra.mxu0 %v5790
    %5792 = vmatprep.subr.mxu0 0.0
    %v5793 = vand.u32 %v2541, 4294901760
    %v5794 = vsub.f32 %v2541, %v5793
    %5795 = vmatpush1.msra.mxu0 %v5794
    %5796 = vmatprep.subr.mxu0 0.0
    %v5797 = vand.u32 %v2542, 4294901760
    %v5798 = vsub.f32 %v2542, %v5797
    %5799 = vmatpush1.msra.mxu0 %v5798
    %5800 = vmatprep.subr.mxu0 0.0
    %v5801 = vand.u32 %v2543, 4294901760
    %v5802 = vsub.f32 %v2543, %v5801
    %5803 = vmatpush1.msra.mxu0 %v5802
    %5804 = vmatprep.subr.mxu0 0.0
    %v5805 = vand.u32 %v2544, 4294901760
    %v5806 = vsub.f32 %v2544, %v5805
    %5807 = vmatpush1.msra.mxu0 %v5806
    %5808 = vmatprep.subr.mxu0 0.0
    %v5809 = vand.u32 %v2545, 4294901760
    %v5810 = vsub.f32 %v2545, %v5809
    %5811 = vmatpush1.msra.mxu0 %v5810
    %5812 = vmatprep.subr.mxu0 0.0
    %v5813 = vand.u32 %v2546, 4294901760
    %v5814 = vsub.f32 %v2546, %v5813
    %5815 = vmatpush1.msra.mxu0 %v5814
    %5816 = vmatprep.subr.mxu0 0.0
    %v5817 = vand.u32 %v2547, 4294901760
    %v5818 = vsub.f32 %v2547, %v5817
    %5819 = vmatpush1.msra.mxu0 %v5818
    %5820 = vmatprep.subr.mxu0 0.0
    %v5821 = vand.u32 %v2548, 4294901760
    %v5822 = vsub.f32 %v2548, %v5821
    %5823 = vmatpush1.msra.mxu0 %v5822
    %5824 = vmatprep.subr.mxu0 0.0
    %v5825 = vand.u32 %v2549, 4294901760
    %v5826 = vsub.f32 %v2549, %v5825
    %5827 = vmatpush1.msra.mxu0 %v5826
    %v5828 = vand.u32 %v2719, 4294901760
    %v5829 = vsub.f32 %v2719, %v5828
    %5830 = vmatprep.mubr.f32.mxu0 %v5829
    %v5831 = vand.u32 %v2717, 4294901760
    %v5832 = vsub.f32 %v2717, %v5831
    %5833 = vmatmul.mubr.f32.gmra.mrb[0].mxu0 %v5832
    %v5834 = vpop.f32.mrb[0].mxu0
    %v5835 = vadd.f32 %v5697, %v5834
    %v5836 = vpop.f32.mrb[0].mxu0
    %5837 = vdwg.mxu0
    %5838 = vmatprep.subr.mxu0 0.0
    %v5839 = vand.u32 %v2518, 4294901760
    %5840 = vmatpush1.msra.mxu0 %v5839
    %5841 = vmatprep.subr.mxu0 0.0
    %v5842 = vand.u32 %v2519, 4294901760
    %5843 = vmatpush1.msra.mxu0 %v5842
    %5844 = vmatprep.subr.mxu0 0.0
    %v5845 = vand.u32 %v2520, 4294901760
    %5846 = vmatpush1.msra.mxu0 %v5845
    %5847 = vmatprep.subr.mxu0 0.0
    %v5848 = vand.u32 %v2521, 4294901760
    %5849 = vmatpush1.msra.mxu0 %v5848
    %5850 = vmatprep.subr.mxu0 0.0
    %v5851 = vand.u32 %v2522, 4294901760
    %5852 = vmatpush1.msra.mxu0 %v5851
    %5853 = vmatprep.subr.mxu0 0.0
    %v5854 = vand.u32 %v2523, 4294901760
    %5855 = vmatpush1.msra.mxu0 %v5854
    %5856 = vmatprep.subr.mxu0 0.0
    %v5857 = vand.u32 %v2524, 4294901760
    %5858 = vmatpush1.msra.mxu0 %v5857
    %5859 = vmatprep.subr.mxu0 0.0
    %v5860 = vand.u32 %v2525, 4294901760
    %5861 = vmatpush1.msra.mxu0 %v5860
    %5862 = vmatprep.subr.mxu0 0.0
    %v5863 = vand.u32 %v2526, 4294901760
    %5864 = vmatpush1.msra.mxu0 %v5863
    %5865 = vmatprep.subr.mxu0 0.0
    %v5866 = vand.u32 %v2527, 4294901760
    %5867 = vmatpush1.msra.mxu0 %v5866
    %5868 = vmatprep.subr.mxu0 0.0
    %v5869 = vand.u32 %v2528, 4294901760
    %5870 = vmatpush1.msra.mxu0 %v5869
    %5871 = vmatprep.subr.mxu0 0.0
    %v5872 = vand.u32 %v2529, 4294901760
    %5873 = vmatpush1.msra.mxu0 %v5872
    %5874 = vmatprep.subr.mxu0 0.0
    %v5875 = vand.u32 %v2530, 4294901760
    %5876 = vmatpush1.msra.mxu0 %v5875
    %5877 = vmatprep.subr.mxu0 0.0
    %v5878 = vand.u32 %v2531, 4294901760
    %5879 = vmatpush1.msra.mxu0 %v5878
    %5880 = vmatprep.subr.mxu0 0.0
    %v5881 = vand.u32 %v2532, 4294901760
    %5882 = vmatpush1.msra.mxu0 %v5881
    %5883 = vmatprep.subr.mxu0 0.0
    %v5884 = vand.u32 %v2533, 4294901760
    %5885 = vmatpush1.msra.mxu0 %v5884
    %5886 = vmatprep.subr.mxu0 0.0
    %v5887 = vand.u32 %v2534, 4294901760
    %5888 = vmatpush1.msra.mxu0 %v5887
    %5889 = vmatprep.subr.mxu0 0.0
    %v5890 = vand.u32 %v2535, 4294901760
    %5891 = vmatpush1.msra.mxu0 %v5890
    %5892 = vmatprep.subr.mxu0 0.0
    %v5893 = vand.u32 %v2536, 4294901760
    %5894 = vmatpush1.msra.mxu0 %v5893
    %5895 = vmatprep.subr.mxu0 0.0
    %v5896 = vand.u32 %v2537, 4294901760
    %5897 = vmatpush1.msra.mxu0 %v5896
    %5898 = vmatprep.subr.mxu0 0.0
    %v5899 = vand.u32 %v2538, 4294901760
    %5900 = vmatpush1.msra.mxu0 %v5899
    %5901 = vmatprep.subr.mxu0 0.0
    %v5902 = vand.u32 %v2539, 4294901760
    %5903 = vmatpush1.msra.mxu0 %v5902
    %5904 = vmatprep.subr.mxu0 0.0
    %v5905 = vand.u32 %v2540, 4294901760
    %5906 = vmatpush1.msra.mxu0 %v5905
    %5907 = vmatprep.subr.mxu0 0.0
    %v5908 = vand.u32 %v2541, 4294901760
    %5909 = vmatpush1.msra.mxu0 %v5908
    %5910 = vmatprep.subr.mxu0 0.0
    %v5911 = vand.u32 %v2542, 4294901760
    %5912 = vmatpush1.msra.mxu0 %v5911
    %5913 = vmatprep.subr.mxu0 0.0
    %v5914 = vand.u32 %v2543, 4294901760
    %5915 = vmatpush1.msra.mxu0 %v5914
    %5916 = vmatprep.subr.mxu0 0.0
    %v5917 = vand.u32 %v2544, 4294901760
    %5918 = vmatpush1.msra.mxu0 %v5917
    %5919 = vmatprep.subr.mxu0 0.0
    %v5920 = vand.u32 %v2545, 4294901760
    %5921 = vmatpush1.msra.mxu0 %v5920
    %5922 = vmatprep.subr.mxu0 0.0
    %v5923 = vand.u32 %v2546, 4294901760
    %5924 = vmatpush1.msra.mxu0 %v5923
    %5925 = vmatprep.subr.mxu0 0.0
    %v5926 = vand.u32 %v2547, 4294901760
    %5927 = vmatpush1.msra.mxu0 %v5926
    %5928 = vmatprep.subr.mxu0 0.0
    %v5929 = vand.u32 %v2548, 4294901760
    %5930 = vmatpush1.msra.mxu0 %v5929
    %5931 = vmatprep.subr.mxu0 0.0
    %v5932 = vand.u32 %v2549, 4294901760
    %5933 = vmatpush1.msra.mxu0 %v5932
    %v5934 = vand.u32 %v2719, 4294901760
    %v5935 = vsub.f32 %v2719, %v5934
    %v5936 = vand.u32 %v5935, 4294901760
    %5937 = vmatprep.mubr.f32.mxu0 %v5936
    %v5938 = vand.u32 %v2717, 4294901760
    %v5939 = vsub.f32 %v2717, %v5938
    %v5940 = vand.u32 %v5939, 4294901760
    %5941 = vmatmul.mubr.f32.gmra.mrb[0].mxu0 %v5940
    %v5942 = vpop.f32.mrb[0].mxu0
    %v5943 = vadd.f32 %v5835, %v5942
    %v5944 = vpop.f32.mrb[0].mxu0
    %5945 = vdwg.mxu0
    %5946 = vmatprep.subr.mxu0 0.0
    %v5947 = vand.u32 %v2518, 4294901760
    %v5948 = vsub.f32 %v2518, %v5947
    %v5949 = vand.u32 %v5948, 4294901760
    %5950 = vmatpush1.msra.mxu0 %v5949
    %5951 = vmatprep.subr.mxu0 0.0
    %v5952 = vand.u32 %v2519, 4294901760
    %v5953 = vsub.f32 %v2519, %v5952
    %v5954 = vand.u32 %v5953, 4294901760
    %5955 = vmatpush1.msra.mxu0 %v5954
    %5956 = vmatprep.subr.mxu0 0.0
    %v5957 = vand.u32 %v2520, 4294901760
    %v5958 = vsub.f32 %v2520, %v5957
    %v5959 = vand.u32 %v5958, 4294901760
    %5960 = vmatpush1.msra.mxu0 %v5959
    %5961 = vmatprep.subr.mxu0 0.0
    %v5962 = vand.u32 %v2521, 4294901760
    %v5963 = vsub.f32 %v2521, %v5962
    %v5964 = vand.u32 %v5963, 4294901760
    %5965 = vmatpush1.msra.mxu0 %v5964
    %5966 = vmatprep.subr.mxu0 0.0
    %v5967 = vand.u32 %v2522, 4294901760
    %v5968 = vsub.f32 %v2522, %v5967
    %v5969 = vand.u32 %v5968, 4294901760
    %5970 = vmatpush1.msra.mxu0 %v5969
    %5971 = vmatprep.subr.mxu0 0.0
    %v5972 = vand.u32 %v2523, 4294901760
    %v5973 = vsub.f32 %v2523, %v5972
    %v5974 = vand.u32 %v5973, 4294901760
    %5975 = vmatpush1.msra.mxu0 %v5974
    %5976 = vmatprep.subr.mxu0 0.0
    %v5977 = vand.u32 %v2524, 4294901760
    %v5978 = vsub.f32 %v2524, %v5977
    %v5979 = vand.u32 %v5978, 4294901760
    %5980 = vmatpush1.msra.mxu0 %v5979
    %5981 = vmatprep.subr.mxu0 0.0
    %v5982 = vand.u32 %v2525, 4294901760
    %v5983 = vsub.f32 %v2525, %v5982
    %v5984 = vand.u32 %v5983, 4294901760
    %5985 = vmatpush1.msra.mxu0 %v5984
    %5986 = vmatprep.subr.mxu0 0.0
    %v5987 = vand.u32 %v2526, 4294901760
    %v5988 = vsub.f32 %v2526, %v5987
    %v5989 = vand.u32 %v5988, 4294901760
    %5990 = vmatpush1.msra.mxu0 %v5989
    %5991 = vmatprep.subr.mxu0 0.0
    %v5992 = vand.u32 %v2527, 4294901760
    %v5993 = vsub.f32 %v2527, %v5992
    %v5994 = vand.u32 %v5993, 4294901760
    %5995 = vmatpush1.msra.mxu0 %v5994
    %5996 = vmatprep.subr.mxu0 0.0
    %v5997 = vand.u32 %v2528, 4294901760
    %v5998 = vsub.f32 %v2528, %v5997
    %v5999 = vand.u32 %v5998, 4294901760
    %6000 = vmatpush1.msra.mxu0 %v5999
    %6001 = vmatprep.subr.mxu0 0.0
    %v6002 = vand.u32 %v2529, 4294901760
    %v6003 = vsub.f32 %v2529, %v6002
    %v6004 = vand.u32 %v6003, 4294901760
    %6005 = vmatpush1.msra.mxu0 %v6004
    %6006 = vmatprep.subr.mxu0 0.0
    %v6007 = vand.u32 %v2530, 4294901760
    %v6008 = vsub.f32 %v2530, %v6007
    %v6009 = vand.u32 %v6008, 4294901760
    %6010 = vmatpush1.msra.mxu0 %v6009
    %6011 = vmatprep.subr.mxu0 0.0
    %v6012 = vand.u32 %v2531, 4294901760
    %v6013 = vsub.f32 %v2531, %v6012
    %v6014 = vand.u32 %v6013, 4294901760
    %6015 = vmatpush1.msra.mxu0 %v6014
    %6016 = vmatprep.subr.mxu0 0.0
    %v6017 = vand.u32 %v2532, 4294901760
    %v6018 = vsub.f32 %v2532, %v6017
    %v6019 = vand.u32 %v6018, 4294901760
    %6020 = vmatpush1.msra.mxu0 %v6019
    %6021 = vmatprep.subr.mxu0 0.0
    %v6022 = vand.u32 %v2533, 4294901760
    %v6023 = vsub.f32 %v2533, %v6022
    %v6024 = vand.u32 %v6023, 4294901760
    %6025 = vmatpush1.msra.mxu0 %v6024
    %6026 = vmatprep.subr.mxu0 0.0
    %v6027 = vand.u32 %v2534, 4294901760
    %v6028 = vsub.f32 %v2534, %v6027
    %v6029 = vand.u32 %v6028, 4294901760
    %6030 = vmatpush1.msra.mxu0 %v6029
    %6031 = vmatprep.subr.mxu0 0.0
    %v6032 = vand.u32 %v2535, 4294901760
    %v6033 = vsub.f32 %v2535, %v6032
    %v6034 = vand.u32 %v6033, 4294901760
    %6035 = vmatpush1.msra.mxu0 %v6034
    %6036 = vmatprep.subr.mxu0 0.0
    %v6037 = vand.u32 %v2536, 4294901760
    %v6038 = vsub.f32 %v2536, %v6037
    %v6039 = vand.u32 %v6038, 4294901760
    %6040 = vmatpush1.msra.mxu0 %v6039
    %6041 = vmatprep.subr.mxu0 0.0
    %v6042 = vand.u32 %v2537, 4294901760
    %v6043 = vsub.f32 %v2537, %v6042
    %v6044 = vand.u32 %v6043, 4294901760
    %6045 = vmatpush1.msra.mxu0 %v6044
    %6046 = vmatprep.subr.mxu0 0.0
    %v6047 = vand.u32 %v2538, 4294901760
    %v6048 = vsub.f32 %v2538, %v6047
    %v6049 = vand.u32 %v6048, 4294901760
    %6050 = vmatpush1.msra.mxu0 %v6049
    %6051 = vmatprep.subr.mxu0 0.0
    %v6052 = vand.u32 %v2539, 4294901760
    %v6053 = vsub.f32 %v2539, %v6052
    %v6054 = vand.u32 %v6053, 4294901760
    %6055 = vmatpush1.msra.mxu0 %v6054
    %6056 = vmatprep.subr.mxu0 0.0
    %v6057 = vand.u32 %v2540, 4294901760
    %v6058 = vsub.f32 %v2540, %v6057
    %v6059 = vand.u32 %v6058, 4294901760
    %6060 = vmatpush1.msra.mxu0 %v6059
    %6061 = vmatprep.subr.mxu0 0.0
    %v6062 = vand.u32 %v2541, 4294901760
    %v6063 = vsub.f32 %v2541, %v6062
    %v6064 = vand.u32 %v6063, 4294901760
    %6065 = vmatpush1.msra.mxu0 %v6064
    %6066 = vmatprep.subr.mxu0 0.0
    %v6067 = vand.u32 %v2542, 4294901760
    %v6068 = vsub.f32 %v2542, %v6067
    %v6069 = vand.u32 %v6068, 4294901760
    %6070 = vmatpush1.msra.mxu0 %v6069
    %6071 = vmatprep.subr.mxu0 0.0
    %v6072 = vand.u32 %v2543, 4294901760
    %v6073 = vsub.f32 %v2543, %v6072
    %v6074 = vand.u32 %v6073, 4294901760
    %6075 = vmatpush1.msra.mxu0 %v6074
    %6076 = vmatprep.subr.mxu0 0.0
    %v6077 = vand.u32 %v2544, 4294901760
    %v6078 = vsub.f32 %v2544, %v6077
    %v6079 = vand.u32 %v6078, 4294901760
    %6080 = vmatpush1.msra.mxu0 %v6079
    %6081 = vmatprep.subr.mxu0 0.0
    %v6082 = vand.u32 %v2545, 4294901760
    %v6083 = vsub.f32 %v2545, %v6082
    %v6084 = vand.u32 %v6083, 4294901760
    %6085 = vmatpush1.msra.mxu0 %v6084
    %6086 = vmatprep.subr.mxu0 0.0
    %v6087 = vand.u32 %v2546, 4294901760
    %v6088 = vsub.f32 %v2546, %v6087
    %v6089 = vand.u32 %v6088, 4294901760
    %6090 = vmatpush1.msra.mxu0 %v6089
    %6091 = vmatprep.subr.mxu0 0.0
    %v6092 = vand.u32 %v2547, 4294901760
    %v6093 = vsub.f32 %v2547, %v6092
    %v6094 = vand.u32 %v6093, 4294901760
    %6095 = vmatpush1.msra.mxu0 %v6094
    %6096 = vmatprep.subr.mxu0 0.0
    %v6097 = vand.u32 %v2548, 4294901760
    %v6098 = vsub.f32 %v2548, %v6097
    %v6099 = vand.u32 %v6098, 4294901760
    %6100 = vmatpush1.msra.mxu0 %v6099
    %6101 = vmatprep.subr.mxu0 0.0
    %v6102 = vand.u32 %v2549, 4294901760
    %v6103 = vsub.f32 %v2549, %v6102
    %v6104 = vand.u32 %v6103, 4294901760
    %6105 = vmatpush1.msra.mxu0 %v6104
    %v6106 = vand.u32 %v2719, 4294901760
    %6107 = vmatprep.mubr.f32.mxu0 %v6106
    %v6108 = vand.u32 %v2717, 4294901760
    %6109 = vmatmul.mubr.f32.gmra.mrb[0].mxu0 %v6108
    %v6110 = vpop.f32.mrb[0].mxu0
    %v6111 = vadd.f32 %v5943, %v6110
    %v6112 = vpop.f32.mrb[0].mxu0
    %6113 = vdwg.mxu0
    %6114 = vmatprep.subr.mxu0 0.0
    %v6115 = vand.u32 %v2518, 4294901760
    %6116 = vmatpush1.msra.mxu0 %v6115
    %6117 = vmatprep.subr.mxu0 0.0
    %v6118 = vand.u32 %v2519, 4294901760
    %6119 = vmatpush1.msra.mxu0 %v6118
    %6120 = vmatprep.subr.mxu0 0.0
    %v6121 = vand.u32 %v2520, 4294901760
    %6122 = vmatpush1.msra.mxu0 %v6121
    %6123 = vmatprep.subr.mxu0 0.0
    %v6124 = vand.u32 %v2521, 4294901760
    %6125 = vmatpush1.msra.mxu0 %v6124
    %6126 = vmatprep.subr.mxu0 0.0
    %v6127 = vand.u32 %v2522, 4294901760
    %6128 = vmatpush1.msra.mxu0 %v6127
    %6129 = vmatprep.subr.mxu0 0.0
    %v6130 = vand.u32 %v2523, 4294901760
    %6131 = vmatpush1.msra.mxu0 %v6130
    %6132 = vmatprep.subr.mxu0 0.0
    %v6133 = vand.u32 %v2524, 4294901760
    %6134 = vmatpush1.msra.mxu0 %v6133
    %6135 = vmatprep.subr.mxu0 0.0
    %v6136 = vand.u32 %v2525, 4294901760
    %6137 = vmatpush1.msra.mxu0 %v6136
    %6138 = vmatprep.subr.mxu0 0.0
    %v6139 = vand.u32 %v2526, 4294901760
    %6140 = vmatpush1.msra.mxu0 %v6139
    %6141 = vmatprep.subr.mxu0 0.0
    %v6142 = vand.u32 %v2527, 4294901760
    %6143 = vmatpush1.msra.mxu0 %v6142
    %6144 = vmatprep.subr.mxu0 0.0
    %v6145 = vand.u32 %v2528, 4294901760
    %6146 = vmatpush1.msra.mxu0 %v6145
    %6147 = vmatprep.subr.mxu0 0.0
    %v6148 = vand.u32 %v2529, 4294901760
    %6149 = vmatpush1.msra.mxu0 %v6148
    %6150 = vmatprep.subr.mxu0 0.0
    %v6151 = vand.u32 %v2530, 4294901760
    %6152 = vmatpush1.msra.mxu0 %v6151
    %6153 = vmatprep.subr.mxu0 0.0
    %v6154 = vand.u32 %v2531, 4294901760
    %6155 = vmatpush1.msra.mxu0 %v6154
    %6156 = vmatprep.subr.mxu0 0.0
    %v6157 = vand.u32 %v2532, 4294901760
    %6158 = vmatpush1.msra.mxu0 %v6157
    %6159 = vmatprep.subr.mxu0 0.0
    %v6160 = vand.u32 %v2533, 4294901760
    %6161 = vmatpush1.msra.mxu0 %v6160
    %6162 = vmatprep.subr.mxu0 0.0
    %v6163 = vand.u32 %v2534, 4294901760
    %6164 = vmatpush1.msra.mxu0 %v6163
    %6165 = vmatprep.subr.mxu0 0.0
    %v6166 = vand.u32 %v2535, 4294901760
    %6167 = vmatpush1.msra.mxu0 %v6166
    %6168 = vmatprep.subr.mxu0 0.0
    %v6169 = vand.u32 %v2536, 4294901760
    %6170 = vmatpush1.msra.mxu0 %v6169
    %6171 = vmatprep.subr.mxu0 0.0
    %v6172 = vand.u32 %v2537, 4294901760
    %6173 = vmatpush1.msra.mxu0 %v6172
    %6174 = vmatprep.subr.mxu0 0.0
    %v6175 = vand.u32 %v2538, 4294901760
    %6176 = vmatpush1.msra.mxu0 %v6175
    %6177 = vmatprep.subr.mxu0 0.0
    %v6178 = vand.u32 %v2539, 4294901760
    %6179 = vmatpush1.msra.mxu0 %v6178
    %6180 = vmatprep.subr.mxu0 0.0
    %v6181 = vand.u32 %v2540, 4294901760
    %6182 = vmatpush1.msra.mxu0 %v6181
    %6183 = vmatprep.subr.mxu0 0.0
    %v6184 = vand.u32 %v2541, 4294901760
    %6185 = vmatpush1.msra.mxu0 %v6184
    %6186 = vmatprep.subr.mxu0 0.0
    %v6187 = vand.u32 %v2542, 4294901760
    %6188 = vmatpush1.msra.mxu0 %v6187
    %6189 = vmatprep.subr.mxu0 0.0
    %v6190 = vand.u32 %v2543, 4294901760
    %6191 = vmatpush1.msra.mxu0 %v6190
    %6192 = vmatprep.subr.mxu0 0.0
    %v6193 = vand.u32 %v2544, 4294901760
    %6194 = vmatpush1.msra.mxu0 %v6193
    %6195 = vmatprep.subr.mxu0 0.0
    %v6196 = vand.u32 %v2545, 4294901760
    %6197 = vmatpush1.msra.mxu0 %v6196
    %6198 = vmatprep.subr.mxu0 0.0
    %v6199 = vand.u32 %v2546, 4294901760
    %6200 = vmatpush1.msra.mxu0 %v6199
    %6201 = vmatprep.subr.mxu0 0.0
    %v6202 = vand.u32 %v2547, 4294901760
    %6203 = vmatpush1.msra.mxu0 %v6202
    %6204 = vmatprep.subr.mxu0 0.0
    %v6205 = vand.u32 %v2548, 4294901760
    %6206 = vmatpush1.msra.mxu0 %v6205
    %6207 = vmatprep.subr.mxu0 0.0
    %v6208 = vand.u32 %v2549, 4294901760
    %6209 = vmatpush1.msra.mxu0 %v6208
    %v6210 = vand.u32 %v2719, 4294901760
    %6211 = vmatprep.mubr.f32.mxu0 %v6210
    %v6212 = vand.u32 %v2717, 4294901760
    %6213 = vmatmul.mubr.f32.gmra.mrb[0].mxu0 %v6212
    %v6214 = vpop.f32.mrb[0].mxu0
    %v6215 = vadd.f32 %v6111, %v6214
    %v6216 = vpop.f32.mrb[0].mxu0
    %6217 = vdwg.mxu0
    %6218 = vmatprep.subr.mxu0 0.0
    %v6219 = vand.u32 %v2550, 4294901760
    %6220 = vmatpush1.msra.mxu0 %v6219
    %6221 = vmatprep.subr.mxu0 0.0
    %v6222 = vand.u32 %v2551, 4294901760
    %6223 = vmatpush1.msra.mxu0 %v6222
    %6224 = vmatprep.subr.mxu0 0.0
    %v6225 = vand.u32 %v2552, 4294901760
    %6226 = vmatpush1.msra.mxu0 %v6225
    %6227 = vmatprep.subr.mxu0 0.0
    %v6228 = vand.u32 %v2553, 4294901760
    %6229 = vmatpush1.msra.mxu0 %v6228
    %6230 = vmatprep.subr.mxu0 0.0
    %v6231 = vand.u32 %v2554, 4294901760
    %6232 = vmatpush1.msra.mxu0 %v6231
    %6233 = vmatprep.subr.mxu0 0.0
    %v6234 = vand.u32 %v2555, 4294901760
    %6235 = vmatpush1.msra.mxu0 %v6234
    %6236 = vmatprep.subr.mxu0 0.0
    %v6237 = vand.u32 %v2556, 4294901760
    %6238 = vmatpush1.msra.mxu0 %v6237
    %6239 = vmatprep.subr.mxu0 0.0
    %v6240 = vand.u32 %v2557, 4294901760
    %6241 = vmatpush1.msra.mxu0 %v6240
    %6242 = vmatprep.subr.mxu0 0.0
    %v6243 = vand.u32 %v2558, 4294901760
    %6244 = vmatpush1.msra.mxu0 %v6243
    %6245 = vmatprep.subr.mxu0 0.0
    %v6246 = vand.u32 %v2559, 4294901760
    %6247 = vmatpush1.msra.mxu0 %v6246
    %6248 = vmatprep.subr.mxu0 0.0
    %v6249 = vand.u32 %v2560, 4294901760
    %6250 = vmatpush1.msra.mxu0 %v6249
    %6251 = vmatprep.subr.mxu0 0.0
    %v6252 = vand.u32 %v2561, 4294901760
    %6253 = vmatpush1.msra.mxu0 %v6252
    %6254 = vmatprep.subr.mxu0 0.0
    %v6255 = vand.u32 %v2562, 4294901760
    %6256 = vmatpush1.msra.mxu0 %v6255
    %6257 = vmatprep.subr.mxu0 0.0
    %v6258 = vand.u32 %v2563, 4294901760
    %6259 = vmatpush1.msra.mxu0 %v6258
    %6260 = vmatprep.subr.mxu0 0.0
    %v6261 = vand.u32 %v2564, 4294901760
    %6262 = vmatpush1.msra.mxu0 %v6261
    %6263 = vmatprep.subr.mxu0 0.0
    %v6264 = vand.u32 %v2565, 4294901760
    %6265 = vmatpush1.msra.mxu0 %v6264
    %6266 = vmatprep.subr.mxu0 0.0
    %v6267 = vand.u32 %v2566, 4294901760
    %6268 = vmatpush1.msra.mxu0 %v6267
    %6269 = vmatprep.subr.mxu0 0.0
    %v6270 = vand.u32 %v2567, 4294901760
    %6271 = vmatpush1.msra.mxu0 %v6270
    %6272 = vmatprep.subr.mxu0 0.0
    %v6273 = vand.u32 %v2568, 4294901760
    %6274 = vmatpush1.msra.mxu0 %v6273
    %6275 = vmatprep.subr.mxu0 0.0
    %v6276 = vand.u32 %v2569, 4294901760
    %6277 = vmatpush1.msra.mxu0 %v6276
    %6278 = vmatprep.subr.mxu0 0.0
    %v6279 = vand.u32 %v2570, 4294901760
    %6280 = vmatpush1.msra.mxu0 %v6279
    %6281 = vmatprep.subr.mxu0 0.0
    %v6282 = vand.u32 %v2571, 4294901760
    %6283 = vmatpush1.msra.mxu0 %v6282
    %6284 = vmatprep.subr.mxu0 0.0
    %v6285 = vand.u32 %v2572, 4294901760
    %6286 = vmatpush1.msra.mxu0 %v6285
    %6287 = vmatprep.subr.mxu0 0.0
    %v6288 = vand.u32 %v2573, 4294901760
    %6289 = vmatpush1.msra.mxu0 %v6288
    %6290 = vmatprep.subr.mxu0 0.0
    %v6291 = vand.u32 %v2574, 4294901760
    %6292 = vmatpush1.msra.mxu0 %v6291
    %6293 = vmatprep.subr.mxu0 0.0
    %v6294 = vand.u32 %v2575, 4294901760
    %6295 = vmatpush1.msra.mxu0 %v6294
    %6296 = vmatprep.subr.mxu0 0.0
    %v6297 = vand.u32 %v2576, 4294901760
    %6298 = vmatpush1.msra.mxu0 %v6297
    %6299 = vmatprep.subr.mxu0 0.0
    %v6300 = vand.u32 %v2577, 4294901760
    %6301 = vmatpush1.msra.mxu0 %v6300
    %6302 = vmatprep.subr.mxu0 0.0
    %v6303 = vand.u32 %v2578, 4294901760
    %6304 = vmatpush1.msra.mxu0 %v6303
    %6305 = vmatprep.subr.mxu0 0.0
    %v6306 = vand.u32 %v2579, 4294901760
    %6307 = vmatpush1.msra.mxu0 %v6306
    %6308 = vmatprep.subr.mxu0 0.0
    %v6309 = vand.u32 %v2580, 4294901760
    %6310 = vmatpush1.msra.mxu0 %v6309
    %6311 = vmatprep.subr.mxu0 0.0
    %v6312 = vand.u32 %v2581, 4294901760
    %6313 = vmatpush1.msra.mxu0 %v6312
    %v6314 = vand.u32 %v2735, 4294901760
    %v6315 = vsub.f32 %v2735, %v6314
    %v6316 = vand.u32 %v6315, 4294901760
    %v6317 = vsub.f32 %v6315, %v6316
    %v6318 = vand.u32 %v6317, 4294901760
    %6319 = vmatprep.mubr.f32.mxu0 %v6318
    %v6320 = vand.u32 %v2727, 4294901760
    %v6321 = vsub.f32 %v2727, %v6320
    %v6322 = vand.u32 %v6321, 4294901760
    %v6323 = vsub.f32 %v6321, %v6322
    %v6324 = vand.u32 %v6323, 4294901760
    %6325 = vmatmul.mubr.f32.gmra.mrb[0].mxu0 %v6324
    %v6326 = vpop.f32.mrb[0].mxu0
    %v6327 = vadd.f32 %v6215, %v6326
    %v6328 = vpop.f32.mrb[0].mxu0
    %6329 = vdwg.mxu0
    %6330 = vmatprep.subr.mxu0 0.0
    %v6331 = vand.u32 %v2550, 4294901760
    %v6332 = vsub.f32 %v2550, %v6331
    %v6333 = vand.u32 %v6332, 4294901760
    %v6334 = vsub.f32 %v6332, %v6333
    %v6335 = vand.u32 %v6334, 4294901760
    %6336 = vmatpush1.msra.mxu0 %v6335
    %6337 = vmatprep.subr.mxu0 0.0
    %v6338 = vand.u32 %v2551, 4294901760
    %v6339 = vsub.f32 %v2551, %v6338
    %v6340 = vand.u32 %v6339, 4294901760
    %v6341 = vsub.f32 %v6339, %v6340
    %v6342 = vand.u32 %v6341, 4294901760
    %6343 = vmatpush1.msra.mxu0 %v6342
    %6344 = vmatprep.subr.mxu0 0.0
    %v6345 = vand.u32 %v2552, 4294901760
    %v6346 = vsub.f32 %v2552, %v6345
    %v6347 = vand.u32 %v6346, 4294901760
    %v6348 = vsub.f32 %v6346, %v6347
    %v6349 = vand.u32 %v6348, 4294901760
    %6350 = vmatpush1.msra.mxu0 %v6349
    %6351 = vmatprep.subr.mxu0 0.0
    %v6352 = vand.u32 %v2553, 4294901760
    %v6353 = vsub.f32 %v2553, %v6352
    %v6354 = vand.u32 %v6353, 4294901760
    %v6355 = vsub.f32 %v6353, %v6354
    %v6356 = vand.u32 %v6355, 4294901760
    %6357 = vmatpush1.msra.mxu0 %v6356
    %6358 = vmatprep.subr.mxu0 0.0
    %v6359 = vand.u32 %v2554, 4294901760
    %v6360 = vsub.f32 %v2554, %v6359
    %v6361 = vand.u32 %v6360, 4294901760
    %v6362 = vsub.f32 %v6360, %v6361
    %v6363 = vand.u32 %v6362, 4294901760
    %6364 = vmatpush1.msra.mxu0 %v6363
    %6365 = vmatprep.subr.mxu0 0.0
    %v6366 = vand.u32 %v2555, 4294901760
    %v6367 = vsub.f32 %v2555, %v6366
    %v6368 = vand.u32 %v6367, 4294901760
    %v6369 = vsub.f32 %v6367, %v6368
    %v6370 = vand.u32 %v6369, 4294901760
    %6371 = vmatpush1.msra.mxu0 %v6370
    %6372 = vmatprep.subr.mxu0 0.0
    %v6373 = vand.u32 %v2556, 4294901760
    %v6374 = vsub.f32 %v2556, %v6373
    %v6375 = vand.u32 %v6374, 4294901760
    %v6376 = vsub.f32 %v6374, %v6375
    %v6377 = vand.u32 %v6376, 4294901760
    %6378 = vmatpush1.msra.mxu0 %v6377
    %6379 = vmatprep.subr.mxu0 0.0
    %v6380 = vand.u32 %v2557, 4294901760
    %v6381 = vsub.f32 %v2557, %v6380
    %v6382 = vand.u32 %v6381, 4294901760
    %v6383 = vsub.f32 %v6381, %v6382
    %v6384 = vand.u32 %v6383, 4294901760
    %6385 = vmatpush1.msra.mxu0 %v6384
    %6386 = vmatprep.subr.mxu0 0.0
    %v6387 = vand.u32 %v2558, 4294901760
    %v6388 = vsub.f32 %v2558, %v6387
    %v6389 = vand.u32 %v6388, 4294901760
    %v6390 = vsub.f32 %v6388, %v6389
    %v6391 = vand.u32 %v6390, 4294901760
    %6392 = vmatpush1.msra.mxu0 %v6391
    %6393 = vmatprep.subr.mxu0 0.0
    %v6394 = vand.u32 %v2559, 4294901760
    %v6395 = vsub.f32 %v2559, %v6394
    %v6396 = vand.u32 %v6395, 4294901760
    %v6397 = vsub.f32 %v6395, %v6396
    %v6398 = vand.u32 %v6397, 4294901760
    %6399 = vmatpush1.msra.mxu0 %v6398
    %6400 = vmatprep.subr.mxu0 0.0
    %v6401 = vand.u32 %v2560, 4294901760
    %v6402 = vsub.f32 %v2560, %v6401
    %v6403 = vand.u32 %v6402, 4294901760
    %v6404 = vsub.f32 %v6402, %v6403
    %v6405 = vand.u32 %v6404, 4294901760
    %6406 = vmatpush1.msra.mxu0 %v6405
    %6407 = vmatprep.subr.mxu0 0.0
    %v6408 = vand.u32 %v2561, 4294901760
    %v6409 = vsub.f32 %v2561, %v6408
    %v6410 = vand.u32 %v6409, 4294901760
    %v6411 = vsub.f32 %v6409, %v6410
    %v6412 = vand.u32 %v6411, 4294901760
    %6413 = vmatpush1.msra.mxu0 %v6412
    %6414 = vmatprep.subr.mxu0 0.0
    %v6415 = vand.u32 %v2562, 4294901760
    %v6416 = vsub.f32 %v2562, %v6415
    %v6417 = vand.u32 %v6416, 4294901760
    %v6418 = vsub.f32 %v6416, %v6417
    %v6419 = vand.u32 %v6418, 4294901760
    %6420 = vmatpush1.msra.mxu0 %v6419
    %6421 = vmatprep.subr.mxu0 0.0
    %v6422 = vand.u32 %v2563, 4294901760
    %v6423 = vsub.f32 %v2563, %v6422
    %v6424 = vand.u32 %v6423, 4294901760
    %v6425 = vsub.f32 %v6423, %v6424
    %v6426 = vand.u32 %v6425, 4294901760
    %6427 = vmatpush1.msra.mxu0 %v6426
    %6428 = vmatprep.subr.mxu0 0.0
    %v6429 = vand.u32 %v2564, 4294901760
    %v6430 = vsub.f32 %v2564, %v6429
    %v6431 = vand.u32 %v6430, 4294901760
    %v6432 = vsub.f32 %v6430, %v6431
    %v6433 = vand.u32 %v6432, 4294901760
    %6434 = vmatpush1.msra.mxu0 %v6433
    %6435 = vmatprep.subr.mxu0 0.0
    %v6436 = vand.u32 %v2565, 4294901760
    %v6437 = vsub.f32 %v2565, %v6436
    %v6438 = vand.u32 %v6437, 4294901760
    %v6439 = vsub.f32 %v6437, %v6438
    %v6440 = vand.u32 %v6439, 4294901760
    %6441 = vmatpush1.msra.mxu0 %v6440
    %6442 = vmatprep.subr.mxu0 0.0
    %v6443 = vand.u32 %v2566, 4294901760
    %v6444 = vsub.f32 %v2566, %v6443
    %v6445 = vand.u32 %v6444, 4294901760
    %v6446 = vsub.f32 %v6444, %v6445
    %v6447 = vand.u32 %v6446, 4294901760
    %6448 = vmatpush1.msra.mxu0 %v6447
    %6449 = vmatprep.subr.mxu0 0.0
    %v6450 = vand.u32 %v2567, 4294901760
    %v6451 = vsub.f32 %v2567, %v6450
    %v6452 = vand.u32 %v6451, 4294901760
    %v6453 = vsub.f32 %v6451, %v6452
    %v6454 = vand.u32 %v6453, 4294901760
    %6455 = vmatpush1.msra.mxu0 %v6454
    %6456 = vmatprep.subr.mxu0 0.0
    %v6457 = vand.u32 %v2568, 4294901760
    %v6458 = vsub.f32 %v2568, %v6457
    %v6459 = vand.u32 %v6458, 4294901760
    %v6460 = vsub.f32 %v6458, %v6459
    %v6461 = vand.u32 %v6460, 4294901760
    %6462 = vmatpush1.msra.mxu0 %v6461
    %6463 = vmatprep.subr.mxu0 0.0
    %v6464 = vand.u32 %v2569, 4294901760
    %v6465 = vsub.f32 %v2569, %v6464
    %v6466 = vand.u32 %v6465, 4294901760
    %v6467 = vsub.f32 %v6465, %v6466
    %v6468 = vand.u32 %v6467, 4294901760
    %6469 = vmatpush1.msra.mxu0 %v6468
    %6470 = vmatprep.subr.mxu0 0.0
    %v6471 = vand.u32 %v2570, 4294901760
    %v6472 = vsub.f32 %v2570, %v6471
    %v6473 = vand.u32 %v6472, 4294901760
    %v6474 = vsub.f32 %v6472, %v6473
    %v6475 = vand.u32 %v6474, 4294901760
    %6476 = vmatpush1.msra.mxu0 %v6475
    %6477 = vmatprep.subr.mxu0 0.0
    %v6478 = vand.u32 %v2571, 4294901760
    %v6479 = vsub.f32 %v2571, %v6478
    %v6480 = vand.u32 %v6479, 4294901760
    %v6481 = vsub.f32 %v6479, %v6480
    %v6482 = vand.u32 %v6481, 4294901760
    %6483 = vmatpush1.msra.mxu0 %v6482
    %6484 = vmatprep.subr.mxu0 0.0
    %v6485 = vand.u32 %v2572, 4294901760
    %v6486 = vsub.f32 %v2572, %v6485
    %v6487 = vand.u32 %v6486, 4294901760
    %v6488 = vsub.f32 %v6486, %v6487
    %v6489 = vand.u32 %v6488, 4294901760
    %6490 = vmatpush1.msra.mxu0 %v6489
    %6491 = vmatprep.subr.mxu0 0.0
    %v6492 = vand.u32 %v2573, 4294901760
    %v6493 = vsub.f32 %v2573, %v6492
    %v6494 = vand.u32 %v6493, 4294901760
    %v6495 = vsub.f32 %v6493, %v6494
    %v6496 = vand.u32 %v6495, 4294901760
    %6497 = vmatpush1.msra.mxu0 %v6496
    %6498 = vmatprep.subr.mxu0 0.0
    %v6499 = vand.u32 %v2574, 4294901760
    %v6500 = vsub.f32 %v2574, %v6499
    %v6501 = vand.u32 %v6500, 4294901760
    %v6502 = vsub.f32 %v6500, %v6501
    %v6503 = vand.u32 %v6502, 4294901760
    %6504 = vmatpush1.msra.mxu0 %v6503
    %6505 = vmatprep.subr.mxu0 0.0
    %v6506 = vand.u32 %v2575, 4294901760
    %v6507 = vsub.f32 %v2575, %v6506
    %v6508 = vand.u32 %v6507, 4294901760
    %v6509 = vsub.f32 %v6507, %v6508
    %v6510 = vand.u32 %v6509, 4294901760
    %6511 = vmatpush1.msra.mxu0 %v6510
    %6512 = vmatprep.subr.mxu0 0.0
    %v6513 = vand.u32 %v2576, 4294901760
    %v6514 = vsub.f32 %v2576, %v6513
    %v6515 = vand.u32 %v6514, 4294901760
    %v6516 = vsub.f32 %v6514, %v6515
    %v6517 = vand.u32 %v6516, 4294901760
    %6518 = vmatpush1.msra.mxu0 %v6517
    %6519 = vmatprep.subr.mxu0 0.0
    %v6520 = vand.u32 %v2577, 4294901760
    %v6521 = vsub.f32 %v2577, %v6520
    %v6522 = vand.u32 %v6521, 4294901760
    %v6523 = vsub.f32 %v6521, %v6522
    %v6524 = vand.u32 %v6523, 4294901760
    %6525 = vmatpush1.msra.mxu0 %v6524
    %6526 = vmatprep.subr.mxu0 0.0
    %v6527 = vand.u32 %v2578, 4294901760
    %v6528 = vsub.f32 %v2578, %v6527
    %v6529 = vand.u32 %v6528, 4294901760
    %v6530 = vsub.f32 %v6528, %v6529
    %v6531 = vand.u32 %v6530, 4294901760
    %6532 = vmatpush1.msra.mxu0 %v6531
    %6533 = vmatprep.subr.mxu0 0.0
    %v6534 = vand.u32 %v2579, 4294901760
    %v6535 = vsub.f32 %v2579, %v6534
    %v6536 = vand.u32 %v6535, 4294901760
    %v6537 = vsub.f32 %v6535, %v6536
    %v6538 = vand.u32 %v6537, 4294901760
    %6539 = vmatpush1.msra.mxu0 %v6538
    %6540 = vmatprep.subr.mxu0 0.0
    %v6541 = vand.u32 %v2580, 4294901760
    %v6542 = vsub.f32 %v2580, %v6541
    %v6543 = vand.u32 %v6542, 4294901760
    %v6544 = vsub.f32 %v6542, %v6543
    %v6545 = vand.u32 %v6544, 4294901760
    %6546 = vmatpush1.msra.mxu0 %v6545
    %6547 = vmatprep.subr.mxu0 0.0
    %v6548 = vand.u32 %v2581, 4294901760
    %v6549 = vsub.f32 %v2581, %v6548
    %v6550 = vand.u32 %v6549, 4294901760
    %v6551 = vsub.f32 %v6549, %v6550
    %v6552 = vand.u32 %v6551, 4294901760
    %6553 = vmatpush1.msra.mxu0 %v6552
    %v6554 = vand.u32 %v2735, 4294901760
    %6555 = vmatprep.mubr.f32.mxu0 %v6554
    %v6556 = vand.u32 %v2727, 4294901760
    %6557 = vmatmul.mubr.f32.gmra.mrb[0].mxu0 %v6556
    %v6558 = vpop.f32.mrb[0].mxu0
    %v6559 = vadd.f32 %v6327, %v6558
    %v6560 = vpop.f32.mrb[0].mxu0
    %6561 = vdwg.mxu0
    %6562 = vmatprep.subr.mxu0 0.0
    %v6563 = vand.u32 %v2550, 4294901760
    %v6564 = vsub.f32 %v2550, %v6563
    %6565 = vmatpush1.msra.mxu0 %v6564
    %6566 = vmatprep.subr.mxu0 0.0
    %v6567 = vand.u32 %v2551, 4294901760
    %v6568 = vsub.f32 %v2551, %v6567
    %6569 = vmatpush1.msra.mxu0 %v6568
    %6570 = vmatprep.subr.mxu0 0.0
    %v6571 = vand.u32 %v2552, 4294901760
    %v6572 = vsub.f32 %v2552, %v6571
    %6573 = vmatpush1.msra.mxu0 %v6572
    %6574 = vmatprep.subr.mxu0 0.0
    %v6575 = vand.u32 %v2553, 4294901760
    %v6576 = vsub.f32 %v2553, %v6575
    %6577 = vmatpush1.msra.mxu0 %v6576
    %6578 = vmatprep.subr.mxu0 0.0
    %v6579 = vand.u32 %v2554, 4294901760
    %v6580 = vsub.f32 %v2554, %v6579
    %6581 = vmatpush1.msra.mxu0 %v6580
    %6582 = vmatprep.subr.mxu0 0.0
    %v6583 = vand.u32 %v2555, 4294901760
    %v6584 = vsub.f32 %v2555, %v6583
    %6585 = vmatpush1.msra.mxu0 %v6584
    %6586 = vmatprep.subr.mxu0 0.0
    %v6587 = vand.u32 %v2556, 4294901760
    %v6588 = vsub.f32 %v2556, %v6587
    %6589 = vmatpush1.msra.mxu0 %v6588
    %6590 = vmatprep.subr.mxu0 0.0
    %v6591 = vand.u32 %v2557, 4294901760
    %v6592 = vsub.f32 %v2557, %v6591
    %6593 = vmatpush1.msra.mxu0 %v6592
    %6594 = vmatprep.subr.mxu0 0.0
    %v6595 = vand.u32 %v2558, 4294901760
    %v6596 = vsub.f32 %v2558, %v6595
    %6597 = vmatpush1.msra.mxu0 %v6596
    %6598 = vmatprep.subr.mxu0 0.0
    %v6599 = vand.u32 %v2559, 4294901760
    %v6600 = vsub.f32 %v2559, %v6599
    %6601 = vmatpush1.msra.mxu0 %v6600
    %6602 = vmatprep.subr.mxu0 0.0
    %v6603 = vand.u32 %v2560, 4294901760
    %v6604 = vsub.f32 %v2560, %v6603
    %6605 = vmatpush1.msra.mxu0 %v6604
    %6606 = vmatprep.subr.mxu0 0.0
    %v6607 = vand.u32 %v2561, 4294901760
    %v6608 = vsub.f32 %v2561, %v6607
    %6609 = vmatpush1.msra.mxu0 %v6608
    %6610 = vmatprep.subr.mxu0 0.0
    %v6611 = vand.u32 %v2562, 4294901760
    %v6612 = vsub.f32 %v2562, %v6611
    %6613 = vmatpush1.msra.mxu0 %v6612
    %6614 = vmatprep.subr.mxu0 0.0
    %v6615 = vand.u32 %v2563, 4294901760
    %v6616 = vsub.f32 %v2563, %v6615
    %6617 = vmatpush1.msra.mxu0 %v6616
    %6618 = vmatprep.subr.mxu0 0.0
    %v6619 = vand.u32 %v2564, 4294901760
    %v6620 = vsub.f32 %v2564, %v6619
    %6621 = vmatpush1.msra.mxu0 %v6620
    %6622 = vmatprep.subr.mxu0 0.0
    %v6623 = vand.u32 %v2565, 4294901760
    %v6624 = vsub.f32 %v2565, %v6623
    %6625 = vmatpush1.msra.mxu0 %v6624
    %6626 = vmatprep.subr.mxu0 0.0
    %v6627 = vand.u32 %v2566, 4294901760
    %v6628 = vsub.f32 %v2566, %v6627
    %6629 = vmatpush1.msra.mxu0 %v6628
    %6630 = vmatprep.subr.mxu0 0.0
    %v6631 = vand.u32 %v2567, 4294901760
    %v6632 = vsub.f32 %v2567, %v6631
    %6633 = vmatpush1.msra.mxu0 %v6632
    %6634 = vmatprep.subr.mxu0 0.0
    %v6635 = vand.u32 %v2568, 4294901760
    %v6636 = vsub.f32 %v2568, %v6635
    %6637 = vmatpush1.msra.mxu0 %v6636
    %6638 = vmatprep.subr.mxu0 0.0
    %v6639 = vand.u32 %v2569, 4294901760
    %v6640 = vsub.f32 %v2569, %v6639
    %6641 = vmatpush1.msra.mxu0 %v6640
    %6642 = vmatprep.subr.mxu0 0.0
    %v6643 = vand.u32 %v2570, 4294901760
    %v6644 = vsub.f32 %v2570, %v6643
    %6645 = vmatpush1.msra.mxu0 %v6644
    %6646 = vmatprep.subr.mxu0 0.0
    %v6647 = vand.u32 %v2571, 4294901760
    %v6648 = vsub.f32 %v2571, %v6647
    %6649 = vmatpush1.msra.mxu0 %v6648
    %6650 = vmatprep.subr.mxu0 0.0
    %v6651 = vand.u32 %v2572, 4294901760
    %v6652 = vsub.f32 %v2572, %v6651
    %6653 = vmatpush1.msra.mxu0 %v6652
    %6654 = vmatprep.subr.mxu0 0.0
    %v6655 = vand.u32 %v2573, 4294901760
    %v6656 = vsub.f32 %v2573, %v6655
    %6657 = vmatpush1.msra.mxu0 %v6656
    %6658 = vmatprep.subr.mxu0 0.0
    %v6659 = vand.u32 %v2574, 4294901760
    %v6660 = vsub.f32 %v2574, %v6659
    %6661 = vmatpush1.msra.mxu0 %v6660
    %6662 = vmatprep.subr.mxu0 0.0
    %v6663 = vand.u32 %v2575, 4294901760
    %v6664 = vsub.f32 %v2575, %v6663
    %6665 = vmatpush1.msra.mxu0 %v6664
    %6666 = vmatprep.subr.mxu0 0.0
    %v6667 = vand.u32 %v2576, 4294901760
    %v6668 = vsub.f32 %v2576, %v6667
    %6669 = vmatpush1.msra.mxu0 %v6668
    %6670 = vmatprep.subr.mxu0 0.0
    %v6671 = vand.u32 %v2577, 4294901760
    %v6672 = vsub.f32 %v2577, %v6671
    %6673 = vmatpush1.msra.mxu0 %v6672
    %6674 = vmatprep.subr.mxu0 0.0
    %v6675 = vand.u32 %v2578, 4294901760
    %v6676 = vsub.f32 %v2578, %v6675
    %6677 = vmatpush1.msra.mxu0 %v6676
    %6678 = vmatprep.subr.mxu0 0.0
    %v6679 = vand.u32 %v2579, 4294901760
    %v6680 = vsub.f32 %v2579, %v6679
    %6681 = vmatpush1.msra.mxu0 %v6680
    %6682 = vmatprep.subr.mxu0 0.0
    %v6683 = vand.u32 %v2580, 4294901760
    %v6684 = vsub.f32 %v2580, %v6683
    %6685 = vmatpush1.msra.mxu0 %v6684
    %6686 = vmatprep.subr.mxu0 0.0
    %v6687 = vand.u32 %v2581, 4294901760
    %v6688 = vsub.f32 %v2581, %v6687
    %6689 = vmatpush1.msra.mxu0 %v6688
    %v6690 = vand.u32 %v2735, 4294901760
    %v6691 = vsub.f32 %v2735, %v6690
    %6692 = vmatprep.mubr.f32.mxu0 %v6691
    %v6693 = vand.u32 %v2727, 4294901760
    %v6694 = vsub.f32 %v2727, %v6693
    %6695 = vmatmul.mubr.f32.gmra.mrb[0].mxu0 %v6694
    %v6696 = vpop.f32.mrb[0].mxu0
    %v6697 = vadd.f32 %v6559, %v6696
    %v6698 = vpop.f32.mrb[0].mxu0
    %6699 = vdwg.mxu0
    %6700 = vmatprep.subr.mxu0 0.0
    %v6701 = vand.u32 %v2550, 4294901760
    %6702 = vmatpush1.msra.mxu0 %v6701
    %6703 = vmatprep.subr.mxu0 0.0
    %v6704 = vand.u32 %v2551, 4294901760
    %6705 = vmatpush1.msra.mxu0 %v6704
    %6706 = vmatprep.subr.mxu0 0.0
    %v6707 = vand.u32 %v2552, 4294901760
    %6708 = vmatpush1.msra.mxu0 %v6707
    %6709 = vmatprep.subr.mxu0 0.0
    %v6710 = vand.u32 %v2553, 4294901760
    %6711 = vmatpush1.msra.mxu0 %v6710
    %6712 = vmatprep.subr.mxu0 0.0
    %v6713 = vand.u32 %v2554, 4294901760
    %6714 = vmatpush1.msra.mxu0 %v6713
    %6715 = vmatprep.subr.mxu0 0.0
    %v6716 = vand.u32 %v2555, 4294901760
    %6717 = vmatpush1.msra.mxu0 %v6716
    %6718 = vmatprep.subr.mxu0 0.0
    %v6719 = vand.u32 %v2556, 4294901760
    %6720 = vmatpush1.msra.mxu0 %v6719
    %6721 = vmatprep.subr.mxu0 0.0
    %v6722 = vand.u32 %v2557, 4294901760
    %6723 = vmatpush1.msra.mxu0 %v6722
    %6724 = vmatprep.subr.mxu0 0.0
    %v6725 = vand.u32 %v2558, 4294901760
    %6726 = vmatpush1.msra.mxu0 %v6725
    %6727 = vmatprep.subr.mxu0 0.0
    %v6728 = vand.u32 %v2559, 4294901760
    %6729 = vmatpush1.msra.mxu0 %v6728
    %6730 = vmatprep.subr.mxu0 0.0
    %v6731 = vand.u32 %v2560, 4294901760
    %6732 = vmatpush1.msra.mxu0 %v6731
    %6733 = vmatprep.subr.mxu0 0.0
    %v6734 = vand.u32 %v2561, 4294901760
    %6735 = vmatpush1.msra.mxu0 %v6734
    %6736 = vmatprep.subr.mxu0 0.0
    %v6737 = vand.u32 %v2562, 4294901760
    %6738 = vmatpush1.msra.mxu0 %v6737
    %6739 = vmatprep.subr.mxu0 0.0
    %v6740 = vand.u32 %v2563, 4294901760
    %6741 = vmatpush1.msra.mxu0 %v6740
    %6742 = vmatprep.subr.mxu0 0.0
    %v6743 = vand.u32 %v2564, 4294901760
    %6744 = vmatpush1.msra.mxu0 %v6743
    %6745 = vmatprep.subr.mxu0 0.0
    %v6746 = vand.u32 %v2565, 4294901760
    %6747 = vmatpush1.msra.mxu0 %v6746
    %6748 = vmatprep.subr.mxu0 0.0
    %v6749 = vand.u32 %v2566, 4294901760
    %6750 = vmatpush1.msra.mxu0 %v6749
    %6751 = vmatprep.subr.mxu0 0.0
    %v6752 = vand.u32 %v2567, 4294901760
    %6753 = vmatpush1.msra.mxu0 %v6752
    %6754 = vmatprep.subr.mxu0 0.0
    %v6755 = vand.u32 %v2568, 4294901760
    %6756 = vmatpush1.msra.mxu0 %v6755
    %6757 = vmatprep.subr.mxu0 0.0
    %v6758 = vand.u32 %v2569, 4294901760
    %6759 = vmatpush1.msra.mxu0 %v6758
    %6760 = vmatprep.subr.mxu0 0.0
    %v6761 = vand.u32 %v2570, 4294901760
    %6762 = vmatpush1.msra.mxu0 %v6761
    %6763 = vmatprep.subr.mxu0 0.0
    %v6764 = vand.u32 %v2571, 4294901760
    %6765 = vmatpush1.msra.mxu0 %v6764
    %6766 = vmatprep.subr.mxu0 0.0
    %v6767 = vand.u32 %v2572, 4294901760
    %6768 = vmatpush1.msra.mxu0 %v6767
    %6769 = vmatprep.subr.mxu0 0.0
    %v6770 = vand.u32 %v2573, 4294901760
    %6771 = vmatpush1.msra.mxu0 %v6770
    %6772 = vmatprep.subr.mxu0 0.0
    %v6773 = vand.u32 %v2574, 4294901760
    %6774 = vmatpush1.msra.mxu0 %v6773
    %6775 = vmatprep.subr.mxu0 0.0
    %v6776 = vand.u32 %v2575, 4294901760
    %6777 = vmatpush1.msra.mxu0 %v6776
    %6778 = vmatprep.subr.mxu0 0.0
    %v6779 = vand.u32 %v2576, 4294901760
    %6780 = vmatpush1.msra.mxu0 %v6779
    %6781 = vmatprep.subr.mxu0 0.0
    %v6782 = vand.u32 %v2577, 4294901760
    %6783 = vmatpush1.msra.mxu0 %v6782
    %6784 = vmatprep.subr.mxu0 0.0
    %v6785 = vand.u32 %v2578, 4294901760
    %6786 = vmatpush1.msra.mxu0 %v6785
    %6787 = vmatprep.subr.mxu0 0.0
    %v6788 = vand.u32 %v2579, 4294901760
    %6789 = vmatpush1.msra.mxu0 %v6788
    %6790 = vmatprep.subr.mxu0 0.0
    %v6791 = vand.u32 %v2580, 4294901760
    %6792 = vmatpush1.msra.mxu0 %v6791
    %6793 = vmatprep.subr.mxu0 0.0
    %v6794 = vand.u32 %v2581, 4294901760
    %6795 = vmatpush1.msra.mxu0 %v6794
    %v6796 = vand.u32 %v2735, 4294901760
    %v6797 = vsub.f32 %v2735, %v6796
    %v6798 = vand.u32 %v6797, 4294901760
    %6799 = vmatprep.mubr.f32.mxu0 %v6798
    %v6800 = vand.u32 %v2727, 4294901760
    %v6801 = vsub.f32 %v2727, %v6800
    %v6802 = vand.u32 %v6801, 4294901760
    %6803 = vmatmul.mubr.f32.gmra.mrb[0].mxu0 %v6802
    %v6804 = vpop.f32.mrb[0].mxu0
    %v6805 = vadd.f32 %v6697, %v6804
    %v6806 = vpop.f32.mrb[0].mxu0
    %6807 = vdwg.mxu0
    %6808 = vmatprep.subr.mxu0 0.0
    %v6809 = vand.u32 %v2550, 4294901760
    %v6810 = vsub.f32 %v2550, %v6809
    %v6811 = vand.u32 %v6810, 4294901760
    %6812 = vmatpush1.msra.mxu0 %v6811
    %6813 = vmatprep.subr.mxu0 0.0
    %v6814 = vand.u32 %v2551, 4294901760
    %v6815 = vsub.f32 %v2551, %v6814
    %v6816 = vand.u32 %v6815, 4294901760
    %6817 = vmatpush1.msra.mxu0 %v6816
    %6818 = vmatprep.subr.mxu0 0.0
    %v6819 = vand.u32 %v2552, 4294901760
    %v6820 = vsub.f32 %v2552, %v6819
    %v6821 = vand.u32 %v6820, 4294901760
    %6822 = vmatpush1.msra.mxu0 %v6821
    %6823 = vmatprep.subr.mxu0 0.0
    %v6824 = vand.u32 %v2553, 4294901760
    %v6825 = vsub.f32 %v2553, %v6824
    %v6826 = vand.u32 %v6825, 4294901760
    %6827 = vmatpush1.msra.mxu0 %v6826
    %6828 = vmatprep.subr.mxu0 0.0
    %v6829 = vand.u32 %v2554, 4294901760
    %v6830 = vsub.f32 %v2554, %v6829
    %v6831 = vand.u32 %v6830, 4294901760
    %6832 = vmatpush1.msra.mxu0 %v6831
    %6833 = vmatprep.subr.mxu0 0.0
    %v6834 = vand.u32 %v2555, 4294901760
    %v6835 = vsub.f32 %v2555, %v6834
    %v6836 = vand.u32 %v6835, 4294901760
    %6837 = vmatpush1.msra.mxu0 %v6836
    %6838 = vmatprep.subr.mxu0 0.0
    %v6839 = vand.u32 %v2556, 4294901760
    %v6840 = vsub.f32 %v2556, %v6839
    %v6841 = vand.u32 %v6840, 4294901760
    %6842 = vmatpush1.msra.mxu0 %v6841
    %6843 = vmatprep.subr.mxu0 0.0
    %v6844 = vand.u32 %v2557, 4294901760
    %v6845 = vsub.f32 %v2557, %v6844
    %v6846 = vand.u32 %v6845, 4294901760
    %6847 = vmatpush1.msra.mxu0 %v6846
    %6848 = vmatprep.subr.mxu0 0.0
    %v6849 = vand.u32 %v2558, 4294901760
    %v6850 = vsub.f32 %v2558, %v6849
    %v6851 = vand.u32 %v6850, 4294901760
    %6852 = vmatpush1.msra.mxu0 %v6851
    %6853 = vmatprep.subr.mxu0 0.0
    %v6854 = vand.u32 %v2559, 4294901760
    %v6855 = vsub.f32 %v2559, %v6854
    %v6856 = vand.u32 %v6855, 4294901760
    %6857 = vmatpush1.msra.mxu0 %v6856
    %6858 = vmatprep.subr.mxu0 0.0
    %v6859 = vand.u32 %v2560, 4294901760
    %v6860 = vsub.f32 %v2560, %v6859
    %v6861 = vand.u32 %v6860, 4294901760
    %6862 = vmatpush1.msra.mxu0 %v6861
    %6863 = vmatprep.subr.mxu0 0.0
    %v6864 = vand.u32 %v2561, 4294901760
    %v6865 = vsub.f32 %v2561, %v6864
    %v6866 = vand.u32 %v6865, 4294901760
    %6867 = vmatpush1.msra.mxu0 %v6866
    %6868 = vmatprep.subr.mxu0 0.0
    %v6869 = vand.u32 %v2562, 4294901760
    %v6870 = vsub.f32 %v2562, %v6869
    %v6871 = vand.u32 %v6870, 4294901760
    %6872 = vmatpush1.msra.mxu0 %v6871
    %6873 = vmatprep.subr.mxu0 0.0
    %v6874 = vand.u32 %v2563, 4294901760
    %v6875 = vsub.f32 %v2563, %v6874
    %v6876 = vand.u32 %v6875, 4294901760
    %6877 = vmatpush1.msra.mxu0 %v6876
    %6878 = vmatprep.subr.mxu0 0.0
    %v6879 = vand.u32 %v2564, 4294901760
    %v6880 = vsub.f32 %v2564, %v6879
    %v6881 = vand.u32 %v6880, 4294901760
    %6882 = vmatpush1.msra.mxu0 %v6881
    %6883 = vmatprep.subr.mxu0 0.0
    %v6884 = vand.u32 %v2565, 4294901760
    %v6885 = vsub.f32 %v2565, %v6884
    %v6886 = vand.u32 %v6885, 4294901760
    %6887 = vmatpush1.msra.mxu0 %v6886
    %6888 = vmatprep.subr.mxu0 0.0
    %v6889 = vand.u32 %v2566, 4294901760
    %v6890 = vsub.f32 %v2566, %v6889
    %v6891 = vand.u32 %v6890, 4294901760
    %6892 = vmatpush1.msra.mxu0 %v6891
    %6893 = vmatprep.subr.mxu0 0.0
    %v6894 = vand.u32 %v2567, 4294901760
    %v6895 = vsub.f32 %v2567, %v6894
    %v6896 = vand.u32 %v6895, 4294901760
    %6897 = vmatpush1.msra.mxu0 %v6896
    %6898 = vmatprep.subr.mxu0 0.0
    %v6899 = vand.u32 %v2568, 4294901760
    %v6900 = vsub.f32 %v2568, %v6899
    %v6901 = vand.u32 %v6900, 4294901760
    %6902 = vmatpush1.msra.mxu0 %v6901
    %6903 = vmatprep.subr.mxu0 0.0
    %v6904 = vand.u32 %v2569, 4294901760
    %v6905 = vsub.f32 %v2569, %v6904
    %v6906 = vand.u32 %v6905, 4294901760
    %6907 = vmatpush1.msra.mxu0 %v6906
    %6908 = vmatprep.subr.mxu0 0.0
    %v6909 = vand.u32 %v2570, 4294901760
    %v6910 = vsub.f32 %v2570, %v6909
    %v6911 = vand.u32 %v6910, 4294901760
    %6912 = vmatpush1.msra.mxu0 %v6911
    %6913 = vmatprep.subr.mxu0 0.0
    %v6914 = vand.u32 %v2571, 4294901760
    %v6915 = vsub.f32 %v2571, %v6914
    %v6916 = vand.u32 %v6915, 4294901760
    %6917 = vmatpush1.msra.mxu0 %v6916
    %6918 = vmatprep.subr.mxu0 0.0
    %v6919 = vand.u32 %v2572, 4294901760
    %v6920 = vsub.f32 %v2572, %v6919
    %v6921 = vand.u32 %v6920, 4294901760
    %6922 = vmatpush1.msra.mxu0 %v6921
    %6923 = vmatprep.subr.mxu0 0.0
    %v6924 = vand.u32 %v2573, 4294901760
    %v6925 = vsub.f32 %v2573, %v6924
    %v6926 = vand.u32 %v6925, 4294901760
    %6927 = vmatpush1.msra.mxu0 %v6926
    %6928 = vmatprep.subr.mxu0 0.0
    %v6929 = vand.u32 %v2574, 4294901760
    %v6930 = vsub.f32 %v2574, %v6929
    %v6931 = vand.u32 %v6930, 4294901760
    %6932 = vmatpush1.msra.mxu0 %v6931
    %6933 = vmatprep.subr.mxu0 0.0
    %v6934 = vand.u32 %v2575, 4294901760
    %v6935 = vsub.f32 %v2575, %v6934
    %v6936 = vand.u32 %v6935, 4294901760
    %6937 = vmatpush1.msra.mxu0 %v6936
    %6938 = vmatprep.subr.mxu0 0.0
    %v6939 = vand.u32 %v2576, 4294901760
    %v6940 = vsub.f32 %v2576, %v6939
    %v6941 = vand.u32 %v6940, 4294901760
    %6942 = vmatpush1.msra.mxu0 %v6941
    %6943 = vmatprep.subr.mxu0 0.0
    %v6944 = vand.u32 %v2577, 4294901760
    %v6945 = vsub.f32 %v2577, %v6944
    %v6946 = vand.u32 %v6945, 4294901760
    %6947 = vmatpush1.msra.mxu0 %v6946
    %6948 = vmatprep.subr.mxu0 0.0
    %v6949 = vand.u32 %v2578, 4294901760
    %v6950 = vsub.f32 %v2578, %v6949
    %v6951 = vand.u32 %v6950, 4294901760
    %6952 = vmatpush1.msra.mxu0 %v6951
    %6953 = vmatprep.subr.mxu0 0.0
    %v6954 = vand.u32 %v2579, 4294901760
    %v6955 = vsub.f32 %v2579, %v6954
    %v6956 = vand.u32 %v6955, 4294901760
    %6957 = vmatpush1.msra.mxu0 %v6956
    %6958 = vmatprep.subr.mxu0 0.0
    %v6959 = vand.u32 %v2580, 4294901760
    %v6960 = vsub.f32 %v2580, %v6959
    %v6961 = vand.u32 %v6960, 4294901760
    %6962 = vmatpush1.msra.mxu0 %v6961
    %6963 = vmatprep.subr.mxu0 0.0
    %v6964 = vand.u32 %v2581, 4294901760
    %v6965 = vsub.f32 %v2581, %v6964
    %v6966 = vand.u32 %v6965, 4294901760
    %6967 = vmatpush1.msra.mxu0 %v6966
    %v6968 = vand.u32 %v2735, 4294901760
    %6969 = vmatprep.mubr.f32.mxu0 %v6968
    %v6970 = vand.u32 %v2727, 4294901760
    %6971 = vmatmul.mubr.f32.gmra.mrb[0].mxu0 %v6970
    %v6972 = vpop.f32.mrb[0].mxu0
    %v6973 = vadd.f32 %v6805, %v6972
    %v6974 = vpop.f32.mrb[0].mxu0
    %6975 = vdwg.mxu0
    %6976 = vmatprep.subr.mxu0 0.0
    %v6977 = vand.u32 %v2550, 4294901760
    %6978 = vmatpush1.msra.mxu0 %v6977
    %6979 = vmatprep.subr.mxu0 0.0
    %v6980 = vand.u32 %v2551, 4294901760
    %6981 = vmatpush1.msra.mxu0 %v6980
    %6982 = vmatprep.subr.mxu0 0.0
    %v6983 = vand.u32 %v2552, 4294901760
    %6984 = vmatpush1.msra.mxu0 %v6983
    %6985 = vmatprep.subr.mxu0 0.0
    %v6986 = vand.u32 %v2553, 4294901760
    %6987 = vmatpush1.msra.mxu0 %v6986
    %6988 = vmatprep.subr.mxu0 0.0
    %v6989 = vand.u32 %v2554, 4294901760
    %6990 = vmatpush1.msra.mxu0 %v6989
    %6991 = vmatprep.subr.mxu0 0.0
    %v6992 = vand.u32 %v2555, 4294901760
    %6993 = vmatpush1.msra.mxu0 %v6992
    %6994 = vmatprep.subr.mxu0 0.0
    %v6995 = vand.u32 %v2556, 4294901760
    %6996 = vmatpush1.msra.mxu0 %v6995
    %6997 = vmatprep.subr.mxu0 0.0
    %v6998 = vand.u32 %v2557, 4294901760
    %6999 = vmatpush1.msra.mxu0 %v6998
    %7000 = vmatprep.subr.mxu0 0.0
    %v7001 = vand.u32 %v2558, 4294901760
    %7002 = vmatpush1.msra.mxu0 %v7001
    %7003 = vmatprep.subr.mxu0 0.0
    %v7004 = vand.u32 %v2559, 4294901760
    %7005 = vmatpush1.msra.mxu0 %v7004
    %7006 = vmatprep.subr.mxu0 0.0
    %v7007 = vand.u32 %v2560, 4294901760
    %7008 = vmatpush1.msra.mxu0 %v7007
    %7009 = vmatprep.subr.mxu0 0.0
    %v7010 = vand.u32 %v2561, 4294901760
    %7011 = vmatpush1.msra.mxu0 %v7010
    %7012 = vmatprep.subr.mxu0 0.0
    %v7013 = vand.u32 %v2562, 4294901760
    %7014 = vmatpush1.msra.mxu0 %v7013
    %7015 = vmatprep.subr.mxu0 0.0
    %v7016 = vand.u32 %v2563, 4294901760
    %7017 = vmatpush1.msra.mxu0 %v7016
    %7018 = vmatprep.subr.mxu0 0.0
    %v7019 = vand.u32 %v2564, 4294901760
    %7020 = vmatpush1.msra.mxu0 %v7019
    %7021 = vmatprep.subr.mxu0 0.0
    %v7022 = vand.u32 %v2565, 4294901760
    %7023 = vmatpush1.msra.mxu0 %v7022
    %7024 = vmatprep.subr.mxu0 0.0
    %v7025 = vand.u32 %v2566, 4294901760
    %7026 = vmatpush1.msra.mxu0 %v7025
    %7027 = vmatprep.subr.mxu0 0.0
    %v7028 = vand.u32 %v2567, 4294901760
    %7029 = vmatpush1.msra.mxu0 %v7028
    %7030 = vmatprep.subr.mxu0 0.0
    %v7031 = vand.u32 %v2568, 4294901760
    %7032 = vmatpush1.msra.mxu0 %v7031
    %7033 = vmatprep.subr.mxu0 0.0
    %v7034 = vand.u32 %v2569, 4294901760
    %7035 = vmatpush1.msra.mxu0 %v7034
    %7036 = vmatprep.subr.mxu0 0.0
    %v7037 = vand.u32 %v2570, 4294901760
    %7038 = vmatpush1.msra.mxu0 %v7037
    %7039 = vmatprep.subr.mxu0 0.0
    %v7040 = vand.u32 %v2571, 4294901760
    %7041 = vmatpush1.msra.mxu0 %v7040
    %7042 = vmatprep.subr.mxu0 0.0
    %v7043 = vand.u32 %v2572, 4294901760
    %7044 = vmatpush1.msra.mxu0 %v7043
    %7045 = vmatprep.subr.mxu0 0.0
    %v7046 = vand.u32 %v2573, 4294901760
    %7047 = vmatpush1.msra.mxu0 %v7046
    %7048 = vmatprep.subr.mxu0 0.0
    %v7049 = vand.u32 %v2574, 4294901760
    %7050 = vmatpush1.msra.mxu0 %v7049
    %7051 = vmatprep.subr.mxu0 0.0
    %v7052 = vand.u32 %v2575, 4294901760
    %7053 = vmatpush1.msra.mxu0 %v7052
    %7054 = vmatprep.subr.mxu0 0.0
    %v7055 = vand.u32 %v2576, 4294901760
    %7056 = vmatpush1.msra.mxu0 %v7055
    %7057 = vmatprep.subr.mxu0 0.0
    %v7058 = vand.u32 %v2577, 4294901760
    %7059 = vmatpush1.msra.mxu0 %v7058
    %7060 = vmatprep.subr.mxu0 0.0
    %v7061 = vand.u32 %v2578, 4294901760
    %7062 = vmatpush1.msra.mxu0 %v7061
    %7063 = vmatprep.subr.mxu0 0.0
    %v7064 = vand.u32 %v2579, 4294901760
    %7065 = vmatpush1.msra.mxu0 %v7064
    %7066 = vmatprep.subr.mxu0 0.0
    %v7067 = vand.u32 %v2580, 4294901760
    %7068 = vmatpush1.msra.mxu0 %v7067
    %7069 = vmatprep.subr.mxu0 0.0
    %v7070 = vand.u32 %v2581, 4294901760
    %7071 = vmatpush1.msra.mxu0 %v7070
    %v7072 = vand.u32 %v2735, 4294901760
    %7073 = vmatprep.mubr.f32.mxu0 %v7072
    %v7074 = vand.u32 %v2727, 4294901760
    %7075 = vmatmul.mubr.f32.gmra.mrb[0].mxu0 %v7074
    %v7076 = vpop.f32.mrb[0].mxu0
    %v7077 = vadd.f32 %v6973, %v7076
    %v7078 = vpop.f32.mrb[0].mxu0
    %7079 = vdwg.mxu0
    %7080 = vmatprep.subr.mxu0 0.0
    %v7081 = vand.u32 %v2582, 4294901760
    %7082 = vmatpush1.msra.mxu0 %v7081
    %7083 = vmatprep.subr.mxu0 0.0
    %v7084 = vand.u32 %v2583, 4294901760
    %7085 = vmatpush1.msra.mxu0 %v7084
    %7086 = vmatprep.subr.mxu0 0.0
    %v7087 = vand.u32 %v2584, 4294901760
    %7088 = vmatpush1.msra.mxu0 %v7087
    %7089 = vmatprep.subr.mxu0 0.0
    %v7090 = vand.u32 %v2585, 4294901760
    %7091 = vmatpush1.msra.mxu0 %v7090
    %7092 = vmatprep.subr.mxu0 0.0
    %v7093 = vand.u32 %v2586, 4294901760
    %7094 = vmatpush1.msra.mxu0 %v7093
    %7095 = vmatprep.subr.mxu0 0.0
    %v7096 = vand.u32 %v2587, 4294901760
    %7097 = vmatpush1.msra.mxu0 %v7096
    %7098 = vmatprep.subr.mxu0 0.0
    %v7099 = vand.u32 %v2588, 4294901760
    %7100 = vmatpush1.msra.mxu0 %v7099
    %7101 = vmatprep.subr.mxu0 0.0
    %v7102 = vand.u32 %v2589, 4294901760
    %7103 = vmatpush1.msra.mxu0 %v7102
    %7104 = vmatprep.subr.mxu0 0.0
    %v7105 = vand.u32 %v2590, 4294901760
    %7106 = vmatpush1.msra.mxu0 %v7105
    %7107 = vmatprep.subr.mxu0 0.0
    %v7108 = vand.u32 %v2591, 4294901760
    %7109 = vmatpush1.msra.mxu0 %v7108
    %7110 = vmatprep.subr.mxu0 0.0
    %v7111 = vand.u32 %v2592, 4294901760
    %7112 = vmatpush1.msra.mxu0 %v7111
    %7113 = vmatprep.subr.mxu0 0.0
    %v7114 = vand.u32 %v2593, 4294901760
    %7115 = vmatpush1.msra.mxu0 %v7114
    %7116 = vmatprep.subr.mxu0 0.0
    %v7117 = vand.u32 %v2594, 4294901760
    %7118 = vmatpush1.msra.mxu0 %v7117
    %7119 = vmatprep.subr.mxu0 0.0
    %v7120 = vand.u32 %v2595, 4294901760
    %7121 = vmatpush1.msra.mxu0 %v7120
    %7122 = vmatprep.subr.mxu0 0.0
    %v7123 = vand.u32 %v2596, 4294901760
    %7124 = vmatpush1.msra.mxu0 %v7123
    %7125 = vmatprep.subr.mxu0 0.0
    %v7126 = vand.u32 %v2597, 4294901760
    %7127 = vmatpush1.msra.mxu0 %v7126
    %7128 = vmatprep.subr.mxu0 0.0
    %v7129 = vand.u32 %v2598, 4294901760
    %7130 = vmatpush1.msra.mxu0 %v7129
    %7131 = vmatprep.subr.mxu0 0.0
    %v7132 = vand.u32 %v2599, 4294901760
    %7133 = vmatpush1.msra.mxu0 %v7132
    %7134 = vmatprep.subr.mxu0 0.0
    %v7135 = vand.u32 %v2600, 4294901760
    %7136 = vmatpush1.msra.mxu0 %v7135
    %7137 = vmatprep.subr.mxu0 0.0
    %v7138 = vand.u32 %v2601, 4294901760
    %7139 = vmatpush1.msra.mxu0 %v7138
    %7140 = vmatprep.subr.mxu0 0.0
    %v7141 = vand.u32 %v2602, 4294901760
    %7142 = vmatpush1.msra.mxu0 %v7141
    %7143 = vmatprep.subr.mxu0 0.0
    %v7144 = vand.u32 %v2603, 4294901760
    %7145 = vmatpush1.msra.mxu0 %v7144
    %7146 = vmatprep.subr.mxu0 0.0
    %v7147 = vand.u32 %v2604, 4294901760
    %7148 = vmatpush1.msra.mxu0 %v7147
    %7149 = vmatprep.subr.mxu0 0.0
    %v7150 = vand.u32 %v2605, 4294901760
    %7151 = vmatpush1.msra.mxu0 %v7150
    %7152 = vmatprep.subr.mxu0 0.0
    %v7153 = vand.u32 %v2606, 4294901760
    %7154 = vmatpush1.msra.mxu0 %v7153
    %7155 = vmatprep.subr.mxu0 0.0
    %v7156 = vand.u32 %v2607, 4294901760
    %7157 = vmatpush1.msra.mxu0 %v7156
    %7158 = vmatprep.subr.mxu0 0.0
    %v7159 = vand.u32 %v2608, 4294901760
    %7160 = vmatpush1.msra.mxu0 %v7159
    %7161 = vmatprep.subr.mxu0 0.0
    %v7162 = vand.u32 %v2609, 4294901760
    %7163 = vmatpush1.msra.mxu0 %v7162
    %7164 = vmatprep.subr.mxu0 0.0
    %v7165 = vand.u32 %v2610, 4294901760
    %7166 = vmatpush1.msra.mxu0 %v7165
    %7167 = vmatprep.subr.mxu0 0.0
    %v7168 = vand.u32 %v2611, 4294901760
    %7169 = vmatpush1.msra.mxu0 %v7168
    %7170 = vmatprep.subr.mxu0 0.0
    %v7171 = vand.u32 %v2612, 4294901760
    %7172 = vmatpush1.msra.mxu0 %v7171
    %7173 = vmatprep.subr.mxu0 0.0
    %v7174 = vand.u32 %v2613, 4294901760
    %7175 = vmatpush1.msra.mxu0 %v7174
    %v7176 = vand.u32 %v2736, 4294901760
    %v7177 = vsub.f32 %v2736, %v7176
    %v7178 = vand.u32 %v7177, 4294901760
    %v7179 = vsub.f32 %v7177, %v7178
    %v7180 = vand.u32 %v7179, 4294901760
    %7181 = vmatprep.mubr.f32.mxu0 %v7180
    %v7182 = vand.u32 %v2734, 4294901760
    %v7183 = vsub.f32 %v2734, %v7182
    %v7184 = vand.u32 %v7183, 4294901760
    %v7185 = vsub.f32 %v7183, %v7184
    %v7186 = vand.u32 %v7185, 4294901760
    %7187 = vmatmul.mubr.f32.gmra.mrb[0].mxu0 %v7186
    %v7188 = vpop.f32.mrb[0].mxu0
    %v7189 = vadd.f32 %v7077, %v7188
    %v7190 = vpop.f32.mrb[0].mxu0
    %7191 = vdwg.mxu0
    %7192 = vmatprep.subr.mxu0 0.0
    %v7193 = vand.u32 %v2582, 4294901760
    %v7194 = vsub.f32 %v2582, %v7193
    %v7195 = vand.u32 %v7194, 4294901760
    %v7196 = vsub.f32 %v7194, %v7195
    %v7197 = vand.u32 %v7196, 4294901760
    %7198 = vmatpush1.msra.mxu0 %v7197
    %7199 = vmatprep.subr.mxu0 0.0
    %v7200 = vand.u32 %v2583, 4294901760
    %v7201 = vsub.f32 %v2583, %v7200
    %v7202 = vand.u32 %v7201, 4294901760
    %v7203 = vsub.f32 %v7201, %v7202
    %v7204 = vand.u32 %v7203, 4294901760
    %7205 = vmatpush1.msra.mxu0 %v7204
    %7206 = vmatprep.subr.mxu0 0.0
    %v7207 = vand.u32 %v2584, 4294901760
    %v7208 = vsub.f32 %v2584, %v7207
    %v7209 = vand.u32 %v7208, 4294901760
    %v7210 = vsub.f32 %v7208, %v7209
    %v7211 = vand.u32 %v7210, 4294901760
    %7212 = vmatpush1.msra.mxu0 %v7211
    %7213 = vmatprep.subr.mxu0 0.0
    %v7214 = vand.u32 %v2585, 4294901760
    %v7215 = vsub.f32 %v2585, %v7214
    %v7216 = vand.u32 %v7215, 4294901760
    %v7217 = vsub.f32 %v7215, %v7216
    %v7218 = vand.u32 %v7217, 4294901760
    %7219 = vmatpush1.msra.mxu0 %v7218
    %7220 = vmatprep.subr.mxu0 0.0
    %v7221 = vand.u32 %v2586, 4294901760
    %v7222 = vsub.f32 %v2586, %v7221
    %v7223 = vand.u32 %v7222, 4294901760
    %v7224 = vsub.f32 %v7222, %v7223
    %v7225 = vand.u32 %v7224, 4294901760
    %7226 = vmatpush1.msra.mxu0 %v7225
    %7227 = vmatprep.subr.mxu0 0.0
    %v7228 = vand.u32 %v2587, 4294901760
    %v7229 = vsub.f32 %v2587, %v7228
    %v7230 = vand.u32 %v7229, 4294901760
    %v7231 = vsub.f32 %v7229, %v7230
    %v7232 = vand.u32 %v7231, 4294901760
    %7233 = vmatpush1.msra.mxu0 %v7232
    %7234 = vmatprep.subr.mxu0 0.0
    %v7235 = vand.u32 %v2588, 4294901760
    %v7236 = vsub.f32 %v2588, %v7235
    %v7237 = vand.u32 %v7236, 4294901760
    %v7238 = vsub.f32 %v7236, %v7237
    %v7239 = vand.u32 %v7238, 4294901760
    %7240 = vmatpush1.msra.mxu0 %v7239
    %7241 = vmatprep.subr.mxu0 0.0
    %v7242 = vand.u32 %v2589, 4294901760
    %v7243 = vsub.f32 %v2589, %v7242
    %v7244 = vand.u32 %v7243, 4294901760
    %v7245 = vsub.f32 %v7243, %v7244
    %v7246 = vand.u32 %v7245, 4294901760
    %7247 = vmatpush1.msra.mxu0 %v7246
    %7248 = vmatprep.subr.mxu0 0.0
    %v7249 = vand.u32 %v2590, 4294901760
    %v7250 = vsub.f32 %v2590, %v7249
    %v7251 = vand.u32 %v7250, 4294901760
    %v7252 = vsub.f32 %v7250, %v7251
    %v7253 = vand.u32 %v7252, 4294901760
    %7254 = vmatpush1.msra.mxu0 %v7253
    %7255 = vmatprep.subr.mxu0 0.0
    %v7256 = vand.u32 %v2591, 4294901760
    %v7257 = vsub.f32 %v2591, %v7256
    %v7258 = vand.u32 %v7257, 4294901760
    %v7259 = vsub.f32 %v7257, %v7258
    %v7260 = vand.u32 %v7259, 4294901760
    %7261 = vmatpush1.msra.mxu0 %v7260
    %7262 = vmatprep.subr.mxu0 0.0
    %v7263 = vand.u32 %v2592, 4294901760
    %v7264 = vsub.f32 %v2592, %v7263
    %v7265 = vand.u32 %v7264, 4294901760
    %v7266 = vsub.f32 %v7264, %v7265
    %v7267 = vand.u32 %v7266, 4294901760
    %7268 = vmatpush1.msra.mxu0 %v7267
    %7269 = vmatprep.subr.mxu0 0.0
    %v7270 = vand.u32 %v2593, 4294901760
    %v7271 = vsub.f32 %v2593, %v7270
    %v7272 = vand.u32 %v7271, 4294901760
    %v7273 = vsub.f32 %v7271, %v7272
    %v7274 = vand.u32 %v7273, 4294901760
    %7275 = vmatpush1.msra.mxu0 %v7274
    %7276 = vmatprep.subr.mxu0 0.0
    %v7277 = vand.u32 %v2594, 4294901760
    %v7278 = vsub.f32 %v2594, %v7277
    %v7279 = vand.u32 %v7278, 4294901760
    %v7280 = vsub.f32 %v7278, %v7279
    %v7281 = vand.u32 %v7280, 4294901760
    %7282 = vmatpush1.msra.mxu0 %v7281
    %7283 = vmatprep.subr.mxu0 0.0
    %v7284 = vand.u32 %v2595, 4294901760
    %v7285 = vsub.f32 %v2595, %v7284
    %v7286 = vand.u32 %v7285, 4294901760
    %v7287 = vsub.f32 %v7285, %v7286
    %v7288 = vand.u32 %v7287, 4294901760
    %7289 = vmatpush1.msra.mxu0 %v7288
    %7290 = vmatprep.subr.mxu0 0.0
    %v7291 = vand.u32 %v2596, 4294901760
    %v7292 = vsub.f32 %v2596, %v7291
    %v7293 = vand.u32 %v7292, 4294901760
    %v7294 = vsub.f32 %v7292, %v7293
    %v7295 = vand.u32 %v7294, 4294901760
    %7296 = vmatpush1.msra.mxu0 %v7295
    %7297 = vmatprep.subr.mxu0 0.0
    %v7298 = vand.u32 %v2597, 4294901760
    %v7299 = vsub.f32 %v2597, %v7298
    %v7300 = vand.u32 %v7299, 4294901760
    %v7301 = vsub.f32 %v7299, %v7300
    %v7302 = vand.u32 %v7301, 4294901760
    %7303 = vmatpush1.msra.mxu0 %v7302
    %7304 = vmatprep.subr.mxu0 0.0
    %v7305 = vand.u32 %v2598, 4294901760
    %v7306 = vsub.f32 %v2598, %v7305
    %v7307 = vand.u32 %v7306, 4294901760
    %v7308 = vsub.f32 %v7306, %v7307
    %v7309 = vand.u32 %v7308, 4294901760
    %7310 = vmatpush1.msra.mxu0 %v7309
    %7311 = vmatprep.subr.mxu0 0.0
    %v7312 = vand.u32 %v2599, 4294901760
    %v7313 = vsub.f32 %v2599, %v7312
    %v7314 = vand.u32 %v7313, 4294901760
    %v7315 = vsub.f32 %v7313, %v7314
    %v7316 = vand.u32 %v7315, 4294901760
    %7317 = vmatpush1.msra.mxu0 %v7316
    %7318 = vmatprep.subr.mxu0 0.0
    %v7319 = vand.u32 %v2600, 4294901760
    %v7320 = vsub.f32 %v2600, %v7319
    %v7321 = vand.u32 %v7320, 4294901760
    %v7322 = vsub.f32 %v7320, %v7321
    %v7323 = vand.u32 %v7322, 4294901760
    %7324 = vmatpush1.msra.mxu0 %v7323
    %7325 = vmatprep.subr.mxu0 0.0
    %v7326 = vand.u32 %v2601, 4294901760
    %v7327 = vsub.f32 %v2601, %v7326
    %v7328 = vand.u32 %v7327, 4294901760
    %v7329 = vsub.f32 %v7327, %v7328
    %v7330 = vand.u32 %v7329, 4294901760
    %7331 = vmatpush1.msra.mxu0 %v7330
    %7332 = vmatprep.subr.mxu0 0.0
    %v7333 = vand.u32 %v2602, 4294901760
    %v7334 = vsub.f32 %v2602, %v7333
    %v7335 = vand.u32 %v7334, 4294901760
    %v7336 = vsub.f32 %v7334, %v7335
    %v7337 = vand.u32 %v7336, 4294901760
    %7338 = vmatpush1.msra.mxu0 %v7337
    %7339 = vmatprep.subr.mxu0 0.0
    %v7340 = vand.u32 %v2603, 4294901760
    %v7341 = vsub.f32 %v2603, %v7340
    %v7342 = vand.u32 %v7341, 4294901760
    %v7343 = vsub.f32 %v7341, %v7342
    %v7344 = vand.u32 %v7343, 4294901760
    %7345 = vmatpush1.msra.mxu0 %v7344
    %7346 = vmatprep.subr.mxu0 0.0
    %v7347 = vand.u32 %v2604, 4294901760
    %v7348 = vsub.f32 %v2604, %v7347
    %v7349 = vand.u32 %v7348, 4294901760
    %v7350 = vsub.f32 %v7348, %v7349
    %v7351 = vand.u32 %v7350, 4294901760
    %7352 = vmatpush1.msra.mxu0 %v7351
    %7353 = vmatprep.subr.mxu0 0.0
    %v7354 = vand.u32 %v2605, 4294901760
    %v7355 = vsub.f32 %v2605, %v7354
    %v7356 = vand.u32 %v7355, 4294901760
    %v7357 = vsub.f32 %v7355, %v7356
    %v7358 = vand.u32 %v7357, 4294901760
    %7359 = vmatpush1.msra.mxu0 %v7358
    %7360 = vmatprep.subr.mxu0 0.0
    %v7361 = vand.u32 %v2606, 4294901760
    %v7362 = vsub.f32 %v2606, %v7361
    %v7363 = vand.u32 %v7362, 4294901760
    %v7364 = vsub.f32 %v7362, %v7363
    %v7365 = vand.u32 %v7364, 4294901760
    %7366 = vmatpush1.msra.mxu0 %v7365
    %7367 = vmatprep.subr.mxu0 0.0
    %v7368 = vand.u32 %v2607, 4294901760
    %v7369 = vsub.f32 %v2607, %v7368
    %v7370 = vand.u32 %v7369, 4294901760
    %v7371 = vsub.f32 %v7369, %v7370
    %v7372 = vand.u32 %v7371, 4294901760
    %7373 = vmatpush1.msra.mxu0 %v7372
    %7374 = vmatprep.subr.mxu0 0.0
    %v7375 = vand.u32 %v2608, 4294901760
    %v7376 = vsub.f32 %v2608, %v7375
    %v7377 = vand.u32 %v7376, 4294901760
    %v7378 = vsub.f32 %v7376, %v7377
    %v7379 = vand.u32 %v7378, 4294901760
    %7380 = vmatpush1.msra.mxu0 %v7379
    %7381 = vmatprep.subr.mxu0 0.0
    %v7382 = vand.u32 %v2609, 4294901760
    %v7383 = vsub.f32 %v2609, %v7382
    %v7384 = vand.u32 %v7383, 4294901760
    %v7385 = vsub.f32 %v7383, %v7384
    %v7386 = vand.u32 %v7385, 4294901760
    %7387 = vmatpush1.msra.mxu0 %v7386
    %7388 = vmatprep.subr.mxu0 0.0
    %v7389 = vand.u32 %v2610, 4294901760
    %v7390 = vsub.f32 %v2610, %v7389
    %v7391 = vand.u32 %v7390, 4294901760
    %v7392 = vsub.f32 %v7390, %v7391
    %v7393 = vand.u32 %v7392, 4294901760
    %7394 = vmatpush1.msra.mxu0 %v7393
    %7395 = vmatprep.subr.mxu0 0.0
    %v7396 = vand.u32 %v2611, 4294901760
    %v7397 = vsub.f32 %v2611, %v7396
    %v7398 = vand.u32 %v7397, 4294901760
    %v7399 = vsub.f32 %v7397, %v7398
    %v7400 = vand.u32 %v7399, 4294901760
    %7401 = vmatpush1.msra.mxu0 %v7400
    %7402 = vmatprep.subr.mxu0 0.0
    %v7403 = vand.u32 %v2612, 4294901760
    %v7404 = vsub.f32 %v2612, %v7403
    %v7405 = vand.u32 %v7404, 4294901760
    %v7406 = vsub.f32 %v7404, %v7405
    %v7407 = vand.u32 %v7406, 4294901760
    %7408 = vmatpush1.msra.mxu0 %v7407
    %7409 = vmatprep.subr.mxu0 0.0
    %v7410 = vand.u32 %v2613, 4294901760
    %v7411 = vsub.f32 %v2613, %v7410
    %v7412 = vand.u32 %v7411, 4294901760
    %v7413 = vsub.f32 %v7411, %v7412
    %v7414 = vand.u32 %v7413, 4294901760
    %7415 = vmatpush1.msra.mxu0 %v7414
    %v7416 = vand.u32 %v2736, 4294901760
    %7417 = vmatprep.mubr.f32.mxu0 %v7416
    %v7418 = vand.u32 %v2734, 4294901760
    %7419 = vmatmul.mubr.f32.gmra.mrb[0].mxu0 %v7418
    %v7420 = vpop.f32.mrb[0].mxu0
    %v7421 = vadd.f32 %v7189, %v7420
    %v7422 = vpop.f32.mrb[0].mxu0
    %7423 = vdwg.mxu0
    %7424 = vmatprep.subr.mxu0 0.0
    %v7425 = vand.u32 %v2582, 4294901760
    %v7426 = vsub.f32 %v2582, %v7425
    %7427 = vmatpush1.msra.mxu0 %v7426
    %7428 = vmatprep.subr.mxu0 0.0
    %v7429 = vand.u32 %v2583, 4294901760
    %v7430 = vsub.f32 %v2583, %v7429
    %7431 = vmatpush1.msra.mxu0 %v7430
    %7432 = vmatprep.subr.mxu0 0.0
    %v7433 = vand.u32 %v2584, 4294901760
    %v7434 = vsub.f32 %v2584, %v7433
    %7435 = vmatpush1.msra.mxu0 %v7434
    %7436 = vmatprep.subr.mxu0 0.0
    %v7437 = vand.u32 %v2585, 4294901760
    %v7438 = vsub.f32 %v2585, %v7437
    %7439 = vmatpush1.msra.mxu0 %v7438
    %7440 = vmatprep.subr.mxu0 0.0
    %v7441 = vand.u32 %v2586, 4294901760
    %v7442 = vsub.f32 %v2586, %v7441
    %7443 = vmatpush1.msra.mxu0 %v7442
    %7444 = vmatprep.subr.mxu0 0.0
    %v7445 = vand.u32 %v2587, 4294901760
    %v7446 = vsub.f32 %v2587, %v7445
    %7447 = vmatpush1.msra.mxu0 %v7446
    %7448 = vmatprep.subr.mxu0 0.0
    %v7449 = vand.u32 %v2588, 4294901760
    %v7450 = vsub.f32 %v2588, %v7449
    %7451 = vmatpush1.msra.mxu0 %v7450
    %7452 = vmatprep.subr.mxu0 0.0
    %v7453 = vand.u32 %v2589, 4294901760
    %v7454 = vsub.f32 %v2589, %v7453
    %7455 = vmatpush1.msra.mxu0 %v7454
    %7456 = vmatprep.subr.mxu0 0.0
    %v7457 = vand.u32 %v2590, 4294901760
    %v7458 = vsub.f32 %v2590, %v7457
    %7459 = vmatpush1.msra.mxu0 %v7458
    %7460 = vmatprep.subr.mxu0 0.0
    %v7461 = vand.u32 %v2591, 4294901760
    %v7462 = vsub.f32 %v2591, %v7461
    %7463 = vmatpush1.msra.mxu0 %v7462
    %7464 = vmatprep.subr.mxu0 0.0
    %v7465 = vand.u32 %v2592, 4294901760
    %v7466 = vsub.f32 %v2592, %v7465
    %7467 = vmatpush1.msra.mxu0 %v7466
    %7468 = vmatprep.subr.mxu0 0.0
    %v7469 = vand.u32 %v2593, 4294901760
    %v7470 = vsub.f32 %v2593, %v7469
    %7471 = vmatpush1.msra.mxu0 %v7470
    %7472 = vmatprep.subr.mxu0 0.0
    %v7473 = vand.u32 %v2594, 4294901760
    %v7474 = vsub.f32 %v2594, %v7473
    %7475 = vmatpush1.msra.mxu0 %v7474
    %7476 = vmatprep.subr.mxu0 0.0
    %v7477 = vand.u32 %v2595, 4294901760
    %v7478 = vsub.f32 %v2595, %v7477
    %7479 = vmatpush1.msra.mxu0 %v7478
    %7480 = vmatprep.subr.mxu0 0.0
    %v7481 = vand.u32 %v2596, 4294901760
    %v7482 = vsub.f32 %v2596, %v7481
    %7483 = vmatpush1.msra.mxu0 %v7482
    %7484 = vmatprep.subr.mxu0 0.0
    %v7485 = vand.u32 %v2597, 4294901760
    %v7486 = vsub.f32 %v2597, %v7485
    %7487 = vmatpush1.msra.mxu0 %v7486
    %7488 = vmatprep.subr.mxu0 0.0
    %v7489 = vand.u32 %v2598, 4294901760
    %v7490 = vsub.f32 %v2598, %v7489
    %7491 = vmatpush1.msra.mxu0 %v7490
    %7492 = vmatprep.subr.mxu0 0.0
    %v7493 = vand.u32 %v2599, 4294901760
    %v7494 = vsub.f32 %v2599, %v7493
    %7495 = vmatpush1.msra.mxu0 %v7494
    %7496 = vmatprep.subr.mxu0 0.0
    %v7497 = vand.u32 %v2600, 4294901760
    %v7498 = vsub.f32 %v2600, %v7497
    %7499 = vmatpush1.msra.mxu0 %v7498
    %7500 = vmatprep.subr.mxu0 0.0
    %v7501 = vand.u32 %v2601, 4294901760
    %v7502 = vsub.f32 %v2601, %v7501
    %7503 = vmatpush1.msra.mxu0 %v7502
    %7504 = vmatprep.subr.mxu0 0.0
    %v7505 = vand.u32 %v2602, 4294901760
    %v7506 = vsub.f32 %v2602, %v7505
    %7507 = vmatpush1.msra.mxu0 %v7506
    %7508 = vmatprep.subr.mxu0 0.0
    %v7509 = vand.u32 %v2603, 4294901760
    %v7510 = vsub.f32 %v2603, %v7509
    %7511 = vmatpush1.msra.mxu0 %v7510
    %7512 = vmatprep.subr.mxu0 0.0
    %v7513 = vand.u32 %v2604, 4294901760
    %v7514 = vsub.f32 %v2604, %v7513
    %7515 = vmatpush1.msra.mxu0 %v7514
    %7516 = vmatprep.subr.mxu0 0.0
    %v7517 = vand.u32 %v2605, 4294901760
    %v7518 = vsub.f32 %v2605, %v7517
    %7519 = vmatpush1.msra.mxu0 %v7518
    %7520 = vmatprep.subr.mxu0 0.0
    %v7521 = vand.u32 %v2606, 4294901760
    %v7522 = vsub.f32 %v2606, %v7521
    %7523 = vmatpush1.msra.mxu0 %v7522
    %7524 = vmatprep.subr.mxu0 0.0
    %v7525 = vand.u32 %v2607, 4294901760
    %v7526 = vsub.f32 %v2607, %v7525
    %7527 = vmatpush1.msra.mxu0 %v7526
    %7528 = vmatprep.subr.mxu0 0.0
    %v7529 = vand.u32 %v2608, 4294901760
    %v7530 = vsub.f32 %v2608, %v7529
    %7531 = vmatpush1.msra.mxu0 %v7530
    %7532 = vmatprep.subr.mxu0 0.0
    %v7533 = vand.u32 %v2609, 4294901760
    %v7534 = vsub.f32 %v2609, %v7533
    %7535 = vmatpush1.msra.mxu0 %v7534
    %7536 = vmatprep.subr.mxu0 0.0
    %v7537 = vand.u32 %v2610, 4294901760
    %v7538 = vsub.f32 %v2610, %v7537
    %7539 = vmatpush1.msra.mxu0 %v7538
    %7540 = vmatprep.subr.mxu0 0.0
    %v7541 = vand.u32 %v2611, 4294901760
    %v7542 = vsub.f32 %v2611, %v7541
    %7543 = vmatpush1.msra.mxu0 %v7542
    %7544 = vmatprep.subr.mxu0 0.0
    %v7545 = vand.u32 %v2612, 4294901760
    %v7546 = vsub.f32 %v2612, %v7545
    %7547 = vmatpush1.msra.mxu0 %v7546
    %7548 = vmatprep.subr.mxu0 0.0
    %v7549 = vand.u32 %v2613, 4294901760
    %v7550 = vsub.f32 %v2613, %v7549
    %7551 = vmatpush1.msra.mxu0 %v7550
    %v7552 = vand.u32 %v2736, 4294901760
    %v7553 = vsub.f32 %v2736, %v7552
    %7554 = vmatprep.mubr.f32.mxu0 %v7553
    %v7555 = vand.u32 %v2734, 4294901760
    %v7556 = vsub.f32 %v2734, %v7555
    %7557 = vmatmul.mubr.f32.gmra.mrb[0].mxu0 %v7556
    %v7558 = vpop.f32.mrb[0].mxu0
    %v7559 = vadd.f32 %v7421, %v7558
    %v7560 = vpop.f32.mrb[0].mxu0
    %7561 = vdwg.mxu0
    %7562 = vmatprep.subr.mxu0 0.0
    %v7563 = vand.u32 %v2582, 4294901760
    %7564 = vmatpush1.msra.mxu0 %v7563
    %7565 = vmatprep.subr.mxu0 0.0
    %v7566 = vand.u32 %v2583, 4294901760
    %7567 = vmatpush1.msra.mxu0 %v7566
    %7568 = vmatprep.subr.mxu0 0.0
    %v7569 = vand.u32 %v2584, 4294901760
    %7570 = vmatpush1.msra.mxu0 %v7569
    %7571 = vmatprep.subr.mxu0 0.0
    %v7572 = vand.u32 %v2585, 4294901760
    %7573 = vmatpush1.msra.mxu0 %v7572
    %7574 = vmatprep.subr.mxu0 0.0
    %v7575 = vand.u32 %v2586, 4294901760
    %7576 = vmatpush1.msra.mxu0 %v7575
    %7577 = vmatprep.subr.mxu0 0.0
    %v7578 = vand.u32 %v2587, 4294901760
    %7579 = vmatpush1.msra.mxu0 %v7578
    %7580 = vmatprep.subr.mxu0 0.0
    %v7581 = vand.u32 %v2588, 4294901760
    %7582 = vmatpush1.msra.mxu0 %v7581
    %7583 = vmatprep.subr.mxu0 0.0
    %v7584 = vand.u32 %v2589, 4294901760
    %7585 = vmatpush1.msra.mxu0 %v7584
    %7586 = vmatprep.subr.mxu0 0.0
    %v7587 = vand.u32 %v2590, 4294901760
    %7588 = vmatpush1.msra.mxu0 %v7587
    %7589 = vmatprep.subr.mxu0 0.0
    %v7590 = vand.u32 %v2591, 4294901760
    %7591 = vmatpush1.msra.mxu0 %v7590
    %7592 = vmatprep.subr.mxu0 0.0
    %v7593 = vand.u32 %v2592, 4294901760
    %7594 = vmatpush1.msra.mxu0 %v7593
    %7595 = vmatprep.subr.mxu0 0.0
    %v7596 = vand.u32 %v2593, 4294901760
    %7597 = vmatpush1.msra.mxu0 %v7596
    %7598 = vmatprep.subr.mxu0 0.0
    %v7599 = vand.u32 %v2594, 4294901760
    %7600 = vmatpush1.msra.mxu0 %v7599
    %7601 = vmatprep.subr.mxu0 0.0
    %v7602 = vand.u32 %v2595, 4294901760
    %7603 = vmatpush1.msra.mxu0 %v7602
    %7604 = vmatprep.subr.mxu0 0.0
    %v7605 = vand.u32 %v2596, 4294901760
    %7606 = vmatpush1.msra.mxu0 %v7605
    %7607 = vmatprep.subr.mxu0 0.0
    %v7608 = vand.u32 %v2597, 4294901760
    %7609 = vmatpush1.msra.mxu0 %v7608
    %7610 = vmatprep.subr.mxu0 0.0
    %v7611 = vand.u32 %v2598, 4294901760
    %7612 = vmatpush1.msra.mxu0 %v7611
    %7613 = vmatprep.subr.mxu0 0.0
    %v7614 = vand.u32 %v2599, 4294901760
    %7615 = vmatpush1.msra.mxu0 %v7614
    %7616 = vmatprep.subr.mxu0 0.0
    %v7617 = vand.u32 %v2600, 4294901760
    %7618 = vmatpush1.msra.mxu0 %v7617
    %7619 = vmatprep.subr.mxu0 0.0
    %v7620 = vand.u32 %v2601, 4294901760
    %7621 = vmatpush1.msra.mxu0 %v7620
    %7622 = vmatprep.subr.mxu0 0.0
    %v7623 = vand.u32 %v2602, 4294901760
    %7624 = vmatpush1.msra.mxu0 %v7623
    %7625 = vmatprep.subr.mxu0 0.0
    %v7626 = vand.u32 %v2603, 4294901760
    %7627 = vmatpush1.msra.mxu0 %v7626
    %7628 = vmatprep.subr.mxu0 0.0
    %v7629 = vand.u32 %v2604, 4294901760
    %7630 = vmatpush1.msra.mxu0 %v7629
    %7631 = vmatprep.subr.mxu0 0.0
    %v7632 = vand.u32 %v2605, 4294901760
    %7633 = vmatpush1.msra.mxu0 %v7632
    %7634 = vmatprep.subr.mxu0 0.0
    %v7635 = vand.u32 %v2606, 4294901760
    %7636 = vmatpush1.msra.mxu0 %v7635
    %7637 = vmatprep.subr.mxu0 0.0
    %v7638 = vand.u32 %v2607, 4294901760
    %7639 = vmatpush1.msra.mxu0 %v7638
    %7640 = vmatprep.subr.mxu0 0.0
    %v7641 = vand.u32 %v2608, 4294901760
    %7642 = vmatpush1.msra.mxu0 %v7641
    %7643 = vmatprep.subr.mxu0 0.0
    %v7644 = vand.u32 %v2609, 4294901760
    %7645 = vmatpush1.msra.mxu0 %v7644
    %7646 = vmatprep.subr.mxu0 0.0
    %v7647 = vand.u32 %v2610, 4294901760
    %7648 = vmatpush1.msra.mxu0 %v7647
    %7649 = vmatprep.subr.mxu0 0.0
    %v7650 = vand.u32 %v2611, 4294901760
    %7651 = vmatpush1.msra.mxu0 %v7650
    %7652 = vmatprep.subr.mxu0 0.0
    %v7653 = vand.u32 %v2612, 4294901760
    %7654 = vmatpush1.msra.mxu0 %v7653
    %7655 = vmatprep.subr.mxu0 0.0
    %v7656 = vand.u32 %v2613, 4294901760
    %7657 = vmatpush1.msra.mxu0 %v7656
    %v7658 = vand.u32 %v2736, 4294901760
    %v7659 = vsub.f32 %v2736, %v7658
    %v7660 = vand.u32 %v7659, 4294901760
    %7661 = vmatprep.mubr.f32.mxu0 %v7660
    %v7662 = vand.u32 %v2734, 4294901760
    %v7663 = vsub.f32 %v2734, %v7662
    %v7664 = vand.u32 %v7663, 4294901760
    %7665 = vmatmul.mubr.f32.gmra.mrb[0].mxu0 %v7664
    %v7666 = vpop.f32.mrb[0].mxu0
    %v7667 = vadd.f32 %v7559, %v7666
    %v7668 = vpop.f32.mrb[0].mxu0
    %7669 = vdwg.mxu0
    %7670 = vmatprep.subr.mxu0 0.0
    %v7671 = vand.u32 %v2582, 4294901760
    %v7672 = vsub.f32 %v2582, %v7671
    %v7673 = vand.u32 %v7672, 4294901760
    %7674 = vmatpush1.msra.mxu0 %v7673
    %7675 = vmatprep.subr.mxu0 0.0
    %v7676 = vand.u32 %v2583, 4294901760
    %v7677 = vsub.f32 %v2583, %v7676
    %v7678 = vand.u32 %v7677, 4294901760
    %7679 = vmatpush1.msra.mxu0 %v7678
    %7680 = vmatprep.subr.mxu0 0.0
    %v7681 = vand.u32 %v2584, 4294901760
    %v7682 = vsub.f32 %v2584, %v7681
    %v7683 = vand.u32 %v7682, 4294901760
    %7684 = vmatpush1.msra.mxu0 %v7683
    %7685 = vmatprep.subr.mxu0 0.0
    %v7686 = vand.u32 %v2585, 4294901760
    %v7687 = vsub.f32 %v2585, %v7686
    %v7688 = vand.u32 %v7687, 4294901760
    %7689 = vmatpush1.msra.mxu0 %v7688
    %7690 = vmatprep.subr.mxu0 0.0
    %v7691 = vand.u32 %v2586, 4294901760
    %v7692 = vsub.f32 %v2586, %v7691
    %v7693 = vand.u32 %v7692, 4294901760
    %7694 = vmatpush1.msra.mxu0 %v7693
    %7695 = vmatprep.subr.mxu0 0.0
    %v7696 = vand.u32 %v2587, 4294901760
    %v7697 = vsub.f32 %v2587, %v7696
    %v7698 = vand.u32 %v7697, 4294901760
    %7699 = vmatpush1.msra.mxu0 %v7698
    %7700 = vmatprep.subr.mxu0 0.0
    %v7701 = vand.u32 %v2588, 4294901760
    %v7702 = vsub.f32 %v2588, %v7701
    %v7703 = vand.u32 %v7702, 4294901760
    %7704 = vmatpush1.msra.mxu0 %v7703
    %7705 = vmatprep.subr.mxu0 0.0
    %v7706 = vand.u32 %v2589, 4294901760
    %v7707 = vsub.f32 %v2589, %v7706
    %v7708 = vand.u32 %v7707, 4294901760
    %7709 = vmatpush1.msra.mxu0 %v7708
    %7710 = vmatprep.subr.mxu0 0.0
    %v7711 = vand.u32 %v2590, 4294901760
    %v7712 = vsub.f32 %v2590, %v7711
    %v7713 = vand.u32 %v7712, 4294901760
    %7714 = vmatpush1.msra.mxu0 %v7713
    %7715 = vmatprep.subr.mxu0 0.0
    %v7716 = vand.u32 %v2591, 4294901760
    %v7717 = vsub.f32 %v2591, %v7716
    %v7718 = vand.u32 %v7717, 4294901760
    %7719 = vmatpush1.msra.mxu0 %v7718
    %7720 = vmatprep.subr.mxu0 0.0
    %v7721 = vand.u32 %v2592, 4294901760
    %v7722 = vsub.f32 %v2592, %v7721
    %v7723 = vand.u32 %v7722, 4294901760
    %7724 = vmatpush1.msra.mxu0 %v7723
    %7725 = vmatprep.subr.mxu0 0.0
    %v7726 = vand.u32 %v2593, 4294901760
    %v7727 = vsub.f32 %v2593, %v7726
    %v7728 = vand.u32 %v7727, 4294901760
    %7729 = vmatpush1.msra.mxu0 %v7728
    %7730 = vmatprep.subr.mxu0 0.0
    %v7731 = vand.u32 %v2594, 4294901760
    %v7732 = vsub.f32 %v2594, %v7731
    %v7733 = vand.u32 %v7732, 4294901760
    %7734 = vmatpush1.msra.mxu0 %v7733
    %7735 = vmatprep.subr.mxu0 0.0
    %v7736 = vand.u32 %v2595, 4294901760
    %v7737 = vsub.f32 %v2595, %v7736
    %v7738 = vand.u32 %v7737, 4294901760
    %7739 = vmatpush1.msra.mxu0 %v7738
    %7740 = vmatprep.subr.mxu0 0.0
    %v7741 = vand.u32 %v2596, 4294901760
    %v7742 = vsub.f32 %v2596, %v7741
    %v7743 = vand.u32 %v7742, 4294901760
    %7744 = vmatpush1.msra.mxu0 %v7743
    %7745 = vmatprep.subr.mxu0 0.0
    %v7746 = vand.u32 %v2597, 4294901760
    %v7747 = vsub.f32 %v2597, %v7746
    %v7748 = vand.u32 %v7747, 4294901760
    %7749 = vmatpush1.msra.mxu0 %v7748
    %7750 = vmatprep.subr.mxu0 0.0
    %v7751 = vand.u32 %v2598, 4294901760
    %v7752 = vsub.f32 %v2598, %v7751
    %v7753 = vand.u32 %v7752, 4294901760
    %7754 = vmatpush1.msra.mxu0 %v7753
    %7755 = vmatprep.subr.mxu0 0.0
    %v7756 = vand.u32 %v2599, 4294901760
    %v7757 = vsub.f32 %v2599, %v7756
    %v7758 = vand.u32 %v7757, 4294901760
    %7759 = vmatpush1.msra.mxu0 %v7758
    %7760 = vmatprep.subr.mxu0 0.0
    %v7761 = vand.u32 %v2600, 4294901760
    %v7762 = vsub.f32 %v2600, %v7761
    %v7763 = vand.u32 %v7762, 4294901760
    %7764 = vmatpush1.msra.mxu0 %v7763
    %7765 = vmatprep.subr.mxu0 0.0
    %v7766 = vand.u32 %v2601, 4294901760
    %v7767 = vsub.f32 %v2601, %v7766
    %v7768 = vand.u32 %v7767, 4294901760
    %7769 = vmatpush1.msra.mxu0 %v7768
    %7770 = vmatprep.subr.mxu0 0.0
    %v7771 = vand.u32 %v2602, 4294901760
    %v7772 = vsub.f32 %v2602, %v7771
    %v7773 = vand.u32 %v7772, 4294901760
    %7774 = vmatpush1.msra.mxu0 %v7773
    %7775 = vmatprep.subr.mxu0 0.0
    %v7776 = vand.u32 %v2603, 4294901760
    %v7777 = vsub.f32 %v2603, %v7776
    %v7778 = vand.u32 %v7777, 4294901760
    %7779 = vmatpush1.msra.mxu0 %v7778
    %7780 = vmatprep.subr.mxu0 0.0
    %v7781 = vand.u32 %v2604, 4294901760
    %v7782 = vsub.f32 %v2604, %v7781
    %v7783 = vand.u32 %v7782, 4294901760
    %7784 = vmatpush1.msra.mxu0 %v7783
    %7785 = vmatprep.subr.mxu0 0.0
    %v7786 = vand.u32 %v2605, 4294901760
    %v7787 = vsub.f32 %v2605, %v7786
    %v7788 = vand.u32 %v7787, 4294901760
    %7789 = vmatpush1.msra.mxu0 %v7788
    %7790 = vmatprep.subr.mxu0 0.0
    %v7791 = vand.u32 %v2606, 4294901760
    %v7792 = vsub.f32 %v2606, %v7791
    %v7793 = vand.u32 %v7792, 4294901760
    %7794 = vmatpush1.msra.mxu0 %v7793
    %7795 = vmatprep.subr.mxu0 0.0
    %v7796 = vand.u32 %v2607, 4294901760
    %v7797 = vsub.f32 %v2607, %v7796
    %v7798 = vand.u32 %v7797, 4294901760
    %7799 = vmatpush1.msra.mxu0 %v7798
    %7800 = vmatprep.subr.mxu0 0.0
    %v7801 = vand.u32 %v2608, 4294901760
    %v7802 = vsub.f32 %v2608, %v7801
    %v7803 = vand.u32 %v7802, 4294901760
    %7804 = vmatpush1.msra.mxu0 %v7803
    %7805 = vmatprep.subr.mxu0 0.0
    %v7806 = vand.u32 %v2609, 4294901760
    %v7807 = vsub.f32 %v2609, %v7806
    %v7808 = vand.u32 %v7807, 4294901760
    %7809 = vmatpush1.msra.mxu0 %v7808
    %7810 = vmatprep.subr.mxu0 0.0
    %v7811 = vand.u32 %v2610, 4294901760
    %v7812 = vsub.f32 %v2610, %v7811
    %v7813 = vand.u32 %v7812, 4294901760
    %7814 = vmatpush1.msra.mxu0 %v7813
    %7815 = vmatprep.subr.mxu0 0.0
    %v7816 = vand.u32 %v2611, 4294901760
    %v7817 = vsub.f32 %v2611, %v7816
    %v7818 = vand.u32 %v7817, 4294901760
    %7819 = vmatpush1.msra.mxu0 %v7818
    %7820 = vmatprep.subr.mxu0 0.0
    %v7821 = vand.u32 %v2612, 4294901760
    %v7822 = vsub.f32 %v2612, %v7821
    %v7823 = vand.u32 %v7822, 4294901760
    %7824 = vmatpush1.msra.mxu0 %v7823
    %7825 = vmatprep.subr.mxu0 0.0
    %v7826 = vand.u32 %v2613, 4294901760
    %v7827 = vsub.f32 %v2613, %v7826
    %v7828 = vand.u32 %v7827, 4294901760
    %7829 = vmatpush1.msra.mxu0 %v7828
    %v7830 = vand.u32 %v2736, 4294901760
    %7831 = vmatprep.mubr.f32.mxu0 %v7830
    %v7832 = vand.u32 %v2734, 4294901760
    %7833 = vmatmul.mubr.f32.gmra.mrb[0].mxu0 %v7832
    %v7834 = vpop.f32.mrb[0].mxu0
    %v7835 = vadd.f32 %v7667, %v7834
    %v7836 = vpop.f32.mrb[0].mxu0
    %7837 = vdwg.mxu0
    %7838 = vmatprep.subr.mxu0 0.0
    %v7839 = vand.u32 %v2582, 4294901760
    %7840 = vmatpush1.msra.mxu0 %v7839
    %7841 = vmatprep.subr.mxu0 0.0
    %v7842 = vand.u32 %v2583, 4294901760
    %7843 = vmatpush1.msra.mxu0 %v7842
    %7844 = vmatprep.subr.mxu0 0.0
    %v7845 = vand.u32 %v2584, 4294901760
    %7846 = vmatpush1.msra.mxu0 %v7845
    %7847 = vmatprep.subr.mxu0 0.0
    %v7848 = vand.u32 %v2585, 4294901760
    %7849 = vmatpush1.msra.mxu0 %v7848
    %7850 = vmatprep.subr.mxu0 0.0
    %v7851 = vand.u32 %v2586, 4294901760
    %7852 = vmatpush1.msra.mxu0 %v7851
    %7853 = vmatprep.subr.mxu0 0.0
    %v7854 = vand.u32 %v2587, 4294901760
    %7855 = vmatpush1.msra.mxu0 %v7854
    %7856 = vmatprep.subr.mxu0 0.0
    %v7857 = vand.u32 %v2588, 4294901760
    %7858 = vmatpush1.msra.mxu0 %v7857
    %7859 = vmatprep.subr.mxu0 0.0
    %v7860 = vand.u32 %v2589, 4294901760
    %7861 = vmatpush1.msra.mxu0 %v7860
    %7862 = vmatprep.subr.mxu0 0.0
    %v7863 = vand.u32 %v2590, 4294901760
    %7864 = vmatpush1.msra.mxu0 %v7863
    %7865 = vmatprep.subr.mxu0 0.0
    %v7866 = vand.u32 %v2591, 4294901760
    %7867 = vmatpush1.msra.mxu0 %v7866
    %7868 = vmatprep.subr.mxu0 0.0
    %v7869 = vand.u32 %v2592, 4294901760
    %7870 = vmatpush1.msra.mxu0 %v7869
    %7871 = vmatprep.subr.mxu0 0.0
    %v7872 = vand.u32 %v2593, 4294901760
    %7873 = vmatpush1.msra.mxu0 %v7872
    %7874 = vmatprep.subr.mxu0 0.0
    %v7875 = vand.u32 %v2594, 4294901760
    %7876 = vmatpush1.msra.mxu0 %v7875
    %7877 = vmatprep.subr.mxu0 0.0
    %v7878 = vand.u32 %v2595, 4294901760
    %7879 = vmatpush1.msra.mxu0 %v7878
    %7880 = vmatprep.subr.mxu0 0.0
    %v7881 = vand.u32 %v2596, 4294901760
    %7882 = vmatpush1.msra.mxu0 %v7881
    %7883 = vmatprep.subr.mxu0 0.0
    %v7884 = vand.u32 %v2597, 4294901760
    %7885 = vmatpush1.msra.mxu0 %v7884
    %7886 = vmatprep.subr.mxu0 0.0
    %v7887 = vand.u32 %v2598, 4294901760
    %7888 = vmatpush1.msra.mxu0 %v7887
    %7889 = vmatprep.subr.mxu0 0.0
    %v7890 = vand.u32 %v2599, 4294901760
    %7891 = vmatpush1.msra.mxu0 %v7890
    %7892 = vmatprep.subr.mxu0 0.0
    %v7893 = vand.u32 %v2600, 4294901760
    %7894 = vmatpush1.msra.mxu0 %v7893
    %7895 = vmatprep.subr.mxu0 0.0
    %v7896 = vand.u32 %v2601, 4294901760
    %7897 = vmatpush1.msra.mxu0 %v7896
    %7898 = vmatprep.subr.mxu0 0.0
    %v7899 = vand.u32 %v2602, 4294901760
    %7900 = vmatpush1.msra.mxu0 %v7899
    %7901 = vmatprep.subr.mxu0 0.0
    %v7902 = vand.u32 %v2603, 4294901760
    %7903 = vmatpush1.msra.mxu0 %v7902
    %7904 = vmatprep.subr.mxu0 0.0
    %v7905 = vand.u32 %v2604, 4294901760
    %7906 = vmatpush1.msra.mxu0 %v7905
    %7907 = vmatprep.subr.mxu0 0.0
    %v7908 = vand.u32 %v2605, 4294901760
    %7909 = vmatpush1.msra.mxu0 %v7908
    %7910 = vmatprep.subr.mxu0 0.0
    %v7911 = vand.u32 %v2606, 4294901760
    %7912 = vmatpush1.msra.mxu0 %v7911
    %7913 = vmatprep.subr.mxu0 0.0
    %v7914 = vand.u32 %v2607, 4294901760
    %7915 = vmatpush1.msra.mxu0 %v7914
    %7916 = vmatprep.subr.mxu0 0.0
    %v7917 = vand.u32 %v2608, 4294901760
    %7918 = vmatpush1.msra.mxu0 %v7917
    %7919 = vmatprep.subr.mxu0 0.0
    %v7920 = vand.u32 %v2609, 4294901760
    %7921 = vmatpush1.msra.mxu0 %v7920
    %7922 = vmatprep.subr.mxu0 0.0
    %v7923 = vand.u32 %v2610, 4294901760
    %7924 = vmatpush1.msra.mxu0 %v7923
    %7925 = vmatprep.subr.mxu0 0.0
    %v7926 = vand.u32 %v2611, 4294901760
    %7927 = vmatpush1.msra.mxu0 %v7926
    %7928 = vmatprep.subr.mxu0 0.0
    %v7929 = vand.u32 %v2612, 4294901760
    %7930 = vmatpush1.msra.mxu0 %v7929
    %7931 = vmatprep.subr.mxu0 0.0
    %v7932 = vand.u32 %v2613, 4294901760
    %7933 = vmatpush1.msra.mxu0 %v7932
    %v7934 = vand.u32 %v2736, 4294901760
    %7935 = vmatprep.mubr.f32.mxu0 %v7934
    %v7936 = vand.u32 %v2734, 4294901760
    %7937 = vmatmul.mubr.f32.gmra.mrb[0].mxu0 %v7936
    %v7938 = vpop.f32.mrb[0].mxu0
    %v7939 = vadd.f32 %v7835, %v7938
    %v7940 = vpop.f32.mrb[0].mxu0
    %7941 = vdwg.mxu0
    %7942 = vmatprep.subr.mxu0 0.0
    %v7943 = vand.u32 %v2614, 4294901760
    %7944 = vmatpush1.msra.mxu0 %v7943
    %7945 = vmatprep.subr.mxu0 0.0
    %v7946 = vand.u32 %v2615, 4294901760
    %7947 = vmatpush1.msra.mxu0 %v7946
    %7948 = vmatprep.subr.mxu0 0.0
    %v7949 = vand.u32 %v2616, 4294901760
    %7950 = vmatpush1.msra.mxu0 %v7949
    %7951 = vmatprep.subr.mxu0 0.0
    %v7952 = vand.u32 %v2617, 4294901760
    %7953 = vmatpush1.msra.mxu0 %v7952
    %7954 = vmatprep.subr.mxu0 0.0
    %v7955 = vand.u32 %v2618, 4294901760
    %7956 = vmatpush1.msra.mxu0 %v7955
    %7957 = vmatprep.subr.mxu0 0.0
    %v7958 = vand.u32 %v2619, 4294901760
    %7959 = vmatpush1.msra.mxu0 %v7958
    %7960 = vmatprep.subr.mxu0 0.0
    %v7961 = vand.u32 %v2620, 4294901760
    %7962 = vmatpush1.msra.mxu0 %v7961
    %7963 = vmatprep.subr.mxu0 0.0
    %v7964 = vand.u32 %v2621, 4294901760
    %7965 = vmatpush1.msra.mxu0 %v7964
    %7966 = vmatprep.subr.mxu0 0.0
    %v7967 = vand.u32 %v2622, 4294901760
    %7968 = vmatpush1.msra.mxu0 %v7967
    %7969 = vmatprep.subr.mxu0 0.0
    %v7970 = vand.u32 %v2623, 4294901760
    %7971 = vmatpush1.msra.mxu0 %v7970
    %7972 = vmatprep.subr.mxu0 0.0
    %v7973 = vand.u32 %v2624, 4294901760
    %7974 = vmatpush1.msra.mxu0 %v7973
    %7975 = vmatprep.subr.mxu0 0.0
    %v7976 = vand.u32 %v2625, 4294901760
    %7977 = vmatpush1.msra.mxu0 %v7976
    %7978 = vmatprep.subr.mxu0 0.0
    %v7979 = vand.u32 %v2626, 4294901760
    %7980 = vmatpush1.msra.mxu0 %v7979
    %7981 = vmatprep.subr.mxu0 0.0
    %v7982 = vand.u32 %v2627, 4294901760
    %7983 = vmatpush1.msra.mxu0 %v7982
    %7984 = vmatprep.subr.mxu0 0.0
    %v7985 = vand.u32 %v2628, 4294901760
    %7986 = vmatpush1.msra.mxu0 %v7985
    %7987 = vmatprep.subr.mxu0 0.0
    %v7988 = vand.u32 %v2629, 4294901760
    %7989 = vmatpush1.msra.mxu0 %v7988
    %7990 = vmatprep.subr.mxu0 0.0
    %v7991 = vand.u32 %v2630, 4294901760
    %7992 = vmatpush1.msra.mxu0 %v7991
    %7993 = vmatprep.subr.mxu0 0.0
    %v7994 = vand.u32 %v2631, 4294901760
    %7995 = vmatpush1.msra.mxu0 %v7994
    %7996 = vmatprep.subr.mxu0 0.0
    %v7997 = vand.u32 %v2632, 4294901760
    %7998 = vmatpush1.msra.mxu0 %v7997
    %7999 = vmatprep.subr.mxu0 0.0
    %v8000 = vand.u32 %v2633, 4294901760
    %8001 = vmatpush1.msra.mxu0 %v8000
    %8002 = vmatprep.subr.mxu0 0.0
    %v8003 = vand.u32 %v2634, 4294901760
    %8004 = vmatpush1.msra.mxu0 %v8003
    %8005 = vmatprep.subr.mxu0 0.0
    %v8006 = vand.u32 %v2635, 4294901760
    %8007 = vmatpush1.msra.mxu0 %v8006
    %8008 = vmatprep.subr.mxu0 0.0
    %v8009 = vand.u32 %v2636, 4294901760
    %8010 = vmatpush1.msra.mxu0 %v8009
    %8011 = vmatprep.subr.mxu0 0.0
    %v8012 = vand.u32 %v2637, 4294901760
    %8013 = vmatpush1.msra.mxu0 %v8012
    %8014 = vmatprep.subr.mxu0 0.0
    %v8015 = vand.u32 %v2638, 4294901760
    %8016 = vmatpush1.msra.mxu0 %v8015
    %8017 = vmatprep.subr.mxu0 0.0
    %v8018 = vand.u32 %v2639, 4294901760
    %8019 = vmatpush1.msra.mxu0 %v8018
    %8020 = vmatprep.subr.mxu0 0.0
    %v8021 = vand.u32 %v2640, 4294901760
    %8022 = vmatpush1.msra.mxu0 %v8021
    %8023 = vmatprep.subr.mxu0 0.0
    %v8024 = vand.u32 %v2641, 4294901760
    %8025 = vmatpush1.msra.mxu0 %v8024
    %8026 = vmatprep.subr.mxu0 0.0
    %v8027 = vand.u32 %v2642, 4294901760
    %8028 = vmatpush1.msra.mxu0 %v8027
    %8029 = vmatprep.subr.mxu0 0.0
    %v8030 = vand.u32 %v2643, 4294901760
    %8031 = vmatpush1.msra.mxu0 %v8030
    %8032 = vmatprep.subr.mxu0 0.0
    %v8033 = vand.u32 %v2644, 4294901760
    %8034 = vmatpush1.msra.mxu0 %v8033
    %8035 = vmatprep.subr.mxu0 0.0
    %v8036 = vand.u32 %v2645, 4294901760
    %8037 = vmatpush1.msra.mxu0 %v8036
    %v8038 = vand.u32 %v2752, 4294901760
    %v8039 = vsub.f32 %v2752, %v8038
    %v8040 = vand.u32 %v8039, 4294901760
    %v8041 = vsub.f32 %v8039, %v8040
    %v8042 = vand.u32 %v8041, 4294901760
    %8043 = vmatprep.mubr.f32.mxu0 %v8042
    %v8044 = vand.u32 %v2744, 4294901760
    %v8045 = vsub.f32 %v2744, %v8044
    %v8046 = vand.u32 %v8045, 4294901760
    %v8047 = vsub.f32 %v8045, %v8046
    %v8048 = vand.u32 %v8047, 4294901760
    %8049 = vmatmul.mubr.f32.gmra.mrb[0].mxu0 %v8048
    %v8050 = vpop.f32.mrb[0].mxu0
    %v8051 = vadd.f32 %v7939, %v8050
    %v8052 = vpop.f32.mrb[0].mxu0
    %8053 = vdwg.mxu0
    %8054 = vmatprep.subr.mxu0 0.0
    %v8055 = vand.u32 %v2614, 4294901760
    %v8056 = vsub.f32 %v2614, %v8055
    %v8057 = vand.u32 %v8056, 4294901760
    %v8058 = vsub.f32 %v8056, %v8057
    %v8059 = vand.u32 %v8058, 4294901760
    %8060 = vmatpush1.msra.mxu0 %v8059
    %8061 = vmatprep.subr.mxu0 0.0
    %v8062 = vand.u32 %v2615, 4294901760
    %v8063 = vsub.f32 %v2615, %v8062
    %v8064 = vand.u32 %v8063, 4294901760
    %v8065 = vsub.f32 %v8063, %v8064
    %v8066 = vand.u32 %v8065, 4294901760
    %8067 = vmatpush1.msra.mxu0 %v8066
    %8068 = vmatprep.subr.mxu0 0.0
    %v8069 = vand.u32 %v2616, 4294901760
    %v8070 = vsub.f32 %v2616, %v8069
    %v8071 = vand.u32 %v8070, 4294901760
    %v8072 = vsub.f32 %v8070, %v8071
    %v8073 = vand.u32 %v8072, 4294901760
    %8074 = vmatpush1.msra.mxu0 %v8073
    %8075 = vmatprep.subr.mxu0 0.0
    %v8076 = vand.u32 %v2617, 4294901760
    %v8077 = vsub.f32 %v2617, %v8076
    %v8078 = vand.u32 %v8077, 4294901760
    %v8079 = vsub.f32 %v8077, %v8078
    %v8080 = vand.u32 %v8079, 4294901760
    %8081 = vmatpush1.msra.mxu0 %v8080
    %8082 = vmatprep.subr.mxu0 0.0
    %v8083 = vand.u32 %v2618, 4294901760
    %v8084 = vsub.f32 %v2618, %v8083
    %v8085 = vand.u32 %v8084, 4294901760
    %v8086 = vsub.f32 %v8084, %v8085
    %v8087 = vand.u32 %v8086, 4294901760
    %8088 = vmatpush1.msra.mxu0 %v8087
    %8089 = vmatprep.subr.mxu0 0.0
    %v8090 = vand.u32 %v2619, 4294901760
    %v8091 = vsub.f32 %v2619, %v8090
    %v8092 = vand.u32 %v8091, 4294901760
    %v8093 = vsub.f32 %v8091, %v8092
    %v8094 = vand.u32 %v8093, 4294901760
    %8095 = vmatpush1.msra.mxu0 %v8094
    %8096 = vmatprep.subr.mxu0 0.0
    %v8097 = vand.u32 %v2620, 4294901760
    %v8098 = vsub.f32 %v2620, %v8097
    %v8099 = vand.u32 %v8098, 4294901760
    %v8100 = vsub.f32 %v8098, %v8099
    %v8101 = vand.u32 %v8100, 4294901760
    %8102 = vmatpush1.msra.mxu0 %v8101
    %8103 = vmatprep.subr.mxu0 0.0
    %v8104 = vand.u32 %v2621, 4294901760
    %v8105 = vsub.f32 %v2621, %v8104
    %v8106 = vand.u32 %v8105, 4294901760
    %v8107 = vsub.f32 %v8105, %v8106
    %v8108 = vand.u32 %v8107, 4294901760
    %8109 = vmatpush1.msra.mxu0 %v8108
    %8110 = vmatprep.subr.mxu0 0.0
    %v8111 = vand.u32 %v2622, 4294901760
    %v8112 = vsub.f32 %v2622, %v8111
    %v8113 = vand.u32 %v8112, 4294901760
    %v8114 = vsub.f32 %v8112, %v8113
    %v8115 = vand.u32 %v8114, 4294901760
    %8116 = vmatpush1.msra.mxu0 %v8115
    %8117 = vmatprep.subr.mxu0 0.0
    %v8118 = vand.u32 %v2623, 4294901760
    %v8119 = vsub.f32 %v2623, %v8118
    %v8120 = vand.u32 %v8119, 4294901760
    %v8121 = vsub.f32 %v8119, %v8120
    %v8122 = vand.u32 %v8121, 4294901760
    %8123 = vmatpush1.msra.mxu0 %v8122
    %8124 = vmatprep.subr.mxu0 0.0
    %v8125 = vand.u32 %v2624, 4294901760
    %v8126 = vsub.f32 %v2624, %v8125
    %v8127 = vand.u32 %v8126, 4294901760
    %v8128 = vsub.f32 %v8126, %v8127
    %v8129 = vand.u32 %v8128, 4294901760
    %8130 = vmatpush1.msra.mxu0 %v8129
    %8131 = vmatprep.subr.mxu0 0.0
    %v8132 = vand.u32 %v2625, 4294901760
    %v8133 = vsub.f32 %v2625, %v8132
    %v8134 = vand.u32 %v8133, 4294901760
    %v8135 = vsub.f32 %v8133, %v8134
    %v8136 = vand.u32 %v8135, 4294901760
    %8137 = vmatpush1.msra.mxu0 %v8136
    %8138 = vmatprep.subr.mxu0 0.0
    %v8139 = vand.u32 %v2626, 4294901760
    %v8140 = vsub.f32 %v2626, %v8139
    %v8141 = vand.u32 %v8140, 4294901760
    %v8142 = vsub.f32 %v8140, %v8141
    %v8143 = vand.u32 %v8142, 4294901760
    %8144 = vmatpush1.msra.mxu0 %v8143
    %8145 = vmatprep.subr.mxu0 0.0
    %v8146 = vand.u32 %v2627, 4294901760
    %v8147 = vsub.f32 %v2627, %v8146
    %v8148 = vand.u32 %v8147, 4294901760
    %v8149 = vsub.f32 %v8147, %v8148
    %v8150 = vand.u32 %v8149, 4294901760
    %8151 = vmatpush1.msra.mxu0 %v8150
    %8152 = vmatprep.subr.mxu0 0.0
    %v8153 = vand.u32 %v2628, 4294901760
    %v8154 = vsub.f32 %v2628, %v8153
    %v8155 = vand.u32 %v8154, 4294901760
    %v8156 = vsub.f32 %v8154, %v8155
    %v8157 = vand.u32 %v8156, 4294901760
    %8158 = vmatpush1.msra.mxu0 %v8157
    %8159 = vmatprep.subr.mxu0 0.0
    %v8160 = vand.u32 %v2629, 4294901760
    %v8161 = vsub.f32 %v2629, %v8160
    %v8162 = vand.u32 %v8161, 4294901760
    %v8163 = vsub.f32 %v8161, %v8162
    %v8164 = vand.u32 %v8163, 4294901760
    %8165 = vmatpush1.msra.mxu0 %v8164
    %8166 = vmatprep.subr.mxu0 0.0
    %v8167 = vand.u32 %v2630, 4294901760
    %v8168 = vsub.f32 %v2630, %v8167
    %v8169 = vand.u32 %v8168, 4294901760
    %v8170 = vsub.f32 %v8168, %v8169
    %v8171 = vand.u32 %v8170, 4294901760
    %8172 = vmatpush1.msra.mxu0 %v8171
    %8173 = vmatprep.subr.mxu0 0.0
    %v8174 = vand.u32 %v2631, 4294901760
    %v8175 = vsub.f32 %v2631, %v8174
    %v8176 = vand.u32 %v8175, 4294901760
    %v8177 = vsub.f32 %v8175, %v8176
    %v8178 = vand.u32 %v8177, 4294901760
    %8179 = vmatpush1.msra.mxu0 %v8178
    %8180 = vmatprep.subr.mxu0 0.0
    %v8181 = vand.u32 %v2632, 4294901760
    %v8182 = vsub.f32 %v2632, %v8181
    %v8183 = vand.u32 %v8182, 4294901760
    %v8184 = vsub.f32 %v8182, %v8183
    %v8185 = vand.u32 %v8184, 4294901760
    %8186 = vmatpush1.msra.mxu0 %v8185
    %8187 = vmatprep.subr.mxu0 0.0
    %v8188 = vand.u32 %v2633, 4294901760
    %v8189 = vsub.f32 %v2633, %v8188
    %v8190 = vand.u32 %v8189, 4294901760
    %v8191 = vsub.f32 %v8189, %v8190
    %v8192 = vand.u32 %v8191, 4294901760
    %8193 = vmatpush1.msra.mxu0 %v8192
    %8194 = vmatprep.subr.mxu0 0.0
    %v8195 = vand.u32 %v2634, 4294901760
    %v8196 = vsub.f32 %v2634, %v8195
    %v8197 = vand.u32 %v8196, 4294901760
    %v8198 = vsub.f32 %v8196, %v8197
    %v8199 = vand.u32 %v8198, 4294901760
    %8200 = vmatpush1.msra.mxu0 %v8199
    %8201 = vmatprep.subr.mxu0 0.0
    %v8202 = vand.u32 %v2635, 4294901760
    %v8203 = vsub.f32 %v2635, %v8202
    %v8204 = vand.u32 %v8203, 4294901760
    %v8205 = vsub.f32 %v8203, %v8204
    %v8206 = vand.u32 %v8205, 4294901760
    %8207 = vmatpush1.msra.mxu0 %v8206
    %8208 = vmatprep.subr.mxu0 0.0
    %v8209 = vand.u32 %v2636, 4294901760
    %v8210 = vsub.f32 %v2636, %v8209
    %v8211 = vand.u32 %v8210, 4294901760
    %v8212 = vsub.f32 %v8210, %v8211
    %v8213 = vand.u32 %v8212, 4294901760
    %8214 = vmatpush1.msra.mxu0 %v8213
    %8215 = vmatprep.subr.mxu0 0.0
    %v8216 = vand.u32 %v2637, 4294901760
    %v8217 = vsub.f32 %v2637, %v8216
    %v8218 = vand.u32 %v8217, 4294901760
    %v8219 = vsub.f32 %v8217, %v8218
    %v8220 = vand.u32 %v8219, 4294901760
    %8221 = vmatpush1.msra.mxu0 %v8220
    %8222 = vmatprep.subr.mxu0 0.0
    %v8223 = vand.u32 %v2638, 4294901760
    %v8224 = vsub.f32 %v2638, %v8223
    %v8225 = vand.u32 %v8224, 4294901760
    %v8226 = vsub.f32 %v8224, %v8225
    %v8227 = vand.u32 %v8226, 4294901760
    %8228 = vmatpush1.msra.mxu0 %v8227
    %8229 = vmatprep.subr.mxu0 0.0
    %v8230 = vand.u32 %v2639, 4294901760
    %v8231 = vsub.f32 %v2639, %v8230
    %v8232 = vand.u32 %v8231, 4294901760
    %v8233 = vsub.f32 %v8231, %v8232
    %v8234 = vand.u32 %v8233, 4294901760
    %8235 = vmatpush1.msra.mxu0 %v8234
    %8236 = vmatprep.subr.mxu0 0.0
    %v8237 = vand.u32 %v2640, 4294901760
    %v8238 = vsub.f32 %v2640, %v8237
    %v8239 = vand.u32 %v8238, 4294901760
    %v8240 = vsub.f32 %v8238, %v8239
    %v8241 = vand.u32 %v8240, 4294901760
    %8242 = vmatpush1.msra.mxu0 %v8241
    %8243 = vmatprep.subr.mxu0 0.0
    %v8244 = vand.u32 %v2641, 4294901760
    %v8245 = vsub.f32 %v2641, %v8244
    %v8246 = vand.u32 %v8245, 4294901760
    %v8247 = vsub.f32 %v8245, %v8246
    %v8248 = vand.u32 %v8247, 4294901760
    %8249 = vmatpush1.msra.mxu0 %v8248
    %8250 = vmatprep.subr.mxu0 0.0
    %v8251 = vand.u32 %v2642, 4294901760
    %v8252 = vsub.f32 %v2642, %v8251
    %v8253 = vand.u32 %v8252, 4294901760
    %v8254 = vsub.f32 %v8252, %v8253
    %v8255 = vand.u32 %v8254, 4294901760
    %8256 = vmatpush1.msra.mxu0 %v8255
    %8257 = vmatprep.subr.mxu0 0.0
    %v8258 = vand.u32 %v2643, 4294901760
    %v8259 = vsub.f32 %v2643, %v8258
    %v8260 = vand.u32 %v8259, 4294901760
    %v8261 = vsub.f32 %v8259, %v8260
    %v8262 = vand.u32 %v8261, 4294901760
    %8263 = vmatpush1.msra.mxu0 %v8262
    %8264 = vmatprep.subr.mxu0 0.0
    %v8265 = vand.u32 %v2644, 4294901760
    %v8266 = vsub.f32 %v2644, %v8265
    %v8267 = vand.u32 %v8266, 4294901760
    %v8268 = vsub.f32 %v8266, %v8267
    %v8269 = vand.u32 %v8268, 4294901760
    %8270 = vmatpush1.msra.mxu0 %v8269
    %8271 = vmatprep.subr.mxu0 0.0
    %v8272 = vand.u32 %v2645, 4294901760
    %v8273 = vsub.f32 %v2645, %v8272
    %v8274 = vand.u32 %v8273, 4294901760
    %v8275 = vsub.f32 %v8273, %v8274
    %v8276 = vand.u32 %v8275, 4294901760
    %8277 = vmatpush1.msra.mxu0 %v8276
    %v8278 = vand.u32 %v2752, 4294901760
    %8279 = vmatprep.mubr.f32.mxu0 %v8278
    %v8280 = vand.u32 %v2744, 4294901760
    %8281 = vmatmul.mubr.f32.gmra.mrb[0].mxu0 %v8280
    %v8282 = vpop.f32.mrb[0].mxu0
    %v8283 = vadd.f32 %v8051, %v8282
    %v8284 = vpop.f32.mrb[0].mxu0
    %8285 = vdwg.mxu0
    %8286 = vmatprep.subr.mxu0 0.0
    %v8287 = vand.u32 %v2614, 4294901760
    %v8288 = vsub.f32 %v2614, %v8287
    %8289 = vmatpush1.msra.mxu0 %v8288
    %8290 = vmatprep.subr.mxu0 0.0
    %v8291 = vand.u32 %v2615, 4294901760
    %v8292 = vsub.f32 %v2615, %v8291
    %8293 = vmatpush1.msra.mxu0 %v8292
    %8294 = vmatprep.subr.mxu0 0.0
    %v8295 = vand.u32 %v2616, 4294901760
    %v8296 = vsub.f32 %v2616, %v8295
    %8297 = vmatpush1.msra.mxu0 %v8296
    %8298 = vmatprep.subr.mxu0 0.0
    %v8299 = vand.u32 %v2617, 4294901760
    %v8300 = vsub.f32 %v2617, %v8299
    %8301 = vmatpush1.msra.mxu0 %v8300
    %8302 = vmatprep.subr.mxu0 0.0
    %v8303 = vand.u32 %v2618, 4294901760
    %v8304 = vsub.f32 %v2618, %v8303
    %8305 = vmatpush1.msra.mxu0 %v8304
    %8306 = vmatprep.subr.mxu0 0.0
    %v8307 = vand.u32 %v2619, 4294901760
    %v8308 = vsub.f32 %v2619, %v8307
    %8309 = vmatpush1.msra.mxu0 %v8308
    %8310 = vmatprep.subr.mxu0 0.0
    %v8311 = vand.u32 %v2620, 4294901760
    %v8312 = vsub.f32 %v2620, %v8311
    %8313 = vmatpush1.msra.mxu0 %v8312
    %8314 = vmatprep.subr.mxu0 0.0
    %v8315 = vand.u32 %v2621, 4294901760
    %v8316 = vsub.f32 %v2621, %v8315
    %8317 = vmatpush1.msra.mxu0 %v8316
    %8318 = vmatprep.subr.mxu0 0.0
    %v8319 = vand.u32 %v2622, 4294901760
    %v8320 = vsub.f32 %v2622, %v8319
    %8321 = vmatpush1.msra.mxu0 %v8320
    %8322 = vmatprep.subr.mxu0 0.0
    %v8323 = vand.u32 %v2623, 4294901760
    %v8324 = vsub.f32 %v2623, %v8323
    %8325 = vmatpush1.msra.mxu0 %v8324
    %8326 = vmatprep.subr.mxu0 0.0
    %v8327 = vand.u32 %v2624, 4294901760
    %v8328 = vsub.f32 %v2624, %v8327
    %8329 = vmatpush1.msra.mxu0 %v8328
    %8330 = vmatprep.subr.mxu0 0.0
    %v8331 = vand.u32 %v2625, 4294901760
    %v8332 = vsub.f32 %v2625, %v8331
    %8333 = vmatpush1.msra.mxu0 %v8332
    %8334 = vmatprep.subr.mxu0 0.0
    %v8335 = vand.u32 %v2626, 4294901760
    %v8336 = vsub.f32 %v2626, %v8335
    %8337 = vmatpush1.msra.mxu0 %v8336
    %8338 = vmatprep.subr.mxu0 0.0
    %v8339 = vand.u32 %v2627, 4294901760
    %v8340 = vsub.f32 %v2627, %v8339
    %8341 = vmatpush1.msra.mxu0 %v8340
    %8342 = vmatprep.subr.mxu0 0.0
    %v8343 = vand.u32 %v2628, 4294901760
    %v8344 = vsub.f32 %v2628, %v8343
    %8345 = vmatpush1.msra.mxu0 %v8344
    %8346 = vmatprep.subr.mxu0 0.0
    %v8347 = vand.u32 %v2629, 4294901760
    %v8348 = vsub.f32 %v2629, %v8347
    %8349 = vmatpush1.msra.mxu0 %v8348
    %8350 = vmatprep.subr.mxu0 0.0
    %v8351 = vand.u32 %v2630, 4294901760
    %v8352 = vsub.f32 %v2630, %v8351
    %8353 = vmatpush1.msra.mxu0 %v8352
    %8354 = vmatprep.subr.mxu0 0.0
    %v8355 = vand.u32 %v2631, 4294901760
    %v8356 = vsub.f32 %v2631, %v8355
    %8357 = vmatpush1.msra.mxu0 %v8356
    %8358 = vmatprep.subr.mxu0 0.0
    %v8359 = vand.u32 %v2632, 4294901760
    %v8360 = vsub.f32 %v2632, %v8359
    %8361 = vmatpush1.msra.mxu0 %v8360
    %8362 = vmatprep.subr.mxu0 0.0
    %v8363 = vand.u32 %v2633, 4294901760
    %v8364 = vsub.f32 %v2633, %v8363
    %8365 = vmatpush1.msra.mxu0 %v8364
    %8366 = vmatprep.subr.mxu0 0.0
    %v8367 = vand.u32 %v2634, 4294901760
    %v8368 = vsub.f32 %v2634, %v8367
    %8369 = vmatpush1.msra.mxu0 %v8368
    %8370 = vmatprep.subr.mxu0 0.0
    %v8371 = vand.u32 %v2635, 4294901760
    %v8372 = vsub.f32 %v2635, %v8371
    %8373 = vmatpush1.msra.mxu0 %v8372
    %8374 = vmatprep.subr.mxu0 0.0
    %v8375 = vand.u32 %v2636, 4294901760
    %v8376 = vsub.f32 %v2636, %v8375
    %8377 = vmatpush1.msra.mxu0 %v8376
    %8378 = vmatprep.subr.mxu0 0.0
    %v8379 = vand.u32 %v2637, 4294901760
    %v8380 = vsub.f32 %v2637, %v8379
    %8381 = vmatpush1.msra.mxu0 %v8380
    %8382 = vmatprep.subr.mxu0 0.0
    %v8383 = vand.u32 %v2638, 4294901760
    %v8384 = vsub.f32 %v2638, %v8383
    %8385 = vmatpush1.msra.mxu0 %v8384
    %8386 = vmatprep.subr.mxu0 0.0
    %v8387 = vand.u32 %v2639, 4294901760
    %v8388 = vsub.f32 %v2639, %v8387
    %8389 = vmatpush1.msra.mxu0 %v8388
    %8390 = vmatprep.subr.mxu0 0.0
    %v8391 = vand.u32 %v2640, 4294901760
    %v8392 = vsub.f32 %v2640, %v8391
    %8393 = vmatpush1.msra.mxu0 %v8392
    %8394 = vmatprep.subr.mxu0 0.0
    %v8395 = vand.u32 %v2641, 4294901760
    %v8396 = vsub.f32 %v2641, %v8395
    %8397 = vmatpush1.msra.mxu0 %v8396
    %8398 = vmatprep.subr.mxu0 0.0
    %v8399 = vand.u32 %v2642, 4294901760
    %v8400 = vsub.f32 %v2642, %v8399
    %8401 = vmatpush1.msra.mxu0 %v8400
    %8402 = vmatprep.subr.mxu0 0.0
    %v8403 = vand.u32 %v2643, 4294901760
    %v8404 = vsub.f32 %v2643, %v8403
    %8405 = vmatpush1.msra.mxu0 %v8404
    %8406 = vmatprep.subr.mxu0 0.0
    %v8407 = vand.u32 %v2644, 4294901760
    %v8408 = vsub.f32 %v2644, %v8407
    %8409 = vmatpush1.msra.mxu0 %v8408
    %8410 = vmatprep.subr.mxu0 0.0
    %v8411 = vand.u32 %v2645, 4294901760
    %v8412 = vsub.f32 %v2645, %v8411
    %8413 = vmatpush1.msra.mxu0 %v8412
    %v8414 = vand.u32 %v2752, 4294901760
    %v8415 = vsub.f32 %v2752, %v8414
    %8416 = vmatprep.mubr.f32.mxu0 %v8415
    %v8417 = vand.u32 %v2744, 4294901760
    %v8418 = vsub.f32 %v2744, %v8417
    %8419 = vmatmul.mubr.f32.gmra.mrb[0].mxu0 %v8418
    %v8420 = vpop.f32.mrb[0].mxu0
    %v8421 = vadd.f32 %v8283, %v8420
    %v8422 = vpop.f32.mrb[0].mxu0
    %8423 = vdwg.mxu0
    %8424 = vmatprep.subr.mxu0 0.0
    %v8425 = vand.u32 %v2614, 4294901760
    %8426 = vmatpush1.msra.mxu0 %v8425
    %8427 = vmatprep.subr.mxu0 0.0
    %v8428 = vand.u32 %v2615, 4294901760
    %8429 = vmatpush1.msra.mxu0 %v8428
    %8430 = vmatprep.subr.mxu0 0.0
    %v8431 = vand.u32 %v2616, 4294901760
    %8432 = vmatpush1.msra.mxu0 %v8431
    %8433 = vmatprep.subr.mxu0 0.0
    %v8434 = vand.u32 %v2617, 4294901760
    %8435 = vmatpush1.msra.mxu0 %v8434
    %8436 = vmatprep.subr.mxu0 0.0
    %v8437 = vand.u32 %v2618, 4294901760
    %8438 = vmatpush1.msra.mxu0 %v8437
    %8439 = vmatprep.subr.mxu0 0.0
    %v8440 = vand.u32 %v2619, 4294901760
    %8441 = vmatpush1.msra.mxu0 %v8440
    %8442 = vmatprep.subr.mxu0 0.0
    %v8443 = vand.u32 %v2620, 4294901760
    %8444 = vmatpush1.msra.mxu0 %v8443
    %8445 = vmatprep.subr.mxu0 0.0
    %v8446 = vand.u32 %v2621, 4294901760
    %8447 = vmatpush1.msra.mxu0 %v8446
    %8448 = vmatprep.subr.mxu0 0.0
    %v8449 = vand.u32 %v2622, 4294901760
    %8450 = vmatpush1.msra.mxu0 %v8449
    %8451 = vmatprep.subr.mxu0 0.0
    %v8452 = vand.u32 %v2623, 4294901760
    %8453 = vmatpush1.msra.mxu0 %v8452
    %8454 = vmatprep.subr.mxu0 0.0
    %v8455 = vand.u32 %v2624, 4294901760
    %8456 = vmatpush1.msra.mxu0 %v8455
    %8457 = vmatprep.subr.mxu0 0.0
    %v8458 = vand.u32 %v2625, 4294901760
    %8459 = vmatpush1.msra.mxu0 %v8458
    %8460 = vmatprep.subr.mxu0 0.0
    %v8461 = vand.u32 %v2626, 4294901760
    %8462 = vmatpush1.msra.mxu0 %v8461
    %8463 = vmatprep.subr.mxu0 0.0
    %v8464 = vand.u32 %v2627, 4294901760
    %8465 = vmatpush1.msra.mxu0 %v8464
    %8466 = vmatprep.subr.mxu0 0.0
    %v8467 = vand.u32 %v2628, 4294901760
    %8468 = vmatpush1.msra.mxu0 %v8467
    %8469 = vmatprep.subr.mxu0 0.0
    %v8470 = vand.u32 %v2629, 4294901760
    %8471 = vmatpush1.msra.mxu0 %v8470
    %8472 = vmatprep.subr.mxu0 0.0
    %v8473 = vand.u32 %v2630, 4294901760
    %8474 = vmatpush1.msra.mxu0 %v8473
    %8475 = vmatprep.subr.mxu0 0.0
    %v8476 = vand.u32 %v2631, 4294901760
    %8477 = vmatpush1.msra.mxu0 %v8476
    %8478 = vmatprep.subr.mxu0 0.0
    %v8479 = vand.u32 %v2632, 4294901760
    %8480 = vmatpush1.msra.mxu0 %v8479
    %8481 = vmatprep.subr.mxu0 0.0
    %v8482 = vand.u32 %v2633, 4294901760
    %8483 = vmatpush1.msra.mxu0 %v8482
    %8484 = vmatprep.subr.mxu0 0.0
    %v8485 = vand.u32 %v2634, 4294901760
    %8486 = vmatpush1.msra.mxu0 %v8485
    %8487 = vmatprep.subr.mxu0 0.0
    %v8488 = vand.u32 %v2635, 4294901760
    %8489 = vmatpush1.msra.mxu0 %v8488
    %8490 = vmatprep.subr.mxu0 0.0
    %v8491 = vand.u32 %v2636, 4294901760
    %8492 = vmatpush1.msra.mxu0 %v8491
    %8493 = vmatprep.subr.mxu0 0.0
    %v8494 = vand.u32 %v2637, 4294901760
    %8495 = vmatpush1.msra.mxu0 %v8494
    %8496 = vmatprep.subr.mxu0 0.0
    %v8497 = vand.u32 %v2638, 4294901760
    %8498 = vmatpush1.msra.mxu0 %v8497
    %8499 = vmatprep.subr.mxu0 0.0
    %v8500 = vand.u32 %v2639, 4294901760
    %8501 = vmatpush1.msra.mxu0 %v8500
    %8502 = vmatprep.subr.mxu0 0.0
    %v8503 = vand.u32 %v2640, 4294901760
    %8504 = vmatpush1.msra.mxu0 %v8503
    %8505 = vmatprep.subr.mxu0 0.0
    %v8506 = vand.u32 %v2641, 4294901760
    %8507 = vmatpush1.msra.mxu0 %v8506
    %8508 = vmatprep.subr.mxu0 0.0
    %v8509 = vand.u32 %v2642, 4294901760
    %8510 = vmatpush1.msra.mxu0 %v8509
    %8511 = vmatprep.subr.mxu0 0.0
    %v8512 = vand.u32 %v2643, 4294901760
    %8513 = vmatpush1.msra.mxu0 %v8512
    %8514 = vmatprep.subr.mxu0 0.0
    %v8515 = vand.u32 %v2644, 4294901760
    %8516 = vmatpush1.msra.mxu0 %v8515
    %8517 = vmatprep.subr.mxu0 0.0
    %v8518 = vand.u32 %v2645, 4294901760
    %8519 = vmatpush1.msra.mxu0 %v8518
    %v8520 = vand.u32 %v2752, 4294901760
    %v8521 = vsub.f32 %v2752, %v8520
    %v8522 = vand.u32 %v8521, 4294901760
    %8523 = vmatprep.mubr.f32.mxu0 %v8522
    %v8524 = vand.u32 %v2744, 4294901760
    %v8525 = vsub.f32 %v2744, %v8524
    %v8526 = vand.u32 %v8525, 4294901760
    %8527 = vmatmul.mubr.f32.gmra.mrb[0].mxu0 %v8526
    %v8528 = vpop.f32.mrb[0].mxu0
    %v8529 = vadd.f32 %v8421, %v8528
    %v8530 = vpop.f32.mrb[0].mxu0
    %8531 = vdwg.mxu0
    %8532 = vmatprep.subr.mxu0 0.0
    %v8533 = vand.u32 %v2614, 4294901760
    %v8534 = vsub.f32 %v2614, %v8533
    %v8535 = vand.u32 %v8534, 4294901760
    %8536 = vmatpush1.msra.mxu0 %v8535
    %8537 = vmatprep.subr.mxu0 0.0
    %v8538 = vand.u32 %v2615, 4294901760
    %v8539 = vsub.f32 %v2615, %v8538
    %v8540 = vand.u32 %v8539, 4294901760
    %8541 = vmatpush1.msra.mxu0 %v8540
    %8542 = vmatprep.subr.mxu0 0.0
    %v8543 = vand.u32 %v2616, 4294901760
    %v8544 = vsub.f32 %v2616, %v8543
    %v8545 = vand.u32 %v8544, 4294901760
    %8546 = vmatpush1.msra.mxu0 %v8545
    %8547 = vmatprep.subr.mxu0 0.0
    %v8548 = vand.u32 %v2617, 4294901760
    %v8549 = vsub.f32 %v2617, %v8548
    %v8550 = vand.u32 %v8549, 4294901760
    %8551 = vmatpush1.msra.mxu0 %v8550
    %8552 = vmatprep.subr.mxu0 0.0
    %v8553 = vand.u32 %v2618, 4294901760
    %v8554 = vsub.f32 %v2618, %v8553
    %v8555 = vand.u32 %v8554, 4294901760
    %8556 = vmatpush1.msra.mxu0 %v8555
    %8557 = vmatprep.subr.mxu0 0.0
    %v8558 = vand.u32 %v2619, 4294901760
    %v8559 = vsub.f32 %v2619, %v8558
    %v8560 = vand.u32 %v8559, 4294901760
    %8561 = vmatpush1.msra.mxu0 %v8560
    %8562 = vmatprep.subr.mxu0 0.0
    %v8563 = vand.u32 %v2620, 4294901760
    %v8564 = vsub.f32 %v2620, %v8563
    %v8565 = vand.u32 %v8564, 4294901760
    %8566 = vmatpush1.msra.mxu0 %v8565
    %8567 = vmatprep.subr.mxu0 0.0
    %v8568 = vand.u32 %v2621, 4294901760
    %v8569 = vsub.f32 %v2621, %v8568
    %v8570 = vand.u32 %v8569, 4294901760
    %8571 = vmatpush1.msra.mxu0 %v8570
    %8572 = vmatprep.subr.mxu0 0.0
    %v8573 = vand.u32 %v2622, 4294901760
    %v8574 = vsub.f32 %v2622, %v8573
    %v8575 = vand.u32 %v8574, 4294901760
    %8576 = vmatpush1.msra.mxu0 %v8575
    %8577 = vmatprep.subr.mxu0 0.0
    %v8578 = vand.u32 %v2623, 4294901760
    %v8579 = vsub.f32 %v2623, %v8578
    %v8580 = vand.u32 %v8579, 4294901760
    %8581 = vmatpush1.msra.mxu0 %v8580
    %8582 = vmatprep.subr.mxu0 0.0
    %v8583 = vand.u32 %v2624, 4294901760
    %v8584 = vsub.f32 %v2624, %v8583
    %v8585 = vand.u32 %v8584, 4294901760
    %8586 = vmatpush1.msra.mxu0 %v8585
    %8587 = vmatprep.subr.mxu0 0.0
    %v8588 = vand.u32 %v2625, 4294901760
    %v8589 = vsub.f32 %v2625, %v8588
    %v8590 = vand.u32 %v8589, 4294901760
    %8591 = vmatpush1.msra.mxu0 %v8590
    %8592 = vmatprep.subr.mxu0 0.0
    %v8593 = vand.u32 %v2626, 4294901760
    %v8594 = vsub.f32 %v2626, %v8593
    %v8595 = vand.u32 %v8594, 4294901760
    %8596 = vmatpush1.msra.mxu0 %v8595
    %8597 = vmatprep.subr.mxu0 0.0
    %v8598 = vand.u32 %v2627, 4294901760
    %v8599 = vsub.f32 %v2627, %v8598
    %v8600 = vand.u32 %v8599, 4294901760
    %8601 = vmatpush1.msra.mxu0 %v8600
    %8602 = vmatprep.subr.mxu0 0.0
    %v8603 = vand.u32 %v2628, 4294901760
    %v8604 = vsub.f32 %v2628, %v8603
    %v8605 = vand.u32 %v8604, 4294901760
    %8606 = vmatpush1.msra.mxu0 %v8605
    %8607 = vmatprep.subr.mxu0 0.0
    %v8608 = vand.u32 %v2629, 4294901760
    %v8609 = vsub.f32 %v2629, %v8608
    %v8610 = vand.u32 %v8609, 4294901760
    %8611 = vmatpush1.msra.mxu0 %v8610
    %8612 = vmatprep.subr.mxu0 0.0
    %v8613 = vand.u32 %v2630, 4294901760
    %v8614 = vsub.f32 %v2630, %v8613
    %v8615 = vand.u32 %v8614, 4294901760
    %8616 = vmatpush1.msra.mxu0 %v8615
    %8617 = vmatprep.subr.mxu0 0.0
    %v8618 = vand.u32 %v2631, 4294901760
    %v8619 = vsub.f32 %v2631, %v8618
    %v8620 = vand.u32 %v8619, 4294901760
    %8621 = vmatpush1.msra.mxu0 %v8620
    %8622 = vmatprep.subr.mxu0 0.0
    %v8623 = vand.u32 %v2632, 4294901760
    %v8624 = vsub.f32 %v2632, %v8623
    %v8625 = vand.u32 %v8624, 4294901760
    %8626 = vmatpush1.msra.mxu0 %v8625
    %8627 = vmatprep.subr.mxu0 0.0
    %v8628 = vand.u32 %v2633, 4294901760
    %v8629 = vsub.f32 %v2633, %v8628
    %v8630 = vand.u32 %v8629, 4294901760
    %8631 = vmatpush1.msra.mxu0 %v8630
    %8632 = vmatprep.subr.mxu0 0.0
    %v8633 = vand.u32 %v2634, 4294901760
    %v8634 = vsub.f32 %v2634, %v8633
    %v8635 = vand.u32 %v8634, 4294901760
    %8636 = vmatpush1.msra.mxu0 %v8635
    %8637 = vmatprep.subr.mxu0 0.0
    %v8638 = vand.u32 %v2635, 4294901760
    %v8639 = vsub.f32 %v2635, %v8638
    %v8640 = vand.u32 %v8639, 4294901760
    %8641 = vmatpush1.msra.mxu0 %v8640
    %8642 = vmatprep.subr.mxu0 0.0
    %v8643 = vand.u32 %v2636, 4294901760
    %v8644 = vsub.f32 %v2636, %v8643
    %v8645 = vand.u32 %v8644, 4294901760
    %8646 = vmatpush1.msra.mxu0 %v8645
    %8647 = vmatprep.subr.mxu0 0.0
    %v8648 = vand.u32 %v2637, 4294901760
    %v8649 = vsub.f32 %v2637, %v8648
    %v8650 = vand.u32 %v8649, 4294901760
    %8651 = vmatpush1.msra.mxu0 %v8650
    %8652 = vmatprep.subr.mxu0 0.0
    %v8653 = vand.u32 %v2638, 4294901760
    %v8654 = vsub.f32 %v2638, %v8653
    %v8655 = vand.u32 %v8654, 4294901760
    %8656 = vmatpush1.msra.mxu0 %v8655
    %8657 = vmatprep.subr.mxu0 0.0
    %v8658 = vand.u32 %v2639, 4294901760
    %v8659 = vsub.f32 %v2639, %v8658
    %v8660 = vand.u32 %v8659, 4294901760
    %8661 = vmatpush1.msra.mxu0 %v8660
    %8662 = vmatprep.subr.mxu0 0.0
    %v8663 = vand.u32 %v2640, 4294901760
    %v8664 = vsub.f32 %v2640, %v8663
    %v8665 = vand.u32 %v8664, 4294901760
    %8666 = vmatpush1.msra.mxu0 %v8665
    %8667 = vmatprep.subr.mxu0 0.0
    %v8668 = vand.u32 %v2641, 4294901760
    %v8669 = vsub.f32 %v2641, %v8668
    %v8670 = vand.u32 %v8669, 4294901760
    %8671 = vmatpush1.msra.mxu0 %v8670
    %8672 = vmatprep.subr.mxu0 0.0
    %v8673 = vand.u32 %v2642, 4294901760
    %v8674 = vsub.f32 %v2642, %v8673
    %v8675 = vand.u32 %v8674, 4294901760
    %8676 = vmatpush1.msra.mxu0 %v8675
    %8677 = vmatprep.subr.mxu0 0.0
    %v8678 = vand.u32 %v2643, 4294901760
    %v8679 = vsub.f32 %v2643, %v8678
    %v8680 = vand.u32 %v8679, 4294901760
    %8681 = vmatpush1.msra.mxu0 %v8680
    %8682 = vmatprep.subr.mxu0 0.0
    %v8683 = vand.u32 %v2644, 4294901760
    %v8684 = vsub.f32 %v2644, %v8683
    %v8685 = vand.u32 %v8684, 4294901760
    %8686 = vmatpush1.msra.mxu0 %v8685
    %8687 = vmatprep.subr.mxu0 0.0
    %v8688 = vand.u32 %v2645, 4294901760
    %v8689 = vsub.f32 %v2645, %v8688
    %v8690 = vand.u32 %v8689, 4294901760
    %8691 = vmatpush1.msra.mxu0 %v8690
    %v8692 = vand.u32 %v2752, 4294901760
    %8693 = vmatprep.mubr.f32.mxu0 %v8692
    %v8694 = vand.u32 %v2744, 4294901760
    %8695 = vmatmul.mubr.f32.gmra.mrb[0].mxu0 %v8694
    %v8696 = vpop.f32.mrb[0].mxu0
    %v8697 = vadd.f32 %v8529, %v8696
    %v8698 = vpop.f32.mrb[0].mxu0
    %8699 = vdwg.mxu0
    %8700 = vmatprep.subr.mxu0 0.0
    %v8701 = vand.u32 %v2614, 4294901760
    %8702 = vmatpush1.msra.mxu0 %v8701
    %8703 = vmatprep.subr.mxu0 0.0
    %v8704 = vand.u32 %v2615, 4294901760
    %8705 = vmatpush1.msra.mxu0 %v8704
    %8706 = vmatprep.subr.mxu0 0.0
    %v8707 = vand.u32 %v2616, 4294901760
    %8708 = vmatpush1.msra.mxu0 %v8707
    %8709 = vmatprep.subr.mxu0 0.0
    %v8710 = vand.u32 %v2617, 4294901760
    %8711 = vmatpush1.msra.mxu0 %v8710
    %8712 = vmatprep.subr.mxu0 0.0
    %v8713 = vand.u32 %v2618, 4294901760
    %8714 = vmatpush1.msra.mxu0 %v8713
    %8715 = vmatprep.subr.mxu0 0.0
    %v8716 = vand.u32 %v2619, 4294901760
    %8717 = vmatpush1.msra.mxu0 %v8716
    %8718 = vmatprep.subr.mxu0 0.0
    %v8719 = vand.u32 %v2620, 4294901760
    %8720 = vmatpush1.msra.mxu0 %v8719
    %8721 = vmatprep.subr.mxu0 0.0
    %v8722 = vand.u32 %v2621, 4294901760
    %8723 = vmatpush1.msra.mxu0 %v8722
    %8724 = vmatprep.subr.mxu0 0.0
    %v8725 = vand.u32 %v2622, 4294901760
    %8726 = vmatpush1.msra.mxu0 %v8725
    %8727 = vmatprep.subr.mxu0 0.0
    %v8728 = vand.u32 %v2623, 4294901760
    %8729 = vmatpush1.msra.mxu0 %v8728
    %8730 = vmatprep.subr.mxu0 0.0
    %v8731 = vand.u32 %v2624, 4294901760
    %8732 = vmatpush1.msra.mxu0 %v8731
    %8733 = vmatprep.subr.mxu0 0.0
    %v8734 = vand.u32 %v2625, 4294901760
    %8735 = vmatpush1.msra.mxu0 %v8734
    %8736 = vmatprep.subr.mxu0 0.0
    %v8737 = vand.u32 %v2626, 4294901760
    %8738 = vmatpush1.msra.mxu0 %v8737
    %8739 = vmatprep.subr.mxu0 0.0
    %v8740 = vand.u32 %v2627, 4294901760
    %8741 = vmatpush1.msra.mxu0 %v8740
    %8742 = vmatprep.subr.mxu0 0.0
    %v8743 = vand.u32 %v2628, 4294901760
    %8744 = vmatpush1.msra.mxu0 %v8743
    %8745 = vmatprep.subr.mxu0 0.0
    %v8746 = vand.u32 %v2629, 4294901760
    %8747 = vmatpush1.msra.mxu0 %v8746
    %8748 = vmatprep.subr.mxu0 0.0
    %v8749 = vand.u32 %v2630, 4294901760
    %8750 = vmatpush1.msra.mxu0 %v8749
    %8751 = vmatprep.subr.mxu0 0.0
    %v8752 = vand.u32 %v2631, 4294901760
    %8753 = vmatpush1.msra.mxu0 %v8752
    %8754 = vmatprep.subr.mxu0 0.0
    %v8755 = vand.u32 %v2632, 4294901760
    %8756 = vmatpush1.msra.mxu0 %v8755
    %8757 = vmatprep.subr.mxu0 0.0
    %v8758 = vand.u32 %v2633, 4294901760
    %8759 = vmatpush1.msra.mxu0 %v8758
    %8760 = vmatprep.subr.mxu0 0.0
    %v8761 = vand.u32 %v2634, 4294901760
    %8762 = vmatpush1.msra.mxu0 %v8761
    %8763 = vmatprep.subr.mxu0 0.0
    %v8764 = vand.u32 %v2635, 4294901760
    %8765 = vmatpush1.msra.mxu0 %v8764
    %8766 = vmatprep.subr.mxu0 0.0
    %v8767 = vand.u32 %v2636, 4294901760
    %8768 = vmatpush1.msra.mxu0 %v8767
    %8769 = vmatprep.subr.mxu0 0.0
    %v8770 = vand.u32 %v2637, 4294901760
    %8771 = vmatpush1.msra.mxu0 %v8770
    %8772 = vmatprep.subr.mxu0 0.0
    %v8773 = vand.u32 %v2638, 4294901760
    %8774 = vmatpush1.msra.mxu0 %v8773
    %8775 = vmatprep.subr.mxu0 0.0
    %v8776 = vand.u32 %v2639, 4294901760
    %8777 = vmatpush1.msra.mxu0 %v8776
    %8778 = vmatprep.subr.mxu0 0.0
    %v8779 = vand.u32 %v2640, 4294901760
    %8780 = vmatpush1.msra.mxu0 %v8779
    %8781 = vmatprep.subr.mxu0 0.0
    %v8782 = vand.u32 %v2641, 4294901760
    %8783 = vmatpush1.msra.mxu0 %v8782
    %8784 = vmatprep.subr.mxu0 0.0
    %v8785 = vand.u32 %v2642, 4294901760
    %8786 = vmatpush1.msra.mxu0 %v8785
    %8787 = vmatprep.subr.mxu0 0.0
    %v8788 = vand.u32 %v2643, 4294901760
    %8789 = vmatpush1.msra.mxu0 %v8788
    %8790 = vmatprep.subr.mxu0 0.0
    %v8791 = vand.u32 %v2644, 4294901760
    %8792 = vmatpush1.msra.mxu0 %v8791
    %8793 = vmatprep.subr.mxu0 0.0
    %v8794 = vand.u32 %v2645, 4294901760
    %8795 = vmatpush1.msra.mxu0 %v8794
    %v8796 = vand.u32 %v2752, 4294901760
    %8797 = vmatprep.mubr.f32.mxu0 %v8796
    %v8798 = vand.u32 %v2744, 4294901760
    %8799 = vmatmul.mubr.f32.gmra.mrb[0].mxu0 %v8798
    %v8800 = vpop.f32.mrb[0].mxu0
    %v8801 = vadd.f32 %v8697, %v8800
    %v8802 = vpop.f32.mrb[0].mxu0
    %8803 = vdwg.mxu0
    %8804 = vmatprep.subr.mxu0 0.0
    %v8805 = vand.u32 %v2646, 4294901760
    %8806 = vmatpush1.msra.mxu0 %v8805
    %8807 = vmatprep.subr.mxu0 0.0
    %v8808 = vand.u32 %v2647, 4294901760
    %8809 = vmatpush1.msra.mxu0 %v8808
    %8810 = vmatprep.subr.mxu0 0.0
    %v8811 = vand.u32 %v2648, 4294901760
    %8812 = vmatpush1.msra.mxu0 %v8811
    %8813 = vmatprep.subr.mxu0 0.0
    %v8814 = vand.u32 %v2649, 4294901760
    %8815 = vmatpush1.msra.mxu0 %v8814
    %8816 = vmatprep.subr.mxu0 0.0
    %v8817 = vand.u32 %v2650, 4294901760
    %8818 = vmatpush1.msra.mxu0 %v8817
    %8819 = vmatprep.subr.mxu0 0.0
    %v8820 = vand.u32 %v2651, 4294901760
    %8821 = vmatpush1.msra.mxu0 %v8820
    %8822 = vmatprep.subr.mxu0 0.0
    %v8823 = vand.u32 %v2652, 4294901760
    %8824 = vmatpush1.msra.mxu0 %v8823
    %8825 = vmatprep.subr.mxu0 0.0
    %v8826 = vand.u32 %v2653, 4294901760
    %8827 = vmatpush1.msra.mxu0 %v8826
    %8828 = vmatprep.subr.mxu0 0.0
    %v8829 = vand.u32 %v2654, 4294901760
    %8830 = vmatpush1.msra.mxu0 %v8829
    %8831 = vmatprep.subr.mxu0 0.0
    %v8832 = vand.u32 %v2655, 4294901760
    %8833 = vmatpush1.msra.mxu0 %v8832
    %8834 = vmatprep.subr.mxu0 0.0
    %v8835 = vand.u32 %v2656, 4294901760
    %8836 = vmatpush1.msra.mxu0 %v8835
    %8837 = vmatprep.subr.mxu0 0.0
    %v8838 = vand.u32 %v2657, 4294901760
    %8839 = vmatpush1.msra.mxu0 %v8838
    %8840 = vmatprep.subr.mxu0 0.0
    %v8841 = vand.u32 %v2658, 4294901760
    %8842 = vmatpush1.msra.mxu0 %v8841
    %8843 = vmatprep.subr.mxu0 0.0
    %v8844 = vand.u32 %v2659, 4294901760
    %8845 = vmatpush1.msra.mxu0 %v8844
    %8846 = vmatprep.subr.mxu0 0.0
    %v8847 = vand.u32 %v2660, 4294901760
    %8848 = vmatpush1.msra.mxu0 %v8847
    %8849 = vmatprep.subr.mxu0 0.0
    %v8850 = vand.u32 %v2661, 4294901760
    %8851 = vmatpush1.msra.mxu0 %v8850
    %8852 = vmatprep.subr.mxu0 0.0
    %v8853 = vand.u32 %v2662, 4294901760
    %8854 = vmatpush1.msra.mxu0 %v8853
    %8855 = vmatprep.subr.mxu0 0.0
    %v8856 = vand.u32 %v2663, 4294901760
    %8857 = vmatpush1.msra.mxu0 %v8856
    %8858 = vmatprep.subr.mxu0 0.0
    %v8859 = vand.u32 %v2664, 4294901760
    %8860 = vmatpush1.msra.mxu0 %v8859
    %8861 = vmatprep.subr.mxu0 0.0
    %v8862 = vand.u32 %v2665, 4294901760
    %8863 = vmatpush1.msra.mxu0 %v8862
    %8864 = vmatprep.subr.mxu0 0.0
    %v8865 = vand.u32 %v2666, 4294901760
    %8866 = vmatpush1.msra.mxu0 %v8865
    %8867 = vmatprep.subr.mxu0 0.0
    %v8868 = vand.u32 %v2667, 4294901760
    %8869 = vmatpush1.msra.mxu0 %v8868
    %8870 = vmatprep.subr.mxu0 0.0
    %v8871 = vand.u32 %v2668, 4294901760
    %8872 = vmatpush1.msra.mxu0 %v8871
    %8873 = vmatprep.subr.mxu0 0.0
    %v8874 = vand.u32 %v2669, 4294901760
    %8875 = vmatpush1.msra.mxu0 %v8874
    %8876 = vmatprep.subr.mxu0 0.0
    %v8877 = vand.u32 %v2670, 4294901760
    %8878 = vmatpush1.msra.mxu0 %v8877
    %8879 = vmatprep.subr.mxu0 0.0
    %v8880 = vand.u32 %v2671, 4294901760
    %8881 = vmatpush1.msra.mxu0 %v8880
    %8882 = vmatprep.subr.mxu0 0.0
    %v8883 = vand.u32 %v2672, 4294901760
    %8884 = vmatpush1.msra.mxu0 %v8883
    %8885 = vmatprep.subr.mxu0 0.0
    %v8886 = vand.u32 %v2673, 4294901760
    %8887 = vmatpush1.msra.mxu0 %v8886
    %8888 = vmatprep.subr.mxu0 0.0
    %v8889 = vand.u32 %v2674, 4294901760
    %8890 = vmatpush1.msra.mxu0 %v8889
    %8891 = vmatprep.subr.mxu0 0.0
    %v8892 = vand.u32 %v2675, 4294901760
    %8893 = vmatpush1.msra.mxu0 %v8892
    %8894 = vmatprep.subr.mxu0 0.0
    %v8895 = vand.u32 %v2676, 4294901760
    %8896 = vmatpush1.msra.mxu0 %v8895
    %8897 = vmatprep.subr.mxu0 0.0
    %v8898 = vand.u32 %v2677, 4294901760
    %8899 = vmatpush1.msra.mxu0 %v8898
    %v8900 = vand.u32 %v2753, 4294901760
    %v8901 = vsub.f32 %v2753, %v8900
    %v8902 = vand.u32 %v8901, 4294901760
    %v8903 = vsub.f32 %v8901, %v8902
    %v8904 = vand.u32 %v8903, 4294901760
    %8905 = vmatprep.mubr.f32.mxu0 %v8904
    %v8906 = vand.u32 %v2751, 4294901760
    %v8907 = vsub.f32 %v2751, %v8906
    %v8908 = vand.u32 %v8907, 4294901760
    %v8909 = vsub.f32 %v8907, %v8908
    %v8910 = vand.u32 %v8909, 4294901760
    %8911 = vmatmul.mubr.f32.gmra.mrb[0].mxu0 %v8910
    %v8912 = vpop.f32.mrb[0].mxu0
    %v8913 = vadd.f32 %v8801, %v8912
    %v8914 = vpop.f32.mrb[0].mxu0
    %8915 = vdwg.mxu0
    %8916 = vmatprep.subr.mxu0 0.0
    %v8917 = vand.u32 %v2646, 4294901760
    %v8918 = vsub.f32 %v2646, %v8917
    %v8919 = vand.u32 %v8918, 4294901760
    %v8920 = vsub.f32 %v8918, %v8919
    %v8921 = vand.u32 %v8920, 4294901760
    %8922 = vmatpush1.msra.mxu0 %v8921
    %8923 = vmatprep.subr.mxu0 0.0
    %v8924 = vand.u32 %v2647, 4294901760
    %v8925 = vsub.f32 %v2647, %v8924
    %v8926 = vand.u32 %v8925, 4294901760
    %v8927 = vsub.f32 %v8925, %v8926
    %v8928 = vand.u32 %v8927, 4294901760
    %8929 = vmatpush1.msra.mxu0 %v8928
    %8930 = vmatprep.subr.mxu0 0.0
    %v8931 = vand.u32 %v2648, 4294901760
    %v8932 = vsub.f32 %v2648, %v8931
    %v8933 = vand.u32 %v8932, 4294901760
    %v8934 = vsub.f32 %v8932, %v8933
    %v8935 = vand.u32 %v8934, 4294901760
    %8936 = vmatpush1.msra.mxu0 %v8935
    %8937 = vmatprep.subr.mxu0 0.0
    %v8938 = vand.u32 %v2649, 4294901760
    %v8939 = vsub.f32 %v2649, %v8938
    %v8940 = vand.u32 %v8939, 4294901760
    %v8941 = vsub.f32 %v8939, %v8940
    %v8942 = vand.u32 %v8941, 4294901760
    %8943 = vmatpush1.msra.mxu0 %v8942
    %8944 = vmatprep.subr.mxu0 0.0
    %v8945 = vand.u32 %v2650, 4294901760
    %v8946 = vsub.f32 %v2650, %v8945
    %v8947 = vand.u32 %v8946, 4294901760
    %v8948 = vsub.f32 %v8946, %v8947
    %v8949 = vand.u32 %v8948, 4294901760
    %8950 = vmatpush1.msra.mxu0 %v8949
    %8951 = vmatprep.subr.mxu0 0.0
    %v8952 = vand.u32 %v2651, 4294901760
    %v8953 = vsub.f32 %v2651, %v8952
    %v8954 = vand.u32 %v8953, 4294901760
    %v8955 = vsub.f32 %v8953, %v8954
    %v8956 = vand.u32 %v8955, 4294901760
    %8957 = vmatpush1.msra.mxu0 %v8956
    %8958 = vmatprep.subr.mxu0 0.0
    %v8959 = vand.u32 %v2652, 4294901760
    %v8960 = vsub.f32 %v2652, %v8959
    %v8961 = vand.u32 %v8960, 4294901760
    %v8962 = vsub.f32 %v8960, %v8961
    %v8963 = vand.u32 %v8962, 4294901760
    %8964 = vmatpush1.msra.mxu0 %v8963
    %8965 = vmatprep.subr.mxu0 0.0
    %v8966 = vand.u32 %v2653, 4294901760
    %v8967 = vsub.f32 %v2653, %v8966
    %v8968 = vand.u32 %v8967, 4294901760
    %v8969 = vsub.f32 %v8967, %v8968
    %v8970 = vand.u32 %v8969, 4294901760
    %8971 = vmatpush1.msra.mxu0 %v8970
    %8972 = vmatprep.subr.mxu0 0.0
    %v8973 = vand.u32 %v2654, 4294901760
    %v8974 = vsub.f32 %v2654, %v8973
    %v8975 = vand.u32 %v8974, 4294901760
    %v8976 = vsub.f32 %v8974, %v8975
    %v8977 = vand.u32 %v8976, 4294901760
    %8978 = vmatpush1.msra.mxu0 %v8977
    %8979 = vmatprep.subr.mxu0 0.0
    %v8980 = vand.u32 %v2655, 4294901760
    %v8981 = vsub.f32 %v2655, %v8980
    %v8982 = vand.u32 %v8981, 4294901760
    %v8983 = vsub.f32 %v8981, %v8982
    %v8984 = vand.u32 %v8983, 4294901760
    %8985 = vmatpush1.msra.mxu0 %v8984
    %8986 = vmatprep.subr.mxu0 0.0
    %v8987 = vand.u32 %v2656, 4294901760
    %v8988 = vsub.f32 %v2656, %v8987
    %v8989 = vand.u32 %v8988, 4294901760
    %v8990 = vsub.f32 %v8988, %v8989
    %v8991 = vand.u32 %v8990, 4294901760
    %8992 = vmatpush1.msra.mxu0 %v8991
    %8993 = vmatprep.subr.mxu0 0.0
    %v8994 = vand.u32 %v2657, 4294901760
    %v8995 = vsub.f32 %v2657, %v8994
    %v8996 = vand.u32 %v8995, 4294901760
    %v8997 = vsub.f32 %v8995, %v8996
    %v8998 = vand.u32 %v8997, 4294901760
    %8999 = vmatpush1.msra.mxu0 %v8998
    %9000 = vmatprep.subr.mxu0 0.0
    %v9001 = vand.u32 %v2658, 4294901760
    %v9002 = vsub.f32 %v2658, %v9001
    %v9003 = vand.u32 %v9002, 4294901760
    %v9004 = vsub.f32 %v9002, %v9003
    %v9005 = vand.u32 %v9004, 4294901760
    %9006 = vmatpush1.msra.mxu0 %v9005
    %9007 = vmatprep.subr.mxu0 0.0
    %v9008 = vand.u32 %v2659, 4294901760
    %v9009 = vsub.f32 %v2659, %v9008
    %v9010 = vand.u32 %v9009, 4294901760
    %v9011 = vsub.f32 %v9009, %v9010
    %v9012 = vand.u32 %v9011, 4294901760
    %9013 = vmatpush1.msra.mxu0 %v9012
    %9014 = vmatprep.subr.mxu0 0.0
    %v9015 = vand.u32 %v2660, 4294901760
    %v9016 = vsub.f32 %v2660, %v9015
    %v9017 = vand.u32 %v9016, 4294901760
    %v9018 = vsub.f32 %v9016, %v9017
    %v9019 = vand.u32 %v9018, 4294901760
    %9020 = vmatpush1.msra.mxu0 %v9019
    %9021 = vmatprep.subr.mxu0 0.0
    %v9022 = vand.u32 %v2661, 4294901760
    %v9023 = vsub.f32 %v2661, %v9022
    %v9024 = vand.u32 %v9023, 4294901760
    %v9025 = vsub.f32 %v9023, %v9024
    %v9026 = vand.u32 %v9025, 4294901760
    %9027 = vmatpush1.msra.mxu0 %v9026
    %9028 = vmatprep.subr.mxu0 0.0
    %v9029 = vand.u32 %v2662, 4294901760
    %v9030 = vsub.f32 %v2662, %v9029
    %v9031 = vand.u32 %v9030, 4294901760
    %v9032 = vsub.f32 %v9030, %v9031
    %v9033 = vand.u32 %v9032, 4294901760
    %9034 = vmatpush1.msra.mxu0 %v9033
    %9035 = vmatprep.subr.mxu0 0.0
    %v9036 = vand.u32 %v2663, 4294901760
    %v9037 = vsub.f32 %v2663, %v9036
    %v9038 = vand.u32 %v9037, 4294901760
    %v9039 = vsub.f32 %v9037, %v9038
    %v9040 = vand.u32 %v9039, 4294901760
    %9041 = vmatpush1.msra.mxu0 %v9040
    %9042 = vmatprep.subr.mxu0 0.0
    %v9043 = vand.u32 %v2664, 4294901760
    %v9044 = vsub.f32 %v2664, %v9043
    %v9045 = vand.u32 %v9044, 4294901760
    %v9046 = vsub.f32 %v9044, %v9045
    %v9047 = vand.u32 %v9046, 4294901760
    %9048 = vmatpush1.msra.mxu0 %v9047
    %9049 = vmatprep.subr.mxu0 0.0
    %v9050 = vand.u32 %v2665, 4294901760
    %v9051 = vsub.f32 %v2665, %v9050
    %v9052 = vand.u32 %v9051, 4294901760
    %v9053 = vsub.f32 %v9051, %v9052
    %v9054 = vand.u32 %v9053, 4294901760
    %9055 = vmatpush1.msra.mxu0 %v9054
    %9056 = vmatprep.subr.mxu0 0.0
    %v9057 = vand.u32 %v2666, 4294901760
    %v9058 = vsub.f32 %v2666, %v9057
    %v9059 = vand.u32 %v9058, 4294901760
    %v9060 = vsub.f32 %v9058, %v9059
    %v9061 = vand.u32 %v9060, 4294901760
    %9062 = vmatpush1.msra.mxu0 %v9061
    %9063 = vmatprep.subr.mxu0 0.0
    %v9064 = vand.u32 %v2667, 4294901760
    %v9065 = vsub.f32 %v2667, %v9064
    %v9066 = vand.u32 %v9065, 4294901760
    %v9067 = vsub.f32 %v9065, %v9066
    %v9068 = vand.u32 %v9067, 4294901760
    %9069 = vmatpush1.msra.mxu0 %v9068
    %9070 = vmatprep.subr.mxu0 0.0
    %v9071 = vand.u32 %v2668, 4294901760
    %v9072 = vsub.f32 %v2668, %v9071
    %v9073 = vand.u32 %v9072, 4294901760
    %v9074 = vsub.f32 %v9072, %v9073
    %v9075 = vand.u32 %v9074, 4294901760
    %9076 = vmatpush1.msra.mxu0 %v9075
    %9077 = vmatprep.subr.mxu0 0.0
    %v9078 = vand.u32 %v2669, 4294901760
    %v9079 = vsub.f32 %v2669, %v9078
    %v9080 = vand.u32 %v9079, 4294901760
    %v9081 = vsub.f32 %v9079, %v9080
    %v9082 = vand.u32 %v9081, 4294901760
    %9083 = vmatpush1.msra.mxu0 %v9082
    %9084 = vmatprep.subr.mxu0 0.0
    %v9085 = vand.u32 %v2670, 4294901760
    %v9086 = vsub.f32 %v2670, %v9085
    %v9087 = vand.u32 %v9086, 4294901760
    %v9088 = vsub.f32 %v9086, %v9087
    %v9089 = vand.u32 %v9088, 4294901760
    %9090 = vmatpush1.msra.mxu0 %v9089
    %9091 = vmatprep.subr.mxu0 0.0
    %v9092 = vand.u32 %v2671, 4294901760
    %v9093 = vsub.f32 %v2671, %v9092
    %v9094 = vand.u32 %v9093, 4294901760
    %v9095 = vsub.f32 %v9093, %v9094
    %v9096 = vand.u32 %v9095, 4294901760
    %9097 = vmatpush1.msra.mxu0 %v9096
    %9098 = vmatprep.subr.mxu0 0.0
    %v9099 = vand.u32 %v2672, 4294901760
    %v9100 = vsub.f32 %v2672, %v9099
    %v9101 = vand.u32 %v9100, 4294901760
    %v9102 = vsub.f32 %v9100, %v9101
    %v9103 = vand.u32 %v9102, 4294901760
    %9104 = vmatpush1.msra.mxu0 %v9103
    %9105 = vmatprep.subr.mxu0 0.0
    %v9106 = vand.u32 %v2673, 4294901760
    %v9107 = vsub.f32 %v2673, %v9106
    %v9108 = vand.u32 %v9107, 4294901760
    %v9109 = vsub.f32 %v9107, %v9108
    %v9110 = vand.u32 %v9109, 4294901760
    %9111 = vmatpush1.msra.mxu0 %v9110
    %9112 = vmatprep.subr.mxu0 0.0
    %v9113 = vand.u32 %v2674, 4294901760
    %v9114 = vsub.f32 %v2674, %v9113
    %v9115 = vand.u32 %v9114, 4294901760
    %v9116 = vsub.f32 %v9114, %v9115
    %v9117 = vand.u32 %v9116, 4294901760
    %9118 = vmatpush1.msra.mxu0 %v9117
    %9119 = vmatprep.subr.mxu0 0.0
    %v9120 = vand.u32 %v2675, 4294901760
    %v9121 = vsub.f32 %v2675, %v9120
    %v9122 = vand.u32 %v9121, 4294901760
    %v9123 = vsub.f32 %v9121, %v9122
    %v9124 = vand.u32 %v9123, 4294901760
    %9125 = vmatpush1.msra.mxu0 %v9124
    %9126 = vmatprep.subr.mxu0 0.0
    %v9127 = vand.u32 %v2676, 4294901760
    %v9128 = vsub.f32 %v2676, %v9127
    %v9129 = vand.u32 %v9128, 4294901760
    %v9130 = vsub.f32 %v9128, %v9129
    %v9131 = vand.u32 %v9130, 4294901760
    %9132 = vmatpush1.msra.mxu0 %v9131
    %9133 = vmatprep.subr.mxu0 0.0
    %v9134 = vand.u32 %v2677, 4294901760
    %v9135 = vsub.f32 %v2677, %v9134
    %v9136 = vand.u32 %v9135, 4294901760
    %v9137 = vsub.f32 %v9135, %v9136
    %v9138 = vand.u32 %v9137, 4294901760
    %9139 = vmatpush1.msra.mxu0 %v9138
    %v9140 = vand.u32 %v2753, 4294901760
    %9141 = vmatprep.mubr.f32.mxu0 %v9140
    %v9142 = vand.u32 %v2751, 4294901760
    %9143 = vmatmul.mubr.f32.gmra.mrb[0].mxu0 %v9142
    %v9144 = vpop.f32.mrb[0].mxu0
    %v9145 = vadd.f32 %v8913, %v9144
    %v9146 = vpop.f32.mrb[0].mxu0
    %9147 = vdwg.mxu0
    %9148 = vmatprep.subr.mxu0 0.0
    %v9149 = vand.u32 %v2646, 4294901760
    %v9150 = vsub.f32 %v2646, %v9149
    %9151 = vmatpush1.msra.mxu0 %v9150
    %9152 = vmatprep.subr.mxu0 0.0
    %v9153 = vand.u32 %v2647, 4294901760
    %v9154 = vsub.f32 %v2647, %v9153
    %9155 = vmatpush1.msra.mxu0 %v9154
    %9156 = vmatprep.subr.mxu0 0.0
    %v9157 = vand.u32 %v2648, 4294901760
    %v9158 = vsub.f32 %v2648, %v9157
    %9159 = vmatpush1.msra.mxu0 %v9158
    %9160 = vmatprep.subr.mxu0 0.0
    %v9161 = vand.u32 %v2649, 4294901760
    %v9162 = vsub.f32 %v2649, %v9161
    %9163 = vmatpush1.msra.mxu0 %v9162
    %9164 = vmatprep.subr.mxu0 0.0
    %v9165 = vand.u32 %v2650, 4294901760
    %v9166 = vsub.f32 %v2650, %v9165
    %9167 = vmatpush1.msra.mxu0 %v9166
    %9168 = vmatprep.subr.mxu0 0.0
    %v9169 = vand.u32 %v2651, 4294901760
    %v9170 = vsub.f32 %v2651, %v9169
    %9171 = vmatpush1.msra.mxu0 %v9170
    %9172 = vmatprep.subr.mxu0 0.0
    %v9173 = vand.u32 %v2652, 4294901760
    %v9174 = vsub.f32 %v2652, %v9173
    %9175 = vmatpush1.msra.mxu0 %v9174
    %9176 = vmatprep.subr.mxu0 0.0
    %v9177 = vand.u32 %v2653, 4294901760
    %v9178 = vsub.f32 %v2653, %v9177
    %9179 = vmatpush1.msra.mxu0 %v9178
    %9180 = vmatprep.subr.mxu0 0.0
    %v9181 = vand.u32 %v2654, 4294901760
    %v9182 = vsub.f32 %v2654, %v9181
    %9183 = vmatpush1.msra.mxu0 %v9182
    %9184 = vmatprep.subr.mxu0 0.0
    %v9185 = vand.u32 %v2655, 4294901760
    %v9186 = vsub.f32 %v2655, %v9185
    %9187 = vmatpush1.msra.mxu0 %v9186
    %9188 = vmatprep.subr.mxu0 0.0
    %v9189 = vand.u32 %v2656, 4294901760
    %v9190 = vsub.f32 %v2656, %v9189
    %9191 = vmatpush1.msra.mxu0 %v9190
    %9192 = vmatprep.subr.mxu0 0.0
    %v9193 = vand.u32 %v2657, 4294901760
    %v9194 = vsub.f32 %v2657, %v9193
    %9195 = vmatpush1.msra.mxu0 %v9194
    %9196 = vmatprep.subr.mxu0 0.0
    %v9197 = vand.u32 %v2658, 4294901760
    %v9198 = vsub.f32 %v2658, %v9197
    %9199 = vmatpush1.msra.mxu0 %v9198
    %9200 = vmatprep.subr.mxu0 0.0
    %v9201 = vand.u32 %v2659, 4294901760
    %v9202 = vsub.f32 %v2659, %v9201
    %9203 = vmatpush1.msra.mxu0 %v9202
    %9204 = vmatprep.subr.mxu0 0.0
    %v9205 = vand.u32 %v2660, 4294901760
    %v9206 = vsub.f32 %v2660, %v9205
    %9207 = vmatpush1.msra.mxu0 %v9206
    %9208 = vmatprep.subr.mxu0 0.0
    %v9209 = vand.u32 %v2661, 4294901760
    %v9210 = vsub.f32 %v2661, %v9209
    %9211 = vmatpush1.msra.mxu0 %v9210
    %9212 = vmatprep.subr.mxu0 0.0
    %v9213 = vand.u32 %v2662, 4294901760
    %v9214 = vsub.f32 %v2662, %v9213
    %9215 = vmatpush1.msra.mxu0 %v9214
    %9216 = vmatprep.subr.mxu0 0.0
    %v9217 = vand.u32 %v2663, 4294901760
    %v9218 = vsub.f32 %v2663, %v9217
    %9219 = vmatpush1.msra.mxu0 %v9218
    %9220 = vmatprep.subr.mxu0 0.0
    %v9221 = vand.u32 %v2664, 4294901760
    %v9222 = vsub.f32 %v2664, %v9221
    %9223 = vmatpush1.msra.mxu0 %v9222
    %9224 = vmatprep.subr.mxu0 0.0
    %v9225 = vand.u32 %v2665, 4294901760
    %v9226 = vsub.f32 %v2665, %v9225
    %9227 = vmatpush1.msra.mxu0 %v9226
    %9228 = vmatprep.subr.mxu0 0.0
    %v9229 = vand.u32 %v2666, 4294901760
    %v9230 = vsub.f32 %v2666, %v9229
    %9231 = vmatpush1.msra.mxu0 %v9230
    %9232 = vmatprep.subr.mxu0 0.0
    %v9233 = vand.u32 %v2667, 4294901760
    %v9234 = vsub.f32 %v2667, %v9233
    %9235 = vmatpush1.msra.mxu0 %v9234
    %9236 = vmatprep.subr.mxu0 0.0
    %v9237 = vand.u32 %v2668, 4294901760
    %v9238 = vsub.f32 %v2668, %v9237
    %9239 = vmatpush1.msra.mxu0 %v9238
    %9240 = vmatprep.subr.mxu0 0.0
    %v9241 = vand.u32 %v2669, 4294901760
    %v9242 = vsub.f32 %v2669, %v9241
    %9243 = vmatpush1.msra.mxu0 %v9242
    %9244 = vmatprep.subr.mxu0 0.0
    %v9245 = vand.u32 %v2670, 4294901760
    %v9246 = vsub.f32 %v2670, %v9245
    %9247 = vmatpush1.msra.mxu0 %v9246
    %9248 = vmatprep.subr.mxu0 0.0
    %v9249 = vand.u32 %v2671, 4294901760
    %v9250 = vsub.f32 %v2671, %v9249
    %9251 = vmatpush1.msra.mxu0 %v9250
    %9252 = vmatprep.subr.mxu0 0.0
    %v9253 = vand.u32 %v2672, 4294901760
    %v9254 = vsub.f32 %v2672, %v9253
    %9255 = vmatpush1.msra.mxu0 %v9254
    %9256 = vmatprep.subr.mxu0 0.0
    %v9257 = vand.u32 %v2673, 4294901760
    %v9258 = vsub.f32 %v2673, %v9257
    %9259 = vmatpush1.msra.mxu0 %v9258
    %9260 = vmatprep.subr.mxu0 0.0
    %v9261 = vand.u32 %v2674, 4294901760
    %v9262 = vsub.f32 %v2674, %v9261
    %9263 = vmatpush1.msra.mxu0 %v9262
    %9264 = vmatprep.subr.mxu0 0.0
    %v9265 = vand.u32 %v2675, 4294901760
    %v9266 = vsub.f32 %v2675, %v9265
    %9267 = vmatpush1.msra.mxu0 %v9266
    %9268 = vmatprep.subr.mxu0 0.0
    %v9269 = vand.u32 %v2676, 4294901760
    %v9270 = vsub.f32 %v2676, %v9269
    %9271 = vmatpush1.msra.mxu0 %v9270
    %9272 = vmatprep.subr.mxu0 0.0
    %v9273 = vand.u32 %v2677, 4294901760
    %v9274 = vsub.f32 %v2677, %v9273
    %9275 = vmatpush1.msra.mxu0 %v9274
    %v9276 = vand.u32 %v2753, 4294901760
    %v9277 = vsub.f32 %v2753, %v9276
    %9278 = vmatprep.mubr.f32.mxu0 %v9277
    %v9279 = vand.u32 %v2751, 4294901760
    %v9280 = vsub.f32 %v2751, %v9279
    %9281 = vmatmul.mubr.f32.gmra.mrb[0].mxu0 %v9280
    %v9282 = vpop.f32.mrb[0].mxu0
    %v9283 = vadd.f32 %v9145, %v9282
    %v9284 = vpop.f32.mrb[0].mxu0
    %9285 = vdwg.mxu0
    %9286 = vmatprep.subr.mxu0 0.0
    %v9287 = vand.u32 %v2646, 4294901760
    %9288 = vmatpush1.msra.mxu0 %v9287
    %9289 = vmatprep.subr.mxu0 0.0
    %v9290 = vand.u32 %v2647, 4294901760
    %9291 = vmatpush1.msra.mxu0 %v9290
    %9292 = vmatprep.subr.mxu0 0.0
    %v9293 = vand.u32 %v2648, 4294901760
    %9294 = vmatpush1.msra.mxu0 %v9293
    %9295 = vmatprep.subr.mxu0 0.0
    %v9296 = vand.u32 %v2649, 4294901760
    %9297 = vmatpush1.msra.mxu0 %v9296
    %9298 = vmatprep.subr.mxu0 0.0
    %v9299 = vand.u32 %v2650, 4294901760
    %9300 = vmatpush1.msra.mxu0 %v9299
    %9301 = vmatprep.subr.mxu0 0.0
    %v9302 = vand.u32 %v2651, 4294901760
    %9303 = vmatpush1.msra.mxu0 %v9302
    %9304 = vmatprep.subr.mxu0 0.0
    %v9305 = vand.u32 %v2652, 4294901760
    %9306 = vmatpush1.msra.mxu0 %v9305
    %9307 = vmatprep.subr.mxu0 0.0
    %v9308 = vand.u32 %v2653, 4294901760
    %9309 = vmatpush1.msra.mxu0 %v9308
    %9310 = vmatprep.subr.mxu0 0.0
    %v9311 = vand.u32 %v2654, 4294901760
    %9312 = vmatpush1.msra.mxu0 %v9311
    %9313 = vmatprep.subr.mxu0 0.0
    %v9314 = vand.u32 %v2655, 4294901760
    %9315 = vmatpush1.msra.mxu0 %v9314
    %9316 = vmatprep.subr.mxu0 0.0
    %v9317 = vand.u32 %v2656, 4294901760
    %9318 = vmatpush1.msra.mxu0 %v9317
    %9319 = vmatprep.subr.mxu0 0.0
    %v9320 = vand.u32 %v2657, 4294901760
    %9321 = vmatpush1.msra.mxu0 %v9320
    %9322 = vmatprep.subr.mxu0 0.0
    %v9323 = vand.u32 %v2658, 4294901760
    %9324 = vmatpush1.msra.mxu0 %v9323
    %9325 = vmatprep.subr.mxu0 0.0
    %v9326 = vand.u32 %v2659, 4294901760
    %9327 = vmatpush1.msra.mxu0 %v9326
    %9328 = vmatprep.subr.mxu0 0.0
    %v9329 = vand.u32 %v2660, 4294901760
    %9330 = vmatpush1.msra.mxu0 %v9329
    %9331 = vmatprep.subr.mxu0 0.0
    %v9332 = vand.u32 %v2661, 4294901760
    %9333 = vmatpush1.msra.mxu0 %v9332
    %9334 = vmatprep.subr.mxu0 0.0
    %v9335 = vand.u32 %v2662, 4294901760
    %9336 = vmatpush1.msra.mxu0 %v9335
    %9337 = vmatprep.subr.mxu0 0.0
    %v9338 = vand.u32 %v2663, 4294901760
    %9339 = vmatpush1.msra.mxu0 %v9338
    %9340 = vmatprep.subr.mxu0 0.0
    %v9341 = vand.u32 %v2664, 4294901760
    %9342 = vmatpush1.msra.mxu0 %v9341
    %9343 = vmatprep.subr.mxu0 0.0
    %v9344 = vand.u32 %v2665, 4294901760
    %9345 = vmatpush1.msra.mxu0 %v9344
    %9346 = vmatprep.subr.mxu0 0.0
    %v9347 = vand.u32 %v2666, 4294901760
    %9348 = vmatpush1.msra.mxu0 %v9347
    %9349 = vmatprep.subr.mxu0 0.0
    %v9350 = vand.u32 %v2667, 4294901760
    %9351 = vmatpush1.msra.mxu0 %v9350
    %9352 = vmatprep.subr.mxu0 0.0
    %v9353 = vand.u32 %v2668, 4294901760
    %9354 = vmatpush1.msra.mxu0 %v9353
    %9355 = vmatprep.subr.mxu0 0.0
    %v9356 = vand.u32 %v2669, 4294901760
    %9357 = vmatpush1.msra.mxu0 %v9356
    %9358 = vmatprep.subr.mxu0 0.0
    %v9359 = vand.u32 %v2670, 4294901760
    %9360 = vmatpush1.msra.mxu0 %v9359
    %9361 = vmatprep.subr.mxu0 0.0
    %v9362 = vand.u32 %v2671, 4294901760
    %9363 = vmatpush1.msra.mxu0 %v9362
    %9364 = vmatprep.subr.mxu0 0.0
    %v9365 = vand.u32 %v2672, 4294901760
    %9366 = vmatpush1.msra.mxu0 %v9365
    %9367 = vmatprep.subr.mxu0 0.0
    %v9368 = vand.u32 %v2673, 4294901760
    %9369 = vmatpush1.msra.mxu0 %v9368
    %9370 = vmatprep.subr.mxu0 0.0
    %v9371 = vand.u32 %v2674, 4294901760
    %9372 = vmatpush1.msra.mxu0 %v9371
    %9373 = vmatprep.subr.mxu0 0.0
    %v9374 = vand.u32 %v2675, 4294901760
    %9375 = vmatpush1.msra.mxu0 %v9374
    %9376 = vmatprep.subr.mxu0 0.0
    %v9377 = vand.u32 %v2676, 4294901760
    %9378 = vmatpush1.msra.mxu0 %v9377
    %9379 = vmatprep.subr.mxu0 0.0
    %v9380 = vand.u32 %v2677, 4294901760
    %9381 = vmatpush1.msra.mxu0 %v9380
    %v9382 = vand.u32 %v2753, 4294901760
    %v9383 = vsub.f32 %v2753, %v9382
    %v9384 = vand.u32 %v9383, 4294901760
    %9385 = vmatprep.mubr.f32.mxu0 %v9384
    %v9386 = vand.u32 %v2751, 4294901760
    %v9387 = vsub.f32 %v2751, %v9386
    %v9388 = vand.u32 %v9387, 4294901760
    %9389 = vmatmul.mubr.f32.gmra.mrb[0].mxu0 %v9388
    %v9390 = vpop.f32.mrb[0].mxu0
    %v9391 = vadd.f32 %v9283, %v9390
    %v9392 = vpop.f32.mrb[0].mxu0
    %9393 = vdwg.mxu0
    %9394 = vmatprep.subr.mxu0 0.0
    %v9395 = vand.u32 %v2646, 4294901760
    %v9396 = vsub.f32 %v2646, %v9395
    %v9397 = vand.u32 %v9396, 4294901760
    %9398 = vmatpush1.msra.mxu0 %v9397
    %9399 = vmatprep.subr.mxu0 0.0
    %v9400 = vand.u32 %v2647, 4294901760
    %v9401 = vsub.f32 %v2647, %v9400
    %v9402 = vand.u32 %v9401, 4294901760
    %9403 = vmatpush1.msra.mxu0 %v9402
    %9404 = vmatprep.subr.mxu0 0.0
    %v9405 = vand.u32 %v2648, 4294901760
    %v9406 = vsub.f32 %v2648, %v9405
    %v9407 = vand.u32 %v9406, 4294901760
    %9408 = vmatpush1.msra.mxu0 %v9407
    %9409 = vmatprep.subr.mxu0 0.0
    %v9410 = vand.u32 %v2649, 4294901760
    %v9411 = vsub.f32 %v2649, %v9410
    %v9412 = vand.u32 %v9411, 4294901760
    %9413 = vmatpush1.msra.mxu0 %v9412
    %9414 = vmatprep.subr.mxu0 0.0
    %v9415 = vand.u32 %v2650, 4294901760
    %v9416 = vsub.f32 %v2650, %v9415
    %v9417 = vand.u32 %v9416, 4294901760
    %9418 = vmatpush1.msra.mxu0 %v9417
    %9419 = vmatprep.subr.mxu0 0.0
    %v9420 = vand.u32 %v2651, 4294901760
    %v9421 = vsub.f32 %v2651, %v9420
    %v9422 = vand.u32 %v9421, 4294901760
    %9423 = vmatpush1.msra.mxu0 %v9422
    %9424 = vmatprep.subr.mxu0 0.0
    %v9425 = vand.u32 %v2652, 4294901760
    %v9426 = vsub.f32 %v2652, %v9425
    %v9427 = vand.u32 %v9426, 4294901760
    %9428 = vmatpush1.msra.mxu0 %v9427
    %9429 = vmatprep.subr.mxu0 0.0
    %v9430 = vand.u32 %v2653, 4294901760
    %v9431 = vsub.f32 %v2653, %v9430
    %v9432 = vand.u32 %v9431, 4294901760
    %9433 = vmatpush1.msra.mxu0 %v9432
    %9434 = vmatprep.subr.mxu0 0.0
    %v9435 = vand.u32 %v2654, 4294901760
    %v9436 = vsub.f32 %v2654, %v9435
    %v9437 = vand.u32 %v9436, 4294901760
    %9438 = vmatpush1.msra.mxu0 %v9437
    %9439 = vmatprep.subr.mxu0 0.0
    %v9440 = vand.u32 %v2655, 4294901760
    %v9441 = vsub.f32 %v2655, %v9440
    %v9442 = vand.u32 %v9441, 4294901760
    %9443 = vmatpush1.msra.mxu0 %v9442
    %9444 = vmatprep.subr.mxu0 0.0
    %v9445 = vand.u32 %v2656, 4294901760
    %v9446 = vsub.f32 %v2656, %v9445
    %v9447 = vand.u32 %v9446, 4294901760
    %9448 = vmatpush1.msra.mxu0 %v9447
    %9449 = vmatprep.subr.mxu0 0.0
    %v9450 = vand.u32 %v2657, 4294901760
    %v9451 = vsub.f32 %v2657, %v9450
    %v9452 = vand.u32 %v9451, 4294901760
    %9453 = vmatpush1.msra.mxu0 %v9452
    %9454 = vmatprep.subr.mxu0 0.0
    %v9455 = vand.u32 %v2658, 4294901760
    %v9456 = vsub.f32 %v2658, %v9455
    %v9457 = vand.u32 %v9456, 4294901760
    %9458 = vmatpush1.msra.mxu0 %v9457
    %9459 = vmatprep.subr.mxu0 0.0
    %v9460 = vand.u32 %v2659, 4294901760
    %v9461 = vsub.f32 %v2659, %v9460
    %v9462 = vand.u32 %v9461, 4294901760
    %9463 = vmatpush1.msra.mxu0 %v9462
    %9464 = vmatprep.subr.mxu0 0.0
    %v9465 = vand.u32 %v2660, 4294901760
    %v9466 = vsub.f32 %v2660, %v9465
    %v9467 = vand.u32 %v9466, 4294901760
    %9468 = vmatpush1.msra.mxu0 %v9467
    %9469 = vmatprep.subr.mxu0 0.0
    %v9470 = vand.u32 %v2661, 4294901760
    %v9471 = vsub.f32 %v2661, %v9470
    %v9472 = vand.u32 %v9471, 4294901760
    %9473 = vmatpush1.msra.mxu0 %v9472
    %9474 = vmatprep.subr.mxu0 0.0
    %v9475 = vand.u32 %v2662, 4294901760
    %v9476 = vsub.f32 %v2662, %v9475
    %v9477 = vand.u32 %v9476, 4294901760
    %9478 = vmatpush1.msra.mxu0 %v9477
    %9479 = vmatprep.subr.mxu0 0.0
    %v9480 = vand.u32 %v2663, 4294901760
    %v9481 = vsub.f32 %v2663, %v9480
    %v9482 = vand.u32 %v9481, 4294901760
    %9483 = vmatpush1.msra.mxu0 %v9482
    %9484 = vmatprep.subr.mxu0 0.0
    %v9485 = vand.u32 %v2664, 4294901760
    %v9486 = vsub.f32 %v2664, %v9485
    %v9487 = vand.u32 %v9486, 4294901760
    %9488 = vmatpush1.msra.mxu0 %v9487
    %9489 = vmatprep.subr.mxu0 0.0
    %v9490 = vand.u32 %v2665, 4294901760
    %v9491 = vsub.f32 %v2665, %v9490
    %v9492 = vand.u32 %v9491, 4294901760
    %9493 = vmatpush1.msra.mxu0 %v9492
    %9494 = vmatprep.subr.mxu0 0.0
    %v9495 = vand.u32 %v2666, 4294901760
    %v9496 = vsub.f32 %v2666, %v9495
    %v9497 = vand.u32 %v9496, 4294901760
    %9498 = vmatpush1.msra.mxu0 %v9497
    %9499 = vmatprep.subr.mxu0 0.0
    %v9500 = vand.u32 %v2667, 4294901760
    %v9501 = vsub.f32 %v2667, %v9500
    %v9502 = vand.u32 %v9501, 4294901760
    %9503 = vmatpush1.msra.mxu0 %v9502
    %9504 = vmatprep.subr.mxu0 0.0
    %v9505 = vand.u32 %v2668, 4294901760
    %v9506 = vsub.f32 %v2668, %v9505
    %v9507 = vand.u32 %v9506, 4294901760
    %9508 = vmatpush1.msra.mxu0 %v9507
    %9509 = vmatprep.subr.mxu0 0.0
    %v9510 = vand.u32 %v2669, 4294901760
    %v9511 = vsub.f32 %v2669, %v9510
    %v9512 = vand.u32 %v9511, 4294901760
    %9513 = vmatpush1.msra.mxu0 %v9512
    %9514 = vmatprep.subr.mxu0 0.0
    %v9515 = vand.u32 %v2670, 4294901760
    %v9516 = vsub.f32 %v2670, %v9515
    %v9517 = vand.u32 %v9516, 4294901760
    %9518 = vmatpush1.msra.mxu0 %v9517
    %9519 = vmatprep.subr.mxu0 0.0
    %v9520 = vand.u32 %v2671, 4294901760
    %v9521 = vsub.f32 %v2671, %v9520
    %v9522 = vand.u32 %v9521, 4294901760
    %9523 = vmatpush1.msra.mxu0 %v9522
    %9524 = vmatprep.subr.mxu0 0.0
    %v9525 = vand.u32 %v2672, 4294901760
    %v9526 = vsub.f32 %v2672, %v9525
    %v9527 = vand.u32 %v9526, 4294901760
    %9528 = vmatpush1.msra.mxu0 %v9527
    %9529 = vmatprep.subr.mxu0 0.0
    %v9530 = vand.u32 %v2673, 4294901760
    %v9531 = vsub.f32 %v2673, %v9530
    %v9532 = vand.u32 %v9531, 4294901760
    %9533 = vmatpush1.msra.mxu0 %v9532
    %9534 = vmatprep.subr.mxu0 0.0
    %v9535 = vand.u32 %v2674, 4294901760
    %v9536 = vsub.f32 %v2674, %v9535
    %v9537 = vand.u32 %v9536, 4294901760
    %9538 = vmatpush1.msra.mxu0 %v9537
    %9539 = vmatprep.subr.mxu0 0.0
    %v9540 = vand.u32 %v2675, 4294901760
    %v9541 = vsub.f32 %v2675, %v9540
    %v9542 = vand.u32 %v9541, 4294901760
    %9543 = vmatpush1.msra.mxu0 %v9542
    %9544 = vmatprep.subr.mxu0 0.0
    %v9545 = vand.u32 %v2676, 4294901760
    %v9546 = vsub.f32 %v2676, %v9545
    %v9547 = vand.u32 %v9546, 4294901760
    %9548 = vmatpush1.msra.mxu0 %v9547
    %9549 = vmatprep.subr.mxu0 0.0
    %v9550 = vand.u32 %v2677, 4294901760
    %v9551 = vsub.f32 %v2677, %v9550
    %v9552 = vand.u32 %v9551, 4294901760
    %9553 = vmatpush1.msra.mxu0 %v9552
    %v9554 = vand.u32 %v2753, 4294901760
    %9555 = vmatprep.mubr.f32.mxu0 %v9554
    %v9556 = vand.u32 %v2751, 4294901760
    %9557 = vmatmul.mubr.f32.gmra.mrb[0].mxu0 %v9556
    %v9558 = vpop.f32.mrb[0].mxu0
    %v9559 = vadd.f32 %v9391, %v9558
    %v9560 = vpop.f32.mrb[0].mxu0
    %9561 = vdwg.mxu0
    %9562 = vmatprep.subr.mxu0 0.0
    %v9563 = vand.u32 %v2646, 4294901760
    %9564 = vmatpush1.msra.mxu0 %v9563
    %9565 = vmatprep.subr.mxu0 0.0
    %v9566 = vand.u32 %v2647, 4294901760
    %9567 = vmatpush1.msra.mxu0 %v9566
    %9568 = vmatprep.subr.mxu0 0.0
    %v9569 = vand.u32 %v2648, 4294901760
    %9570 = vmatpush1.msra.mxu0 %v9569
    %9571 = vmatprep.subr.mxu0 0.0
    %v9572 = vand.u32 %v2649, 4294901760
    %9573 = vmatpush1.msra.mxu0 %v9572
    %9574 = vmatprep.subr.mxu0 0.0
    %v9575 = vand.u32 %v2650, 4294901760
    %9576 = vmatpush1.msra.mxu0 %v9575
    %9577 = vmatprep.subr.mxu0 0.0
    %v9578 = vand.u32 %v2651, 4294901760
    %9579 = vmatpush1.msra.mxu0 %v9578
    %9580 = vmatprep.subr.mxu0 0.0
    %v9581 = vand.u32 %v2652, 4294901760
    %9582 = vmatpush1.msra.mxu0 %v9581
    %9583 = vmatprep.subr.mxu0 0.0
    %v9584 = vand.u32 %v2653, 4294901760
    %9585 = vmatpush1.msra.mxu0 %v9584
    %9586 = vmatprep.subr.mxu0 0.0
    %v9587 = vand.u32 %v2654, 4294901760
    %9588 = vmatpush1.msra.mxu0 %v9587
    %9589 = vmatprep.subr.mxu0 0.0
    %v9590 = vand.u32 %v2655, 4294901760
    %9591 = vmatpush1.msra.mxu0 %v9590
    %9592 = vmatprep.subr.mxu0 0.0
    %v9593 = vand.u32 %v2656, 4294901760
    %9594 = vmatpush1.msra.mxu0 %v9593
    %9595 = vmatprep.subr.mxu0 0.0
    %v9596 = vand.u32 %v2657, 4294901760
    %9597 = vmatpush1.msra.mxu0 %v9596
    %9598 = vmatprep.subr.mxu0 0.0
    %v9599 = vand.u32 %v2658, 4294901760
    %9600 = vmatpush1.msra.mxu0 %v9599
    %9601 = vmatprep.subr.mxu0 0.0
    %v9602 = vand.u32 %v2659, 4294901760
    %9603 = vmatpush1.msra.mxu0 %v9602
    %9604 = vmatprep.subr.mxu0 0.0
    %v9605 = vand.u32 %v2660, 4294901760
    %9606 = vmatpush1.msra.mxu0 %v9605
    %9607 = vmatprep.subr.mxu0 0.0
    %v9608 = vand.u32 %v2661, 4294901760
    %9609 = vmatpush1.msra.mxu0 %v9608
    %9610 = vmatprep.subr.mxu0 0.0
    %v9611 = vand.u32 %v2662, 4294901760
    %9612 = vmatpush1.msra.mxu0 %v9611
    %9613 = vmatprep.subr.mxu0 0.0
    %v9614 = vand.u32 %v2663, 4294901760
    %9615 = vmatpush1.msra.mxu0 %v9614
    %9616 = vmatprep.subr.mxu0 0.0
    %v9617 = vand.u32 %v2664, 4294901760
    %9618 = vmatpush1.msra.mxu0 %v9617
    %9619 = vmatprep.subr.mxu0 0.0
    %v9620 = vand.u32 %v2665, 4294901760
    %9621 = vmatpush1.msra.mxu0 %v9620
    %9622 = vmatprep.subr.mxu0 0.0
    %v9623 = vand.u32 %v2666, 4294901760
    %9624 = vmatpush1.msra.mxu0 %v9623
    %9625 = vmatprep.subr.mxu0 0.0
    %v9626 = vand.u32 %v2667, 4294901760
    %9627 = vmatpush1.msra.mxu0 %v9626
    %9628 = vmatprep.subr.mxu0 0.0
    %v9629 = vand.u32 %v2668, 4294901760
    %9630 = vmatpush1.msra.mxu0 %v9629
    %9631 = vmatprep.subr.mxu0 0.0
    %v9632 = vand.u32 %v2669, 4294901760
    %9633 = vmatpush1.msra.mxu0 %v9632
    %9634 = vmatprep.subr.mxu0 0.0
    %v9635 = vand.u32 %v2670, 4294901760
    %9636 = vmatpush1.msra.mxu0 %v9635
    %9637 = vmatprep.subr.mxu0 0.0
    %v9638 = vand.u32 %v2671, 4294901760
    %9639 = vmatpush1.msra.mxu0 %v9638
    %9640 = vmatprep.subr.mxu0 0.0
    %v9641 = vand.u32 %v2672, 4294901760
    %9642 = vmatpush1.msra.mxu0 %v9641
    %9643 = vmatprep.subr.mxu0 0.0
    %v9644 = vand.u32 %v2673, 4294901760
    %9645 = vmatpush1.msra.mxu0 %v9644
    %9646 = vmatprep.subr.mxu0 0.0
    %v9647 = vand.u32 %v2674, 4294901760
    %9648 = vmatpush1.msra.mxu0 %v9647
    %9649 = vmatprep.subr.mxu0 0.0
    %v9650 = vand.u32 %v2675, 4294901760
    %9651 = vmatpush1.msra.mxu0 %v9650
    %9652 = vmatprep.subr.mxu0 0.0
    %v9653 = vand.u32 %v2676, 4294901760
    %9654 = vmatpush1.msra.mxu0 %v9653
    %9655 = vmatprep.subr.mxu0 0.0
    %v9656 = vand.u32 %v2677, 4294901760
    %9657 = vmatpush1.msra.mxu0 %v9656
    %v9658 = vand.u32 %v2753, 4294901760
    %9659 = vmatprep.mubr.f32.mxu0 %v9658
    %v9660 = vand.u32 %v2751, 4294901760
    %9661 = vmatmul.mubr.f32.gmra.mrb[0].mxu0 %v9660
    %v9662 = vpop.f32.mrb[0].mxu0
    %v9663 = vadd.f32 %v9559, %v9662
    %v9664 = vpop.f32.mrb[0].mxu0
    %9665 = vdwg.mxu0
    %vm9666 = vcmask 33792
    %v9667 = vsel %vm9666, %v9663, -inf
    %9668 = vmax.xlane.f32.xlu0 %v9667
    %v9669 = vpop.xlane.xlu0 %9668
    %v9670 = vsub.f32 %v9663, %v9669
    %v9671 = vmul.f32 %v9670, 1.442695
    %v9672 = vpow.pop %v9671
    %v9673 = vsel %vm9666, %v9672, 0.0
    %9674 = vadd.xlane.f32.xlu0 %v9673
    %v9675 = vpop.xlane.xlu0 %9674
    %v9676 = vrcp.pop %v9675
    %v9677 = vmul.f32 %v9672, %v9676
    %9678 = vst.msk [vmem:[#allocation3] sm:$0x3] %vm9666, %v9677
    // Predicated region
    $region14: #{net_forward.1} parent=1 // pred_check
      _
    $region15: #{net_forward.1} parent=1 // pred_check_branch
      %9680 = sbr.rel (0) target = $region17
    $region16: #{net_forward.1} parent=1 // pred_region
      %s9682 = ssub.s32 32, 32
      %9683 = vsyncadd [#allocation4], %s9682
      %s9685 = sshll.u32 [#allocation3], 4
      %s9686 = int_to_ptr.vmem [resolvable:$true] %s9685
      %9688 = dma.vmem_to_hbm [thread:$0]  %s9686, 32, %s3, [#allocation4]
    $region17: #{net_forward.1} parent=1 // pred_fallthru
      _
    // Predicated region
    $region18: #{net_forward.1} parent=1 // pred_check
      _
    $region19: #{net_forward.1} parent=1 // pred_check_branch
      %9690 = sbr.rel (0) target = $region21
    $region20: #{net_forward.1} parent=1 // pred_region
      %9691 = dma.done [#allocation4], 32
    $region21: #{net_forward.1} parent=1 // pred_fallthru
      _
    %9692 = vsyncpa [#allocation4], 1

</llo_original>
